<compile_context>
chip_gen: v5e
topology: v5e:2x2
jax: 0.10.0
libtpu: 0.0.40
codegen_flags: <defaults>
</compile_context>

<pallas_src>
import functools

import jax
import jax.numpy as jnp
from jax.experimental import pallas as pl
from jax.experimental.pallas import tpu as pltpu


def _round_up(a, b):
    return (a + b - 1) // b * b


def _pick_block(dim, pref, align):
    """Largest block <= pref that is a multiple of `align` and divides dim,
    or the full dim (full-extent blocks bypass the (8,128) tiling rule)."""
    if dim <= pref:
        return dim
    cand = (pref // align) * align
    while cand >= align:
        if dim % cand == 0:
            return cand
        cand -= align
    return dim


# ----------------------------------------------------------------------------
# Tiled matmul:  y = [LN(x)] @ w + b  [+ QuickGELU] [+ residual]
# LayerNorm prologue requires a single reduction step (tk == K).
# ----------------------------------------------------------------------------
def _matmul_bias_kernel(*refs, nk, activation, has_residual, has_ln, ln_eps):
    it = iter(refs)
    x_ref = next(it)
    w_ref = next(it)
    b_ref = next(it)
    g_ref = next(it) if has_ln else None
    bb_ref = next(it) if has_ln else None
    r_ref = next(it) if has_residual else None
    o_ref = next(it)
    acc_ref = next(it) if nk > 1 else None

    def _load_x():
        xv = x_ref[...]
        if not has_ln:
            return xv
        xf = xv.astype(jnp.float32)
        mu = jnp.mean(xf, axis=-1, keepdims=True)
        var = jnp.mean(jnp.square(xf - mu), axis=-1, keepdims=True)
        xf = (xf - mu) * jax.lax.rsqrt(var + ln_eps)
        xf = xf * g_ref[...].astype(jnp.float32) + bb_ref[...].astype(jnp.float32)
        return xf.astype(xv.dtype)

    def _epilogue(acc):
        acc = acc + b_ref[...].astype(jnp.float32)
        if activation == "quick_gelu":
            acc = acc * jax.nn.sigmoid(1.702 * acc)
        if has_residual:
            acc = acc + r_ref[...].astype(jnp.float32)
        o_ref[...] = acc.astype(o_ref.dtype)

    if nk == 1:
        _epilogue(jnp.dot(_load_x(), w_ref[...],
                          preferred_element_type=jnp.float32))
    else:
        k = pl.program_id(2)

        @pl.when(k == 0)
        def _init():
            acc_ref[...] = jnp.zeros_like(acc_ref)

        acc_ref[...] += jnp.dot(_load_x(), w_ref[...],
                                preferred_element_type=jnp.float32)

        @pl.when(k == nk - 1)
        def _finalize():
            _epilogue(acc_ref[...])


def matmul_bias(x, w, b=None, *, activation=None, residual=None, ln=None,
                out_dtype=None, tm=512, tn=512):
    """x:[M,K] @ w:[K,N] (+bias, +QuickGELU, +residual, optional fused LN on x)."""
    M, K = x.shape
    K2, N = w.shape
    assert K == K2
    out_dtype = out_dtype or x.dtype

    tm_ = _pick_block(M, tm, 8)
    tn_ = _pick_block(N, tn, 128)
    tk_ = K if (ln is not None or K <= 4096) else _pick_block(K, 2048, 128)
    nm, nn, nk = M // tm_, N // tn_, K // tk_
    assert ln is None or nk == 1

    if b is None:
        b = jnp.zeros((1, N), jnp.float32)
    elif b.ndim == 1:
        b = b.reshape(1, N)

    in_specs = [
        pl.BlockSpec((tm_, tk_), lambda i, j, k: (i, k)),
        pl.BlockSpec((tk_, tn_), lambda i, j, k: (k, j)),
        pl.BlockSpec((1, tn_), lambda i, j, k: (0, j)),
    ]
    operands = [x, w, b]
    ln_eps = 0.0
    if ln is not None:
        g, beta, ln_eps = ln
        g = g.reshape(1, K) if g.ndim == 1 else g
        beta = beta.reshape(1, K) if beta.ndim == 1 else beta
        in_specs += [pl.BlockSpec((1, tk_), lambda i, j, k: (0, 0)),
                     pl.BlockSpec((1, tk_), lambda i, j, k: (0, 0))]
        operands += [g, beta]
    if residual is not None:
        in_specs.append(pl.BlockSpec((tm_, tn_), lambda i, j, k: (i, j)))
        operands.append(residual)

    scratch = [pltpu.VMEM((tm_, tn_), jnp.float32)] if nk > 1 else []

    # right-sized scoped-VMEM request (double-buffered blocks + f32 staging)
    need = 2 * (tm_ * tk_ * x.dtype.itemsize
                + tk_ * tn_ * w.dtype.itemsize
                + tm_ * tn_ * jnp.dtype(out_dtype).itemsize)
    need += tm_ * tn_ * 4  # f32 accumulator / epilogue staging
    if residual is not None:
        need += 2 * tm_ * tn_ * residual.dtype.itemsize
    vmem_limit = min(max(int(need * 2), 16 * 1024 * 1024), 100 * 1024 * 1024)

    return pl.pallas_call(
        functools.partial(_matmul_bias_kernel, nk=nk, activation=activation,
                          has_residual=residual is not None,
                          has_ln=ln is not None, ln_eps=ln_eps),
        grid=(nm, nn, nk),
        in_specs=in_specs,
        out_specs=pl.BlockSpec((tm_, tn_), lambda i, j, k: (i, j)),
        out_shape=jax.ShapeDtypeStruct((M, N), out_dtype),
        scratch_shapes=scratch,
        compiler_params=pltpu.CompilerParams(
            dimension_semantics=("parallel", "parallel", "arbitrary"),
            vmem_limit_bytes=vmem_limit),
    )(*operands)


# ----------------------------------------------------------------------------
# Standalone LayerNorm (only used for ln_pre; f32 math, like the torch subclass)
# ----------------------------------------------------------------------------
def _layernorm_kernel(x_ref, g_ref, b_ref, o_ref, *, eps):
    x = x_ref[...].astype(jnp.float32)
    mu = jnp.mean(x, axis=-1, keepdims=True)
    var = jnp.mean(jnp.square(x - mu), axis=-1, keepdims=True)
    y = (x - mu) * jax.lax.rsqrt(var + eps)
    y = y * g_ref[...].astype(jnp.float32) + b_ref[...].astype(jnp.float32)
    o_ref[...] = y.astype(o_ref.dtype)


def layernorm(x, g, b, *, eps=1e-5, out_dtype=None, tm=256):
    M, D = x.shape
    out_dtype = out_dtype or x.dtype
    tm_ = _pick_block(M, tm, 8)
    g2 = g.reshape(1, D) if g.ndim == 1 else g
    b2 = b.reshape(1, D) if b.ndim == 1 else b
    return pl.pallas_call(
        functools.partial(_layernorm_kernel, eps=eps),
        grid=(M // tm_,),
        in_specs=[pl.BlockSpec((tm_, D), lambda i: (i, 0)),
                  pl.BlockSpec((1, D), lambda i: (0, 0)),
                  pl.BlockSpec((1, D), lambda i: (0, 0))],
        out_specs=pl.BlockSpec((tm_, D), lambda i: (i, 0)),
        out_shape=jax.ShapeDtypeStruct((M, D), out_dtype),
        compiler_params=pltpu.CompilerParams(dimension_semantics=("parallel",)),
    )(x, g2, b2)


# ----------------------------------------------------------------------------
# Multi-head self-attention.
# Grid = (batch, query-row-blocks); q/k/v come in as three lane-aligned views of
# the QKV tensor.  Per-head PV results stream directly into o_ref lane slices.
# Padded key positions (index >= valid_len) are masked out.
# ----------------------------------------------------------------------------
def _attention_kernel(q_ref, k_ref, v_ref, o_ref, *, heads, scale, valid_len):
    W = q_ref.shape[-1]
    hd = W // heads
    Lk = k_ref.shape[1]
    q = q_ref[0]                      # [tq, W]
    k = k_ref[0]                      # [Lk, W]
    v = v_ref[0]                      # [Lk, W]
    if valid_len is not None:
        kmask = jax.lax.broadcasted_iota(jnp.int32, (q.shape[0], Lk), 1) < valid_len

    for h in range(heads):
        sl = slice(h * hd, (h + 1) * hd)
        s = jax.lax.dot_general(q[:, sl], k[:, sl], (((1,), (1,)), ((), ())),
                                preferred_element_type=jnp.float32) * scale
        if valid_len is not None:
            s = jnp.where(kmask, s, -1e30)
        s = s - jnp.max(s, axis=-1, keepdims=True)
        p = jnp.exp(s)
        p = p * pl.reciprocal(jnp.sum(p, axis=-1, keepdims=True), approx=True)
        oh = jnp.dot(p.astype(v.dtype), v[:, sl],
                     preferred_element_type=jnp.float32)
        o_ref[0, :, sl] = oh.astype(o_ref.dtype)


def attention(qkv, heads, scale, valid_len=None):
    """qkv: [B, Lp, 3*W] -> out [B, Lp, W]."""
    B, Lp, W3 = qkv.shape
    W = W3 // 3
    tq = 128 if (Lp % 128 == 0 and Lp > 128) else Lp
    nq = Lp // tq

    if W % 128 == 0:
        # three 128-lane-aligned block views of the same array (no copies)
        q_arr = k_arr = v_arr = qkv
        q_spec = pl.BlockSpec((1, tq, W), lambda b, qi: (b, qi, 0))
        k_spec = pl.BlockSpec((1, Lp, W), lambda b, qi: (b, 0, 1))
        v_spec = pl.BlockSpec((1, Lp, W), lambda b, qi: (b, 0, 2))
    else:
        # small/unaligned widths: split once in XLA so blocks span full lane axes
        q_arr, k_arr, v_arr = qkv[..., :W], qkv[..., W:2 * W], qkv[..., 2 * W:]
        q_spec = pl.BlockSpec((1, tq, W), lambda b, qi: (b, qi, 0))
        k_spec = pl.BlockSpec((1, Lp, W), lambda b, qi: (b, 0, 0))
        v_spec = pl.BlockSpec((1, Lp, W), lambda b, qi: (b, 0, 0))

    return pl.pallas_call(
        functools.partial(_attention_kernel, heads=heads, scale=scale,
                          valid_len=valid_len),
        grid=(B, nq),
        in_specs=[q_spec, k_spec, v_spec],
        out_specs=pl.BlockSpec((1, tq, W), lambda b, qi: (b, qi, 0)),
        out_shape=jax.ShapeDtypeStruct((B, Lp, W), qkv.dtype),
        compiler_params=pltpu.CompilerParams(
            dimension_semantics=("parallel", "parallel")),
    )(q_arr, k_arr, v_arr)


# ----------------------------------------------------------------------------
# Head-averaged CLS-query attention row (the only attention weights returned).
# Tiny recomputation on the last layer only; EXACT softmax division.
# ----------------------------------------------------------------------------
def _cls_attn_weights_kernel(q_ref, k_ref, w_ref, *, heads, scale, valid_len):
    W = q_ref.shape[-1]
    hd = W // heads
    Lk = k_ref.shape[1]
    q0 = q_ref[0, 0:1, :]             # CLS query row
    k = k_ref[0]
    if valid_len is not None:
        kmask = jax.lax.broadcasted_iota(jnp.int32, (1, Lk), 1) < valid_len
    acc = jnp.zeros((1, Lk), jnp.float32)
    for h in range(heads):
        sl = slice(h * hd, (h + 1) * hd)
        s = jax.lax.dot_general(q0[:, sl], k[:, sl], (((1,), (1,)), ((), ())),
                                preferred_element_type=jnp.float32) * scale
        if valid_len is not None:
            s = jnp.where(kmask, s, -1e30)
        s = s - jnp.max(s, axis=-1, keepdims=True)
        p = jnp.exp(s)
        acc = acc + p / jnp.sum(p, axis=-1, keepdims=True)
    w_ref[0] = (acc * (1.0 / heads)).astype(w_ref.dtype)


def cls_attention_weights(qkv, heads, scale, valid_len=None):
    B, Lp, W3 = qkv.shape
    W = W3 // 3
    if W % 128 == 0:
        q_arr = k_arr = qkv
        q_spec = pl.BlockSpec((1, 8, W), lambda b: (b, 0, 0))
        k_spec = pl.BlockSpec((1, Lp, W), lambda b: (b, 0, 1))
    else:
        q_arr, k_arr = qkv[..., :W], qkv[..., W:2 * W]
        q_spec = pl.BlockSpec((1, 8, W), lambda b: (b, 0, 0))
        k_spec = pl.BlockSpec((1, Lp, W), lambda b: (b, 0, 0))
    return pl.pallas_call(
        functools.partial(_cls_attn_weights_kernel, heads=heads, scale=scale,
                          valid_len=valid_len),
        grid=(B,),
        in_specs=[q_spec, k_spec],
        out_specs=pl.BlockSpec((1, 1, Lp), lambda b: (b, 0, 0)),
        out_shape=jax.ShapeDtypeStruct((B, 1, Lp), jnp.float32),
        compiler_params=pltpu.CompilerParams(dimension_semantics=("parallel",)),
    )(q_arr, k_arr)


# ----------------------------------------------------------------------------
# Parameter initialization (deterministic, synthetic; PyTorch layout, f32)
# ----------------------------------------------------------------------------
def init_params(key, *, input_resolution, patch_size, width, layers, heads,
                output_dim):
    n_patches = (input_resolution // patch_size) ** 2
    scale = width ** (-0.5)
    keys = jax.random.split(key, 4 + 6 * layers)
    kit = iter(keys)

    def rnd(k, shape, s=0.02):
        return (s * jax.random.normal(k, shape)).astype(jnp.float32)

    params = {
        "conv1_w": rnd(next(kit), (width, 3, patch_size, patch_size)),
        "class_embedding": (scale * jax.random.normal(next(kit), (width,))
                            ).astype(jnp.float32),
        "positional_embedding": (scale * jax.random.normal(
            next(kit), (n_patches + 1, width))).astype(jnp.float32),
        "ln_pre_w": jnp.ones((width,), jnp.float32),
        "ln_pre_b": jnp.zeros((width,), jnp.float32),
        "ln_post_w": jnp.ones((width,), jnp.float32),
        "ln_post_b": jnp.zeros((width,), jnp.float32),
        "proj": (scale * jax.random.normal(next(kit), (width, output_dim))
                 ).astype(jnp.float32),
        "layers": [],
    }
    for _ in range(layers):
        lk = [next(kit) for _ in range(6)]
        params["layers"].append({
            "in_proj_w": rnd(lk[0], (3 * width, width)),   # PyTorch [out, in]
            "in_proj_b": jnp.zeros((3 * width,), jnp.float32),
            "out_proj_w": rnd(lk[1], (width, width)),
            "out_proj_b": jnp.zeros((width,), jnp.float32),
            "ln1_w": jnp.ones((width,), jnp.float32),
            "ln1_b": jnp.zeros((width,), jnp.float32),
            "ln2_w": jnp.ones((width,), jnp.float32),
            "ln2_b": jnp.zeros((width,), jnp.float32),
            "fc_w": rnd(lk[2], (4 * width, width)),
            "fc_b": jnp.zeros((4 * width,), jnp.float32),
            "cproj_w": rnd(lk[3], (width, 4 * width)),
            "cproj_b": jnp.zeros((width,), jnp.float32),
        })
    return params


def prepare_params(params, compute_dtype=jnp.bfloat16):
    """One-time: pre-transpose Linear weights to [K, N] and cast to bf16.
    Biases / LN params / embeddings stay f32 (added in f32 epilogues)."""
    cd = compute_dtype
    width = params["conv1_w"].shape[0]

    def row(v):
        return v.reshape(1, -1).astype(jnp.float32)

    prepped = {
        "conv1_w": params["conv1_w"].reshape(width, -1).T.astype(cd),  # [C*P*P, W]
        "class_embedding": params["class_embedding"].astype(jnp.float32),
        "positional_embedding": params["positional_embedding"].astype(jnp.float32),
        "ln_pre_w": row(params["ln_pre_w"]), "ln_pre_b": row(params["ln_pre_b"]),
        "ln_post_w": row(params["ln_post_w"]), "ln_post_b": row(params["ln_post_b"]),
        "proj": params["proj"].astype(cd),
        "layers": [],
    }
    for lyr in params["layers"]:
        prepped["layers"].append({
            "in_proj_w": lyr["in_proj_w"].T.astype(cd),    # [W, 3W]
            "in_proj_b": row(lyr["in_proj_b"]),
            "out_proj_w": lyr["out_proj_w"].T.astype(cd),  # [W, W]
            "out_proj_b": row(lyr["out_proj_b"]),
            "ln1_w": row(lyr["ln1_w"]), "ln1_b": row(lyr["ln1_b"]),
            "ln2_w": row(lyr["ln2_w"]), "ln2_b": row(lyr["ln2_b"]),
            "fc_w": lyr["fc_w"].T.astype(cd),              # [W, 4W]
            "fc_b": row(lyr["fc_b"]),
            "cproj_w": lyr["cproj_w"].T.astype(cd),        # [4W, W]
            "cproj_b": row(lyr["cproj_b"]),
        })
    return prepped


# ----------------------------------------------------------------------------
# Forward pass
# ----------------------------------------------------------------------------
def vision_transformer_forward(x, params, *, patch_size, heads,
                               compute_dtype=jnp.bfloat16, ln_eps=1e-5):
    B, C, R, _ = x.shape
    P = patch_size
    G = R // P
    Npatch = G * G
    w_conv = params["conv1_w"]                 # [C*P*P, width]
    width = w_conv.shape[1]
    L = Npatch + 1
    Lp = _round_up(L, 128) if L > 64 else _round_up(L, 8)
    assert width % heads == 0
    hd = width // heads
    sm_scale = 1.0 / float(hd) ** 0.5
    cd = compute_dtype
    mask_len = L if Lp > L else None

    # conv1 (kernel == stride == patch, no bias) as im2col + tiled matmul
    patches = (x.astype(cd).reshape(B, C, G, P, G, P)
                 .transpose(0, 2, 4, 1, 3, 5)          # [B, G, G, C, P, P]
                 .reshape(B * Npatch, C * P * P))
    tok = matmul_bias(patches, w_conv)                 # [B*Npatch, width] bf16

    # CLS token + positional embedding in f32; pad sequence ONCE to Lp rows
    tok = tok.reshape(B, Npatch, width).astype(jnp.float32)
    cls = jnp.broadcast_to(params["class_embedding"], (B, 1, width))
    h = jnp.concatenate([cls, tok], axis=1) + params["positional_embedding"][None]
    if Lp != L:
        h = jnp.pad(h, ((0, 0), (0, Lp - L), (0, 0)))
    xcur = layernorm(h.reshape(B * Lp, width), params["ln_pre_w"],
                     params["ln_pre_b"], eps=ln_eps, out_dtype=cd)

    attn_weight = None
    n_layers = len(params["layers"])
    for li, lyr in enumerate(params["layers"]):
        last = li == n_layers - 1

        # --- attention block: ln_1 fused into in_proj, residual fused in out_proj
        qkv = matmul_bias(xcur, lyr["in_proj_w"], lyr["in_proj_b"],
                          ln=(lyr["ln1_w"], lyr["ln1_b"], ln_eps))   # [B*Lp, 3W]
        qkv3 = qkv.reshape(B, Lp, 3 * width)
        ao = attention(qkv3, heads, sm_scale, mask_len)              # [B, Lp, W]
        if last:
            attn_weight = cls_attention_weights(qkv3, heads, sm_scale, mask_len)
        xcur = matmul_bias(ao.reshape(B * Lp, width), lyr["out_proj_w"],
                           lyr["out_proj_b"], residual=xcur)

        # --- MLP block: ln_2 fused into c_fc, QuickGELU in c_fc epilogue,
        #     residual fused into c_proj
        m = matmul_bias(xcur, lyr["fc_w"], lyr["fc_b"], activation="quick_gelu",
                        ln=(lyr["ln2_w"], lyr["ln2_b"], ln_eps))
        xcur = matmul_bias(m, lyr["cproj_w"], lyr["cproj_b"], residual=xcur)

    # ln_post fused into the output projection (torch.bmm with repeated proj)
    out_dim = params["proj"].shape[1]
    out = matmul_bias(xcur, params["proj"],
                      ln=(params["ln_post_w"], params["ln_post_b"], ln_eps),
                      out_dtype=jnp.float32)            # [B*Lp, out_dim]
    out = out.reshape(B, Lp, out_dim)

    seq_tokens = out[:, 1:L, :].transpose(1, 0, 2)       # [L-1, B, out_dim]
    cls_token = out[:, 0, :]                             # [B, out_dim]
    attn_weight = attn_weight[:, 0, 1:L]                 # [B, L-1]
    return seq_tokens, attn_weight, cls_token


# ----------------------------------------------------------------------------
if __name__ == "__main__":
    INPUT_RES = 16
    PATCH = 4
    WIDTH = 128      # lane-aligned width keeps every attention block 128-lane dense
    LAYERS = 2
    HEADS = 4
    OUT_DIM = 64
    BATCH = 2

    key = jax.random.PRNGKey(0)
    pkey, xkey = jax.random.split(key)
    raw_params = init_params(pkey, input_resolution=INPUT_RES, patch_size=PATCH,
                             width=WIDTH, layers=LAYERS, heads=HEADS,
                             output_dim=OUT_DIM)
    params = prepare_params(raw_params, compute_dtype=jnp.bfloat16)
    x = jax.random.normal(xkey, (BATCH, 3, INPUT_RES, INPUT_RES),
                          dtype=jnp.float32)

    fwd = jax.jit(functools.partial(vision_transformer_forward,
                                    patch_size=PATCH, heads=HEADS))
    seq_tokens, attn_weight, cls_token = fwd(x, params)
    jax.block_until_ready((seq_tokens, attn_weight, cls_token))

    n_patches = (INPUT_RES // PATCH) ** 2
    assert seq_tokens.shape == (n_patches, BATCH, OUT_DIM)
    assert cls_token.shape == (BATCH, OUT_DIM)
    assert attn_weight.shape == (BATCH, n_patches)
    assert bool(jnp.all(jnp.isfinite(seq_tokens)))
    assert bool(jnp.all(jnp.isfinite(attn_weight)))
    print("KERNEL_OK")
</pallas_src>

<mosaic_0001>
module attributes {stable_mosaic.version = 11 : i64} {
  func.func @_matmul_bias_kernel(%arg0: i32, %arg1: i32, %arg2: i32, %arg3: memref<32x48xbf16, #tpu.memory_space<vmem>>, %arg4: memref<48x128xbf16, #tpu.memory_space<vmem>>, %arg5: memref<1x128xf32, #tpu.memory_space<vmem>>, %arg6: memref<32x128xbf16, #tpu.memory_space<vmem>>) attributes {dimension_semantics = [#tpu.dimension_semantics<parallel>, #tpu.dimension_semantics<parallel>, #tpu.dimension_semantics<arbitrary>], iteration_bounds = array<i64: 1, 1, 1>, scalar_prefetch = 0 : i64, scratch_operands = 0 : i64, tpu.core_type = #tpu.core_type<tc>, window_params = [{transform_indices = @transform_0, window_bounds = array<i64: 32, 48>}, {transform_indices = @transform_1, window_bounds = array<i64: 48, 128>}, {transform_indices = @transform_2, window_bounds = array<i64: 1, 128>}, {transform_indices = @transform_3, window_bounds = array<i64: 32, 128>}]} {
    %c0 = arith.constant 0 : index
    %c0_0 = arith.constant 0 : index
    %0 = vector.load %arg3[%c0, %c0_0] : memref<32x48xbf16, #tpu.memory_space<vmem>>, vector<32x48xbf16>
    %c0_1 = arith.constant 0 : index
    %c0_2 = arith.constant 0 : index
    %1 = vector.load %arg4[%c0_1, %c0_2] : memref<48x128xbf16, #tpu.memory_space<vmem>>, vector<48x128xbf16>
    %cst = arith.constant dense<0.000000e+00> : vector<32x128xf32>
    %2 = tpu.matmul %0, %1, %cst {dimension_numbers = #tpu.dot_dimension_numbers<[1], [0], [0], [1], [0, 0, 1, 1], [], []>} : vector<32x48xbf16>, vector<48x128xbf16>, vector<32x128xf32> -> vector<32x128xf32>
    %c0_3 = arith.constant 0 : index
    %c0_4 = arith.constant 0 : index
    %3 = vector.load %arg5[%c0_3, %c0_4] : memref<1x128xf32, #tpu.memory_space<vmem>>, vector<1x128xf32>
    %4 = vector.broadcast %3 : vector<1x128xf32> to vector<32x128xf32>
    %5 = arith.addf %2, %4 : vector<32x128xf32>
    %6 = arith.truncf %5 : vector<32x128xf32> to vector<32x128xbf16>
    %c0_5 = arith.constant 0 : index
    %c0_6 = arith.constant 0 : index
    %7 = vector.load %arg6[%c0_5, %c0_6] : memref<32x128xbf16, #tpu.memory_space<vmem>>, vector<32x128xbf16>
    tpu.vector_store %arg6[%c0_5, %c0_6], %6 {strides = array<i32>} : memref<32x128xbf16, #tpu.memory_space<vmem>>, vector<32x128xbf16>,
    return
  }
  func.func @transform_0(%arg0: i32, %arg1: i32, %arg2: i32) -> (i32, i32) {
    %c0_i32 = arith.constant 0 : i32
    return %arg0, %arg2 : i32, i32
  }
  func.func @transform_1(%arg0: i32, %arg1: i32, %arg2: i32) -> (i32, i32) {
    %c0_i32 = arith.constant 0 : i32
    return %arg2, %arg1 : i32, i32
  }
  func.func @transform_2(%arg0: i32, %arg1: i32, %arg2: i32) -> (i32, i32) {
    %c0_i32 = arith.constant 0 : i32
    %c0_i32_0 = arith.constant 0 : i32
    return %c0_i32, %arg1 : i32, i32
  }
  func.func @transform_3(%arg0: i32, %arg1: i32, %arg2: i32) -> (i32, i32) {
    %c0_i32 = arith.constant 0 : i32
    return %arg0, %arg1 : i32, i32
  }
}

module attributes {stable_mosaic.version = 11 : i64} {
  func.func @_matmul_bias_kernel(%arg0: i32, %arg1: i32, %arg2: i32, %arg3: memref<48x128xbf16, #tpu.memory_space<vmem>>, %arg4: memref<128x384xbf16, #tpu.memory_space<vmem>>, %arg5: memref<1x384xf32, #tpu.memory_space<vmem>>, %arg6: memref<1x128xf32, #tpu.memory_space<vmem>>, %arg7: memref<1x128xf32, #tpu.memory_space<vmem>>, %arg8: memref<48x384xbf16, #tpu.memory_space<vmem>>) attributes {dimension_semantics = [#tpu.dimension_semantics<parallel>, #tpu.dimension_semantics<parallel>, #tpu.dimension_semantics<arbitrary>], iteration_bounds = array<i64: 1, 1, 1>, scalar_prefetch = 0 : i64, scratch_operands = 0 : i64, tpu.core_type = #tpu.core_type<tc>, window_params = [{transform_indices = @transform_0, window_bounds = array<i64: 48, 128>}, {transform_indices = @transform_1, window_bounds = array<i64: 128, 384>}, {transform_indices = @transform_2, window_bounds = array<i64: 1, 384>}, {pipeline_mode = #tpu.pipeline_mode<synchronous>, transform_indices = @transform_3, window_bounds = array<i64: 1, 128>}, {pipeline_mode = #tpu.pipeline_mode<synchronous>, transform_indices = @transform_4, window_bounds = array<i64: 1, 128>}, {transform_indices = @transform_5, window_bounds = array<i64: 48, 384>}]} {
    %c0 = arith.constant 0 : index
    %c0_0 = arith.constant 0 : index
    %0 = vector.load %arg3[%c0, %c0_0] : memref<48x128xbf16, #tpu.memory_space<vmem>>, vector<48x128xbf16>
    %1 = arith.extf %0 : vector<48x128xbf16> to vector<48x128xf32>
    %cst = arith.constant dense<0.000000e+00> : vector<48xf32>
    %2 = vector.multi_reduction <add>, %1, %cst [1] : vector<48x128xf32> to vector<48xf32>
    %3 = vector.shape_cast %2 : vector<48xf32> to vector<48x1xf32>
    %cst_1 = arith.constant 1.280000e+02 : f32
    %4 = vector.broadcast %cst_1 : f32 to vector<48x1xf32>
    %5 = arith.divf %3, %4 : vector<48x1xf32>
    %6 = vector.broadcast %5 : vector<48x1xf32> to vector<48x128xf32>
    %7 = arith.subf %1, %6 : vector<48x128xf32>
    %8 = arith.mulf %7, %7 : vector<48x128xf32>
    %cst_2 = arith.constant dense<0.000000e+00> : vector<48xf32>
    %9 = vector.multi_reduction <add>, %8, %cst_2 [1] : vector<48x128xf32> to vector<48xf32>
    %10 = vector.shape_cast %9 : vector<48xf32> to vector<48x1xf32>
    %cst_3 = arith.constant 1.280000e+02 : f32
    %11 = vector.broadcast %cst_3 : f32 to vector<48x1xf32>
    %12 = arith.divf %10, %11 : vector<48x1xf32>
    %13 = vector.broadcast %5 : vector<48x1xf32> to vector<48x128xf32>
    %14 = arith.subf %1, %13 : vector<48x128xf32>
    %cst_4 = arith.constant 9.99999974E-6 : f32
    %15 = vector.broadcast %cst_4 : f32 to vector<48x1xf32>
    %16 = arith.addf %12, %15 : vector<48x1xf32>
    %17 = math.rsqrt %16 : vector<48x1xf32>
    %18 = vector.broadcast %17 : vector<48x1xf32> to vector<48x128xf32>
    %19 = arith.mulf %14, %18 : vector<48x128xf32>
    %c0_5 = arith.constant 0 : index
    %c0_6 = arith.constant 0 : index
    %20 = vector.load %arg6[%c0_5, %c0_6] : memref<1x128xf32, #tpu.memory_space<vmem>>, vector<1x128xf32>
    %21 = vector.broadcast %20 : vector<1x128xf32> to vector<48x128xf32>
    %22 = arith.mulf %19, %21 : vector<48x128xf32>
    %c0_7 = arith.constant 0 : index
    %c0_8 = arith.constant 0 : index
    %23 = vector.load %arg7[%c0_7, %c0_8] : memref<1x128xf32, #tpu.memory_space<vmem>>, vector<1x128xf32>
    %24 = vector.broadcast %23 : vector<1x128xf32> to vector<48x128xf32>
    %25 = arith.addf %22, %24 : vector<48x128xf32>
    %26 = arith.truncf %25 : vector<48x128xf32> to vector<48x128xbf16>
    %c0_9 = arith.constant 0 : index
    %c0_10 = arith.constant 0 : index
    %27 = vector.load %arg4[%c0_9, %c0_10] : memref<128x384xbf16, #tpu.memory_space<vmem>>, vector<128x384xbf16>
    %cst_11 = arith.constant dense<0.000000e+00> : vector<48x384xf32>
    %28 = tpu.matmul %26, %27, %cst_11 {dimension_numbers = #tpu.dot_dimension_numbers<[1], [0], [0], [1], [0, 0, 1, 1], [], []>} : vector<48x128xbf16>, vector<128x384xbf16>, vector<48x384xf32> -> vector<48x384xf32>
    %c0_12 = arith.constant 0 : index
    %c0_13 = arith.constant 0 : index
    %29 = vector.load %arg5[%c0_12, %c0_13] : memref<1x384xf32, #tpu.memory_space<vmem>>, vector<1x384xf32>
    %30 = vector.broadcast %29 : vector<1x384xf32> to vector<48x384xf32>
    %31 = arith.addf %28, %30 : vector<48x384xf32>
    %32 = arith.truncf %31 : vector<48x384xf32> to vector<48x384xbf16>
    %c0_14 = arith.constant 0 : index
    %c0_15 = arith.constant 0 : index
    %33 = vector.load %arg8[%c0_14, %c0_15] : memref<48x384xbf16, #tpu.memory_space<vmem>>, vector<48x384xbf16>
    tpu.vector_store %arg8[%c0_14, %c0_15], %32 {strides = array<i32>} : memref<48x384xbf16, #tpu.memory_space<vmem>>, vector<48x384xbf16>,
    return
  }
  func.func @transform_0(%arg0: i32, %arg1: i32, %arg2: i32) -> (i32, i32) {
    %c0_i32 = arith.constant 0 : i32
    return %arg0, %arg2 : i32, i32
  }
  func.func @transform_1(%arg0: i32, %arg1: i32, %arg2: i32) -> (i32, i32) {
    %c0_i32 = arith.constant 0 : i32
    return %arg2, %arg1 : i32, i32
  }
  func.func @transform_2(%arg0: i32, %arg1: i32, %arg2: i32) -> (i32, i32) {
    %c0_i32 = arith.constant 0 : i32
    %c0_i32_0 = arith.constant 0 : i32
    return %c0_i32, %arg1 : i32, i32
  }
  func.func @transform_3(%arg0: i32, %arg1: i32, %arg2: i32) -> (i32, i32) {
    %c0_i32 = arith.constant 0 : i32
    %c0_i32_0 = arith.constant 0 : i32
    %c0_i32_1 = arith.constant 0 : i32
    return %c0_i32, %c0_i32_0 : i32, i32
  }
  func.func @transform_4(%arg0: i32, %arg1: i32, %arg2: i32) -> (i32, i32) {
    %c0_i32 = arith.constant 0 : i32
    %c0_i32_0 = arith.constant 0 : i32
    %c0_i32_1 = arith.constant 0 : i32
    return %c0_i32, %c0_i32_0 : i32, i32
  }
  func.func @transform_5(%arg0: i32, %arg1: i32, %arg2: i32) -> (i32, i32) {
    %c0_i32 = arith.constant 0 : i32
    return %arg0, %arg1 : i32, i32
  }
}

module attributes {stable_mosaic.version = 11 : i64} {
  func.func @_layernorm_kernel(%arg0: i32, %arg1: memref<48x128xf32, #tpu.memory_space<vmem>>, %arg2: memref<1x128xf32, #tpu.memory_space<vmem>>, %arg3: memref<1x128xf32, #tpu.memory_space<vmem>>, %arg4: memref<48x128xbf16, #tpu.memory_space<vmem>>) attributes {dimension_semantics = [#tpu.dimension_semantics<parallel>], iteration_bounds = array<i64: 1>, scalar_prefetch = 0 : i64, scratch_operands = 0 : i64, tpu.core_type = #tpu.core_type<tc>, window_params = [{transform_indices = @transform_0, window_bounds = array<i64: 48, 128>}, {pipeline_mode = #tpu.pipeline_mode<synchronous>, transform_indices = @transform_1, window_bounds = array<i64: 1, 128>}, {pipeline_mode = #tpu.pipeline_mode<synchronous>, transform_indices = @transform_2, window_bounds = array<i64: 1, 128>}, {transform_indices = @transform_3, window_bounds = array<i64: 48, 128>}]} {
    %c0 = arith.constant 0 : index
    %c0_0 = arith.constant 0 : index
    %0 = vector.load %arg1[%c0, %c0_0] : memref<48x128xf32, #tpu.memory_space<vmem>>, vector<48x128xf32>
    %cst = arith.constant dense<0.000000e+00> : vector<48xf32>
    %1 = vector.multi_reduction <add>, %0, %cst [1] : vector<48x128xf32> to vector<48xf32>
    %2 = vector.shape_cast %1 : vector<48xf32> to vector<48x1xf32>
    %cst_1 = arith.constant 1.280000e+02 : f32
    %3 = vector.broadcast %cst_1 : f32 to vector<48x1xf32>
    %4 = arith.divf %2, %3 : vector<48x1xf32>
    %5 = vector.broadcast %4 : vector<48x1xf32> to vector<48x128xf32>
    %6 = arith.subf %0, %5 : vector<48x128xf32>
    %7 = arith.mulf %6, %6 : vector<48x128xf32>
    %cst_2 = arith.constant dense<0.000000e+00> : vector<48xf32>
    %8 = vector.multi_reduction <add>, %7, %cst_2 [1] : vector<48x128xf32> to vector<48xf32>
    %9 = vector.shape_cast %8 : vector<48xf32> to vector<48x1xf32>
    %cst_3 = arith.constant 1.280000e+02 : f32
    %10 = vector.broadcast %cst_3 : f32 to vector<48x1xf32>
    %11 = arith.divf %9, %10 : vector<48x1xf32>
    %12 = vector.broadcast %4 : vector<48x1xf32> to vector<48x128xf32>
    %13 = arith.subf %0, %12 : vector<48x128xf32>
    %cst_4 = arith.constant 9.99999974E-6 : f32
    %14 = vector.broadcast %cst_4 : f32 to vector<48x1xf32>
    %15 = arith.addf %11, %14 : vector<48x1xf32>
    %16 = math.rsqrt %15 : vector<48x1xf32>
    %17 = vector.broadcast %16 : vector<48x1xf32> to vector<48x128xf32>
    %18 = arith.mulf %13, %17 : vector<48x128xf32>
    %c0_5 = arith.constant 0 : index
    %c0_6 = arith.constant 0 : index
    %19 = vector.load %arg2[%c0_5, %c0_6] : memref<1x128xf32, #tpu.memory_space<vmem>>, vector<1x128xf32>
    %20 = vector.broadcast %19 : vector<1x128xf32> to vector<48x128xf32>
    %21 = arith.mulf %18, %20 : vector<48x128xf32>
    %c0_7 = arith.constant 0 : index
    %c0_8 = arith.constant 0 : index
    %22 = vector.load %arg3[%c0_7, %c0_8] : memref<1x128xf32, #tpu.memory_space<vmem>>, vector<1x128xf32>
    %23 = vector.broadcast %22 : vector<1x128xf32> to vector<48x128xf32>
    %24 = arith.addf %21, %23 : vector<48x128xf32>
    %25 = arith.truncf %24 : vector<48x128xf32> to vector<48x128xbf16>
    %c0_9 = arith.constant 0 : index
    %c0_10 = arith.constant 0 : index
    %26 = vector.load %arg4[%c0_9, %c0_10] : memref<48x128xbf16, #tpu.memory_space<vmem>>, vector<48x128xbf16>
    tpu.vector_store %arg4[%c0_9, %c0_10], %25 {strides = array<i32>} : memref<48x128xbf16, #tpu.memory_space<vmem>>, vector<48x128xbf16>,
    return
  }
  func.func @transform_0(%arg0: i32) -> (i32, i32) {
    %c0_i32 = arith.constant 0 : i32
    %c0_i32_0 = arith.constant 0 : i32
    return %arg0, %c0_i32 : i32, i32
  }
  func.func @transform_1(%arg0: i32) -> (i32, i32) {
    %c0_i32 = arith.constant 0 : i32
    %c0_i32_0 = arith.constant 0 : i32
    %c0_i32_1 = arith.constant 0 : i32
    return %c0_i32, %c0_i32_0 : i32, i32
  }
  func.func @transform_2(%arg0: i32) -> (i32, i32) {
    %c0_i32 = arith.constant 0 : i32
    %c0_i32_0 = arith.constant 0 : i32
    %c0_i32_1 = arith.constant 0 : i32
    return %c0_i32, %c0_i32_0 : i32, i32
  }
  func.func @transform_3(%arg0: i32) -> (i32, i32) {
    %c0_i32 = arith.constant 0 : i32
    %c0_i32_0 = arith.constant 0 : i32
    return %arg0, %c0_i32 : i32, i32
  }
}

module attributes {stable_mosaic.version = 11 : i64} {
  func.func @_attention_kernel(%arg0: i32, %arg1: i32, %arg2: memref<1x24x128xbf16, #tpu.memory_space<vmem>>, %arg3: memref<1x24x128xbf16, #tpu.memory_space<vmem>>, %arg4: memref<1x24x128xbf16, #tpu.memory_space<vmem>>, %arg5: memref<1x24x128xbf16, #tpu.memory_space<vmem>>) attributes {dimension_semantics = [#tpu.dimension_semantics<parallel>, #tpu.dimension_semantics<parallel>], iteration_bounds = array<i64: 2, 1>, scalar_prefetch = 0 : i64, scratch_operands = 0 : i64, tpu.core_type = #tpu.core_type<tc>, window_params = [{transform_indices = @transform_0, window_bounds = array<i64: 1, 24, 128>}, {transform_indices = @transform_1, window_bounds = array<i64: 1, 24, 128>}, {transform_indices = @transform_2, window_bounds = array<i64: 1, 24, 128>}, {transform_indices = @transform_3, window_bounds = array<i64: 1, 24, 128>}]} {
    %c0 = arith.constant 0 : index
    %c0_0 = arith.constant 0 : index
    %c0_1 = arith.constant 0 : index
    %0 = vector.load %arg2[%c0, %c0_0, %c0_1] : memref<1x24x128xbf16, #tpu.memory_space<vmem>>, vector<1x24x128xbf16>
    %1 = vector.shape_cast %0 : vector<1x24x128xbf16> to vector<24x128xbf16>
    %c0_2 = arith.constant 0 : index
    %c0_3 = arith.constant 0 : index
    %c0_4 = arith.constant 0 : index
    %2 = vector.load %arg3[%c0_2, %c0_3, %c0_4] : memref<1x24x128xbf16, #tpu.memory_space<vmem>>, vector<1x24x128xbf16>
    %3 = vector.shape_cast %2 : vector<1x24x128xbf16> to vector<24x128xbf16>
    %c0_5 = arith.constant 0 : index
    %c0_6 = arith.constant 0 : index
    %c0_7 = arith.constant 0 : index
    %4 = vector.load %arg4[%c0_5, %c0_6, %c0_7] : memref<1x24x128xbf16, #tpu.memory_space<vmem>>, vector<1x24x128xbf16>
    %5 = vector.shape_cast %4 : vector<1x24x128xbf16> to vector<24x128xbf16>
    %6 = tpu.iota {dimensions = array<i32: 1>} : vector<24x24xi32>
    %c17_i32 = arith.constant 17 : i32
    %7 = vector.broadcast %c17_i32 : i32 to vector<24x24xi32>
    %8 = arith.cmpi slt, %6, %7 : vector<24x24xi32>
    %9 = vector.extract_strided_slice %1 {offsets = [0, 0], sizes = [24, 32], strides = [1, 1]} : vector<24x128xbf16> to vector<24x32xbf16>
    %10 = vector.extract_strided_slice %3 {offsets = [0, 0], sizes = [24, 32], strides = [1, 1]} : vector<24x128xbf16> to vector<24x32xbf16>
    %cst = arith.constant dense<0.000000e+00> : vector<24x24xf32>
    %11 = tpu.matmul %9, %10, %cst {dimension_numbers = #tpu.dot_dimension_numbers<[1], [1], [0], [0], [0, 0, 1, 0], [], []>} : vector<24x32xbf16>, vector<24x32xbf16>, vector<24x24xf32> -> vector<24x24xf32>
    %cst_8 = arith.constant 0.176776692 : f32
    %12 = vector.broadcast %cst_8 : f32 to vector<24x24xf32>
    %13 = arith.mulf %11, %12 : vector<24x24xf32>
    %cst_9 = arith.constant -1.000000e+30 : f32
    %14 = vector.broadcast %cst_9 : f32 to vector<24x24xf32>
    %15 = arith.select %8, %13, %14 : vector<24x24xi1>, vector<24x24xf32>
    %cst_10 = arith.constant dense<0xFF800000> : vector<24xf32>
    %16 = vector.multi_reduction <maximumf>, %15, %cst_10 [1] : vector<24x24xf32> to vector<24xf32>
    %17 = vector.shape_cast %16 : vector<24xf32> to vector<24x1xf32>
    %18 = vector.broadcast %17 : vector<24x1xf32> to vector<24x24xf32>
    %19 = arith.subf %15, %18 : vector<24x24xf32>
    %20 = math.exp %19 : vector<24x24xf32>
    %cst_11 = arith.constant dense<0.000000e+00> : vector<24xf32>
    %21 = vector.multi_reduction <add>, %20, %cst_11 [1] : vector<24x24xf32> to vector<24xf32>
    %22 = vector.shape_cast %21 : vector<24xf32> to vector<24x1xf32>
    %23 = tpu.reciprocal %22 {approx = true} : vector<24x1xf32> -> vector<24x1xf32>
    %24 = vector.broadcast %23 : vector<24x1xf32> to vector<24x24xf32>
    %25 = arith.mulf %20, %24 : vector<24x24xf32>
    %26 = arith.truncf %25 : vector<24x24xf32> to vector<24x24xbf16>
    %27 = vector.extract_strided_slice %5 {offsets = [0, 0], sizes = [24, 32], strides = [1, 1]} : vector<24x128xbf16> to vector<24x32xbf16>
    %cst_12 = arith.constant dense<0.000000e+00> : vector<24x32xf32>
    %28 = tpu.matmul %26, %27, %cst_12 {dimension_numbers = #tpu.dot_dimension_numbers<[1], [0], [0], [1], [0, 0, 1, 1], [], []>} : vector<24x24xbf16>, vector<24x32xbf16>, vector<24x32xf32> -> vector<24x32xf32>
    %29 = arith.truncf %28 : vector<24x32xf32> to vector<24x32xbf16>
    %c0_13 = arith.constant 0 : index
    %c0_14 = arith.constant 0 : index
    %c0_15 = arith.constant 0 : index
    %30 = vector.load %arg5[%c0_13, %c0_14, %c0_15] : memref<1x24x128xbf16, #tpu.memory_space<vmem>>, vector<1x24x32xbf16>
    %31 = vector.shape_cast %30 : vector<1x24x32xbf16> to vector<24x32xbf16>
    %32 = vector.shape_cast %29 : vector<24x32xbf16> to vector<1x24x32xbf16>
    tpu.vector_store %arg5[%c0_13, %c0_14, %c0_15], %32 {strides = array<i32>} : memref<1x24x128xbf16, #tpu.memory_space<vmem>>, vector<1x24x32xbf16>,
    %33 = vector.extract_strided_slice %1 {offsets = [0, 32], sizes = [24, 32], strides = [1, 1]} : vector<24x128xbf16> to vector<24x32xbf16>
    %34 = vector.extract_strided_slice %3 {offsets = [0, 32], sizes = [24, 32], strides = [1, 1]} : vector<24x128xbf16> to vector<24x32xbf16>
    %cst_16 = arith.constant dense<0.000000e+00> : vector<24x24xf32>
    %35 = tpu.matmul %33, %34, %cst_16 {dimension_numbers = #tpu.dot_dimension_numbers<[1], [1], [0], [0], [0, 0, 1, 0], [], []>} : vector<24x32xbf16>, vector<24x32xbf16>, vector<24x24xf32> -> vector<24x24xf32>
    %cst_17 = arith.constant 0.176776692 : f32
    %36 = vector.broadcast %cst_17 : f32 to vector<24x24xf32>
    %37 = arith.mulf %35, %36 : vector<24x24xf32>
    %cst_18 = arith.constant -1.000000e+30 : f32
    %38 = vector.broadcast %cst_18 : f32 to vector<24x24xf32>
    %39 = arith.select %8, %37, %38 : vector<24x24xi1>, vector<24x24xf32>
    %cst_19 = arith.constant dense<0xFF800000> : vector<24xf32>
    %40 = vector.multi_reduction <maximumf>, %39, %cst_19 [1] : vector<24x24xf32> to vector<24xf32>
    %41 = vector.shape_cast %40 : vector<24xf32> to vector<24x1xf32>
    %42 = vector.broadcast %41 : vector<24x1xf32> to vector<24x24xf32>
    %43 = arith.subf %39, %42 : vector<24x24xf32>
    %44 = math.exp %43 : vector<24x24xf32>
    %cst_20 = arith.constant dense<0.000000e+00> : vector<24xf32>
    %45 = vector.multi_reduction <add>, %44, %cst_20 [1] : vector<24x24xf32> to vector<24xf32>
    %46 = vector.shape_cast %45 : vector<24xf32> to vector<24x1xf32>
    %47 = tpu.reciprocal %46 {approx = true} : vector<24x1xf32> -> vector<24x1xf32>
    %48 = vector.broadcast %47 : vector<24x1xf32> to vector<24x24xf32>
    %49 = arith.mulf %44, %48 : vector<24x24xf32>
    %50 = arith.truncf %49 : vector<24x24xf32> to vector<24x24xbf16>
    %51 = vector.extract_strided_slice %5 {offsets = [0, 32], sizes = [24, 32], strides = [1, 1]} : vector<24x128xbf16> to vector<24x32xbf16>
    %cst_21 = arith.constant dense<0.000000e+00> : vector<24x32xf32>
    %52 = tpu.matmul %50, %51, %cst_21 {dimension_numbers = #tpu.dot_dimension_numbers<[1], [0], [0], [1], [0, 0, 1, 1], [], []>} : vector<24x24xbf16>, vector<24x32xbf16>, vector<24x32xf32> -> vector<24x32xf32>
    %53 = arith.truncf %52 : vector<24x32xf32> to vector<24x32xbf16>
    %c0_22 = arith.constant 0 : index
    %c0_23 = arith.constant 0 : index
    %c32 = arith.constant 32 : index
    %54 = vector.load %arg5[%c0_22, %c0_23, %c32] : memref<1x24x128xbf16, #tpu.memory_space<vmem>>, vector<1x24x32xbf16>
    %55 = vector.shape_cast %54 : vector<1x24x32xbf16> to vector<24x32xbf16>
    %56 = vector.shape_cast %53 : vector<24x32xbf16> to vector<1x24x32xbf16>
    tpu.vector_store %arg5[%c0_22, %c0_23, %c32], %56 {strides = array<i32>} : memref<1x24x128xbf16, #tpu.memory_space<vmem>>, vector<1x24x32xbf16>,
    %57 = vector.extract_strided_slice %1 {offsets = [0, 64], sizes = [24, 32], strides = [1, 1]} : vector<24x128xbf16> to vector<24x32xbf16>
    %58 = vector.extract_strided_slice %3 {offsets = [0, 64], sizes = [24, 32], strides = [1, 1]} : vector<24x128xbf16> to vector<24x32xbf16>
    %cst_24 = arith.constant dense<0.000000e+00> : vector<24x24xf32>
    %59 = tpu.matmul %57, %58, %cst_24 {dimension_numbers = #tpu.dot_dimension_numbers<[1], [1], [0], [0], [0, 0, 1, 0], [], []>} : vector<24x32xbf16>, vector<24x32xbf16>, vector<24x24xf32> -> vector<24x24xf32>
    %cst_25 = arith.constant 0.176776692 : f32
    %60 = vector.broadcast %cst_25 : f32 to vector<24x24xf32>
    %61 = arith.mulf %59, %60 : vector<24x24xf32>
    %cst_26 = arith.constant -1.000000e+30 : f32
    %62 = vector.broadcast %cst_26 : f32 to vector<24x24xf32>
    %63 = arith.select %8, %61, %62 : vector<24x24xi1>, vector<24x24xf32>
    %cst_27 = arith.constant dense<0xFF800000> : vector<24xf32>
    %64 = vector.multi_reduction <maximumf>, %63, %cst_27 [1] : vector<24x24xf32> to vector<24xf32>
    %65 = vector.shape_cast %64 : vector<24xf32> to vector<24x1xf32>
    %66 = vector.broadcast %65 : vector<24x1xf32> to vector<24x24xf32>
    %67 = arith.subf %63, %66 : vector<24x24xf32>
    %68 = math.exp %67 : vector<24x24xf32>
    %cst_28 = arith.constant dense<0.000000e+00> : vector<24xf32>
    %69 = vector.multi_reduction <add>, %68, %cst_28 [1] : vector<24x24xf32> to vector<24xf32>
    %70 = vector.shape_cast %69 : vector<24xf32> to vector<24x1xf32>
    %71 = tpu.reciprocal %70 {approx = true} : vector<24x1xf32> -> vector<24x1xf32>
    %72 = vector.broadcast %71 : vector<24x1xf32> to vector<24x24xf32>
    %73 = arith.mulf %68, %72 : vector<24x24xf32>
    %74 = arith.truncf %73 : vector<24x24xf32> to vector<24x24xbf16>
    %75 = vector.extract_strided_slice %5 {offsets = [0, 64], sizes = [24, 32], strides = [1, 1]} : vector<24x128xbf16> to vector<24x32xbf16>
    %cst_29 = arith.constant dense<0.000000e+00> : vector<24x32xf32>
    %76 = tpu.matmul %74, %75, %cst_29 {dimension_numbers = #tpu.dot_dimension_numbers<[1], [0], [0], [1], [0, 0, 1, 1], [], []>} : vector<24x24xbf16>, vector<24x32xbf16>, vector<24x32xf32> -> vector<24x32xf32>
    %77 = arith.truncf %76 : vector<24x32xf32> to vector<24x32xbf16>
    %c0_30 = arith.constant 0 : index
    %c0_31 = arith.constant 0 : index
    %c64 = arith.constant 64 : index
    %78 = vector.load %arg5[%c0_30, %c0_31, %c64] : memref<1x24x128xbf16, #tpu.memory_space<vmem>>, vector<1x24x32xbf16>
    %79 = vector.shape_cast %78 : vector<1x24x32xbf16> to vector<24x32xbf16>
    %80 = vector.shape_cast %77 : vector<24x32xbf16> to vector<1x24x32xbf16>
    tpu.vector_store %arg5[%c0_30, %c0_31, %c64], %80 {strides = array<i32>} : memref<1x24x128xbf16, #tpu.memory_space<vmem>>, vector<1x24x32xbf16>,
    %81 = vector.extract_strided_slice %1 {offsets = [0, 96], sizes = [24, 32], strides = [1, 1]} : vector<24x128xbf16> to vector<24x32xbf16>
    %82 = vector.extract_strided_slice %3 {offsets = [0, 96], sizes = [24, 32], strides = [1, 1]} : vector<24x128xbf16> to vector<24x32xbf16>
    %cst_32 = arith.constant dense<0.000000e+00> : vector<24x24xf32>
    %83 = tpu.matmul %81, %82, %cst_32 {dimension_numbers = #tpu.dot_dimension_numbers<[1], [1], [0], [0], [0, 0, 1, 0], [], []>} : vector<24x32xbf16>, vector<24x32xbf16>, vector<24x24xf32> -> vector<24x24xf32>
    %cst_33 = arith.constant 0.176776692 : f32
    %84 = vector.broadcast %cst_33 : f32 to vector<24x24xf32>
    %85 = arith.mulf %83, %84 : vector<24x24xf32>
    %cst_34 = arith.constant -1.000000e+30 : f32
    %86 = vector.broadcast %cst_34 : f32 to vector<24x24xf32>
    %87 = arith.select %8, %85, %86 : vector<24x24xi1>, vector<24x24xf32>
    %cst_35 = arith.constant dense<0xFF800000> : vector<24xf32>
    %88 = vector.multi_reduction <maximumf>, %87, %cst_35 [1] : vector<24x24xf32> to vector<24xf32>
    %89 = vector.shape_cast %88 : vector<24xf32> to vector<24x1xf32>
    %90 = vector.broadcast %89 : vector<24x1xf32> to vector<24x24xf32>
    %91 = arith.subf %87, %90 : vector<24x24xf32>
    %92 = math.exp %91 : vector<24x24xf32>
    %cst_36 = arith.constant dense<0.000000e+00> : vector<24xf32>
    %93 = vector.multi_reduction <add>, %92, %cst_36 [1] : vector<24x24xf32> to vector<24xf32>
    %94 = vector.shape_cast %93 : vector<24xf32> to vector<24x1xf32>
    %95 = tpu.reciprocal %94 {approx = true} : vector<24x1xf32> -> vector<24x1xf32>
    %96 = vector.broadcast %95 : vector<24x1xf32> to vector<24x24xf32>
    %97 = arith.mulf %92, %96 : vector<24x24xf32>
    %98 = arith.truncf %97 : vector<24x24xf32> to vector<24x24xbf16>
    %99 = vector.extract_strided_slice %5 {offsets = [0, 96], sizes = [24, 32], strides = [1, 1]} : vector<24x128xbf16> to vector<24x32xbf16>
    %cst_37 = arith.constant dense<0.000000e+00> : vector<24x32xf32>
    %100 = tpu.matmul %98, %99, %cst_37 {dimension_numbers = #tpu.dot_dimension_numbers<[1], [0], [0], [1], [0, 0, 1, 1], [], []>} : vector<24x24xbf16>, vector<24x32xbf16>, vector<24x32xf32> -> vector<24x32xf32>
    %101 = arith.truncf %100 : vector<24x32xf32> to vector<24x32xbf16>
    %c0_38 = arith.constant 0 : index
    %c0_39 = arith.constant 0 : index
    %c96 = arith.constant 96 : index
    %102 = vector.load %arg5[%c0_38, %c0_39, %c96] : memref<1x24x128xbf16, #tpu.memory_space<vmem>>, vector<1x24x32xbf16>
    %103 = vector.shape_cast %102 : vector<1x24x32xbf16> to vector<24x32xbf16>
    %104 = vector.shape_cast %101 : vector<24x32xbf16> to vector<1x24x32xbf16>
    tpu.vector_store %arg5[%c0_38, %c0_39, %c96], %104 {strides = array<i32>} : memref<1x24x128xbf16, #tpu.memory_space<vmem>>, vector<1x24x32xbf16>,
    return
  }
  func.func @transform_0(%arg0: i32, %arg1: i32) -> (i32, i32, i32) {
    %c0_i32 = arith.constant 0 : i32
    %c0_i32_0 = arith.constant 0 : i32
    return %arg0, %arg1, %c0_i32 : i32, i32, i32
  }
  func.func @transform_1(%arg0: i32, %arg1: i32) -> (i32, i32, i32) {
    %c0_i32 = arith.constant 0 : i32
    %c1_i32 = arith.constant 1 : i32
    %c0_i32_0 = arith.constant 0 : i32
    return %arg0, %c0_i32, %c1_i32 : i32, i32, i32
  }
  func.func @transform_2(%arg0: i32, %arg1: i32) -> (i32, i32, i32) {
    %c0_i32 = arith.constant 0 : i32
    %c2_i32 = arith.constant 2 : i32
    %c0_i32_0 = arith.constant 0 : i32
    return %arg0, %c0_i32, %c2_i32 : i32, i32, i32
  }
  func.func @transform_3(%arg0: i32, %arg1: i32) -> (i32, i32, i32) {
    %c0_i32 = arith.constant 0 : i32
    %c0_i32_0 = arith.constant 0 : i32
    return %arg0, %arg1, %c0_i32 : i32, i32, i32
  }
}

module attributes {stable_mosaic.version = 11 : i64} {
  func.func @_matmul_bias_kernel(%arg0: i32, %arg1: i32, %arg2: i32, %arg3: memref<48x128xbf16, #tpu.memory_space<vmem>>, %arg4: memref<128x128xbf16, #tpu.memory_space<vmem>>, %arg5: memref<1x128xf32, #tpu.memory_space<vmem>>, %arg6: memref<48x128xbf16, #tpu.memory_space<vmem>>, %arg7: memref<48x128xbf16, #tpu.memory_space<vmem>>) attributes {dimension_semantics = [#tpu.dimension_semantics<parallel>, #tpu.dimension_semantics<parallel>, #tpu.dimension_semantics<arbitrary>], iteration_bounds = array<i64: 1, 1, 1>, scalar_prefetch = 0 : i64, scratch_operands = 0 : i64, tpu.core_type = #tpu.core_type<tc>, window_params = [{transform_indices = @transform_0, window_bounds = array<i64: 48, 128>}, {transform_indices = @transform_1, window_bounds = array<i64: 128, 128>}, {transform_indices = @transform_2, window_bounds = array<i64: 1, 128>}, {transform_indices = @transform_3, window_bounds = array<i64: 48, 128>}, {transform_indices = @transform_4, window_bounds = array<i64: 48, 128>}]} {
    %c0 = arith.constant 0 : index
    %c0_0 = arith.constant 0 : index
    %0 = vector.load %arg3[%c0, %c0_0] : memref<48x128xbf16, #tpu.memory_space<vmem>>, vector<48x128xbf16>
    %c0_1 = arith.constant 0 : index
    %c0_2 = arith.constant 0 : index
    %1 = vector.load %arg4[%c0_1, %c0_2] : memref<128x128xbf16, #tpu.memory_space<vmem>>, vector<128x128xbf16>
    %cst = arith.constant dense<0.000000e+00> : vector<48x128xf32>
    %2 = tpu.matmul %0, %1, %cst {dimension_numbers = #tpu.dot_dimension_numbers<[1], [0], [0], [1], [0, 0, 1, 1], [], []>} : vector<48x128xbf16>, vector<128x128xbf16>, vector<48x128xf32> -> vector<48x128xf32>
    %c0_3 = arith.constant 0 : index
    %c0_4 = arith.constant 0 : index
    %3 = vector.load %arg5[%c0_3, %c0_4] : memref<1x128xf32, #tpu.memory_space<vmem>>, vector<1x128xf32>
    %4 = vector.broadcast %3 : vector<1x128xf32> to vector<48x128xf32>
    %5 = arith.addf %2, %4 : vector<48x128xf32>
    %c0_5 = arith.constant 0 : index
    %c0_6 = arith.constant 0 : index
    %6 = vector.load %arg6[%c0_5, %c0_6] : memref<48x128xbf16, #tpu.memory_space<vmem>>, vector<48x128xbf16>
    %7 = arith.extf %6 : vector<48x128xbf16> to vector<48x128xf32>
    %8 = arith.addf %5, %7 : vector<48x128xf32>
    %9 = arith.truncf %8 : vector<48x128xf32> to vector<48x128xbf16>
    %c0_7 = arith.constant 0 : index
    %c0_8 = arith.constant 0 : index
    %10 = vector.load %arg7[%c0_7, %c0_8] : memref<48x128xbf16, #tpu.memory_space<vmem>>, vector<48x128xbf16>
    tpu.vector_store %arg7[%c0_7, %c0_8], %9 {strides = array<i32>} : memref<48x128xbf16, #tpu.memory_space<vmem>>, vector<48x128xbf16>,
    return
  }
  func.func @transform_0(%arg0: i32, %arg1: i32, %arg2: i32) -> (i32, i32) {
    %c0_i32 = arith.constant 0 : i32
    return %arg0, %arg2 : i32, i32
  }
  func.func @transform_1(%arg0: i32, %arg1: i32, %arg2: i32) -> (i32, i32) {
    %c0_i32 = arith.constant 0 : i32
    return %arg2, %arg1 : i32, i32
  }
  func.func @transform_2(%arg0: i32, %arg1: i32, %arg2: i32) -> (i32, i32) {
    %c0_i32 = arith.constant 0 : i32
    %c0_i32_0 = arith.constant 0 : i32
    return %c0_i32, %arg1 : i32, i32
  }
  func.func @transform_3(%arg0: i32, %arg1: i32, %arg2: i32) -> (i32, i32) {
    %c0_i32 = arith.constant 0 : i32
    return %arg0, %arg1 : i32, i32
  }
  func.func @transform_4(%arg0: i32, %arg1: i32, %arg2: i32) -> (i32, i32) {
    %c0_i32 = arith.constant 0 : i32
    return %arg0, %arg1 : i32, i32
  }
}

module attributes {stable_mosaic.version = 11 : i64} {
  func.func @_matmul_bias_kernel(%arg0: i32, %arg1: i32, %arg2: i32, %arg3: memref<48x128xbf16, #tpu.memory_space<vmem>>, %arg4: memref<128x512xbf16, #tpu.memory_space<vmem>>, %arg5: memref<1x512xf32, #tpu.memory_space<vmem>>, %arg6: memref<1x128xf32, #tpu.memory_space<vmem>>, %arg7: memref<1x128xf32, #tpu.memory_space<vmem>>, %arg8: memref<48x512xbf16, #tpu.memory_space<vmem>>) attributes {dimension_semantics = [#tpu.dimension_semantics<parallel>, #tpu.dimension_semantics<parallel>, #tpu.dimension_semantics<arbitrary>], iteration_bounds = array<i64: 1, 1, 1>, scalar_prefetch = 0 : i64, scratch_operands = 0 : i64, tpu.core_type = #tpu.core_type<tc>, window_params = [{transform_indices = @transform_0, window_bounds = array<i64: 48, 128>}, {transform_indices = @transform_1, window_bounds = array<i64: 128, 512>}, {transform_indices = @transform_2, window_bounds = array<i64: 1, 512>}, {pipeline_mode = #tpu.pipeline_mode<synchronous>, transform_indices = @transform_3, window_bounds = array<i64: 1, 128>}, {pipeline_mode = #tpu.pipeline_mode<synchronous>, transform_indices = @transform_4, window_bounds = array<i64: 1, 128>}, {transform_indices = @transform_5, window_bounds = array<i64: 48, 512>}]} {
    %c0 = arith.constant 0 : index
    %c0_0 = arith.constant 0 : index
    %0 = vector.load %arg3[%c0, %c0_0] : memref<48x128xbf16, #tpu.memory_space<vmem>>, vector<48x128xbf16>
    %1 = arith.extf %0 : vector<48x128xbf16> to vector<48x128xf32>
    %cst = arith.constant dense<0.000000e+00> : vector<48xf32>
    %2 = vector.multi_reduction <add>, %1, %cst [1] : vector<48x128xf32> to vector<48xf32>
    %3 = vector.shape_cast %2 : vector<48xf32> to vector<48x1xf32>
    %cst_1 = arith.constant 1.280000e+02 : f32
    %4 = vector.broadcast %cst_1 : f32 to vector<48x1xf32>
    %5 = arith.divf %3, %4 : vector<48x1xf32>
    %6 = vector.broadcast %5 : vector<48x1xf32> to vector<48x128xf32>
    %7 = arith.subf %1, %6 : vector<48x128xf32>
    %8 = arith.mulf %7, %7 : vector<48x128xf32>
    %cst_2 = arith.constant dense<0.000000e+00> : vector<48xf32>
    %9 = vector.multi_reduction <add>, %8, %cst_2 [1] : vector<48x128xf32> to vector<48xf32>
    %10 = vector.shape_cast %9 : vector<48xf32> to vector<48x1xf32>
    %cst_3 = arith.constant 1.280000e+02 : f32
    %11 = vector.broadcast %cst_3 : f32 to vector<48x1xf32>
    %12 = arith.divf %10, %11 : vector<48x1xf32>
    %13 = vector.broadcast %5 : vector<48x1xf32> to vector<48x128xf32>
    %14 = arith.subf %1, %13 : vector<48x128xf32>
    %cst_4 = arith.constant 9.99999974E-6 : f32
    %15 = vector.broadcast %cst_4 : f32 to vector<48x1xf32>
    %16 = arith.addf %12, %15 : vector<48x1xf32>
    %17 = math.rsqrt %16 : vector<48x1xf32>
    %18 = vector.broadcast %17 : vector<48x1xf32> to vector<48x128xf32>
    %19 = arith.mulf %14, %18 : vector<48x128xf32>
    %c0_5 = arith.constant 0 : index
    %c0_6 = arith.constant 0 : index
    %20 = vector.load %arg6[%c0_5, %c0_6] : memref<1x128xf32, #tpu.memory_space<vmem>>, vector<1x128xf32>
    %21 = vector.broadcast %20 : vector<1x128xf32> to vector<48x128xf32>
    %22 = arith.mulf %19, %21 : vector<48x128xf32>
    %c0_7 = arith.constant 0 : index
    %c0_8 = arith.constant 0 : index
    %23 = vector.load %arg7[%c0_7, %c0_8] : memref<1x128xf32, #tpu.memory_space<vmem>>, vector<1x128xf32>
    %24 = vector.broadcast %23 : vector<1x128xf32> to vector<48x128xf32>
    %25 = arith.addf %22, %24 : vector<48x128xf32>
    %26 = arith.truncf %25 : vector<48x128xf32> to vector<48x128xbf16>
    %c0_9 = arith.constant 0 : index
    %c0_10 = arith.constant 0 : index
    %27 = vector.load %arg4[%c0_9, %c0_10] : memref<128x512xbf16, #tpu.memory_space<vmem>>, vector<128x512xbf16>
    %cst_11 = arith.constant dense<0.000000e+00> : vector<48x512xf32>
    %28 = tpu.matmul %26, %27, %cst_11 {dimension_numbers = #tpu.dot_dimension_numbers<[1], [0], [0], [1], [0, 0, 1, 1], [], []>} : vector<48x128xbf16>, vector<128x512xbf16>, vector<48x512xf32> -> vector<48x512xf32>
    %c0_12 = arith.constant 0 : index
    %c0_13 = arith.constant 0 : index
    %29 = vector.load %arg5[%c0_12, %c0_13] : memref<1x512xf32, #tpu.memory_space<vmem>>, vector<1x512xf32>
    %30 = vector.broadcast %29 : vector<1x512xf32> to vector<48x512xf32>
    %31 = arith.addf %28, %30 : vector<48x512xf32>
    %cst_14 = arith.constant 1.702000e+00 : f32
    %32 = vector.broadcast %cst_14 : f32 to vector<48x512xf32>
    %33 = arith.mulf %32, %31 : vector<48x512xf32>
    %34 = arith.negf %33 : vector<48x512xf32>
    %35 = math.exp %34 : vector<48x512xf32>
    %cst_15 = arith.constant 1.000000e+00 : f32
    %36 = vector.broadcast %cst_15 : f32 to vector<48x512xf32>
    %37 = arith.addf %36, %35 : vector<48x512xf32>
    %38 = arith.divf %36, %37 : vector<48x512xf32>
    %39 = arith.mulf %31, %38 : vector<48x512xf32>
    %40 = arith.truncf %39 : vector<48x512xf32> to vector<48x512xbf16>
    %c0_16 = arith.constant 0 : index
    %c0_17 = arith.constant 0 : index
    %41 = vector.load %arg8[%c0_16, %c0_17] : memref<48x512xbf16, #tpu.memory_space<vmem>>, vector<48x512xbf16>
    tpu.vector_store %arg8[%c0_16, %c0_17], %40 {strides = array<i32>} : memref<48x512xbf16, #tpu.memory_space<vmem>>, vector<48x512xbf16>,
    return
  }
  func.func @transform_0(%arg0: i32, %arg1: i32, %arg2: i32) -> (i32, i32) {
    %c0_i32 = arith.constant 0 : i32
    return %arg0, %arg2 : i32, i32
  }
  func.func @transform_1(%arg0: i32, %arg1: i32, %arg2: i32) -> (i32, i32) {
    %c0_i32 = arith.constant 0 : i32
    return %arg2, %arg1 : i32, i32
  }
  func.func @transform_2(%arg0: i32, %arg1: i32, %arg2: i32) -> (i32, i32) {
    %c0_i32 = arith.constant 0 : i32
    %c0_i32_0 = arith.constant 0 : i32
    return %c0_i32, %arg1 : i32, i32
  }
  func.func @transform_3(%arg0: i32, %arg1: i32, %arg2: i32) -> (i32, i32) {
    %c0_i32 = arith.constant 0 : i32
    %c0_i32_0 = arith.constant 0 : i32
    %c0_i32_1 = arith.constant 0 : i32
    return %c0_i32, %c0_i32_0 : i32, i32
  }
  func.func @transform_4(%arg0: i32, %arg1: i32, %arg2: i32) -> (i32, i32) {
    %c0_i32 = arith.constant 0 : i32
    %c0_i32_0 = arith.constant 0 : i32
    %c0_i32_1 = arith.constant 0 : i32
    return %c0_i32, %c0_i32_0 : i32, i32
  }
  func.func @transform_5(%arg0: i32, %arg1: i32, %arg2: i32) -> (i32, i32) {
    %c0_i32 = arith.constant 0 : i32
    return %arg0, %arg1 : i32, i32
  }
}

module attributes {stable_mosaic.version = 11 : i64} {
  func.func @_matmul_bias_kernel(%arg0: i32, %arg1: i32, %arg2: i32, %arg3: memref<48x512xbf16, #tpu.memory_space<vmem>>, %arg4: memref<512x128xbf16, #tpu.memory_space<vmem>>, %arg5: memref<1x128xf32, #tpu.memory_space<vmem>>, %arg6: memref<48x128xbf16, #tpu.memory_space<vmem>>, %arg7: memref<48x128xbf16, #tpu.memory_space<vmem>>) attributes {dimension_semantics = [#tpu.dimension_semantics<parallel>, #tpu.dimension_semantics<parallel>, #tpu.dimension_semantics<arbitrary>], iteration_bounds = array<i64: 1, 1, 1>, scalar_prefetch = 0 : i64, scratch_operands = 0 : i64, tpu.core_type = #tpu.core_type<tc>, window_params = [{transform_indices = @transform_0, window_bounds = array<i64: 48, 512>}, {transform_indices = @transform_1, window_bounds = array<i64: 512, 128>}, {transform_indices = @transform_2, window_bounds = array<i64: 1, 128>}, {transform_indices = @transform_3, window_bounds = array<i64: 48, 128>}, {transform_indices = @transform_4, window_bounds = array<i64: 48, 128>}]} {
    %c0 = arith.constant 0 : index
    %c0_0 = arith.constant 0 : index
    %0 = vector.load %arg3[%c0, %c0_0] : memref<48x512xbf16, #tpu.memory_space<vmem>>, vector<48x512xbf16>
    %c0_1 = arith.constant 0 : index
    %c0_2 = arith.constant 0 : index
    %1 = vector.load %arg4[%c0_1, %c0_2] : memref<512x128xbf16, #tpu.memory_space<vmem>>, vector<512x128xbf16>
    %cst = arith.constant dense<0.000000e+00> : vector<48x128xf32>
    %2 = tpu.matmul %0, %1, %cst {dimension_numbers = #tpu.dot_dimension_numbers<[1], [0], [0], [1], [0, 0, 1, 1], [], []>} : vector<48x512xbf16>, vector<512x128xbf16>, vector<48x128xf32> -> vector<48x128xf32>
    %c0_3 = arith.constant 0 : index
    %c0_4 = arith.constant 0 : index
    %3 = vector.load %arg5[%c0_3, %c0_4] : memref<1x128xf32, #tpu.memory_space<vmem>>, vector<1x128xf32>
    %4 = vector.broadcast %3 : vector<1x128xf32> to vector<48x128xf32>
    %5 = arith.addf %2, %4 : vector<48x128xf32>
    %c0_5 = arith.constant 0 : index
    %c0_6 = arith.constant 0 : index
    %6 = vector.load %arg6[%c0_5, %c0_6] : memref<48x128xbf16, #tpu.memory_space<vmem>>, vector<48x128xbf16>
    %7 = arith.extf %6 : vector<48x128xbf16> to vector<48x128xf32>
    %8 = arith.addf %5, %7 : vector<48x128xf32>
    %9 = arith.truncf %8 : vector<48x128xf32> to vector<48x128xbf16>
    %c0_7 = arith.constant 0 : index
    %c0_8 = arith.constant 0 : index
    %10 = vector.load %arg7[%c0_7, %c0_8] : memref<48x128xbf16, #tpu.memory_space<vmem>>, vector<48x128xbf16>
    tpu.vector_store %arg7[%c0_7, %c0_8], %9 {strides = array<i32>} : memref<48x128xbf16, #tpu.memory_space<vmem>>, vector<48x128xbf16>,
    return
  }
  func.func @transform_0(%arg0: i32, %arg1: i32, %arg2: i32) -> (i32, i32) {
    %c0_i32 = arith.constant 0 : i32
    return %arg0, %arg2 : i32, i32
  }
  func.func @transform_1(%arg0: i32, %arg1: i32, %arg2: i32) -> (i32, i32) {
    %c0_i32 = arith.constant 0 : i32
    return %arg2, %arg1 : i32, i32
  }
  func.func @transform_2(%arg0: i32, %arg1: i32, %arg2: i32) -> (i32, i32) {
    %c0_i32 = arith.constant 0 : i32
    %c0_i32_0 = arith.constant 0 : i32
    return %c0_i32, %arg1 : i32, i32
  }
  func.func @transform_3(%arg0: i32, %arg1: i32, %arg2: i32) -> (i32, i32) {
    %c0_i32 = arith.constant 0 : i32
    return %arg0, %arg1 : i32, i32
  }
  func.func @transform_4(%arg0: i32, %arg1: i32, %arg2: i32) -> (i32, i32) {
    %c0_i32 = arith.constant 0 : i32
    return %arg0, %arg1 : i32, i32
  }
}

module attributes {stable_mosaic.version = 11 : i64} {
  func.func @_matmul_bias_kernel(%arg0: i32, %arg1: i32, %arg2: i32, %arg3: memref<48x128xbf16, #tpu.memory_space<vmem>>, %arg4: memref<128x384xbf16, #tpu.memory_space<vmem>>, %arg5: memref<1x384xf32, #tpu.memory_space<vmem>>, %arg6: memref<1x128xf32, #tpu.memory_space<vmem>>, %arg7: memref<1x128xf32, #tpu.memory_space<vmem>>, %arg8: memref<48x384xbf16, #tpu.memory_space<vmem>>) attributes {dimension_semantics = [#tpu.dimension_semantics<parallel>, #tpu.dimension_semantics<parallel>, #tpu.dimension_semantics<arbitrary>], iteration_bounds = array<i64: 1, 1, 1>, scalar_prefetch = 0 : i64, scratch_operands = 0 : i64, tpu.core_type = #tpu.core_type<tc>, window_params = [{transform_indices = @transform_0, window_bounds = array<i64: 48, 128>}, {transform_indices = @transform_1, window_bounds = array<i64: 128, 384>}, {transform_indices = @transform_2, window_bounds = array<i64: 1, 384>}, {pipeline_mode = #tpu.pipeline_mode<synchronous>, transform_indices = @transform_3, window_bounds = array<i64: 1, 128>}, {pipeline_mode = #tpu.pipeline_mode<synchronous>, transform_indices = @transform_4, window_bounds = array<i64: 1, 128>}, {transform_indices = @transform_5, window_bounds = array<i64: 48, 384>}]} {
    %c0 = arith.constant 0 : index
    %c0_0 = arith.constant 0 : index
    %0 = vector.load %arg3[%c0, %c0_0] : memref<48x128xbf16, #tpu.memory_space<vmem>>, vector<48x128xbf16>
    %1 = arith.extf %0 : vector<48x128xbf16> to vector<48x128xf32>
    %cst = arith.constant dense<0.000000e+00> : vector<48xf32>
    %2 = vector.multi_reduction <add>, %1, %cst [1] : vector<48x128xf32> to vector<48xf32>
    %3 = vector.shape_cast %2 : vector<48xf32> to vector<48x1xf32>
    %cst_1 = arith.constant 1.280000e+02 : f32
    %4 = vector.broadcast %cst_1 : f32 to vector<48x1xf32>
    %5 = arith.divf %3, %4 : vector<48x1xf32>
    %6 = vector.broadcast %5 : vector<48x1xf32> to vector<48x128xf32>
    %7 = arith.subf %1, %6 : vector<48x128xf32>
    %8 = arith.mulf %7, %7 : vector<48x128xf32>
    %cst_2 = arith.constant dense<0.000000e+00> : vector<48xf32>
    %9 = vector.multi_reduction <add>, %8, %cst_2 [1] : vector<48x128xf32> to vector<48xf32>
    %10 = vector.shape_cast %9 : vector<48xf32> to vector<48x1xf32>
    %cst_3 = arith.constant 1.280000e+02 : f32
    %11 = vector.broadcast %cst_3 : f32 to vector<48x1xf32>
    %12 = arith.divf %10, %11 : vector<48x1xf32>
    %13 = vector.broadcast %5 : vector<48x1xf32> to vector<48x128xf32>
    %14 = arith.subf %1, %13 : vector<48x128xf32>
    %cst_4 = arith.constant 9.99999974E-6 : f32
    %15 = vector.broadcast %cst_4 : f32 to vector<48x1xf32>
    %16 = arith.addf %12, %15 : vector<48x1xf32>
    %17 = math.rsqrt %16 : vector<48x1xf32>
    %18 = vector.broadcast %17 : vector<48x1xf32> to vector<48x128xf32>
    %19 = arith.mulf %14, %18 : vector<48x128xf32>
    %c0_5 = arith.constant 0 : index
    %c0_6 = arith.constant 0 : index
    %20 = vector.load %arg6[%c0_5, %c0_6] : memref<1x128xf32, #tpu.memory_space<vmem>>, vector<1x128xf32>
    %21 = vector.broadcast %20 : vector<1x128xf32> to vector<48x128xf32>
    %22 = arith.mulf %19, %21 : vector<48x128xf32>
    %c0_7 = arith.constant 0 : index
    %c0_8 = arith.constant 0 : index
    %23 = vector.load %arg7[%c0_7, %c0_8] : memref<1x128xf32, #tpu.memory_space<vmem>>, vector<1x128xf32>
    %24 = vector.broadcast %23 : vector<1x128xf32> to vector<48x128xf32>
    %25 = arith.addf %22, %24 : vector<48x128xf32>
    %26 = arith.truncf %25 : vector<48x128xf32> to vector<48x128xbf16>
    %c0_9 = arith.constant 0 : index
    %c0_10 = arith.constant 0 : index
    %27 = vector.load %arg4[%c0_9, %c0_10] : memref<128x384xbf16, #tpu.memory_space<vmem>>, vector<128x384xbf16>
    %cst_11 = arith.constant dense<0.000000e+00> : vector<48x384xf32>
    %28 = tpu.matmul %26, %27, %cst_11 {dimension_numbers = #tpu.dot_dimension_numbers<[1], [0], [0], [1], [0, 0, 1, 1], [], []>} : vector<48x128xbf16>, vector<128x384xbf16>, vector<48x384xf32> -> vector<48x384xf32>
    %c0_12 = arith.constant 0 : index
    %c0_13 = arith.constant 0 : index
    %29 = vector.load %arg5[%c0_12, %c0_13] : memref<1x384xf32, #tpu.memory_space<vmem>>, vector<1x384xf32>
    %30 = vector.broadcast %29 : vector<1x384xf32> to vector<48x384xf32>
    %31 = arith.addf %28, %30 : vector<48x384xf32>
    %32 = arith.truncf %31 : vector<48x384xf32> to vector<48x384xbf16>
    %c0_14 = arith.constant 0 : index
    %c0_15 = arith.constant 0 : index
    %33 = vector.load %arg8[%c0_14, %c0_15] : memref<48x384xbf16, #tpu.memory_space<vmem>>, vector<48x384xbf16>
    tpu.vector_store %arg8[%c0_14, %c0_15], %32 {strides = array<i32>} : memref<48x384xbf16, #tpu.memory_space<vmem>>, vector<48x384xbf16>,
    return
  }
  func.func @transform_0(%arg0: i32, %arg1: i32, %arg2: i32) -> (i32, i32) {
    %c0_i32 = arith.constant 0 : i32
    return %arg0, %arg2 : i32, i32
  }
  func.func @transform_1(%arg0: i32, %arg1: i32, %arg2: i32) -> (i32, i32) {
    %c0_i32 = arith.constant 0 : i32
    return %arg2, %arg1 : i32, i32
  }
  func.func @transform_2(%arg0: i32, %arg1: i32, %arg2: i32) -> (i32, i32) {
    %c0_i32 = arith.constant 0 : i32
    %c0_i32_0 = arith.constant 0 : i32
    return %c0_i32, %arg1 : i32, i32
  }
  func.func @transform_3(%arg0: i32, %arg1: i32, %arg2: i32) -> (i32, i32) {
    %c0_i32 = arith.constant 0 : i32
    %c0_i32_0 = arith.constant 0 : i32
    %c0_i32_1 = arith.constant 0 : i32
    return %c0_i32, %c0_i32_0 : i32, i32
  }
  func.func @transform_4(%arg0: i32, %arg1: i32, %arg2: i32) -> (i32, i32) {
    %c0_i32 = arith.constant 0 : i32
    %c0_i32_0 = arith.constant 0 : i32
    %c0_i32_1 = arith.constant 0 : i32
    return %c0_i32, %c0_i32_0 : i32, i32
  }
  func.func @transform_5(%arg0: i32, %arg1: i32, %arg2: i32) -> (i32, i32) {
    %c0_i32 = arith.constant 0 : i32
    return %arg0, %arg1 : i32, i32
  }
}

module attributes {stable_mosaic.version = 11 : i64} {
  func.func @_matmul_bias_kernel(%arg0: i32, %arg1: i32, %arg2: i32, %arg3: memref<48x128xbf16, #tpu.memory_space<vmem>>, %arg4: memref<128x512xbf16, #tpu.memory_space<vmem>>, %arg5: memref<1x512xf32, #tpu.memory_space<vmem>>, %arg6: memref<1x128xf32, #tpu.memory_space<vmem>>, %arg7: memref<1x128xf32, #tpu.memory_space<vmem>>, %arg8: memref<48x512xbf16, #tpu.memory_space<vmem>>) attributes {dimension_semantics = [#tpu.dimension_semantics<parallel>, #tpu.dimension_semantics<parallel>, #tpu.dimension_semantics<arbitrary>], iteration_bounds = array<i64: 1, 1, 1>, scalar_prefetch = 0 : i64, scratch_operands = 0 : i64, tpu.core_type = #tpu.core_type<tc>, window_params = [{transform_indices = @transform_0, window_bounds = array<i64: 48, 128>}, {transform_indices = @transform_1, window_bounds = array<i64: 128, 512>}, {transform_indices = @transform_2, window_bounds = array<i64: 1, 512>}, {pipeline_mode = #tpu.pipeline_mode<synchronous>, transform_indices = @transform_3, window_bounds = array<i64: 1, 128>}, {pipeline_mode = #tpu.pipeline_mode<synchronous>, transform_indices = @transform_4, window_bounds = array<i64: 1, 128>}, {transform_indices = @transform_5, window_bounds = array<i64: 48, 512>}]} {
    %c0 = arith.constant 0 : index
    %c0_0 = arith.constant 0 : index
    %0 = vector.load %arg3[%c0, %c0_0] : memref<48x128xbf16, #tpu.memory_space<vmem>>, vector<48x128xbf16>
    %1 = arith.extf %0 : vector<48x128xbf16> to vector<48x128xf32>
    %cst = arith.constant dense<0.000000e+00> : vector<48xf32>
    %2 = vector.multi_reduction <add>, %1, %cst [1] : vector<48x128xf32> to vector<48xf32>
    %3 = vector.shape_cast %2 : vector<48xf32> to vector<48x1xf32>
    %cst_1 = arith.constant 1.280000e+02 : f32
    %4 = vector.broadcast %cst_1 : f32 to vector<48x1xf32>
    %5 = arith.divf %3, %4 : vector<48x1xf32>
    %6 = vector.broadcast %5 : vector<48x1xf32> to vector<48x128xf32>
    %7 = arith.subf %1, %6 : vector<48x128xf32>
    %8 = arith.mulf %7, %7 : vector<48x128xf32>
    %cst_2 = arith.constant dense<0.000000e+00> : vector<48xf32>
    %9 = vector.multi_reduction <add>, %8, %cst_2 [1] : vector<48x128xf32> to vector<48xf32>
    %10 = vector.shape_cast %9 : vector<48xf32> to vector<48x1xf32>
    %cst_3 = arith.constant 1.280000e+02 : f32
    %11 = vector.broadcast %cst_3 : f32 to vector<48x1xf32>
    %12 = arith.divf %10, %11 : vector<48x1xf32>
    %13 = vector.broadcast %5 : vector<48x1xf32> to vector<48x128xf32>
    %14 = arith.subf %1, %13 : vector<48x128xf32>
    %cst_4 = arith.constant 9.99999974E-6 : f32
    %15 = vector.broadcast %cst_4 : f32 to vector<48x1xf32>
    %16 = arith.addf %12, %15 : vector<48x1xf32>
    %17 = math.rsqrt %16 : vector<48x1xf32>
    %18 = vector.broadcast %17 : vector<48x1xf32> to vector<48x128xf32>
    %19 = arith.mulf %14, %18 : vector<48x128xf32>
    %c0_5 = arith.constant 0 : index
    %c0_6 = arith.constant 0 : index
    %20 = vector.load %arg6[%c0_5, %c0_6] : memref<1x128xf32, #tpu.memory_space<vmem>>, vector<1x128xf32>
    %21 = vector.broadcast %20 : vector<1x128xf32> to vector<48x128xf32>
    %22 = arith.mulf %19, %21 : vector<48x128xf32>
    %c0_7 = arith.constant 0 : index
    %c0_8 = arith.constant 0 : index
    %23 = vector.load %arg7[%c0_7, %c0_8] : memref<1x128xf32, #tpu.memory_space<vmem>>, vector<1x128xf32>
    %24 = vector.broadcast %23 : vector<1x128xf32> to vector<48x128xf32>
    %25 = arith.addf %22, %24 : vector<48x128xf32>
    %26 = arith.truncf %25 : vector<48x128xf32> to vector<48x128xbf16>
    %c0_9 = arith.constant 0 : index
    %c0_10 = arith.constant 0 : index
    %27 = vector.load %arg4[%c0_9, %c0_10] : memref<128x512xbf16, #tpu.memory_space<vmem>>, vector<128x512xbf16>
    %cst_11 = arith.constant dense<0.000000e+00> : vector<48x512xf32>
    %28 = tpu.matmul %26, %27, %cst_11 {dimension_numbers = #tpu.dot_dimension_numbers<[1], [0], [0], [1], [0, 0, 1, 1], [], []>} : vector<48x128xbf16>, vector<128x512xbf16>, vector<48x512xf32> -> vector<48x512xf32>
    %c0_12 = arith.constant 0 : index
    %c0_13 = arith.constant 0 : index
    %29 = vector.load %arg5[%c0_12, %c0_13] : memref<1x512xf32, #tpu.memory_space<vmem>>, vector<1x512xf32>
    %30 = vector.broadcast %29 : vector<1x512xf32> to vector<48x512xf32>
    %31 = arith.addf %28, %30 : vector<48x512xf32>
    %cst_14 = arith.constant 1.702000e+00 : f32
    %32 = vector.broadcast %cst_14 : f32 to vector<48x512xf32>
    %33 = arith.mulf %32, %31 : vector<48x512xf32>
    %34 = arith.negf %33 : vector<48x512xf32>
    %35 = math.exp %34 : vector<48x512xf32>
    %cst_15 = arith.constant 1.000000e+00 : f32
    %36 = vector.broadcast %cst_15 : f32 to vector<48x512xf32>
    %37 = arith.addf %36, %35 : vector<48x512xf32>
    %38 = arith.divf %36, %37 : vector<48x512xf32>
    %39 = arith.mulf %31, %38 : vector<48x512xf32>
    %40 = arith.truncf %39 : vector<48x512xf32> to vector<48x512xbf16>
    %c0_16 = arith.constant 0 : index
    %c0_17 = arith.constant 0 : index
    %41 = vector.load %arg8[%c0_16, %c0_17] : memref<48x512xbf16, #tpu.memory_space<vmem>>, vector<48x512xbf16>
    tpu.vector_store %arg8[%c0_16, %c0_17], %40 {strides = array<i32>} : memref<48x512xbf16, #tpu.memory_space<vmem>>, vector<48x512xbf16>,
    return
  }
  func.func @transform_0(%arg0: i32, %arg1: i32, %arg2: i32) -> (i32, i32) {
    %c0_i32 = arith.constant 0 : i32
    return %arg0, %arg2 : i32, i32
  }
  func.func @transform_1(%arg0: i32, %arg1: i32, %arg2: i32) -> (i32, i32) {
    %c0_i32 = arith.constant 0 : i32
    return %arg2, %arg1 : i32, i32
  }
  func.func @transform_2(%arg0: i32, %arg1: i32, %arg2: i32) -> (i32, i32) {
    %c0_i32 = arith.constant 0 : i32
    %c0_i32_0 = arith.constant 0 : i32
    return %c0_i32, %arg1 : i32, i32
  }
  func.func @transform_3(%arg0: i32, %arg1: i32, %arg2: i32) -> (i32, i32) {
    %c0_i32 = arith.constant 0 : i32
    %c0_i32_0 = arith.constant 0 : i32
    %c0_i32_1 = arith.constant 0 : i32
    return %c0_i32, %c0_i32_0 : i32, i32
  }
  func.func @transform_4(%arg0: i32, %arg1: i32, %arg2: i32) -> (i32, i32) {
    %c0_i32 = arith.constant 0 : i32
    %c0_i32_0 = arith.constant 0 : i32
    %c0_i32_1 = arith.constant 0 : i32
    return %c0_i32, %c0_i32_0 : i32, i32
  }
  func.func @transform_5(%arg0: i32, %arg1: i32, %arg2: i32) -> (i32, i32) {
    %c0_i32 = arith.constant 0 : i32
    return %arg0, %arg1 : i32, i32
  }
}

module attributes {stable_mosaic.version = 11 : i64} {
  func.func @_matmul_bias_kernel(%arg0: i32, %arg1: i32, %arg2: i32, %arg3: memref<48x512xbf16, #tpu.memory_space<vmem>>, %arg4: memref<512x128xbf16, #tpu.memory_space<vmem>>, %arg5: memref<1x128xf32, #tpu.memory_space<vmem>>, %arg6: memref<48x128xbf16, #tpu.memory_space<vmem>>, %arg7: memref<48x128xbf16, #tpu.memory_space<vmem>>) attributes {dimension_semantics = [#tpu.dimension_semantics<parallel>, #tpu.dimension_semantics<parallel>, #tpu.dimension_semantics<arbitrary>], iteration_bounds = array<i64: 1, 1, 1>, scalar_prefetch = 0 : i64, scratch_operands = 0 : i64, tpu.core_type = #tpu.core_type<tc>, window_params = [{transform_indices = @transform_0, window_bounds = array<i64: 48, 512>}, {transform_indices = @transform_1, window_bounds = array<i64: 512, 128>}, {transform_indices = @transform_2, window_bounds = array<i64: 1, 128>}, {transform_indices = @transform_3, window_bounds = array<i64: 48, 128>}, {transform_indices = @transform_4, window_bounds = array<i64: 48, 128>}]} {
    %c0 = arith.constant 0 : index
    %c0_0 = arith.constant 0 : index
    %0 = vector.load %arg3[%c0, %c0_0] : memref<48x512xbf16, #tpu.memory_space<vmem>>, vector<48x512xbf16>
    %c0_1 = arith.constant 0 : index
    %c0_2 = arith.constant 0 : index
    %1 = vector.load %arg4[%c0_1, %c0_2] : memref<512x128xbf16, #tpu.memory_space<vmem>>, vector<512x128xbf16>
    %cst = arith.constant dense<0.000000e+00> : vector<48x128xf32>
    %2 = tpu.matmul %0, %1, %cst {dimension_numbers = #tpu.dot_dimension_numbers<[1], [0], [0], [1], [0, 0, 1, 1], [], []>} : vector<48x512xbf16>, vector<512x128xbf16>, vector<48x128xf32> -> vector<48x128xf32>
    %c0_3 = arith.constant 0 : index
    %c0_4 = arith.constant 0 : index
    %3 = vector.load %arg5[%c0_3, %c0_4] : memref<1x128xf32, #tpu.memory_space<vmem>>, vector<1x128xf32>
    %4 = vector.broadcast %3 : vector<1x128xf32> to vector<48x128xf32>
    %5 = arith.addf %2, %4 : vector<48x128xf32>
    %c0_5 = arith.constant 0 : index
    %c0_6 = arith.constant 0 : index
    %6 = vector.load %arg6[%c0_5, %c0_6] : memref<48x128xbf16, #tpu.memory_space<vmem>>, vector<48x128xbf16>
    %7 = arith.extf %6 : vector<48x128xbf16> to vector<48x128xf32>
    %8 = arith.addf %5, %7 : vector<48x128xf32>
    %9 = arith.truncf %8 : vector<48x128xf32> to vector<48x128xbf16>
    %c0_7 = arith.constant 0 : index
    %c0_8 = arith.constant 0 : index
    %10 = vector.load %arg7[%c0_7, %c0_8] : memref<48x128xbf16, #tpu.memory_space<vmem>>, vector<48x128xbf16>
    tpu.vector_store %arg7[%c0_7, %c0_8], %9 {strides = array<i32>} : memref<48x128xbf16, #tpu.memory_space<vmem>>, vector<48x128xbf16>,
    return
  }
  func.func @transform_0(%arg0: i32, %arg1: i32, %arg2: i32) -> (i32, i32) {
    %c0_i32 = arith.constant 0 : i32
    return %arg0, %arg2 : i32, i32
  }
  func.func @transform_1(%arg0: i32, %arg1: i32, %arg2: i32) -> (i32, i32) {
    %c0_i32 = arith.constant 0 : i32
    return %arg2, %arg1 : i32, i32
  }
  func.func @transform_2(%arg0: i32, %arg1: i32, %arg2: i32) -> (i32, i32) {
    %c0_i32 = arith.constant 0 : i32
    %c0_i32_0 = arith.constant 0 : i32
    return %c0_i32, %arg1 : i32, i32
  }
  func.func @transform_3(%arg0: i32, %arg1: i32, %arg2: i32) -> (i32, i32) {
    %c0_i32 = arith.constant 0 : i32
    return %arg0, %arg1 : i32, i32
  }
  func.func @transform_4(%arg0: i32, %arg1: i32, %arg2: i32) -> (i32, i32) {
    %c0_i32 = arith.constant 0 : i32
    return %arg0, %arg1 : i32, i32
  }
}

module attributes {stable_mosaic.version = 11 : i64} {
  func.func @_matmul_bias_kernel(%arg0: i32, %arg1: i32, %arg2: i32, %arg3: memref<48x128xbf16, #tpu.memory_space<vmem>>, %arg4: memref<128x64xbf16, #tpu.memory_space<vmem>>, %arg5: memref<1x64xf32, #tpu.memory_space<vmem>>, %arg6: memref<1x128xf32, #tpu.memory_space<vmem>>, %arg7: memref<1x128xf32, #tpu.memory_space<vmem>>, %arg8: memref<48x64xf32, #tpu.memory_space<vmem>>) attributes {dimension_semantics = [#tpu.dimension_semantics<parallel>, #tpu.dimension_semantics<parallel>, #tpu.dimension_semantics<arbitrary>], iteration_bounds = array<i64: 1, 1, 1>, scalar_prefetch = 0 : i64, scratch_operands = 0 : i64, tpu.core_type = #tpu.core_type<tc>, window_params = [{transform_indices = @transform_0, window_bounds = array<i64: 48, 128>}, {transform_indices = @transform_1, window_bounds = array<i64: 128, 64>}, {transform_indices = @transform_2, window_bounds = array<i64: 1, 64>}, {pipeline_mode = #tpu.pipeline_mode<synchronous>, transform_indices = @transform_3, window_bounds = array<i64: 1, 128>}, {pipeline_mode = #tpu.pipeline_mode<synchronous>, transform_indices = @transform_4, window_bounds = array<i64: 1, 128>}, {transform_indices = @transform_5, window_bounds = array<i64: 48, 64>}]} {
    %c0 = arith.constant 0 : index
    %c0_0 = arith.constant 0 : index
    %0 = vector.load %arg3[%c0, %c0_0] : memref<48x128xbf16, #tpu.memory_space<vmem>>, vector<48x128xbf16>
    %1 = arith.extf %0 : vector<48x128xbf16> to vector<48x128xf32>
    %cst = arith.constant dense<0.000000e+00> : vector<48xf32>
    %2 = vector.multi_reduction <add>, %1, %cst [1] : vector<48x128xf32> to vector<48xf32>
    %3 = vector.shape_cast %2 : vector<48xf32> to vector<48x1xf32>
    %cst_1 = arith.constant 1.280000e+02 : f32
    %4 = vector.broadcast %cst_1 : f32 to vector<48x1xf32>
    %5 = arith.divf %3, %4 : vector<48x1xf32>
    %6 = vector.broadcast %5 : vector<48x1xf32> to vector<48x128xf32>
    %7 = arith.subf %1, %6 : vector<48x128xf32>
    %8 = arith.mulf %7, %7 : vector<48x128xf32>
    %cst_2 = arith.constant dense<0.000000e+00> : vector<48xf32>
    %9 = vector.multi_reduction <add>, %8, %cst_2 [1] : vector<48x128xf32> to vector<48xf32>
    %10 = vector.shape_cast %9 : vector<48xf32> to vector<48x1xf32>
    %cst_3 = arith.constant 1.280000e+02 : f32
    %11 = vector.broadcast %cst_3 : f32 to vector<48x1xf32>
    %12 = arith.divf %10, %11 : vector<48x1xf32>
    %13 = vector.broadcast %5 : vector<48x1xf32> to vector<48x128xf32>
    %14 = arith.subf %1, %13 : vector<48x128xf32>
    %cst_4 = arith.constant 9.99999974E-6 : f32
    %15 = vector.broadcast %cst_4 : f32 to vector<48x1xf32>
    %16 = arith.addf %12, %15 : vector<48x1xf32>
    %17 = math.rsqrt %16 : vector<48x1xf32>
    %18 = vector.broadcast %17 : vector<48x1xf32> to vector<48x128xf32>
    %19 = arith.mulf %14, %18 : vector<48x128xf32>
    %c0_5 = arith.constant 0 : index
    %c0_6 = arith.constant 0 : index
    %20 = vector.load %arg6[%c0_5, %c0_6] : memref<1x128xf32, #tpu.memory_space<vmem>>, vector<1x128xf32>
    %21 = vector.broadcast %20 : vector<1x128xf32> to vector<48x128xf32>
    %22 = arith.mulf %19, %21 : vector<48x128xf32>
    %c0_7 = arith.constant 0 : index
    %c0_8 = arith.constant 0 : index
    %23 = vector.load %arg7[%c0_7, %c0_8] : memref<1x128xf32, #tpu.memory_space<vmem>>, vector<1x128xf32>
    %24 = vector.broadcast %23 : vector<1x128xf32> to vector<48x128xf32>
    %25 = arith.addf %22, %24 : vector<48x128xf32>
    %26 = arith.truncf %25 : vector<48x128xf32> to vector<48x128xbf16>
    %c0_9 = arith.constant 0 : index
    %c0_10 = arith.constant 0 : index
    %27 = vector.load %arg4[%c0_9, %c0_10] : memref<128x64xbf16, #tpu.memory_space<vmem>>, vector<128x64xbf16>
    %cst_11 = arith.constant dense<0.000000e+00> : vector<48x64xf32>
    %28 = tpu.matmul %26, %27, %cst_11 {dimension_numbers = #tpu.dot_dimension_numbers<[1], [0], [0], [1], [0, 0, 1, 1], [], []>} : vector<48x128xbf16>, vector<128x64xbf16>, vector<48x64xf32> -> vector<48x64xf32>
    %c0_12 = arith.constant 0 : index
    %c0_13 = arith.constant 0 : index
    %29 = vector.load %arg5[%c0_12, %c0_13] : memref<1x64xf32, #tpu.memory_space<vmem>>, vector<1x64xf32>
    %30 = vector.broadcast %29 : vector<1x64xf32> to vector<48x64xf32>
    %31 = arith.addf %28, %30 : vector<48x64xf32>
    %c0_14 = arith.constant 0 : index
    %c0_15 = arith.constant 0 : index
    %32 = vector.load %arg8[%c0_14, %c0_15] : memref<48x64xf32, #tpu.memory_space<vmem>>, vector<48x64xf32>
    tpu.vector_store %arg8[%c0_14, %c0_15], %31 {strides = array<i32>} : memref<48x64xf32, #tpu.memory_space<vmem>>, vector<48x64xf32>,
    return
  }
  func.func @transform_0(%arg0: i32, %arg1: i32, %arg2: i32) -> (i32, i32) {
    %c0_i32 = arith.constant 0 : i32
    return %arg0, %arg2 : i32, i32
  }
  func.func @transform_1(%arg0: i32, %arg1: i32, %arg2: i32) -> (i32, i32) {
    %c0_i32 = arith.constant 0 : i32
    return %arg2, %arg1 : i32, i32
  }
  func.func @transform_2(%arg0: i32, %arg1: i32, %arg2: i32) -> (i32, i32) {
    %c0_i32 = arith.constant 0 : i32
    %c0_i32_0 = arith.constant 0 : i32
    return %c0_i32, %arg1 : i32, i32
  }
  func.func @transform_3(%arg0: i32, %arg1: i32, %arg2: i32) -> (i32, i32) {
    %c0_i32 = arith.constant 0 : i32
    %c0_i32_0 = arith.constant 0 : i32
    %c0_i32_1 = arith.constant 0 : i32
    return %c0_i32, %c0_i32_0 : i32, i32
  }
  func.func @transform_4(%arg0: i32, %arg1: i32, %arg2: i32) -> (i32, i32) {
    %c0_i32 = arith.constant 0 : i32
    %c0_i32_0 = arith.constant 0 : i32
    %c0_i32_1 = arith.constant 0 : i32
    return %c0_i32, %c0_i32_0 : i32, i32
  }
  func.func @transform_5(%arg0: i32, %arg1: i32, %arg2: i32) -> (i32, i32) {
    %c0_i32 = arith.constant 0 : i32
    return %arg0, %arg1 : i32, i32
  }
}

module attributes {stable_mosaic.version = 11 : i64} {
  func.func @_cls_attn_weights_kernel(%arg0: i32, %arg1: memref<1x8x128xbf16, #tpu.memory_space<vmem>>, %arg2: memref<1x24x128xbf16, #tpu.memory_space<vmem>>, %arg3: memref<1x1x24xf32, #tpu.memory_space<vmem>>) attributes {dimension_semantics = [#tpu.dimension_semantics<parallel>], iteration_bounds = array<i64: 2>, scalar_prefetch = 0 : i64, scratch_operands = 0 : i64, tpu.core_type = #tpu.core_type<tc>, window_params = [{transform_indices = @transform_0, window_bounds = array<i64: 1, 8, 128>}, {transform_indices = @transform_1, window_bounds = array<i64: 1, 24, 128>}, {transform_indices = @transform_2, window_bounds = array<i64: 1, 1, 24>}]} {
    %c0 = arith.constant 0 : index
    %c0_0 = arith.constant 0 : index
    %c0_1 = arith.constant 0 : index
    %0 = vector.load %arg1[%c0, %c0_0, %c0_1] : memref<1x8x128xbf16, #tpu.memory_space<vmem>>, vector<1x1x128xbf16>
    %1 = vector.shape_cast %0 : vector<1x1x128xbf16> to vector<1x128xbf16>
    %c0_2 = arith.constant 0 : index
    %c0_3 = arith.constant 0 : index
    %c0_4 = arith.constant 0 : index
    %2 = vector.load %arg2[%c0_2, %c0_3, %c0_4] : memref<1x24x128xbf16, #tpu.memory_space<vmem>>, vector<1x24x128xbf16>
    %3 = vector.shape_cast %2 : vector<1x24x128xbf16> to vector<24x128xbf16>
    %4 = tpu.iota {dimensions = array<i32: 1>} : vector<1x24xi32>
    %c17_i32 = arith.constant 17 : i32
    %5 = vector.broadcast %c17_i32 : i32 to vector<1x24xi32>
    %6 = arith.cmpi slt, %4, %5 : vector<1x24xi32>
    %cst = arith.constant 0.000000e+00 : f32
    %7 = vector.broadcast %cst : f32 to vector<1x24xf32>
    %8 = vector.extract_strided_slice %1 {offsets = [0, 0], sizes = [1, 32], strides = [1, 1]} : vector<1x128xbf16> to vector<1x32xbf16>
    %9 = vector.extract_strided_slice %3 {offsets = [0, 0], sizes = [24, 32], strides = [1, 1]} : vector<24x128xbf16> to vector<24x32xbf16>
    %cst_5 = arith.constant dense<0.000000e+00> : vector<1x24xf32>
    %10 = tpu.matmul %8, %9, %cst_5 {dimension_numbers = #tpu.dot_dimension_numbers<[1], [1], [0], [0], [0, 0, 1, 0], [], []>} : vector<1x32xbf16>, vector<24x32xbf16>, vector<1x24xf32> -> vector<1x24xf32>
    %cst_6 = arith.constant 0.176776692 : f32
    %11 = vector.broadcast %cst_6 : f32 to vector<1x24xf32>
    %12 = arith.mulf %10, %11 : vector<1x24xf32>
    %cst_7 = arith.constant -1.000000e+30 : f32
    %13 = vector.broadcast %cst_7 : f32 to vector<1x24xf32>
    %14 = arith.select %6, %12, %13 : vector<1x24xi1>, vector<1x24xf32>
    %cst_8 = arith.constant dense<0xFF800000> : vector<1xf32>
    %15 = vector.multi_reduction <maximumf>, %14, %cst_8 [1] : vector<1x24xf32> to vector<1xf32>
    %16 = vector.shape_cast %15 : vector<1xf32> to vector<1x1xf32>
    %17 = vector.broadcast %16 : vector<1x1xf32> to vector<1x24xf32>
    %18 = arith.subf %14, %17 : vector<1x24xf32>
    %19 = math.exp %18 : vector<1x24xf32>
    %cst_9 = arith.constant dense<0.000000e+00> : vector<1xf32>
    %20 = vector.multi_reduction <add>, %19, %cst_9 [1] : vector<1x24xf32> to vector<1xf32>
    %21 = vector.shape_cast %20 : vector<1xf32> to vector<1x1xf32>
    %22 = vector.broadcast %21 : vector<1x1xf32> to vector<1x24xf32>
    %23 = arith.divf %19, %22 : vector<1x24xf32>
    %24 = arith.addf %7, %23 : vector<1x24xf32>
    %25 = vector.extract_strided_slice %1 {offsets = [0, 32], sizes = [1, 32], strides = [1, 1]} : vector<1x128xbf16> to vector<1x32xbf16>
    %26 = vector.extract_strided_slice %3 {offsets = [0, 32], sizes = [24, 32], strides = [1, 1]} : vector<24x128xbf16> to vector<24x32xbf16>
    %cst_10 = arith.constant dense<0.000000e+00> : vector<1x24xf32>
    %27 = tpu.matmul %25, %26, %cst_10 {dimension_numbers = #tpu.dot_dimension_numbers<[1], [1], [0], [0], [0, 0, 1, 0], [], []>} : vector<1x32xbf16>, vector<24x32xbf16>, vector<1x24xf32> -> vector<1x24xf32>
    %cst_11 = arith.constant 0.176776692 : f32
    %28 = vector.broadcast %cst_11 : f32 to vector<1x24xf32>
    %29 = arith.mulf %27, %28 : vector<1x24xf32>
    %cst_12 = arith.constant -1.000000e+30 : f32
    %30 = vector.broadcast %cst_12 : f32 to vector<1x24xf32>
    %31 = arith.select %6, %29, %30 : vector<1x24xi1>, vector<1x24xf32>
    %cst_13 = arith.constant dense<0xFF800000> : vector<1xf32>
    %32 = vector.multi_reduction <maximumf>, %31, %cst_13 [1] : vector<1x24xf32> to vector<1xf32>
    %33 = vector.shape_cast %32 : vector<1xf32> to vector<1x1xf32>
    %34 = vector.broadcast %33 : vector<1x1xf32> to vector<1x24xf32>
    %35 = arith.subf %31, %34 : vector<1x24xf32>
    %36 = math.exp %35 : vector<1x24xf32>
    %cst_14 = arith.constant dense<0.000000e+00> : vector<1xf32>
    %37 = vector.multi_reduction <add>, %36, %cst_14 [1] : vector<1x24xf32> to vector<1xf32>
    %38 = vector.shape_cast %37 : vector<1xf32> to vector<1x1xf32>
    %39 = vector.broadcast %38 : vector<1x1xf32> to vector<1x24xf32>
    %40 = arith.divf %36, %39 : vector<1x24xf32>
    %41 = arith.addf %24, %40 : vector<1x24xf32>
    %42 = vector.extract_strided_slice %1 {offsets = [0, 64], sizes = [1, 32], strides = [1, 1]} : vector<1x128xbf16> to vector<1x32xbf16>
    %43 = vector.extract_strided_slice %3 {offsets = [0, 64], sizes = [24, 32], strides = [1, 1]} : vector<24x128xbf16> to vector<24x32xbf16>
    %cst_15 = arith.constant dense<0.000000e+00> : vector<1x24xf32>
    %44 = tpu.matmul %42, %43, %cst_15 {dimension_numbers = #tpu.dot_dimension_numbers<[1], [1], [0], [0], [0, 0, 1, 0], [], []>} : vector<1x32xbf16>, vector<24x32xbf16>, vector<1x24xf32> -> vector<1x24xf32>
    %cst_16 = arith.constant 0.176776692 : f32
    %45 = vector.broadcast %cst_16 : f32 to vector<1x24xf32>
    %46 = arith.mulf %44, %45 : vector<1x24xf32>
    %cst_17 = arith.constant -1.000000e+30 : f32
    %47 = vector.broadcast %cst_17 : f32 to vector<1x24xf32>
    %48 = arith.select %6, %46, %47 : vector<1x24xi1>, vector<1x24xf32>
    %cst_18 = arith.constant dense<0xFF800000> : vector<1xf32>
    %49 = vector.multi_reduction <maximumf>, %48, %cst_18 [1] : vector<1x24xf32> to vector<1xf32>
    %50 = vector.shape_cast %49 : vector<1xf32> to vector<1x1xf32>
    %51 = vector.broadcast %50 : vector<1x1xf32> to vector<1x24xf32>
    %52 = arith.subf %48, %51 : vector<1x24xf32>
    %53 = math.exp %52 : vector<1x24xf32>
    %cst_19 = arith.constant dense<0.000000e+00> : vector<1xf32>
    %54 = vector.multi_reduction <add>, %53, %cst_19 [1] : vector<1x24xf32> to vector<1xf32>
    %55 = vector.shape_cast %54 : vector<1xf32> to vector<1x1xf32>
    %56 = vector.broadcast %55 : vector<1x1xf32> to vector<1x24xf32>
    %57 = arith.divf %53, %56 : vector<1x24xf32>
    %58 = arith.addf %41, %57 : vector<1x24xf32>
    %59 = vector.extract_strided_slice %1 {offsets = [0, 96], sizes = [1, 32], strides = [1, 1]} : vector<1x128xbf16> to vector<1x32xbf16>
    %60 = vector.extract_strided_slice %3 {offsets = [0, 96], sizes = [24, 32], strides = [1, 1]} : vector<24x128xbf16> to vector<24x32xbf16>
    %cst_20 = arith.constant dense<0.000000e+00> : vector<1x24xf32>
    %61 = tpu.matmul %59, %60, %cst_20 {dimension_numbers = #tpu.dot_dimension_numbers<[1], [1], [0], [0], [0, 0, 1, 0], [], []>} : vector<1x32xbf16>, vector<24x32xbf16>, vector<1x24xf32> -> vector<1x24xf32>
    %cst_21 = arith.constant 0.176776692 : f32
    %62 = vector.broadcast %cst_21 : f32 to vector<1x24xf32>
    %63 = arith.mulf %61, %62 : vector<1x24xf32>
    %cst_22 = arith.constant -1.000000e+30 : f32
    %64 = vector.broadcast %cst_22 : f32 to vector<1x24xf32>
    %65 = arith.select %6, %63, %64 : vector<1x24xi1>, vector<1x24xf32>
    %cst_23 = arith.constant dense<0xFF800000> : vector<1xf32>
    %66 = vector.multi_reduction <maximumf>, %65, %cst_23 [1] : vector<1x24xf32> to vector<1xf32>
    %67 = vector.shape_cast %66 : vector<1xf32> to vector<1x1xf32>
    %68 = vector.broadcast %67 : vector<1x1xf32> to vector<1x24xf32>
    %69 = arith.subf %65, %68 : vector<1x24xf32>
    %70 = math.exp %69 : vector<1x24xf32>
    %cst_24 = arith.constant dense<0.000000e+00> : vector<1xf32>
    %71 = vector.multi_reduction <add>, %70, %cst_24 [1] : vector<1x24xf32> to vector<1xf32>
    %72 = vector.shape_cast %71 : vector<1xf32> to vector<1x1xf32>
    %73 = vector.broadcast %72 : vector<1x1xf32> to vector<1x24xf32>
    %74 = arith.divf %70, %73 : vector<1x24xf32>
    %75 = arith.addf %58, %74 : vector<1x24xf32>
    %cst_25 = arith.constant 2.500000e-01 : f32
    %76 = vector.broadcast %cst_25 : f32 to vector<1x24xf32>
    %77 = arith.mulf %75, %76 : vector<1x24xf32>
    %c0_26 = arith.constant 0 : index
    %c0_27 = arith.constant 0 : index
    %c0_28 = arith.constant 0 : index
    %78 = vector.load %arg3[%c0_26, %c0_27, %c0_28] : memref<1x1x24xf32, #tpu.memory_space<vmem>>, vector<1x1x24xf32>
    %79 = vector.shape_cast %78 : vector<1x1x24xf32> to vector<1x24xf32>
    %80 = vector.shape_cast %77 : vector<1x24xf32> to vector<1x1x24xf32>
    tpu.vector_store %arg3[%c0_26, %c0_27, %c0_28], %80 {strides = array<i32>} : memref<1x1x24xf32, #tpu.memory_space<vmem>>, vector<1x1x24xf32>,
    return
  }
  func.func @transform_0(%arg0: i32) -> (i32, i32, i32) {
    %c0_i32 = arith.constant 0 : i32
    %c0_i32_0 = arith.constant 0 : i32
    %c0_i32_1 = arith.constant 0 : i32
    return %arg0, %c0_i32, %c0_i32_0 : i32, i32, i32
  }
  func.func @transform_1(%arg0: i32) -> (i32, i32, i32) {
    %c0_i32 = arith.constant 0 : i32
    %c1_i32 = arith.constant 1 : i32
    %c0_i32_0 = arith.constant 0 : i32
    return %arg0, %c0_i32, %c1_i32 : i32, i32, i32
  }
  func.func @transform_2(%arg0: i32) -> (i32, i32, i32) {
    %c0_i32 = arith.constant 0 : i32
    %c0_i32_0 = arith.constant 0 : i32
    %c0_i32_1 = arith.constant 0 : i32
    return %arg0, %c0_i32, %c0_i32_0 : i32, i32, i32
  }
}

</mosaic_0001>

<llo_original>
// kernel: vision_transformer_forward.15
$region0: #{vision_transformer_forward.15}
  #allocation0 [shape = 'u32[]', space=smem, size = 0x4, offset = 0x4, fixed_abs, tag = 'smem constant byte address 0x4 - core index']
  #allocation1 [shape = 'u32[72,128]{1,0:T(1,128)}', space=vmem, size = 0x9000, scoped, tag = 'internal scratch']
  %s0 = inlined_call_operand.vmem [shape: f32[48,128], index: 0, kind: input, shape index: {}]
  %s1 = inlined_call_operand.vmem [shape: f32[1,128], index: 1, kind: input, shape index: {}]
  %s2 = inlined_call_operand.vmem [shape: f32[1,128], index: 2, kind: input, shape index: {}]
  %s3 = inlined_call_operand.vmem [shape: bf16[48,128], index: 3, kind: output, shape index: {}]
  %s4 = sld [smem:[#allocation0]]
  $region22: #{vision_transformer_forward.15} parent=0
    _
  %s6 = ssub.s32 1, %s4
  %s7 = scalar_select 0, %s6, %s4
  // Predicated region
  $region2: #{vision_transformer_forward.15} parent=0 // pred_check
    _
  $region3: #{vision_transformer_forward.15} parent=0 // pred_check_branch
    %9 = sbr.rel (0) target = $region5
  $region4: #{vision_transformer_forward.15} parent=0 // pred_region
    _
  $region5: #{vision_transformer_forward.15} parent=0 // pred_fallthru
    _
  // Predicated region
  $region6: #{vision_transformer_forward.15} parent=0 // pred_check
    _
  $region7: #{vision_transformer_forward.15} parent=0 // pred_check_branch
    %11 = sbr.rel (0) target = $region9
  $region8: #{vision_transformer_forward.15} parent=0 // pred_region
    _
  $region9: #{vision_transformer_forward.15} parent=0 // pred_fallthru
    _
  // Predicated region
  $region10: #{vision_transformer_forward.15} parent=0 // pred_check
    _
  $region11: #{vision_transformer_forward.15} parent=0 // pred_check_branch
    %13 = sbr.rel (0) target = $region13
  $region12: #{vision_transformer_forward.15} parent=0 // pred_region
    _
  $region13: #{vision_transformer_forward.15} parent=0 // pred_fallthru
    _
  %v14 = vld [vmem:[%s0] sm:$0xff]
  %v15 = vld [vmem:[%s0 + $0x8] sm:$0xff]
  %v16 = vld [vmem:[%s0 + $0x10] sm:$0xff]
  %v17 = vld [vmem:[%s0 + $0x18] sm:$0xff]
  %v18 = vld [vmem:[%s0 + $0x20] sm:$0xff]
  %v19 = vld [vmem:[%s0 + $0x28] sm:$0xff]
  %20 = vadd.xlane.f32.xlu0 %v14
  %v21 = vpop.xlane.xlu0 %20
  %22 = vadd.xlane.f32.xlu0 %v15
  %v23 = vpop.xlane.xlu0 %22
  %24 = vadd.xlane.f32.xlu0 %v16
  %v25 = vpop.xlane.xlu0 %24
  %26 = vadd.xlane.f32.xlu0 %v17
  %v27 = vpop.xlane.xlu0 %26
  %28 = vadd.xlane.f32.xlu0 %v18
  %v29 = vpop.xlane.xlu0 %28
  %30 = vadd.xlane.f32.xlu0 %v19
  %v31 = vpop.xlane.xlu0 %30
  %v32 = vrcp.pop 128.0
  %v33 = vmul.f32 128.0, %v32
  %v34 = vsub.f32 1.0, %v33
  %v35 = vmul.f32 %v32, %v34
  %v36 = vadd.f32 %v32, %v35
  %vm37 = vweird.f32 %v32
  %v38 = vsel %vm37, %v32, %v36
  %v39 = vmul.f32 %v21, %v38
  %v40 = vmul.f32 %v23, %v38
  %v41 = vmul.f32 %v25, %v38
  %v42 = vmul.f32 %v27, %v38
  %v43 = vmul.f32 %v29, %v38
  %v44 = vmul.f32 %v31, %v38
  %v45 = vsub.f32 %v14, %v39
  %v46 = vsub.f32 %v15, %v40
  %v47 = vsub.f32 %v16, %v41
  %v48 = vsub.f32 %v17, %v42
  %v49 = vsub.f32 %v18, %v43
  %v50 = vsub.f32 %v19, %v44
  %v51 = vmul.f32 %v45, %v45
  %v52 = vmul.f32 %v46, %v46
  %v53 = vmul.f32 %v47, %v47
  %v54 = vmul.f32 %v48, %v48
  %v55 = vmul.f32 %v49, %v49
  %v56 = vmul.f32 %v50, %v50
  %57 = vadd.xlane.f32.xlu0 %v51
  %v58 = vpop.xlane.xlu0 %57
  %59 = vadd.xlane.f32.xlu0 %v52
  %v60 = vpop.xlane.xlu0 %59
  %61 = vadd.xlane.f32.xlu0 %v53
  %v62 = vpop.xlane.xlu0 %61
  %63 = vadd.xlane.f32.xlu0 %v54
  %v64 = vpop.xlane.xlu0 %63
  %65 = vadd.xlane.f32.xlu0 %v55
  %v66 = vpop.xlane.xlu0 %65
  %67 = vadd.xlane.f32.xlu0 %v56
  %v68 = vpop.xlane.xlu0 %67
  %v69 = vmul.f32 %v58, %v38
  %v70 = vmul.f32 %v60, %v38
  %v71 = vmul.f32 %v62, %v38
  %v72 = vmul.f32 %v64, %v38
  %v73 = vmul.f32 %v66, %v38
  %v74 = vmul.f32 %v68, %v38
  %v75 = vadd.f32 %v69, 1e-05
  %v76 = vadd.f32 %v70, 1e-05
  %v77 = vadd.f32 %v71, 1e-05
  %v78 = vadd.f32 %v72, 1e-05
  %v79 = vadd.f32 %v73, 1e-05
  %v80 = vadd.f32 %v74, 1e-05
  %v81 = vrsqrt.pop %v75
  %v82 = vmul.f32 %v81, %v75
  %v83 = vmul.f32 %v82, %v81
  %v84 = vmul.f32 0.5, %v83
  %v85 = vsub.f32 1.5, %v84
  %v86 = vmul.f32 %v81, %v85
  %vm87 = vweird.f32 %v75
  %vm88 = vweird.f32 %v81
  %vm89 = vmor %vm87, %vm88
  %v90 = vsel %vm89, %v81, %v86
  %v91 = vrsqrt.pop %v76
  %v92 = vmul.f32 %v91, %v76
  %v93 = vmul.f32 %v92, %v91
  %v94 = vmul.f32 0.5, %v93
  %v95 = vsub.f32 1.5, %v94
  %v96 = vmul.f32 %v91, %v95
  %vm97 = vweird.f32 %v76
  %vm98 = vweird.f32 %v91
  %vm99 = vmor %vm97, %vm98
  %v100 = vsel %vm99, %v91, %v96
  %v101 = vrsqrt.pop %v77
  %v102 = vmul.f32 %v101, %v77
  %v103 = vmul.f32 %v102, %v101
  %v104 = vmul.f32 0.5, %v103
  %v105 = vsub.f32 1.5, %v104
  %v106 = vmul.f32 %v101, %v105
  %vm107 = vweird.f32 %v77
  %vm108 = vweird.f32 %v101
  %vm109 = vmor %vm107, %vm108
  %v110 = vsel %vm109, %v101, %v106
  %v111 = vrsqrt.pop %v78
  %v112 = vmul.f32 %v111, %v78
  %v113 = vmul.f32 %v112, %v111
  %v114 = vmul.f32 0.5, %v113
  %v115 = vsub.f32 1.5, %v114
  %v116 = vmul.f32 %v111, %v115
  %vm117 = vweird.f32 %v78
  %vm118 = vweird.f32 %v111
  %vm119 = vmor %vm117, %vm118
  %v120 = vsel %vm119, %v111, %v116
  %v121 = vrsqrt.pop %v79
  %v122 = vmul.f32 %v121, %v79
  %v123 = vmul.f32 %v122, %v121
  %v124 = vmul.f32 0.5, %v123
  %v125 = vsub.f32 1.5, %v124
  %v126 = vmul.f32 %v121, %v125
  %vm127 = vweird.f32 %v79
  %vm128 = vweird.f32 %v121
  %vm129 = vmor %vm127, %vm128
  %v130 = vsel %vm129, %v121, %v126
  %v131 = vrsqrt.pop %v80
  %v132 = vmul.f32 %v131, %v80
  %v133 = vmul.f32 %v132, %v131
  %v134 = vmul.f32 0.5, %v133
  %v135 = vsub.f32 1.5, %v134
  %v136 = vmul.f32 %v131, %v135
  %vm137 = vweird.f32 %v80
  %vm138 = vweird.f32 %v131
  %vm139 = vmor %vm137, %vm138
  %v140 = vsel %vm139, %v131, %v136
  %v141 = vmul.f32 %v45, %v90
  %v142 = vmul.f32 %v46, %v100
  %v143 = vmul.f32 %v47, %v110
  %v144 = vmul.f32 %v48, %v120
  %v145 = vmul.f32 %v49, %v130
  %v146 = vmul.f32 %v50, %v140
  %v147 = vld [vmem:[%s1] sm:$0x1]
  %v149 = vperm.slane %v147, 0
  %v151 = vmul.f32 %v141, %v149
  %v152 = vmul.f32 %v142, %v149
  %v153 = vmul.f32 %v143, %v149
  %v154 = vmul.f32 %v144, %v149
  %v155 = vmul.f32 %v145, %v149
  %v156 = vmul.f32 %v146, %v149
  %v157 = vld [vmem:[%s2] sm:$0x1]
  %v159 = vperm.slane %v157, 0
  %v161 = vadd.f32 %v151, %v159
  %v162 = vadd.f32 %v152, %v159
  %v163 = vadd.f32 %v153, %v159
  %v164 = vadd.f32 %v154, %v159
  %v165 = vadd.f32 %v155, %v159
  %v166 = vadd.f32 %v156, %v159
  %v167 = vpack.c.bf16 %v161, %v161
  %v168 = vpack.c.bf16 %v162, %v162
  %v169 = vpack.c.bf16 %v163, %v163
  %v170 = vpack.c.bf16 %v164, %v164
  %v171 = vpack.c.bf16 %v165, %v165
  %v172 = vpack.c.bf16 %v166, %v166
  %173 = vst [vmem:[%s3] sm:$0xf] %v167
  %174 = vst [vmem:[%s3 + $0x4] sm:$0xf] %v168
  %175 = vst [vmem:[%s3 + $0x8] sm:$0xf] %v169
  %176 = vst [vmem:[%s3 + $0xc] sm:$0xf] %v170
  %177 = vst [vmem:[%s3 + $0x10] sm:$0xf] %v171
  %178 = vst [vmem:[%s3 + $0x14] sm:$0xf] %v172
  // Predicated region
  $region14: #{vision_transformer_forward.15} parent=0 // pred_check
    _
  $region15: #{vision_transformer_forward.15} parent=0 // pred_check_branch
    %180 = sbr.rel (0) target = $region17
  $region16: #{vision_transformer_forward.15} parent=0 // pred_region
    _
  $region17: #{vision_transformer_forward.15} parent=0 // pred_fallthru
    _
  // Predicated region
  $region18: #{vision_transformer_forward.15} parent=0 // pred_check
    _
  $region19: #{vision_transformer_forward.15} parent=0 // pred_check_branch
    %182 = sbr.rel (0) target = $region21
  $region20: #{vision_transformer_forward.15} parent=0 // pred_region
    _
  $region21: #{vision_transformer_forward.15} parent=0 // pred_fallthru
    _

// kernel: vision_transformer_forward.14
$region0: #{vision_transformer_forward.14}
  #allocation0 [shape = 'u32[]', space=smem, size = 0x4, offset = 0x4, fixed_abs, tag = 'smem constant byte address 0x4 - core index']
  #allocation1 [shape = 'u32[72,128]{1,0:T(1,128)}', space=vmem, size = 0x9000, scoped, tag = 'internal scratch']
  %s0 = inlined_call_operand.vmem [shape: bf16[32,48], index: 0, kind: input, shape index: {}]
  %s1 = inlined_call_operand.vmem [shape: bf16[48,128], index: 1, kind: input, shape index: {}]
  %s2 = inlined_call_operand.vmem [shape: f32[1,128], index: 2, kind: input, shape index: {}]
  %s3 = inlined_call_operand.vmem [shape: bf16[32,128], index: 3, kind: output, shape index: {}]
  %s4 = sld [smem:[#allocation0]]
  $region22: #{vision_transformer_forward.14} parent=0
    _
  %s6 = ssub.s32 1, %s4
  %s7 = scalar_select 0, %s6, %s4
  // Predicated region
  $region2: #{vision_transformer_forward.14} parent=0 // pred_check
    _
  $region3: #{vision_transformer_forward.14} parent=0 // pred_check_branch
    %9 = sbr.rel (0) target = $region5
  $region4: #{vision_transformer_forward.14} parent=0 // pred_region
    _
  $region5: #{vision_transformer_forward.14} parent=0 // pred_fallthru
    _
  // Predicated region
  $region6: #{vision_transformer_forward.14} parent=0 // pred_check
    _
  $region7: #{vision_transformer_forward.14} parent=0 // pred_check_branch
    %11 = sbr.rel (0) target = $region9
  $region8: #{vision_transformer_forward.14} parent=0 // pred_region
    _
  $region9: #{vision_transformer_forward.14} parent=0 // pred_fallthru
    _
  // Predicated region
  $region10: #{vision_transformer_forward.14} parent=0 // pred_check
    _
  $region11: #{vision_transformer_forward.14} parent=0 // pred_check_branch
    %13 = sbr.rel (0) target = $region13
  $region12: #{vision_transformer_forward.14} parent=0 // pred_region
    _
  $region13: #{vision_transformer_forward.14} parent=0 // pred_fallthru
    _
  %v15 = vld [vmem:[%s0] sm:$0xf]
  %v16 = vld [vmem:[%s0 + $0x4] sm:$0xf]
  %v17 = vld [vmem:[%s0 + $0x8] sm:$0xf]
  %v18 = vld [vmem:[%s0 + $0xc] sm:$0xf]
  %v19 = vld [vmem:[%s1] sm:$0xf]
  %v20 = vld [vmem:[%s1 + $0x4] sm:$0xf]
  %v21 = vld [vmem:[%s1 + $0x8] sm:$0xf]
  %v22 = vld [vmem:[%s1 + $0xc] sm:$0xf]
  %v23 = vld [vmem:[%s1 + $0x10] sm:$0xf]
  %v24 = vld [vmem:[%s1 + $0x14] sm:$0xf]
  %v25 = vld [vmem:[%s2] sm:$0x1]
  %v27 = vperm.slane %v25, 0
  %v33 = vunpack.c.l.b16 %v15
  %v34 = vunpack.c.l.b16 %v16
  %v35 = vunpack.c.l.b16 %v17
  %v36 = vunpack.c.l.b16 %v18
  %v37 = vpack.c.b16 %v34, %v33
  %v38 = vpack.c.b16 %v36, %v35
  %v45 = vunpack.c.l.b16 %v19
  %v46 = vunpack.c.l.b16 %v20
  %v47 = vunpack.c.l.b16 %v21
  %v48 = vunpack.c.l.b16 %v22
  %v49 = vunpack.c.l.b16 %v23
  %v50 = vunpack.c.l.b16 %v24
  %v51 = vpack.c.b16 %v46, %v45
  %v52 = vpack.c.b16 %v48, %v47
  %v53 = vpack.c.b16 %v50, %v49
  %vm57 = vcmask 392192
  %v59 = vsel %vm57, %v37, 0
  %v62 = vsel %vm57, %v38, 0
  %64 = vmatpush.bf16.msra.mxu0 0
  %65 = vmatpush.bf16.msra.mxu0 0
  %66 = vmatpush.bf16.msra.mxu0 0
  %67 = vmatpush.bf16.msra.mxu0 0
  %68 = vmatpush.bf16.msra.mxu0 0
  %69 = vmatpush.bf16.msra.mxu0 %v53
  %70 = vmatpush.bf16.msra.mxu0 %v52
  %71 = vmatpush.bf16.msra.mxu0 %v51
  %72 = vmatmul.bf16.gmra.mxu0 %v59
  %v73 = vpop.f32.mrf.mxu0
  %v74 = vadd.f32 %v27, %v73
  %v75 = vpop.f32.mrf.mxu0
  %v76 = vadd.f32 %v27, %v75
  %77 = vmatmul.bf16.gmra.mxu0 %v62
  %v78 = vpop.f32.mrf.mxu0
  %v79 = vadd.f32 %v27, %v78
  %v80 = vpop.f32.mrf.mxu0
  %v81 = vadd.f32 %v27, %v80
  %82 = vdwg.mxu0
  %v83 = vpack.c.bf16 %v74, %v74
  %v84 = vpack.c.bf16 %v76, %v76
  %v85 = vpack.c.bf16 %v79, %v79
  %v86 = vpack.c.bf16 %v81, %v81
  %87 = vst [vmem:[%s3] sm:$0xf] %v83
  %88 = vst [vmem:[%s3 + $0x4] sm:$0xf] %v84
  %89 = vst [vmem:[%s3 + $0x8] sm:$0xf] %v85
  %90 = vst [vmem:[%s3 + $0xc] sm:$0xf] %v86
  // Predicated region
  $region14: #{vision_transformer_forward.14} parent=0 // pred_check
    _
  $region15: #{vision_transformer_forward.14} parent=0 // pred_check_branch
    %92 = sbr.rel (0) target = $region17
  $region16: #{vision_transformer_forward.14} parent=0 // pred_region
    _
  $region17: #{vision_transformer_forward.14} parent=0 // pred_fallthru
    _
  // Predicated region
  $region18: #{vision_transformer_forward.14} parent=0 // pred_check
    _
  $region19: #{vision_transformer_forward.14} parent=0 // pred_check_branch
    %94 = sbr.rel (0) target = $region21
  $region20: #{vision_transformer_forward.14} parent=0 // pred_region
    _
  $region21: #{vision_transformer_forward.14} parent=0 // pred_fallthru
    _

// kernel: vision_transformer_forward.16
$region0: #{vision_transformer_forward.16}
  #allocation0 [shape = 'u32[]', space=smem, size = 0x4, offset = 0x4, fixed_abs, tag = 'smem constant byte address 0x4 - core index']
  #allocation1 [shape = 'u32[72,128]{1,0:T(1,128)}', space=vmem, size = 0x9000, scoped, tag = 'internal scratch']
  %s0 = inlined_call_operand.vmem [shape: bf16[48,128], index: 0, kind: input, shape index: {}]
  %s1 = inlined_call_operand.vmem [shape: bf16[128,384], index: 1, kind: input, shape index: {}]
  %s2 = inlined_call_operand.vmem [shape: f32[1,384], index: 2, kind: input, shape index: {}]
  %s3 = inlined_call_operand.vmem [shape: f32[1,128], index: 3, kind: input, shape index: {}]
  %s4 = inlined_call_operand.vmem [shape: f32[1,128], index: 4, kind: input, shape index: {}]
  %s5 = inlined_call_operand.vmem [shape: bf16[48,384], index: 5, kind: output, shape index: {}]
  %s6 = sld [smem:[#allocation0]]
  $region30: #{vision_transformer_forward.16} parent=0
    _
  %s8 = ssub.s32 1, %s6
  %s9 = scalar_select 0, %s8, %s6
  // Predicated region
  $region2: #{vision_transformer_forward.16} parent=0 // pred_check
    _
  $region3: #{vision_transformer_forward.16} parent=0 // pred_check_branch
    %11 = sbr.rel (0) target = $region5
  $region4: #{vision_transformer_forward.16} parent=0 // pred_region
    _
  $region5: #{vision_transformer_forward.16} parent=0 // pred_fallthru
    _
  // Predicated region
  $region6: #{vision_transformer_forward.16} parent=0 // pred_check
    _
  $region7: #{vision_transformer_forward.16} parent=0 // pred_check_branch
    %13 = sbr.rel (0) target = $region9
  $region8: #{vision_transformer_forward.16} parent=0 // pred_region
    _
  $region9: #{vision_transformer_forward.16} parent=0 // pred_fallthru
    _
  // Predicated region
  $region10: #{vision_transformer_forward.16} parent=0 // pred_check
    _
  $region11: #{vision_transformer_forward.16} parent=0 // pred_check_branch
    %15 = sbr.rel (0) target = $region13
  $region12: #{vision_transformer_forward.16} parent=0 // pred_region
    _
  $region13: #{vision_transformer_forward.16} parent=0 // pred_fallthru
    _
  // Predicated region
  $region14: #{vision_transformer_forward.16} parent=0 // pred_check
    _
  $region15: #{vision_transformer_forward.16} parent=0 // pred_check_branch
    %17 = sbr.rel (0) target = $region17
  $region16: #{vision_transformer_forward.16} parent=0 // pred_region
    _
  $region17: #{vision_transformer_forward.16} parent=0 // pred_fallthru
    _
  // Predicated region
  $region18: #{vision_transformer_forward.16} parent=0 // pred_check
    _
  $region19: #{vision_transformer_forward.16} parent=0 // pred_check_branch
    %19 = sbr.rel (0) target = $region21
  $region20: #{vision_transformer_forward.16} parent=0 // pred_region
    _
  $region21: #{vision_transformer_forward.16} parent=0 // pred_fallthru
    _
  %v20 = vld [vmem:[%s0] sm:$0xf]
  %v21 = vld [vmem:[%s0 + $0x4] sm:$0xf]
  %v22 = vld [vmem:[%s0 + $0x8] sm:$0xf]
  %v23 = vld [vmem:[%s0 + $0xc] sm:$0xf]
  %v24 = vld [vmem:[%s0 + $0x10] sm:$0xf]
  %v25 = vld [vmem:[%s0 + $0x14] sm:$0xf]
  %v26 = vunpack.c.l.bf16 %v20
  %v27 = vunpack.c.l.bf16 %v21
  %v28 = vunpack.c.l.bf16 %v22
  %v29 = vunpack.c.l.bf16 %v23
  %v30 = vunpack.c.l.bf16 %v24
  %v31 = vunpack.c.l.bf16 %v25
  %32 = vadd.xlane.f32.xlu0 %v26
  %v33 = vpop.xlane.xlu0 %32
  %34 = vadd.xlane.f32.xlu0 %v27
  %v35 = vpop.xlane.xlu0 %34
  %36 = vadd.xlane.f32.xlu0 %v28
  %v37 = vpop.xlane.xlu0 %36
  %38 = vadd.xlane.f32.xlu0 %v29
  %v39 = vpop.xlane.xlu0 %38
  %40 = vadd.xlane.f32.xlu0 %v30
  %v41 = vpop.xlane.xlu0 %40
  %42 = vadd.xlane.f32.xlu0 %v31
  %v43 = vpop.xlane.xlu0 %42
  %v44 = vrcp.pop 128.0
  %v45 = vmul.f32 128.0, %v44
  %v46 = vsub.f32 1.0, %v45
  %v47 = vmul.f32 %v44, %v46
  %v48 = vadd.f32 %v44, %v47
  %vm49 = vweird.f32 %v44
  %v50 = vsel %vm49, %v44, %v48
  %v51 = vmul.f32 %v33, %v50
  %v52 = vmul.f32 %v35, %v50
  %v53 = vmul.f32 %v37, %v50
  %v54 = vmul.f32 %v39, %v50
  %v55 = vmul.f32 %v41, %v50
  %v56 = vmul.f32 %v43, %v50
  %v57 = vsub.f32 %v26, %v51
  %v58 = vsub.f32 %v27, %v52
  %v59 = vsub.f32 %v28, %v53
  %v60 = vsub.f32 %v29, %v54
  %v61 = vsub.f32 %v30, %v55
  %v62 = vsub.f32 %v31, %v56
  %v63 = vmul.f32 %v57, %v57
  %v64 = vmul.f32 %v58, %v58
  %v65 = vmul.f32 %v59, %v59
  %v66 = vmul.f32 %v60, %v60
  %v67 = vmul.f32 %v61, %v61
  %v68 = vmul.f32 %v62, %v62
  %69 = vadd.xlane.f32.xlu0 %v63
  %v70 = vpop.xlane.xlu0 %69
  %71 = vadd.xlane.f32.xlu0 %v64
  %v72 = vpop.xlane.xlu0 %71
  %73 = vadd.xlane.f32.xlu0 %v65
  %v74 = vpop.xlane.xlu0 %73
  %75 = vadd.xlane.f32.xlu0 %v66
  %v76 = vpop.xlane.xlu0 %75
  %77 = vadd.xlane.f32.xlu0 %v67
  %v78 = vpop.xlane.xlu0 %77
  %79 = vadd.xlane.f32.xlu0 %v68
  %v80 = vpop.xlane.xlu0 %79
  %v81 = vmul.f32 %v70, %v50
  %v82 = vmul.f32 %v72, %v50
  %v83 = vmul.f32 %v74, %v50
  %v84 = vmul.f32 %v76, %v50
  %v85 = vmul.f32 %v78, %v50
  %v86 = vmul.f32 %v80, %v50
  %v87 = vadd.f32 %v81, 1e-05
  %v88 = vadd.f32 %v82, 1e-05
  %v89 = vadd.f32 %v83, 1e-05
  %v90 = vadd.f32 %v84, 1e-05
  %v91 = vadd.f32 %v85, 1e-05
  %v92 = vadd.f32 %v86, 1e-05
  %v93 = vrsqrt.pop %v87
  %v94 = vmul.f32 %v93, %v87
  %v95 = vmul.f32 %v94, %v93
  %v96 = vmul.f32 0.5, %v95
  %v97 = vsub.f32 1.5, %v96
  %v98 = vmul.f32 %v93, %v97
  %vm99 = vweird.f32 %v87
  %vm100 = vweird.f32 %v93
  %vm101 = vmor %vm99, %vm100
  %v102 = vsel %vm101, %v93, %v98
  %v103 = vrsqrt.pop %v88
  %v104 = vmul.f32 %v103, %v88
  %v105 = vmul.f32 %v104, %v103
  %v106 = vmul.f32 0.5, %v105
  %v107 = vsub.f32 1.5, %v106
  %v108 = vmul.f32 %v103, %v107
  %vm109 = vweird.f32 %v88
  %vm110 = vweird.f32 %v103
  %vm111 = vmor %vm109, %vm110
  %v112 = vsel %vm111, %v103, %v108
  %v113 = vrsqrt.pop %v89
  %v114 = vmul.f32 %v113, %v89
  %v115 = vmul.f32 %v114, %v113
  %v116 = vmul.f32 0.5, %v115
  %v117 = vsub.f32 1.5, %v116
  %v118 = vmul.f32 %v113, %v117
  %vm119 = vweird.f32 %v89
  %vm120 = vweird.f32 %v113
  %vm121 = vmor %vm119, %vm120
  %v122 = vsel %vm121, %v113, %v118
  %v123 = vrsqrt.pop %v90
  %v124 = vmul.f32 %v123, %v90
  %v125 = vmul.f32 %v124, %v123
  %v126 = vmul.f32 0.5, %v125
  %v127 = vsub.f32 1.5, %v126
  %v128 = vmul.f32 %v123, %v127
  %vm129 = vweird.f32 %v90
  %vm130 = vweird.f32 %v123
  %vm131 = vmor %vm129, %vm130
  %v132 = vsel %vm131, %v123, %v128
  %v133 = vrsqrt.pop %v91
  %v134 = vmul.f32 %v133, %v91
  %v135 = vmul.f32 %v134, %v133
  %v136 = vmul.f32 0.5, %v135
  %v137 = vsub.f32 1.5, %v136
  %v138 = vmul.f32 %v133, %v137
  %vm139 = vweird.f32 %v91
  %vm140 = vweird.f32 %v133
  %vm141 = vmor %vm139, %vm140
  %v142 = vsel %vm141, %v133, %v138
  %v143 = vrsqrt.pop %v92
  %v144 = vmul.f32 %v143, %v92
  %v145 = vmul.f32 %v144, %v143
  %v146 = vmul.f32 0.5, %v145
  %v147 = vsub.f32 1.5, %v146
  %v148 = vmul.f32 %v143, %v147
  %vm149 = vweird.f32 %v92
  %vm150 = vweird.f32 %v143
  %vm151 = vmor %vm149, %vm150
  %v152 = vsel %vm151, %v143, %v148
  %v153 = vmul.f32 %v57, %v102
  %v154 = vmul.f32 %v58, %v112
  %v155 = vmul.f32 %v59, %v122
  %v156 = vmul.f32 %v60, %v132
  %v157 = vmul.f32 %v61, %v142
  %v158 = vmul.f32 %v62, %v152
  %v159 = vld [vmem:[%s3] sm:$0x1]
  %v161 = vperm.slane %v159, 0
  %v163 = vmul.f32 %v153, %v161
  %v164 = vmul.f32 %v154, %v161
  %v165 = vmul.f32 %v155, %v161
  %v166 = vmul.f32 %v156, %v161
  %v167 = vmul.f32 %v157, %v161
  %v168 = vmul.f32 %v158, %v161
  %v169 = vld [vmem:[%s4] sm:$0x1]
  %v171 = vperm.slane %v169, 0
  %v173 = vadd.f32 %v163, %v171
  %v174 = vadd.f32 %v164, %v171
  %v175 = vadd.f32 %v165, %v171
  %v176 = vadd.f32 %v166, %v171
  %v177 = vadd.f32 %v167, %v171
  %v178 = vadd.f32 %v168, %v171
  %v179 = vpack.c.bf16 %v174, %v173
  %v180 = vpack.c.bf16 %v176, %v175
  %v181 = vpack.c.bf16 %v178, %v177
  %v182 = vld [vmem:[%s1] sm:$0xff]
  %v183 = vld [vmem:[%s1 + $0x8] sm:$0xf]
  %v184 = vld [vmem:[%s1 + $0xc] sm:$0xff]
  %v185 = vld [vmem:[%s1 + $0x14] sm:$0xf]
  %v186 = vld [vmem:[%s1 + $0x18] sm:$0xff]
  %v187 = vld [vmem:[%s1 + $0x20] sm:$0xf]
  %v188 = vld [vmem:[%s1 + $0x24] sm:$0xff]
  %v189 = vld [vmem:[%s1 + $0x2c] sm:$0xf]
  %v190 = vld [vmem:[%s1 + $0x30] sm:$0xff]
  %v191 = vld [vmem:[%s1 + $0x38] sm:$0xf]
  %v192 = vld [vmem:[%s1 + $0x3c] sm:$0xff]
  %v193 = vld [vmem:[%s1 + $0x44] sm:$0xf]
  %v194 = vld [vmem:[%s1 + $0x48] sm:$0xff]
  %v195 = vld [vmem:[%s1 + $0x50] sm:$0xf]
  %v196 = vld [vmem:[%s1 + $0x54] sm:$0xff]
  %v197 = vld [vmem:[%s1 + $0x5c] sm:$0xf]
  %v198 = vld [vmem:[%s1 + $0x60] sm:$0xff]
  %v199 = vld [vmem:[%s1 + $0x68] sm:$0xf]
  %v200 = vld [vmem:[%s1 + $0x6c] sm:$0xff]
  %v201 = vld [vmem:[%s1 + $0x74] sm:$0xf]
  %v202 = vld [vmem:[%s1 + $0x78] sm:$0xff]
  %v203 = vld [vmem:[%s1 + $0x80] sm:$0xf]
  %v204 = vld [vmem:[%s1 + $0x84] sm:$0xff]
  %v205 = vld [vmem:[%s1 + $0x8c] sm:$0xf]
  %v206 = vld [vmem:[%s1 + $0x90] sm:$0xff]
  %v207 = vld [vmem:[%s1 + $0x98] sm:$0xf]
  %v208 = vld [vmem:[%s1 + $0x9c] sm:$0xff]
  %v209 = vld [vmem:[%s1 + $0xa4] sm:$0xf]
  %v210 = vld [vmem:[%s1 + $0xa8] sm:$0xff]
  %v211 = vld [vmem:[%s1 + $0xb0] sm:$0xf]
  %v212 = vld [vmem:[%s1 + $0xb4] sm:$0xff]
  %v213 = vld [vmem:[%s1 + $0xbc] sm:$0xf]
  %v214 = vld [vmem:[%s2] sm:$0x7]
  %v216 = vperm.slane %v214, 0
  %v217 = vperm.slane %v214, 1
  %v218 = vperm.slane %v214, 2
  %v254 = vunpack.c.l.b16 %v182
  %v255 = vunpack.c.h.b16 %v182
  %v256 = vunpack.c.l.b16 %v183
  %v257 = vunpack.c.l.b16 %v184
  %v258 = vunpack.c.h.b16 %v184
  %v259 = vunpack.c.l.b16 %v185
  %v260 = vunpack.c.l.b16 %v186
  %v261 = vunpack.c.h.b16 %v186
  %v262 = vunpack.c.l.b16 %v187
  %v263 = vunpack.c.l.b16 %v188
  %v264 = vunpack.c.h.b16 %v188
  %v265 = vunpack.c.l.b16 %v189
  %v266 = vunpack.c.l.b16 %v190
  %v267 = vunpack.c.h.b16 %v190
  %v268 = vunpack.c.l.b16 %v191
  %v269 = vunpack.c.l.b16 %v192
  %v270 = vunpack.c.h.b16 %v192
  %v271 = vunpack.c.l.b16 %v193
  %v272 = vunpack.c.l.b16 %v194
  %v273 = vunpack.c.h.b16 %v194
  %v274 = vunpack.c.l.b16 %v195
  %v275 = vunpack.c.l.b16 %v196
  %v276 = vunpack.c.h.b16 %v196
  %v277 = vunpack.c.l.b16 %v197
  %v278 = vunpack.c.l.b16 %v198
  %v279 = vunpack.c.h.b16 %v198
  %v280 = vunpack.c.l.b16 %v199
  %v281 = vunpack.c.l.b16 %v200
  %v282 = vunpack.c.h.b16 %v200
  %v283 = vunpack.c.l.b16 %v201
  %v284 = vunpack.c.l.b16 %v202
  %v285 = vunpack.c.h.b16 %v202
  %v286 = vunpack.c.l.b16 %v203
  %v287 = vunpack.c.l.b16 %v204
  %v288 = vunpack.c.h.b16 %v204
  %v289 = vunpack.c.l.b16 %v205
  %v290 = vunpack.c.l.b16 %v206
  %v291 = vunpack.c.h.b16 %v206
  %v292 = vunpack.c.l.b16 %v207
  %v293 = vunpack.c.l.b16 %v208
  %v294 = vunpack.c.h.b16 %v208
  %v295 = vunpack.c.l.b16 %v209
  %v296 = vunpack.c.l.b16 %v210
  %v297 = vunpack.c.h.b16 %v210
  %v298 = vunpack.c.l.b16 %v211
  %v299 = vunpack.c.l.b16 %v212
  %v300 = vunpack.c.h.b16 %v212
  %v301 = vunpack.c.l.b16 %v213
  %v302 = vpack.c.b16 %v257, %v254
  %v303 = vpack.c.b16 %v258, %v255
  %v304 = vpack.c.b16 %v259, %v256
  %v305 = vpack.c.b16 %v263, %v260
  %v306 = vpack.c.b16 %v264, %v261
  %v307 = vpack.c.b16 %v265, %v262
  %v308 = vpack.c.b16 %v269, %v266
  %v309 = vpack.c.b16 %v270, %v267
  %v310 = vpack.c.b16 %v271, %v268
  %v311 = vpack.c.b16 %v275, %v272
  %v312 = vpack.c.b16 %v276, %v273
  %v313 = vpack.c.b16 %v277, %v274
  %v314 = vpack.c.b16 %v281, %v278
  %v315 = vpack.c.b16 %v282, %v279
  %v316 = vpack.c.b16 %v283, %v280
  %v317 = vpack.c.b16 %v287, %v284
  %v318 = vpack.c.b16 %v288, %v285
  %v319 = vpack.c.b16 %v289, %v286
  %v320 = vpack.c.b16 %v293, %v290
  %v321 = vpack.c.b16 %v294, %v291
  %v322 = vpack.c.b16 %v295, %v292
  %v323 = vpack.c.b16 %v299, %v296
  %v324 = vpack.c.b16 %v300, %v297
  %v325 = vpack.c.b16 %v301, %v298
  %350 = vmatpush.bf16.msra.mxu0 %v323
  %351 = vmatpush.bf16.msra.mxu0 %v320
  %352 = vmatpush.bf16.msra.mxu0 %v317
  %353 = vmatpush.bf16.msra.mxu0 %v314
  %354 = vmatpush.bf16.msra.mxu0 %v311
  %355 = vmatpush.bf16.msra.mxu0 %v308
  %356 = vmatpush.bf16.msra.mxu0 %v305
  %357 = vmatpush.bf16.msra.mxu0 %v302
  %358 = vmatmul.bf16.gmra.mxu0 %v179
  %v359 = vpop.f32.mrf.mxu0
  %v360 = vadd.f32 %v216, %v359
  %v361 = vpop.f32.mrf.mxu0
  %v362 = vadd.f32 %v216, %v361
  %363 = vmatmul.bf16.gmra.mxu0 %v180
  %v364 = vpop.f32.mrf.mxu0
  %v365 = vadd.f32 %v216, %v364
  %v366 = vpop.f32.mrf.mxu0
  %v367 = vadd.f32 %v216, %v366
  %368 = vmatmul.bf16.gmra.mxu0 %v181
  %v369 = vpop.f32.mrf.mxu0
  %v370 = vadd.f32 %v216, %v369
  %v371 = vpop.f32.mrf.mxu0
  %v372 = vadd.f32 %v216, %v371
  %373 = vdwg.mxu0
  %374 = vmatpush.bf16.msra.mxu0 %v324
  %375 = vmatpush.bf16.msra.mxu0 %v321
  %376 = vmatpush.bf16.msra.mxu0 %v318
  %377 = vmatpush.bf16.msra.mxu0 %v315
  %378 = vmatpush.bf16.msra.mxu0 %v312
  %379 = vmatpush.bf16.msra.mxu0 %v309
  %380 = vmatpush.bf16.msra.mxu0 %v306
  %381 = vmatpush.bf16.msra.mxu0 %v303
  %382 = vmatmul.bf16.gmra.mxu0 %v179
  %v383 = vpop.f32.mrf.mxu0
  %v384 = vadd.f32 %v217, %v383
  %v385 = vpop.f32.mrf.mxu0
  %v386 = vadd.f32 %v217, %v385
  %387 = vmatmul.bf16.gmra.mxu0 %v180
  %v388 = vpop.f32.mrf.mxu0
  %v389 = vadd.f32 %v217, %v388
  %v390 = vpop.f32.mrf.mxu0
  %v391 = vadd.f32 %v217, %v390
  %392 = vmatmul.bf16.gmra.mxu0 %v181
  %v393 = vpop.f32.mrf.mxu0
  %v394 = vadd.f32 %v217, %v393
  %v395 = vpop.f32.mrf.mxu0
  %v396 = vadd.f32 %v217, %v395
  %397 = vdwg.mxu0
  %398 = vmatpush.bf16.msra.mxu0 %v325
  %399 = vmatpush.bf16.msra.mxu0 %v322
  %400 = vmatpush.bf16.msra.mxu0 %v319
  %401 = vmatpush.bf16.msra.mxu0 %v316
  %402 = vmatpush.bf16.msra.mxu0 %v313
  %403 = vmatpush.bf16.msra.mxu0 %v310
  %404 = vmatpush.bf16.msra.mxu0 %v307
  %405 = vmatpush.bf16.msra.mxu0 %v304
  %406 = vmatmul.bf16.gmra.mxu0 %v179
  %v407 = vpop.f32.mrf.mxu0
  %v408 = vadd.f32 %v218, %v407
  %v409 = vpop.f32.mrf.mxu0
  %v410 = vadd.f32 %v218, %v409
  %411 = vmatmul.bf16.gmra.mxu0 %v180
  %v412 = vpop.f32.mrf.mxu0
  %v413 = vadd.f32 %v218, %v412
  %v414 = vpop.f32.mrf.mxu0
  %v415 = vadd.f32 %v218, %v414
  %416 = vmatmul.bf16.gmra.mxu0 %v181
  %v417 = vpop.f32.mrf.mxu0
  %v418 = vadd.f32 %v218, %v417
  %v419 = vpop.f32.mrf.mxu0
  %v420 = vadd.f32 %v218, %v419
  %421 = vdwg.mxu0
  %v422 = vpack.c.bf16 %v384, %v360
  %v423 = vpack.c.bf16 %v408, %v408
  %v424 = vpack.c.bf16 %v386, %v362
  %v425 = vpack.c.bf16 %v410, %v410
  %v426 = vpack.c.bf16 %v389, %v365
  %v427 = vpack.c.bf16 %v413, %v413
  %v428 = vpack.c.bf16 %v391, %v367
  %v429 = vpack.c.bf16 %v415, %v415
  %v430 = vpack.c.bf16 %v394, %v370
  %v431 = vpack.c.bf16 %v418, %v418
  %v432 = vpack.c.bf16 %v396, %v372
  %v433 = vpack.c.bf16 %v420, %v420
  %434 = vst [vmem:[%s5] sm:$0xff] %v422
  %435 = vst [vmem:[%s5 + $0x8] sm:$0xf] %v423
  %436 = vst [vmem:[%s5 + $0xc] sm:$0xff] %v424
  %437 = vst [vmem:[%s5 + $0x14] sm:$0xf] %v425
  %438 = vst [vmem:[%s5 + $0x18] sm:$0xff] %v426
  %439 = vst [vmem:[%s5 + $0x20] sm:$0xf] %v427
  %440 = vst [vmem:[%s5 + $0x24] sm:$0xff] %v428
  %441 = vst [vmem:[%s5 + $0x2c] sm:$0xf] %v429
  %442 = vst [vmem:[%s5 + $0x30] sm:$0xff] %v430
  %443 = vst [vmem:[%s5 + $0x38] sm:$0xf] %v431
  %444 = vst [vmem:[%s5 + $0x3c] sm:$0xff] %v432
  %445 = vst [vmem:[%s5 + $0x44] sm:$0xf] %v433
  // Predicated region
  $region22: #{vision_transformer_forward.16} parent=0 // pred_check
    _
  $region23: #{vision_transformer_forward.16} parent=0 // pred_check_branch
    %447 = sbr.rel (0) target = $region25
  $region24: #{vision_transformer_forward.16} parent=0 // pred_region
    _
  $region25: #{vision_transformer_forward.16} parent=0 // pred_fallthru
    _
  // Predicated region
  $region26: #{vision_transformer_forward.16} parent=0 // pred_check
    _
  $region27: #{vision_transformer_forward.16} parent=0 // pred_check_branch
    %449 = sbr.rel (0) target = $region29
  $region28: #{vision_transformer_forward.16} parent=0 // pred_region
    _
  $region29: #{vision_transformer_forward.16} parent=0 // pred_fallthru
    _

// kernel: vision_transformer_forward.17
$region0: #{vision_transformer_forward.17}
  #allocation0 [shape = 'u32[]', space=smem, size = 0x4, offset = 0x4, fixed_abs, tag = 'smem constant byte address 0x4 - core index']
  #allocation1 [shape = 'u32[72,128]{1,0:T(1,128)}', space=vmem, size = 0x9000, scoped, tag = 'internal scratch']
  %s0 = inlined_call_operand.vmem [shape: bf16[2,24,384], index: 0, kind: input, shape index: {}, may-alias: {0,1,2}]
  %s1 = inlined_call_operand.vmem [shape: bf16[2,24,384], index: 1, kind: input, shape index: {}, may-alias: {0,1,2}]
  %s2 = inlined_call_operand.vmem [shape: bf16[2,24,384], index: 2, kind: input, shape index: {}, may-alias: {0,1,2}]
  %s3 = inlined_call_operand.vmem [shape: bf16[2,24,128], index: 3, kind: output, shape index: {}]
  %s4 = sld [smem:[#allocation0]]
  $region168: #{vision_transformer_forward.17} parent=0
    _
  %s6 = ssub.s32 1, %s4
  %s7 = scalar_select 0, %s6, %s4
  $region1: #{vision_transformer_forward.17} parent=0
    #allocation2 [shape = 'u8[12288]{0}', space=vmem, size = 0x3000, scoped, tag = 'input window, operand 0']
    #allocation3 [shape = 'u8[12288]{0}', space=vmem, size = 0x3000, scoped, tag = 'input window, operand 1']
    #allocation4 [shape = 'u8[12288]{0}', space=vmem, size = 0x3000, scoped, tag = 'input window, operand 2']
    loop: start=0, step=1, limit=4
    $region2: #{vision_transformer_forward.17} parent=1 // loop_pre_header
      _
    $region3: #{vision_transformer_forward.17} parent=1 // loop_header
      %s9 = sphi 0, %s13
      %p10 = scmp.ge.s32.totalorder %s9, 4
      %s16 = sphi 0, %s28
      %s17 = sphi 0, %s24
      %s18 = sphi 0, %s16
      %s19 = sphi 0, %s17
      %s20 = sphi 0, %s18
      %s21 = sphi 0, %s19
      %s33 = sphi 0, %s35
      %s36 = sphi 0, %s33
      %s37 = sphi 0, %s36
      %s53 = sphi 0, %s37
      %s59 = sphi 0, %s61
      %s62 = sphi 0, %s59
      %s63 = sphi 0, %s62
      %s79 = sphi 0, %s63
      %s85 = sphi 0, %s87
      %s88 = sphi 0, %s85
      %s89 = sphi 0, %s88
      %s105 = sphi 0, %s89
      %s113 = sphi 0, %s115
      %s116 = sphi 0, %s113
      %s117 = sphi 0, %s116
      %s133 = sphi 0, %s117
    $region4: #{vision_transformer_forward.17} parent=1 // loop_header_branch
      %12 = sbr.rel (%p10) target = $region8
    $region5: #{vision_transformer_forward.17} parent=1 // loop_body
      %s14 = ssub.s32 %s9, 1
      %s15 = ssub.s32 %s9, 2
      %s22 = sadd.s32 1, %s17
      %p23 = scmp.ge.s32.totalorder %s22, 1
      %s24 = scalar_select %p23, 0, %s22
      %s25 = sadd.s32 1, %s16
      %s26 = scalar_select %p23, %s25, %s16
      %p27 = scmp.ge.s32.totalorder %s26, 2
      %s28 = scalar_select %p27, 0, %s26
      %s29 = ssub.s32 %s16, %s28
      %s30 = ssub.s32 %s17, %s24
      %s31 = sor.u32 %s29, %s30
      %p32 = scmp.eq.s32.totalorder %s31, 0
      %s34 = sadd.s32 %s33, 1
      %s35 = scalar_select %p32, %s33, %s34
      %p38 = pneg %p32
      %p39 = scmp.eq.s32.totalorder %s9, 1
      %p40 = por %p38, %p39
      %p41 = scmp.ne.s32.totalorder %s33, %s36
      %p42 = scmp.eq.s32.totalorder %s9, 0
      %p43 = por %p41, %p42
      %p44 = scmp.ne.s32.totalorder %s33, %s36
      %p45 = scmp.eq.s32.totalorder %s14, 1
      %p46 = por %p44, %p45
      %p47 = scmp.ne.s32.totalorder %s36, %s37
      %p48 = scmp.eq.s32.totalorder %s14, 0
      %p49 = por %p47, %p48
      %p50 = scmp.ne.s32.totalorder %s36, %s37
      %p51 = scmp.eq.s32.totalorder %s15, 1
      %p52 = por %p50, %p51
      %p54 = scmp.ne.s32.totalorder %s37, %s53
      %p55 = scmp.eq.s32.totalorder %s15, 0
      %p56 = por %p54, %p55
      %s57 = ssub.s32 %s16, %s28
      %p58 = scmp.eq.s32.totalorder %s57, 0
      %s60 = sadd.s32 %s59, 1
      %s61 = scalar_select %p58, %s59, %s60
      %p64 = pneg %p58
      %p65 = scmp.eq.s32.totalorder %s9, 1
      %p66 = por %p64, %p65
      %p67 = scmp.ne.s32.totalorder %s59, %s62
      %p68 = scmp.eq.s32.totalorder %s9, 0
      %p69 = por %p67, %p68
      %p70 = scmp.ne.s32.totalorder %s59, %s62
      %p71 = scmp.eq.s32.totalorder %s14, 1
      %p72 = por %p70, %p71
      %p73 = scmp.ne.s32.totalorder %s62, %s63
      %p74 = scmp.eq.s32.totalorder %s14, 0
      %p75 = por %p73, %p74
      %p76 = scmp.ne.s32.totalorder %s62, %s63
      %p77 = scmp.eq.s32.totalorder %s15, 1
      %p78 = por %p76, %p77
      %p80 = scmp.ne.s32.totalorder %s63, %s79
      %p81 = scmp.eq.s32.totalorder %s15, 0
      %p82 = por %p80, %p81
      %s83 = ssub.s32 %s16, %s28
      %p84 = scmp.eq.s32.totalorder %s83, 0
      %s86 = sadd.s32 %s85, 1
      %s87 = scalar_select %p84, %s85, %s86
      %p90 = pneg %p84
      %p91 = scmp.eq.s32.totalorder %s9, 1
      %p92 = por %p90, %p91
      %p93 = scmp.ne.s32.totalorder %s85, %s88
      %p94 = scmp.eq.s32.totalorder %s9, 0
      %p95 = por %p93, %p94
      %p96 = scmp.ne.s32.totalorder %s85, %s88
      %p97 = scmp.eq.s32.totalorder %s14, 1
      %p98 = por %p96, %p97
      %p99 = scmp.ne.s32.totalorder %s88, %s89
      %p100 = scmp.eq.s32.totalorder %s14, 0
      %p101 = por %p99, %p100
      %p102 = scmp.ne.s32.totalorder %s88, %s89
      %p103 = scmp.eq.s32.totalorder %s15, 1
      %p104 = por %p102, %p103
      %p106 = scmp.ne.s32.totalorder %s89, %s105
      %p107 = scmp.eq.s32.totalorder %s15, 0
      %p108 = por %p106, %p107
      %s109 = ssub.s32 %s16, %s28
      %s110 = ssub.s32 %s17, %s24
      %s111 = sor.u32 %s109, %s110
      %p112 = scmp.eq.s32.totalorder %s111, 0
      %s114 = sadd.s32 %s113, 1
      %s115 = scalar_select %p112, %s113, %s114
      %p118 = pneg %p112
      %p119 = scmp.eq.s32.totalorder %s9, 1
      %p120 = por %p118, %p119
      %p121 = scmp.ne.s32.totalorder %s113, %s116
      %p122 = scmp.eq.s32.totalorder %s9, 0
      %p123 = por %p121, %p122
      %p124 = scmp.ne.s32.totalorder %s113, %s116
      %p125 = scmp.eq.s32.totalorder %s14, 1
      %p126 = por %p124, %p125
      %p127 = scmp.ne.s32.totalorder %s116, %s117
      %p128 = scmp.eq.s32.totalorder %s14, 0
      %p129 = por %p127, %p128
      %p130 = scmp.ne.s32.totalorder %s116, %s117
      %p131 = scmp.eq.s32.totalorder %s15, 1
      %p132 = por %p130, %p131
      %p134 = scmp.ne.s32.totalorder %s117, %s133
      %p135 = scmp.eq.s32.totalorder %s15, 0
      %p136 = por %p134, %p135
      %p137 = scmp.le.s32.totalorder 1, %s9
      %p138 = scmp.lt.s32.totalorder %s9, 3
      %p139 = pnand %p137, %p138
      %p140 = pneg %p139
      // Predicated region
      $region9: #{vision_transformer_forward.17} parent=5 // pred_check
        _
      $region10: #{vision_transformer_forward.17} parent=5 // pred_check_branch
        %142 = sbr.rel (%p139) target = $region12
      $region11: #{vision_transformer_forward.17} parent=5 // pred_region
        %s143 = ssub.s32 %s9, 1
      $region12: #{vision_transformer_forward.17} parent=5 // pred_fallthru
        _
      %p144 = scmp.lt.s32.totalorder %s9, 2
      // Predicated region
      $region13: #{vision_transformer_forward.17} parent=5 // pred_check
        %p145 = pneg %p144
      $region14: #{vision_transformer_forward.17} parent=5 // pred_check_branch
        %147 = sbr.rel (%p145) target = $region16
      $region15: #{vision_transformer_forward.17} parent=5 // pred_region
        // Predicated region
        $region17: #{vision_transformer_forward.17} parent=15 // pred_check
          %p148 = pneg %p43
        $region18: #{vision_transformer_forward.17} parent=15 // pred_check_branch
          %150 = sbr.rel (%p148) target = $region20
        $region19: #{vision_transformer_forward.17} parent=15 // pred_region
          %s151 = sand.u32 %s33, 1
          %s152 = sand.u32 %s33, 1
          %s153 = smul.addr %s152, 12
          %s154 = scalar_lea.vmem [#allocation2], %s153
          %s155 = smul.u32 3, %s17
          %s156 = smul.addr %s155, 3
          %s157 = smul.addr %s16, 9
          %s158 = sadd.s32 %s156, %s157
          %s159 = smul.addr %s158, 4
          %s160 = scalar_lea.vmem %s0, %s159
          // Predicated region
          $region21: #{vision_transformer_forward.17} parent=19 // pred_check
            _
          $region22: #{vision_transformer_forward.17} parent=19 // pred_check_branch
            %162 = sbr.rel (0) target = $region24
          $region23: #{vision_transformer_forward.17} parent=19 // pred_region
            // Predicated region
            $region25: #{vision_transformer_forward.17} parent=23 // pred_check
              _
            $region26: #{vision_transformer_forward.17} parent=23 // pred_check_branch
              %164 = sbr.rel target = $region28
            $region27: #{vision_transformer_forward.17} parent=23 // pred_region
              // Predicated region
              $region40: #{vision_transformer_forward.17} parent=27 // pred_check
                _
              $region41: #{vision_transformer_forward.17} parent=27 // pred_check_branch
                %184 = sbr.rel (0) target = $region43
              $region42: #{vision_transformer_forward.17} parent=27 // pred_region
                loop: start=0, step=1, limit=1
                $region44: #{vision_transformer_forward.17} parent=42 // loop_pre_header
                  _
                $region45: #{vision_transformer_forward.17} parent=42 // loop_header
                  %s186 = sphi 0, %s190
                  %p187 = scmp.ge.s32.totalorder %s186, 1
                  %s191 = sphi %s160, %s160
                  %s192 = sphi %s154, %s154
                $region46: #{vision_transformer_forward.17} parent=42 // loop_header_branch
                  %189 = sbr.rel (%p187) target = $region50
                $region47: #{vision_transformer_forward.17} parent=42 // loop_body
                  _
                $region48: #{vision_transformer_forward.17} parent=42 // loop_footer
                  %s190 = sadd.s32 1, %s186
                $region49: #{vision_transformer_forward.17} parent=42 // loop_footer_branch
                  %185 = sbr.rel target = $region45
                $region50: #{vision_transformer_forward.17} parent=42 // loop_exit
                  _
                %s194 = ssub.s32 16, 1
                loop: start=0, step=1, limit=1
                $region51: #{vision_transformer_forward.17} parent=42 // loop_pre_header
                  _
                $region52: #{vision_transformer_forward.17} parent=42 // loop_header
                  %s196 = sphi 0, %s200
                  %p197 = scmp.ge.s32.totalorder %s196, 1
                  %s201 = sphi %s160, %s160
                  %s202 = sphi %s154, %s154
                $region53: #{vision_transformer_forward.17} parent=42 // loop_header_branch
                  %199 = sbr.rel (%p197) target = $region57
                $region54: #{vision_transformer_forward.17} parent=42 // loop_body
                  %v203 = vld [vmem:[%s201] sm:%s194]
                  %204 = vst [vmem:[%s202] sm:%s194] %v203
                  %v205 = vld [vmem:[%s201 + $0xc] sm:%s194]
                  %206 = vst [vmem:[%s202 + $0x4] sm:%s194] %v205
                  %v207 = vld [vmem:[%s201 + $0x18] sm:%s194]
                  %208 = vst [vmem:[%s202 + $0x8] sm:%s194] %v207
                $region55: #{vision_transformer_forward.17} parent=42 // loop_footer
                  %s200 = sadd.s32 1, %s196
                $region56: #{vision_transformer_forward.17} parent=42 // loop_footer_branch
                  %195 = sbr.rel target = $region52
                $region57: #{vision_transformer_forward.17} parent=42 // loop_exit
                  _
              $region43: #{vision_transformer_forward.17} parent=27 // pred_fallthru
                _
            $region28: #{vision_transformer_forward.17} parent=23 // pred_fallthru
              _
            // Predicated region
            $region29: #{vision_transformer_forward.17} parent=23 // pred_check
              _
            $region30: #{vision_transformer_forward.17} parent=23 // pred_check_branch
              %166 = sbr.rel (0) target = $region32
            $region31: #{vision_transformer_forward.17} parent=23 // pred_region
              %s168 = ssub.s32 16, 1
              loop: start=0, step=1, limit=1
              $region33: #{vision_transformer_forward.17} parent=31 // loop_pre_header
                _
              $region34: #{vision_transformer_forward.17} parent=31 // loop_header
                %s170 = sphi 0, %s174
                %p171 = scmp.ge.s32.totalorder %s170, 1
                %s175 = sphi %s160, %s160
                %s176 = sphi %s154, %s154
              $region35: #{vision_transformer_forward.17} parent=31 // loop_header_branch
                %173 = sbr.rel (%p171) target = $region39
              $region36: #{vision_transformer_forward.17} parent=31 // loop_body
                %v177 = vld [vmem:[%s175] sm:%s168]
                %178 = vst [vmem:[%s176] sm:%s168] %v177
                %v179 = vld [vmem:[%s175 + $0xc] sm:%s168]
                %180 = vst [vmem:[%s176 + $0x4] sm:%s168] %v179
                %v181 = vld [vmem:[%s175 + $0x18] sm:%s168]
                %182 = vst [vmem:[%s176 + $0x8] sm:%s168] %v181
              $region37: #{vision_transformer_forward.17} parent=31 // loop_footer
                %s174 = sadd.s32 1, %s170
              $region38: #{vision_transformer_forward.17} parent=31 // loop_footer_branch
                %169 = sbr.rel target = $region34
              $region39: #{vision_transformer_forward.17} parent=31 // loop_exit
                _
            $region32: #{vision_transformer_forward.17} parent=23 // pred_fallthru
              _
          $region24: #{vision_transformer_forward.17} parent=19 // pred_fallthru
            _
          %209 = vnop
        $region20: #{vision_transformer_forward.17} parent=15 // pred_fallthru
          _
        // Predicated region
        $region58: #{vision_transformer_forward.17} parent=15 // pred_check
          %p210 = pneg %p69
        $region59: #{vision_transformer_forward.17} parent=15 // pred_check_branch
          %212 = sbr.rel (%p210) target = $region61
        $region60: #{vision_transformer_forward.17} parent=15 // pred_region
          %s213 = sand.u32 %s59, 1
          %s214 = sand.u32 %s59, 1
          %s215 = smul.addr %s214, 12
          %s216 = scalar_lea.vmem [#allocation3], %s215
          %s217 = smul.addr %s16, 9
          %s218 = sadd.s32 1, %s217
          %s219 = smul.addr %s218, 4
          %s220 = scalar_lea.vmem %s1, %s219
          // Predicated region
          $region62: #{vision_transformer_forward.17} parent=60 // pred_check
            _
          $region63: #{vision_transformer_forward.17} parent=60 // pred_check_branch
            %222 = sbr.rel (0) target = $region65
          $region64: #{vision_transformer_forward.17} parent=60 // pred_region
            // Predicated region
            $region66: #{vision_transformer_forward.17} parent=64 // pred_check
              _
            $region67: #{vision_transformer_forward.17} parent=64 // pred_check_branch
              %224 = sbr.rel target = $region69
            $region68: #{vision_transformer_forward.17} parent=64 // pred_region
              // Predicated region
              $region81: #{vision_transformer_forward.17} parent=68 // pred_check
                _
              $region82: #{vision_transformer_forward.17} parent=68 // pred_check_branch
                %244 = sbr.rel (0) target = $region84
              $region83: #{vision_transformer_forward.17} parent=68 // pred_region
                loop: start=0, step=1, limit=1
                $region85: #{vision_transformer_forward.17} parent=83 // loop_pre_header
                  _
                $region86: #{vision_transformer_forward.17} parent=83 // loop_header
                  %s246 = sphi 0, %s250
                  %p247 = scmp.ge.s32.totalorder %s246, 1
                  %s251 = sphi %s220, %s220
                  %s252 = sphi %s216, %s216
                $region87: #{vision_transformer_forward.17} parent=83 // loop_header_branch
                  %249 = sbr.rel (%p247) target = $region91
                $region88: #{vision_transformer_forward.17} parent=83 // loop_body
                  _
                $region89: #{vision_transformer_forward.17} parent=83 // loop_footer
                  %s250 = sadd.s32 1, %s246
                $region90: #{vision_transformer_forward.17} parent=83 // loop_footer_branch
                  %245 = sbr.rel target = $region86
                $region91: #{vision_transformer_forward.17} parent=83 // loop_exit
                  _
                %s254 = ssub.s32 16, 1
                loop: start=0, step=1, limit=1
                $region92: #{vision_transformer_forward.17} parent=83 // loop_pre_header
                  _
                $region93: #{vision_transformer_forward.17} parent=83 // loop_header
                  %s256 = sphi 0, %s260
                  %p257 = scmp.ge.s32.totalorder %s256, 1
                  %s261 = sphi %s220, %s220
                  %s262 = sphi %s216, %s216
                $region94: #{vision_transformer_forward.17} parent=83 // loop_header_branch
                  %259 = sbr.rel (%p257) target = $region98
                $region95: #{vision_transformer_forward.17} parent=83 // loop_body
                  %v263 = vld [vmem:[%s261] sm:%s254]
                  %264 = vst [vmem:[%s262] sm:%s254] %v263
                  %v265 = vld [vmem:[%s261 + $0xc] sm:%s254]
                  %266 = vst [vmem:[%s262 + $0x4] sm:%s254] %v265
                  %v267 = vld [vmem:[%s261 + $0x18] sm:%s254]
                  %268 = vst [vmem:[%s262 + $0x8] sm:%s254] %v267
                $region96: #{vision_transformer_forward.17} parent=83 // loop_footer
                  %s260 = sadd.s32 1, %s256
                $region97: #{vision_transformer_forward.17} parent=83 // loop_footer_branch
                  %255 = sbr.rel target = $region93
                $region98: #{vision_transformer_forward.17} parent=83 // loop_exit
                  _
              $region84: #{vision_transformer_forward.17} parent=68 // pred_fallthru
                _
            $region69: #{vision_transformer_forward.17} parent=64 // pred_fallthru
              _
            // Predicated region
            $region70: #{vision_transformer_forward.17} parent=64 // pred_check
              _
            $region71: #{vision_transformer_forward.17} parent=64 // pred_check_branch
              %226 = sbr.rel (0) target = $region73
            $region72: #{vision_transformer_forward.17} parent=64 // pred_region
              %s228 = ssub.s32 16, 1
              loop: start=0, step=1, limit=1
              $region74: #{vision_transformer_forward.17} parent=72 // loop_pre_header
                _
              $region75: #{vision_transformer_forward.17} parent=72 // loop_header
                %s230 = sphi 0, %s234
                %p231 = scmp.ge.s32.totalorder %s230, 1
                %s235 = sphi %s220, %s220
                %s236 = sphi %s216, %s216
              $region76: #{vision_transformer_forward.17} parent=72 // loop_header_branch
                %233 = sbr.rel (%p231) target = $region80
              $region77: #{vision_transformer_forward.17} parent=72 // loop_body
                %v237 = vld [vmem:[%s235] sm:%s228]
                %238 = vst [vmem:[%s236] sm:%s228] %v237
                %v239 = vld [vmem:[%s235 + $0xc] sm:%s228]
                %240 = vst [vmem:[%s236 + $0x4] sm:%s228] %v239
                %v241 = vld [vmem:[%s235 + $0x18] sm:%s228]
                %242 = vst [vmem:[%s236 + $0x8] sm:%s228] %v241
              $region78: #{vision_transformer_forward.17} parent=72 // loop_footer
                %s234 = sadd.s32 1, %s230
              $region79: #{vision_transformer_forward.17} parent=72 // loop_footer_branch
                %229 = sbr.rel target = $region75
              $region80: #{vision_transformer_forward.17} parent=72 // loop_exit
                _
            $region73: #{vision_transformer_forward.17} parent=64 // pred_fallthru
              _
          $region65: #{vision_transformer_forward.17} parent=60 // pred_fallthru
            _
          %269 = vnop
        $region61: #{vision_transformer_forward.17} parent=15 // pred_fallthru
          _
        // Predicated region
        $region99: #{vision_transformer_forward.17} parent=15 // pred_check
          %p270 = pneg %p95
        $region100: #{vision_transformer_forward.17} parent=15 // pred_check_branch
          %272 = sbr.rel (%p270) target = $region102
        $region101: #{vision_transformer_forward.17} parent=15 // pred_region
          %s273 = sand.u32 %s85, 1
          %s274 = sand.u32 %s85, 1
          %s275 = smul.addr %s274, 12
          %s276 = scalar_lea.vmem [#allocation4], %s275
          %s277 = smul.addr %s16, 9
          %s278 = sadd.s32 2, %s277
          %s279 = smul.addr %s278, 4
          %s280 = scalar_lea.vmem %s2, %s279
          // Predicated region
          $region103: #{vision_transformer_forward.17} parent=101 // pred_check
            _
          $region104: #{vision_transformer_forward.17} parent=101 // pred_check_branch
            %282 = sbr.rel (0) target = $region106
          $region105: #{vision_transformer_forward.17} parent=101 // pred_region
            // Predicated region
            $region107: #{vision_transformer_forward.17} parent=105 // pred_check
              _
            $region108: #{vision_transformer_forward.17} parent=105 // pred_check_branch
              %284 = sbr.rel target = $region110
            $region109: #{vision_transformer_forward.17} parent=105 // pred_region
              // Predicated region
              $region122: #{vision_transformer_forward.17} parent=109 // pred_check
                _
              $region123: #{vision_transformer_forward.17} parent=109 // pred_check_branch
                %304 = sbr.rel (0) target = $region125
              $region124: #{vision_transformer_forward.17} parent=109 // pred_region
                loop: start=0, step=1, limit=1
                $region126: #{vision_transformer_forward.17} parent=124 // loop_pre_header
                  _
                $region127: #{vision_transformer_forward.17} parent=124 // loop_header
                  %s306 = sphi 0, %s310
                  %p307 = scmp.ge.s32.totalorder %s306, 1
                  %s311 = sphi %s280, %s280
                  %s312 = sphi %s276, %s276
                $region128: #{vision_transformer_forward.17} parent=124 // loop_header_branch
                  %309 = sbr.rel (%p307) target = $region132
                $region129: #{vision_transformer_forward.17} parent=124 // loop_body
                  _
                $region130: #{vision_transformer_forward.17} parent=124 // loop_footer
                  %s310 = sadd.s32 1, %s306
                $region131: #{vision_transformer_forward.17} parent=124 // loop_footer_branch
                  %305 = sbr.rel target = $region127
                $region132: #{vision_transformer_forward.17} parent=124 // loop_exit
                  _
                %s314 = ssub.s32 16, 1
                loop: start=0, step=1, limit=1
                $region133: #{vision_transformer_forward.17} parent=124 // loop_pre_header
                  _
                $region134: #{vision_transformer_forward.17} parent=124 // loop_header
                  %s316 = sphi 0, %s320
                  %p317 = scmp.ge.s32.totalorder %s316, 1
                  %s321 = sphi %s280, %s280
                  %s322 = sphi %s276, %s276
                $region135: #{vision_transformer_forward.17} parent=124 // loop_header_branch
                  %319 = sbr.rel (%p317) target = $region139
                $region136: #{vision_transformer_forward.17} parent=124 // loop_body
                  %v323 = vld [vmem:[%s321] sm:%s314]
                  %324 = vst [vmem:[%s322] sm:%s314] %v323
                  %v325 = vld [vmem:[%s321 + $0xc] sm:%s314]
                  %326 = vst [vmem:[%s322 + $0x4] sm:%s314] %v325
                  %v327 = vld [vmem:[%s321 + $0x18] sm:%s314]
                  %328 = vst [vmem:[%s322 + $0x8] sm:%s314] %v327
                $region137: #{vision_transformer_forward.17} parent=124 // loop_footer
                  %s320 = sadd.s32 1, %s316
                $region138: #{vision_transformer_forward.17} parent=124 // loop_footer_branch
                  %315 = sbr.rel target = $region134
                $region139: #{vision_transformer_forward.17} parent=124 // loop_exit
                  _
              $region125: #{vision_transformer_forward.17} parent=109 // pred_fallthru
                _
            $region110: #{vision_transformer_forward.17} parent=105 // pred_fallthru
              _
            // Predicated region
            $region111: #{vision_transformer_forward.17} parent=105 // pred_check
              _
            $region112: #{vision_transformer_forward.17} parent=105 // pred_check_branch
              %286 = sbr.rel (0) target = $region114
            $region113: #{vision_transformer_forward.17} parent=105 // pred_region
              %s288 = ssub.s32 16, 1
              loop: start=0, step=1, limit=1
              $region115: #{vision_transformer_forward.17} parent=113 // loop_pre_header
                _
              $region116: #{vision_transformer_forward.17} parent=113 // loop_header
                %s290 = sphi 0, %s294
                %p291 = scmp.ge.s32.totalorder %s290, 1
                %s295 = sphi %s280, %s280
                %s296 = sphi %s276, %s276
              $region117: #{vision_transformer_forward.17} parent=113 // loop_header_branch
                %293 = sbr.rel (%p291) target = $region121
              $region118: #{vision_transformer_forward.17} parent=113 // loop_body
                %v297 = vld [vmem:[%s295] sm:%s288]
                %298 = vst [vmem:[%s296] sm:%s288] %v297
                %v299 = vld [vmem:[%s295 + $0xc] sm:%s288]
                %300 = vst [vmem:[%s296 + $0x4] sm:%s288] %v299
                %v301 = vld [vmem:[%s295 + $0x18] sm:%s288]
                %302 = vst [vmem:[%s296 + $0x8] sm:%s288] %v301
              $region119: #{vision_transformer_forward.17} parent=113 // loop_footer
                %s294 = sadd.s32 1, %s290
              $region120: #{vision_transformer_forward.17} parent=113 // loop_footer_branch
                %289 = sbr.rel target = $region116
              $region121: #{vision_transformer_forward.17} parent=113 // loop_exit
                _
            $region114: #{vision_transformer_forward.17} parent=105 // pred_fallthru
              _
          $region106: #{vision_transformer_forward.17} parent=101 // pred_fallthru
            _
          %329 = vnop
        $region102: #{vision_transformer_forward.17} parent=15 // pred_fallthru
          _
      $region16: #{vision_transformer_forward.17} parent=5 // pred_fallthru
        _
      %p330 = scmp.le.s32.totalorder 1, %s9
      %p331 = scmp.lt.s32.totalorder %s9, 3
      %p332 = pnand %p330, %p331
      %p333 = pneg %p332
      // Predicated region
      $region140: #{vision_transformer_forward.17} parent=5 // pred_check
        _
      $region141: #{vision_transformer_forward.17} parent=5 // pred_check_branch
        %335 = sbr.rel (%p332) target = $region143
      $region142: #{vision_transformer_forward.17} parent=5 // pred_region
        %s336 = ssub.s32 %s9, 1
        %s337 = sand.u32 %s36, 1
        %s338 = sand.u32 %s36, 1
        %s339 = smul.addr %s338, 12
        %s340 = scalar_lea.vmem [#allocation2], %s339
        // Predicated region
        $region144: #{vision_transformer_forward.17} parent=142 // pred_check
          %p341 = pneg %p49
        $region145: #{vision_transformer_forward.17} parent=142 // pred_check_branch
          %343 = sbr.rel (%p341) target = $region147
        $region146: #{vision_transformer_forward.17} parent=142 // pred_region
          _
        $region147: #{vision_transformer_forward.17} parent=142 // pred_fallthru
          _
        %s344 = sand.u32 %s62, 1
        %s345 = sand.u32 %s62, 1
        %s346 = smul.addr %s345, 12
        %s347 = scalar_lea.vmem [#allocation3], %s346
        // Predicated region
        $region148: #{vision_transformer_forward.17} parent=142 // pred_check
          %p348 = pneg %p75
        $region149: #{vision_transformer_forward.17} parent=142 // pred_check_branch
          %350 = sbr.rel (%p348) target = $region151
        $region150: #{vision_transformer_forward.17} parent=142 // pred_region
          _
        $region151: #{vision_transformer_forward.17} parent=142 // pred_fallthru
          _
        %s351 = sand.u32 %s88, 1
        %s352 = sand.u32 %s88, 1
        %s353 = smul.addr %s352, 12
        %s354 = scalar_lea.vmem [#allocation4], %s353
        // Predicated region
        $region152: #{vision_transformer_forward.17} parent=142 // pred_check
          %p355 = pneg %p101
        $region153: #{vision_transformer_forward.17} parent=142 // pred_check_branch
          %357 = sbr.rel (%p355) target = $region155
        $region154: #{vision_transformer_forward.17} parent=142 // pred_region
          _
        $region155: #{vision_transformer_forward.17} parent=142 // pred_fallthru
          _
        %s358 = sand.u32 %s36, 1
        %s359 = sand.u32 %s36, 1
        %s360 = smul.addr %s359, 12
        %s361 = scalar_lea.vmem [#allocation2], %s360
        %p362 = pneg %p49
        %p363 = pneg %p46
        %s364 = sand.u32 %s62, 1
        %s365 = sand.u32 %s62, 1
        %s366 = smul.addr %s365, 12
        %s367 = scalar_lea.vmem [#allocation3], %s366
        %p368 = pneg %p75
        %p369 = pneg %p72
        %s370 = sand.u32 %s88, 1
        %s371 = sand.u32 %s88, 1
        %s372 = smul.addr %s371, 12
        %s373 = scalar_lea.vmem [#allocation4], %s372
        %p374 = pneg %p101
        %p375 = pneg %p98
        %p376 = pneg %p129
        %p377 = pneg %p126
        %s378 = smul.u32 3, %s19
        %p379 = scmp.lt.s32.totalorder %s18, 1
        %s380 = scalar_select %p379, %s18, 1
        %p381 = scmp.lt.s32.totalorder %s378, 2
        %s382 = scalar_select %p381, %s378, 2
        %s383 = smul.addr %s380, 3
        %s384 = sadd.s32 %s382, %s383
        %s385 = smul.addr %s384, 4
        %s386 = scalar_lea.vmem %s3, %s385
        %s387 = smul.u32 3, %s19
        %s388 = smul.u32 3, %s19
        %p389 = scmp.lt.s32.totalorder %s18, 1
        %s390 = scalar_select %p389, %s18, 1
        %p391 = scmp.lt.s32.totalorder %s388, 2
        %s392 = scalar_select %p391, %s388, 2
        %s393 = smul.addr %s390, 3
        %s394 = sadd.s32 %s392, %s393
        %s395 = smul.addr %s394, 4
        %s396 = scalar_lea.vmem %s3, %s395
        %s397 = smul.u32 3, %s19
        %v399 = vld [vmem:[%s340] sm:$0xf]
        %v400 = vld [vmem:[%s340 + $0x4] sm:$0xf]
        %v401 = vld [vmem:[%s340 + $0x8] sm:$0xf]
        %v402 = vld [vmem:[%s347] sm:$0xf]
        %v403 = vld [vmem:[%s347 + $0x4] sm:$0xf]
        %v404 = vld [vmem:[%s347 + $0x8] sm:$0xf]
        %v405 = vld [vmem:[%s354] sm:$0xf]
        %v406 = vld [vmem:[%s354 + $0x4] sm:$0xf]
        %v407 = vld [vmem:[%s354 + $0x8] sm:$0xf]
        %v408 = vlaneseq
        %v409 = vand.u32 %v408, 127
        %vm410 = vcmp.lt.s32.totalorder %v409, 17
        %v414 = vunpack.c.l.b16 %v399
        %v415 = vunpack.c.l.b16 %v400
        %v416 = vunpack.c.l.b16 %v401
        %v417 = vpack.c.b16 %v415, %v414
        %v418 = vpack.c.b16 %v416, %v416
        %v422 = vunpack.c.l.b16 %v402
        %v423 = vunpack.c.l.b16 %v403
        %v424 = vunpack.c.l.b16 %v404
        %v425 = vpack.c.b16 %v423, %v422
        %v426 = vpack.c.b16 %v424, %v424
        %vm427 = vcmask 261120
        %v429 = vsel %vm427, %v417, 0
        %v432 = vsel %vm427, %v418, 0
        %v435 = vsel %vm427, %v425, 0
        %v438 = vsel %vm427, %v426, 0
        %440 = vmatpush.bf16.xpose.msra.mxu0 0
        %441 = vmatpush.bf16.xpose.msra.mxu0 0
        %442 = vmatpush.bf16.xpose.msra.mxu0 0
        %443 = vmatpush.bf16.xpose.msra.mxu0 0
        %444 = vmatpush.bf16.xpose.msra.mxu0 0
        %445 = vmatpush.bf16.xpose.msra.mxu0 0
        %446 = vmatpush.bf16.xpose.msra.mxu0 %v438
        %447 = vmatpush.bf16.xpose.msra.mxu0 %v435
        %448 = vmatmul.bf16.gmra.mxu0 %v429
        %v449 = vpop.f32.mrf.mxu0
        %v450 = vadd.f32 0.0, %v449
        %v451 = vpop.f32.mrf.mxu0
        %v452 = vadd.f32 0.0, %v451
        %453 = vmatmul.bf16.gmra.mxu0 %v432
        %v454 = vpop.f32.mrf.mxu0
        %v455 = vadd.f32 0.0, %v454
        %v456 = vpop.f32.mrf.mxu0
        %457 = vdwg.mxu0
        %v458 = vmul.f32 %v450, 0.17677669
        %v459 = vmul.f32 %v452, 0.17677669
        %v460 = vmul.f32 %v455, 0.17677669
        %v461 = vsel %vm410, %v458, -1e+30
        %v462 = vsel %vm410, %v459, -1e+30
        %v463 = vsel %vm410, %v460, -1e+30
        %vm464 = vcmask 195584
        %v465 = vsel %vm464, %v461, -inf
        %466 = vmax.xlane.f32.xlu0 %v465
        %v467 = vpop.xlane.xlu0 %466
        %v468 = vsel %vm464, %v462, -inf
        %469 = vmax.xlane.f32.xlu0 %v468
        %v470 = vpop.xlane.xlu0 %469
        %v471 = vsel %vm464, %v463, -inf
        %472 = vmax.xlane.f32.xlu0 %v471
        %v473 = vpop.xlane.xlu0 %472
        %v474 = vsub.f32 %v461, %v467
        %v475 = vsub.f32 %v462, %v470
        %v476 = vsub.f32 %v463, %v473
        %v477 = vmul.f32 %v474, 1.442695
        %v478 = vpow.pop %v477
        %v479 = vmul.f32 %v475, 1.442695
        %v480 = vpow.pop %v479
        %v481 = vmul.f32 %v476, 1.442695
        %v482 = vpow.pop %v481
        %v483 = vsel %vm464, %v478, 0.0
        %484 = vadd.xlane.f32.xlu0 %v483
        %v485 = vpop.xlane.xlu0 %484
        %v486 = vsel %vm464, %v480, 0.0
        %487 = vadd.xlane.f32.xlu0 %v486
        %v488 = vpop.xlane.xlu0 %487
        %v489 = vsel %vm464, %v482, 0.0
        %490 = vadd.xlane.f32.xlu0 %v489
        %v491 = vpop.xlane.xlu0 %490
        %v492 = vrcp.pop %v485
        %v493 = vrcp.pop %v488
        %v494 = vrcp.pop %v491
        %v495 = vmul.f32 %v478, %v492
        %v496 = vmul.f32 %v480, %v493
        %v497 = vmul.f32 %v482, %v494
        %v498 = vpack.c.bf16 %v496, %v495
        %v499 = vpack.c.bf16 %v497, %v497
        %v503 = vunpack.c.l.b16 %v405
        %v504 = vunpack.c.l.b16 %v406
        %v505 = vunpack.c.l.b16 %v407
        %v506 = vpack.c.b16 %v504, %v503
        %v507 = vpack.c.b16 %v505, %v505
        %v510 = vsel %vm464, %v498, 0
        %v513 = vsel %vm464, %v499, 0
        %vm515 = vcmask 1043456
        %v517 = vsel %vm515, %v507, 0
        %519 = vmatpush.bf16.msra.mxu0 0
        %520 = vmatpush.bf16.msra.mxu0 0
        %521 = vmatpush.bf16.msra.mxu0 0
        %522 = vmatpush.bf16.msra.mxu0 0
        %523 = vmatpush.bf16.msra.mxu0 0
        %524 = vmatpush.bf16.msra.mxu0 0
        %525 = vmatpush.bf16.msra.mxu0 %v517
        %526 = vmatpush.bf16.msra.mxu0 %v506
        %527 = vmatmul.bf16.gmra.mxu0 %v510
        %v528 = vpop.f32.mrf.mxu0
        %v529 = vadd.f32 0.0, %v528
        %v530 = vpop.f32.mrf.mxu0
        %v531 = vadd.f32 0.0, %v530
        %532 = vmatmul.bf16.gmra.mxu0 %v513
        %v533 = vpop.f32.mrf.mxu0
        %v534 = vadd.f32 0.0, %v533
        %v535 = vpop.f32.mrf.mxu0
        %536 = vdwg.mxu0
        %v537 = vpack.c.bf16 %v529, %v529
        %v538 = vpack.c.bf16 %v531, %v531
        %v539 = vpack.c.bf16 %v534, %v534
        %vm540 = vcmask 257024
        %541 = vst.msk [vmem:[%s396] sm:$0xf] %vm540, %v537
        %542 = vst.msk [vmem:[%s396 + $0x4] sm:$0xf] %vm540, %v538
        %543 = vst.msk [vmem:[%s396 + $0x8] sm:$0xf] %vm540, %v539
        %544 = vrot.lane.b32.xlu0 %v417, 96
        %v545 = vpop.permute.xlu0 %544
        %546 = vrot.lane.b32.xlu0 %v418, 96
        %v547 = vpop.permute.xlu0 %546
        %548 = vrot.lane.b32.xlu0 %v425, 96
        %v549 = vpop.permute.xlu0 %548
        %550 = vrot.lane.b32.xlu0 %v426, 96
        %v551 = vpop.permute.xlu0 %550
        %v553 = vsel %vm427, %v545, 0
        %v556 = vsel %vm427, %v547, 0
        %v559 = vsel %vm427, %v549, 0
        %v562 = vsel %vm427, %v551, 0
        %564 = vmatpush.bf16.xpose.msra.mxu0 0
        %565 = vmatpush.bf16.xpose.msra.mxu0 0
        %566 = vmatpush.bf16.xpose.msra.mxu0 0
        %567 = vmatpush.bf16.xpose.msra.mxu0 0
        %568 = vmatpush.bf16.xpose.msra.mxu0 0
        %569 = vmatpush.bf16.xpose.msra.mxu0 0
        %570 = vmatpush.bf16.xpose.msra.mxu0 %v562
        %571 = vmatpush.bf16.xpose.msra.mxu0 %v559
        %572 = vmatmul.bf16.gmra.mxu0 %v553
        %v573 = vpop.f32.mrf.mxu0
        %v574 = vadd.f32 0.0, %v573
        %v575 = vpop.f32.mrf.mxu0
        %v576 = vadd.f32 0.0, %v575
        %577 = vmatmul.bf16.gmra.mxu0 %v556
        %v578 = vpop.f32.mrf.mxu0
        %v579 = vadd.f32 0.0, %v578
        %v580 = vpop.f32.mrf.mxu0
        %581 = vdwg.mxu0
        %v582 = vmul.f32 %v574, 0.17677669
        %v583 = vmul.f32 %v576, 0.17677669
        %v584 = vmul.f32 %v579, 0.17677669
        %v585 = vsel %vm410, %v582, -1e+30
        %v586 = vsel %vm410, %v583, -1e+30
        %v587 = vsel %vm410, %v584, -1e+30
        %v588 = vsel %vm464, %v585, -inf
        %589 = vmax.xlane.f32.xlu0 %v588
        %v590 = vpop.xlane.xlu0 %589
        %v591 = vsel %vm464, %v586, -inf
        %592 = vmax.xlane.f32.xlu0 %v591
        %v593 = vpop.xlane.xlu0 %592
        %v594 = vsel %vm464, %v587, -inf
        %595 = vmax.xlane.f32.xlu0 %v594
        %v596 = vpop.xlane.xlu0 %595
        %v597 = vsub.f32 %v585, %v590
        %v598 = vsub.f32 %v586, %v593
        %v599 = vsub.f32 %v587, %v596
        %v600 = vmul.f32 %v597, 1.442695
        %v601 = vpow.pop %v600
        %v602 = vmul.f32 %v598, 1.442695
        %v603 = vpow.pop %v602
        %v604 = vmul.f32 %v599, 1.442695
        %v605 = vpow.pop %v604
        %v606 = vsel %vm464, %v601, 0.0
        %607 = vadd.xlane.f32.xlu0 %v606
        %v608 = vpop.xlane.xlu0 %607
        %v609 = vsel %vm464, %v603, 0.0
        %610 = vadd.xlane.f32.xlu0 %v609
        %v611 = vpop.xlane.xlu0 %610
        %v612 = vsel %vm464, %v605, 0.0
        %613 = vadd.xlane.f32.xlu0 %v612
        %v614 = vpop.xlane.xlu0 %613
        %v615 = vrcp.pop %v608
        %v616 = vrcp.pop %v611
        %v617 = vrcp.pop %v614
        %v618 = vmul.f32 %v601, %v615
        %v619 = vmul.f32 %v603, %v616
        %v620 = vmul.f32 %v605, %v617
        %v621 = vpack.c.bf16 %v619, %v618
        %v622 = vpack.c.bf16 %v620, %v620
        %623 = vrot.lane.b32.xlu0 %v506, 96
        %v624 = vpop.permute.xlu0 %623
        %625 = vrot.lane.b32.xlu0 %v507, 96
        %v626 = vpop.permute.xlu0 %625
        %v629 = vsel %vm464, %v621, 0
        %v632 = vsel %vm464, %v622, 0
        %v635 = vsel %vm515, %v626, 0
        %637 = vmatpush.bf16.msra.mxu0 0
        %638 = vmatpush.bf16.msra.mxu0 0
        %639 = vmatpush.bf16.msra.mxu0 0
        %640 = vmatpush.bf16.msra.mxu0 0
        %641 = vmatpush.bf16.msra.mxu0 0
        %642 = vmatpush.bf16.msra.mxu0 0
        %643 = vmatpush.bf16.msra.mxu0 %v635
        %644 = vmatpush.bf16.msra.mxu0 %v624
        %645 = vmatmul.bf16.gmra.mxu0 %v629
        %v646 = vpop.f32.mrf.mxu0
        %v647 = vadd.f32 0.0, %v646
        %v648 = vpop.f32.mrf.mxu0
        %v649 = vadd.f32 0.0, %v648
        %650 = vmatmul.bf16.gmra.mxu0 %v632
        %v651 = vpop.f32.mrf.mxu0
        %v652 = vadd.f32 0.0, %v651
        %v653 = vpop.f32.mrf.mxu0
        %654 = vdwg.mxu0
        %v655 = vpack.c.bf16 %v647, %v647
        %v656 = vpack.c.bf16 %v649, %v649
        %v657 = vpack.c.bf16 %v652, %v652
        %661 = vrot.lane.b32.xlu0 %v655, 32
        %v662 = vpop.permute.xlu0 %661
        %663 = vrot.lane.b32.xlu0 %v656, 32
        %v664 = vpop.permute.xlu0 %663
        %665 = vrot.lane.b32.xlu0 %v657, 32
        %v666 = vpop.permute.xlu0 %665
        %vm670 = vcmask 519424
        %671 = vst.msk [vmem:[%s396] sm:$0xf] %vm670, %v662
        %672 = vst.msk [vmem:[%s396 + $0x4] sm:$0xf] %vm670, %v664
        %673 = vst.msk [vmem:[%s396 + $0x8] sm:$0xf] %vm670, %v666
        %674 = vrot.lane.b32.xlu0 %v417, 64
        %v675 = vpop.permute.xlu0 %674
        %676 = vrot.lane.b32.xlu0 %v418, 64
        %v677 = vpop.permute.xlu0 %676
        %678 = vrot.lane.b32.xlu0 %v425, 64
        %v679 = vpop.permute.xlu0 %678
        %680 = vrot.lane.b32.xlu0 %v426, 64
        %v681 = vpop.permute.xlu0 %680
        %v683 = vsel %vm427, %v675, 0
        %v686 = vsel %vm427, %v677, 0
        %v689 = vsel %vm427, %v679, 0
        %v692 = vsel %vm427, %v681, 0
        %694 = vmatpush.bf16.xpose.msra.mxu0 0
        %695 = vmatpush.bf16.xpose.msra.mxu0 0
        %696 = vmatpush.bf16.xpose.msra.mxu0 0
        %697 = vmatpush.bf16.xpose.msra.mxu0 0
        %698 = vmatpush.bf16.xpose.msra.mxu0 0
        %699 = vmatpush.bf16.xpose.msra.mxu0 0
        %700 = vmatpush.bf16.xpose.msra.mxu0 %v692
        %701 = vmatpush.bf16.xpose.msra.mxu0 %v689
        %702 = vmatmul.bf16.gmra.mxu0 %v683
        %v703 = vpop.f32.mrf.mxu0
        %v704 = vadd.f32 0.0, %v703
        %v705 = vpop.f32.mrf.mxu0
        %v706 = vadd.f32 0.0, %v705
        %707 = vmatmul.bf16.gmra.mxu0 %v686
        %v708 = vpop.f32.mrf.mxu0
        %v709 = vadd.f32 0.0, %v708
        %v710 = vpop.f32.mrf.mxu0
        %711 = vdwg.mxu0
        %v712 = vmul.f32 %v704, 0.17677669
        %v713 = vmul.f32 %v706, 0.17677669
        %v714 = vmul.f32 %v709, 0.17677669
        %v715 = vsel %vm410, %v712, -1e+30
        %v716 = vsel %vm410, %v713, -1e+30
        %v717 = vsel %vm410, %v714, -1e+30
        %v718 = vsel %vm464, %v715, -inf
        %719 = vmax.xlane.f32.xlu0 %v718
        %v720 = vpop.xlane.xlu0 %719
        %v721 = vsel %vm464, %v716, -inf
        %722 = vmax.xlane.f32.xlu0 %v721
        %v723 = vpop.xlane.xlu0 %722
        %v724 = vsel %vm464, %v717, -inf
        %725 = vmax.xlane.f32.xlu0 %v724
        %v726 = vpop.xlane.xlu0 %725
        %v727 = vsub.f32 %v715, %v720
        %v728 = vsub.f32 %v716, %v723
        %v729 = vsub.f32 %v717, %v726
        %v730 = vmul.f32 %v727, 1.442695
        %v731 = vpow.pop %v730
        %v732 = vmul.f32 %v728, 1.442695
        %v733 = vpow.pop %v732
        %v734 = vmul.f32 %v729, 1.442695
        %v735 = vpow.pop %v734
        %v736 = vsel %vm464, %v731, 0.0
        %737 = vadd.xlane.f32.xlu0 %v736
        %v738 = vpop.xlane.xlu0 %737
        %v739 = vsel %vm464, %v733, 0.0
        %740 = vadd.xlane.f32.xlu0 %v739
        %v741 = vpop.xlane.xlu0 %740
        %v742 = vsel %vm464, %v735, 0.0
        %743 = vadd.xlane.f32.xlu0 %v742
        %v744 = vpop.xlane.xlu0 %743
        %v745 = vrcp.pop %v738
        %v746 = vrcp.pop %v741
        %v747 = vrcp.pop %v744
        %v748 = vmul.f32 %v731, %v745
        %v749 = vmul.f32 %v733, %v746
        %v750 = vmul.f32 %v735, %v747
        %v751 = vpack.c.bf16 %v749, %v748
        %v752 = vpack.c.bf16 %v750, %v750
        %753 = vrot.lane.b32.xlu0 %v506, 64
        %v754 = vpop.permute.xlu0 %753
        %755 = vrot.lane.b32.xlu0 %v507, 64
        %v756 = vpop.permute.xlu0 %755
        %v759 = vsel %vm464, %v751, 0
        %v762 = vsel %vm464, %v752, 0
        %v765 = vsel %vm515, %v756, 0
        %767 = vmatpush.bf16.msra.mxu0 0
        %768 = vmatpush.bf16.msra.mxu0 0
        %769 = vmatpush.bf16.msra.mxu0 0
        %770 = vmatpush.bf16.msra.mxu0 0
        %771 = vmatpush.bf16.msra.mxu0 0
        %772 = vmatpush.bf16.msra.mxu0 0
        %773 = vmatpush.bf16.msra.mxu0 %v765
        %774 = vmatpush.bf16.msra.mxu0 %v754
        %775 = vmatmul.bf16.gmra.mxu0 %v759
        %v776 = vpop.f32.mrf.mxu0
        %v777 = vadd.f32 0.0, %v776
        %v778 = vpop.f32.mrf.mxu0
        %v779 = vadd.f32 0.0, %v778
        %780 = vmatmul.bf16.gmra.mxu0 %v762
        %v781 = vpop.f32.mrf.mxu0
        %v782 = vadd.f32 0.0, %v781
        %v783 = vpop.f32.mrf.mxu0
        %784 = vdwg.mxu0
        %v785 = vpack.c.bf16 %v777, %v777
        %v786 = vpack.c.bf16 %v779, %v779
        %v787 = vpack.c.bf16 %v782, %v782
        %791 = vrot.lane.b32.xlu0 %v785, 64
        %v792 = vpop.permute.xlu0 %791
        %793 = vrot.lane.b32.xlu0 %v786, 64
        %v794 = vpop.permute.xlu0 %793
        %795 = vrot.lane.b32.xlu0 %v787, 64
        %v796 = vpop.permute.xlu0 %795
        %vm800 = vcmask 781824
        %801 = vst.msk [vmem:[%s396] sm:$0xf] %vm800, %v792
        %802 = vst.msk [vmem:[%s396 + $0x4] sm:$0xf] %vm800, %v794
        %803 = vst.msk [vmem:[%s396 + $0x8] sm:$0xf] %vm800, %v796
        %804 = vrot.lane.b32.xlu0 %v417, 32
        %v805 = vpop.permute.xlu0 %804
        %806 = vrot.lane.b32.xlu0 %v418, 32
        %v807 = vpop.permute.xlu0 %806
        %808 = vrot.lane.b32.xlu0 %v425, 32
        %v809 = vpop.permute.xlu0 %808
        %810 = vrot.lane.b32.xlu0 %v426, 32
        %v811 = vpop.permute.xlu0 %810
        %v813 = vsel %vm427, %v805, 0
        %v816 = vsel %vm427, %v807, 0
        %v819 = vsel %vm427, %v809, 0
        %v822 = vsel %vm427, %v811, 0
        %824 = vmatpush.bf16.xpose.msra.mxu0 0
        %825 = vmatpush.bf16.xpose.msra.mxu0 0
        %826 = vmatpush.bf16.xpose.msra.mxu0 0
        %827 = vmatpush.bf16.xpose.msra.mxu0 0
        %828 = vmatpush.bf16.xpose.msra.mxu0 0
        %829 = vmatpush.bf16.xpose.msra.mxu0 0
        %830 = vmatpush.bf16.xpose.msra.mxu0 %v822
        %831 = vmatpush.bf16.xpose.msra.mxu0 %v819
        %832 = vmatmul.bf16.gmra.mxu0 %v813
        %v833 = vpop.f32.mrf.mxu0
        %v834 = vadd.f32 0.0, %v833
        %v835 = vpop.f32.mrf.mxu0
        %v836 = vadd.f32 0.0, %v835
        %837 = vmatmul.bf16.gmra.mxu0 %v816
        %v838 = vpop.f32.mrf.mxu0
        %v839 = vadd.f32 0.0, %v838
        %v840 = vpop.f32.mrf.mxu0
        %841 = vdwg.mxu0
        %v842 = vmul.f32 %v834, 0.17677669
        %v843 = vmul.f32 %v836, 0.17677669
        %v844 = vmul.f32 %v839, 0.17677669
        %v845 = vsel %vm410, %v842, -1e+30
        %v846 = vsel %vm410, %v843, -1e+30
        %v847 = vsel %vm410, %v844, -1e+30
        %v848 = vsel %vm464, %v845, -inf
        %849 = vmax.xlane.f32.xlu0 %v848
        %v850 = vpop.xlane.xlu0 %849
        %v851 = vsel %vm464, %v846, -inf
        %852 = vmax.xlane.f32.xlu0 %v851
        %v853 = vpop.xlane.xlu0 %852
        %v854 = vsel %vm464, %v847, -inf
        %855 = vmax.xlane.f32.xlu0 %v854
        %v856 = vpop.xlane.xlu0 %855
        %v857 = vsub.f32 %v845, %v850
        %v858 = vsub.f32 %v846, %v853
        %v859 = vsub.f32 %v847, %v856
        %v860 = vmul.f32 %v857, 1.442695
        %v861 = vpow.pop %v860
        %v862 = vmul.f32 %v858, 1.442695
        %v863 = vpow.pop %v862
        %v864 = vmul.f32 %v859, 1.442695
        %v865 = vpow.pop %v864
        %v866 = vsel %vm464, %v861, 0.0
        %867 = vadd.xlane.f32.xlu0 %v866
        %v868 = vpop.xlane.xlu0 %867
        %v869 = vsel %vm464, %v863, 0.0
        %870 = vadd.xlane.f32.xlu0 %v869
        %v871 = vpop.xlane.xlu0 %870
        %v872 = vsel %vm464, %v865, 0.0
        %873 = vadd.xlane.f32.xlu0 %v872
        %v874 = vpop.xlane.xlu0 %873
        %v875 = vrcp.pop %v868
        %v876 = vrcp.pop %v871
        %v877 = vrcp.pop %v874
        %v878 = vmul.f32 %v861, %v875
        %v879 = vmul.f32 %v863, %v876
        %v880 = vmul.f32 %v865, %v877
        %v881 = vpack.c.bf16 %v879, %v878
        %v882 = vpack.c.bf16 %v880, %v880
        %883 = vrot.lane.b32.xlu0 %v506, 32
        %v884 = vpop.permute.xlu0 %883
        %885 = vrot.lane.b32.xlu0 %v507, 32
        %v886 = vpop.permute.xlu0 %885
        %v889 = vsel %vm464, %v881, 0
        %v892 = vsel %vm464, %v882, 0
        %v895 = vsel %vm515, %v886, 0
        %897 = vmatpush.bf16.msra.mxu0 0
        %898 = vmatpush.bf16.msra.mxu0 0
        %899 = vmatpush.bf16.msra.mxu0 0
        %900 = vmatpush.bf16.msra.mxu0 0
        %901 = vmatpush.bf16.msra.mxu0 0
        %902 = vmatpush.bf16.msra.mxu0 0
        %903 = vmatpush.bf16.msra.mxu0 %v895
        %904 = vmatpush.bf16.msra.mxu0 %v884
        %905 = vmatmul.bf16.gmra.mxu0 %v889
        %v906 = vpop.f32.mrf.mxu0
        %v907 = vadd.f32 0.0, %v906
        %v908 = vpop.f32.mrf.mxu0
        %v909 = vadd.f32 0.0, %v908
        %910 = vmatmul.bf16.gmra.mxu0 %v892
        %v911 = vpop.f32.mrf.mxu0
        %v912 = vadd.f32 0.0, %v911
        %v913 = vpop.f32.mrf.mxu0
        %914 = vdwg.mxu0
        %v915 = vpack.c.bf16 %v907, %v907
        %v916 = vpack.c.bf16 %v909, %v909
        %v917 = vpack.c.bf16 %v912, %v912
        %921 = vrot.lane.b32.xlu0 %v915, 96
        %v922 = vpop.permute.xlu0 %921
        %923 = vrot.lane.b32.xlu0 %v916, 96
        %v924 = vpop.permute.xlu0 %923
        %925 = vrot.lane.b32.xlu0 %v917, 96
        %v926 = vpop.permute.xlu0 %925
        %vm930 = vcmask 1044224
        %931 = vst.msk [vmem:[%s396] sm:$0xf] %vm930, %v922
        %932 = vst.msk [vmem:[%s396 + $0x4] sm:$0xf] %vm930, %v924
        %933 = vst.msk [vmem:[%s396 + $0x8] sm:$0xf] %vm930, %v926
        %s934 = smul.u32 3, %s19
        %p935 = scmp.lt.s32.totalorder %s18, 1
        %s936 = scalar_select %p935, %s18, 1
        %p937 = scmp.lt.s32.totalorder %s934, 2
        %s938 = scalar_select %p937, %s934, 2
        %s939 = smul.addr %s936, 3
        %s940 = sadd.s32 %s938, %s939
        %s941 = smul.addr %s940, 4
        %s942 = scalar_lea.vmem %s3, %s941
        // Predicated region
        $region156: #{vision_transformer_forward.17} parent=142 // pred_check
          %p943 = pneg %p126
        $region157: #{vision_transformer_forward.17} parent=142 // pred_check_branch
          %945 = sbr.rel (%p943) target = $region159
        $region158: #{vision_transformer_forward.17} parent=142 // pred_region
          %s946 = smul.u32 3, %s19
        $region159: #{vision_transformer_forward.17} parent=142 // pred_fallthru
          _
      $region143: #{vision_transformer_forward.17} parent=5 // pred_fallthru
        _
      %p947 = scmp.le.s32.totalorder 2, %s9
      // Predicated region
      $region160: #{vision_transformer_forward.17} parent=5 // pred_check
        %p948 = pneg %p947
      $region161: #{vision_transformer_forward.17} parent=5 // pred_check_branch
        %950 = sbr.rel (%p948) target = $region163
      $region162: #{vision_transformer_forward.17} parent=5 // pred_region
        %s951 = ssub.s32 %s9, 2
        // Predicated region
        $region164: #{vision_transformer_forward.17} parent=162 // pred_check
          %p952 = pneg %p132
        $region165: #{vision_transformer_forward.17} parent=162 // pred_check_branch
          %954 = sbr.rel (%p952) target = $region167
        $region166: #{vision_transformer_forward.17} parent=162 // pred_region
          %s955 = smul.u32 3, %s21
          %p956 = scmp.lt.s32.totalorder %s20, 1
          %s957 = scalar_select %p956, %s20, 1
          %p958 = scmp.lt.s32.totalorder %s955, 2
          %s959 = scalar_select %p958, %s955, 2
          %s960 = smul.addr %s957, 3
          %s961 = sadd.s32 %s959, %s960
          %s962 = smul.addr %s961, 4
          %s963 = scalar_lea.vmem %s3, %s962
        $region167: #{vision_transformer_forward.17} parent=162 // pred_fallthru
          _
      $region163: #{vision_transformer_forward.17} parent=5 // pred_fallthru
        _
    $region6: #{vision_transformer_forward.17} parent=1 // loop_footer
      %s13 = sadd.s32 1, %s9
    $region7: #{vision_transformer_forward.17} parent=1 // loop_footer_branch
      %8 = sbr.rel target = $region3
    $region8: #{vision_transformer_forward.17} parent=1 // loop_exit
      _

// kernel: vision_transformer_forward.18
$region0: #{vision_transformer_forward.18}
  #allocation0 [shape = 'u32[]', space=smem, size = 0x4, offset = 0x4, fixed_abs, tag = 'smem constant byte address 0x4 - core index']
  #allocation1 [shape = 'u32[72,128]{1,0:T(1,128)}', space=vmem, size = 0x9000, scoped, tag = 'internal scratch']
  %s0 = inlined_call_operand.vmem [shape: bf16[48,128], index: 0, kind: input, shape index: {}]
  %s1 = inlined_call_operand.hbm [shape: bf16[128,128], index: 1, kind: input, shape index: {}]
  %s2 = inlined_call_operand.vmem [shape: f32[1,128], index: 2, kind: input, shape index: {}]
  %s3 = inlined_call_operand.vmem [shape: bf16[48,128], index: 3, kind: input, shape index: {}]
  %s4 = inlined_call_operand.vmem [shape: bf16[48,128], index: 4, kind: output, shape index: {}]
  %s5 = sld [smem:[#allocation0]]
  $region30: #{vision_transformer_forward.18} parent=0
    _
  %s7 = ssub.s32 1, %s5
  %s8 = scalar_select 0, %s7, %s5
  $region1: #{vision_transformer_forward.18} parent=0
    #allocation2 [shape = 'u8[32768]{0}', space=vmem, size = 0x8000, scoped, tag = 'input window, operand 1, single buffered']
    #allocation3 [shape = 's32[1]{0}', space=sflag, size = 0x4, scoped, tag = 'scoped memory for vision_transformer_forward.18']
    %9 = vsyncpa [#allocation3], 0
    // Predicated region
    $region2: #{vision_transformer_forward.18} parent=1 // pred_check
      _
    $region3: #{vision_transformer_forward.18} parent=1 // pred_check_branch
      %11 = sbr.rel (0) target = $region5
    $region4: #{vision_transformer_forward.18} parent=1 // pred_region
      _
    $region5: #{vision_transformer_forward.18} parent=1 // pred_fallthru
      _
    // Predicated region
    $region6: #{vision_transformer_forward.18} parent=1 // pred_check
      _
    $region7: #{vision_transformer_forward.18} parent=1 // pred_check_branch
      %13 = sbr.rel (0) target = $region9
    $region8: #{vision_transformer_forward.18} parent=1 // pred_region
      %15 = vsyncadd [#allocation3], 0
      %s16 = sshll.u32 %s1, 4
      %s17 = int_to_ptr.hbm [resolvable:$true] %s16
      %s18 = sshll.u32 [#allocation2], 4
      %s19 = int_to_ptr.vmem [resolvable:$true] %s18
      %24 = dma.hbm_to_vmem [thread:$0]  %s17, 1024, %s19, [#allocation3], 64, 64, 4
    $region9: #{vision_transformer_forward.18} parent=1 // pred_fallthru
      _
    // Predicated region
    $region10: #{vision_transformer_forward.18} parent=1 // pred_check
      _
    $region11: #{vision_transformer_forward.18} parent=1 // pred_check_branch
      %26 = sbr.rel (0) target = $region13
    $region12: #{vision_transformer_forward.18} parent=1 // pred_region
      _
    $region13: #{vision_transformer_forward.18} parent=1 // pred_fallthru
      _
    // Predicated region
    $region14: #{vision_transformer_forward.18} parent=1 // pred_check
      _
    $region15: #{vision_transformer_forward.18} parent=1 // pred_check_branch
      %28 = sbr.rel (0) target = $region17
    $region16: #{vision_transformer_forward.18} parent=1 // pred_region
      _
    $region17: #{vision_transformer_forward.18} parent=1 // pred_fallthru
      _
    // Predicated region
    $region18: #{vision_transformer_forward.18} parent=1 // pred_check
      _
    $region19: #{vision_transformer_forward.18} parent=1 // pred_check_branch
      %30 = sbr.rel (0) target = $region21
    $region20: #{vision_transformer_forward.18} parent=1 // pred_region
      %32 = dma.done [#allocation3], 1024
    $region21: #{vision_transformer_forward.18} parent=1 // pred_fallthru
      _
    %v33 = vld [vmem:[%s0] sm:$0xf]
    %v34 = vld [vmem:[%s0 + $0x4] sm:$0xf]
    %v35 = vld [vmem:[%s0 + $0x8] sm:$0xf]
    %v36 = vld [vmem:[%s0 + $0xc] sm:$0xf]
    %v37 = vld [vmem:[%s0 + $0x10] sm:$0xf]
    %v38 = vld [vmem:[%s0 + $0x14] sm:$0xf]
    %v39 = vld [vmem:[#allocation2] sm:$0xf]
    %v40 = vld [vmem:[#allocation2 + $0x4] sm:$0xf]
    %v41 = vld [vmem:[#allocation2 + $0x8] sm:$0xf]
    %v42 = vld [vmem:[#allocation2 + $0xc] sm:$0xf]
    %v43 = vld [vmem:[#allocation2 + $0x10] sm:$0xf]
    %v44 = vld [vmem:[#allocation2 + $0x14] sm:$0xf]
    %v45 = vld [vmem:[#allocation2 + $0x18] sm:$0xf]
    %v46 = vld [vmem:[#allocation2 + $0x1c] sm:$0xf]
    %v47 = vld [vmem:[#allocation2 + $0x20] sm:$0xf]
    %v48 = vld [vmem:[#allocation2 + $0x24] sm:$0xf]
    %v49 = vld [vmem:[#allocation2 + $0x28] sm:$0xf]
    %v50 = vld [vmem:[#allocation2 + $0x2c] sm:$0xf]
    %v51 = vld [vmem:[#allocation2 + $0x30] sm:$0xf]
    %v52 = vld [vmem:[#allocation2 + $0x34] sm:$0xf]
    %v53 = vld [vmem:[#allocation2 + $0x38] sm:$0xf]
    %v54 = vld [vmem:[#allocation2 + $0x3c] sm:$0xf]
    %v55 = vld [vmem:[%s2] sm:$0x1]
    %v57 = vperm.slane %v55, 0
    %v65 = vunpack.c.l.b16 %v33
    %v66 = vunpack.c.l.b16 %v34
    %v67 = vunpack.c.l.b16 %v35
    %v68 = vunpack.c.l.b16 %v36
    %v69 = vunpack.c.l.b16 %v37
    %v70 = vunpack.c.l.b16 %v38
    %v71 = vpack.c.b16 %v66, %v65
    %v72 = vpack.c.b16 %v68, %v67
    %v73 = vpack.c.b16 %v70, %v69
    %v93 = vunpack.c.l.b16 %v39
    %v94 = vunpack.c.l.b16 %v40
    %v95 = vunpack.c.l.b16 %v41
    %v96 = vunpack.c.l.b16 %v42
    %v97 = vunpack.c.l.b16 %v43
    %v98 = vunpack.c.l.b16 %v44
    %v99 = vunpack.c.l.b16 %v45
    %v100 = vunpack.c.l.b16 %v46
    %v101 = vunpack.c.l.b16 %v47
    %v102 = vunpack.c.l.b16 %v48
    %v103 = vunpack.c.l.b16 %v49
    %v104 = vunpack.c.l.b16 %v50
    %v105 = vunpack.c.l.b16 %v51
    %v106 = vunpack.c.l.b16 %v52
    %v107 = vunpack.c.l.b16 %v53
    %v108 = vunpack.c.l.b16 %v54
    %v109 = vpack.c.b16 %v94, %v93
    %v110 = vpack.c.b16 %v96, %v95
    %v111 = vpack.c.b16 %v98, %v97
    %v112 = vpack.c.b16 %v100, %v99
    %v113 = vpack.c.b16 %v102, %v101
    %v114 = vpack.c.b16 %v104, %v103
    %v115 = vpack.c.b16 %v106, %v105
    %v116 = vpack.c.b16 %v108, %v107
    %125 = vmatpush.bf16.msra.mxu0 %v116
    %126 = vmatpush.bf16.msra.mxu0 %v115
    %127 = vmatpush.bf16.msra.mxu0 %v114
    %128 = vmatpush.bf16.msra.mxu0 %v113
    %129 = vmatpush.bf16.msra.mxu0 %v112
    %130 = vmatpush.bf16.msra.mxu0 %v111
    %131 = vmatpush.bf16.msra.mxu0 %v110
    %132 = vmatpush.bf16.msra.mxu0 %v109
    %133 = vmatmul.bf16.gmra.mxu0 %v71
    %v134 = vpop.f32.mrf.mxu0
    %v135 = vadd.f32 %v57, %v134
    %v136 = vpop.f32.mrf.mxu0
    %v137 = vadd.f32 %v57, %v136
    %138 = vmatmul.bf16.gmra.mxu0 %v72
    %v139 = vpop.f32.mrf.mxu0
    %v140 = vadd.f32 %v57, %v139
    %v141 = vpop.f32.mrf.mxu0
    %v142 = vadd.f32 %v57, %v141
    %143 = vmatmul.bf16.gmra.mxu0 %v73
    %v144 = vpop.f32.mrf.mxu0
    %v145 = vadd.f32 %v57, %v144
    %v146 = vpop.f32.mrf.mxu0
    %v147 = vadd.f32 %v57, %v146
    %148 = vdwg.mxu0
    %v149 = vld [vmem:[%s3] sm:$0xf]
    %v150 = vld [vmem:[%s3 + $0x4] sm:$0xf]
    %v151 = vld [vmem:[%s3 + $0x8] sm:$0xf]
    %v152 = vld [vmem:[%s3 + $0xc] sm:$0xf]
    %v153 = vld [vmem:[%s3 + $0x10] sm:$0xf]
    %v154 = vld [vmem:[%s3 + $0x14] sm:$0xf]
    %v155 = vunpack.c.l.bf16 %v149
    %v156 = vunpack.c.l.bf16 %v150
    %v157 = vunpack.c.l.bf16 %v151
    %v158 = vunpack.c.l.bf16 %v152
    %v159 = vunpack.c.l.bf16 %v153
    %v160 = vunpack.c.l.bf16 %v154
    %v161 = vadd.f32 %v135, %v155
    %v162 = vadd.f32 %v137, %v156
    %v163 = vadd.f32 %v140, %v157
    %v164 = vadd.f32 %v142, %v158
    %v165 = vadd.f32 %v145, %v159
    %v166 = vadd.f32 %v147, %v160
    %v167 = vpack.c.bf16 %v161, %v161
    %v168 = vpack.c.bf16 %v162, %v162
    %v169 = vpack.c.bf16 %v163, %v163
    %v170 = vpack.c.bf16 %v164, %v164
    %v171 = vpack.c.bf16 %v165, %v165
    %v172 = vpack.c.bf16 %v166, %v166
    %173 = vst [vmem:[%s4] sm:$0xf] %v167
    %174 = vst [vmem:[%s4 + $0x4] sm:$0xf] %v168
    %175 = vst [vmem:[%s4 + $0x8] sm:$0xf] %v169
    %176 = vst [vmem:[%s4 + $0xc] sm:$0xf] %v170
    %177 = vst [vmem:[%s4 + $0x10] sm:$0xf] %v171
    %178 = vst [vmem:[%s4 + $0x14] sm:$0xf] %v172
    // Predicated region
    $region22: #{vision_transformer_forward.18} parent=1 // pred_check
      _
    $region23: #{vision_transformer_forward.18} parent=1 // pred_check_branch
      %180 = sbr.rel (0) target = $region25
    $region24: #{vision_transformer_forward.18} parent=1 // pred_region
      _
    $region25: #{vision_transformer_forward.18} parent=1 // pred_fallthru
      _
    // Predicated region
    $region26: #{vision_transformer_forward.18} parent=1 // pred_check
      _
    $region27: #{vision_transformer_forward.18} parent=1 // pred_check_branch
      %182 = sbr.rel (0) target = $region29
    $region28: #{vision_transformer_forward.18} parent=1 // pred_region
      _
    $region29: #{vision_transformer_forward.18} parent=1 // pred_fallthru
      _
    %183 = vsyncpa [#allocation3], 1

// kernel: vision_transformer_forward.19
$region0: #{vision_transformer_forward.19}
  #allocation0 [shape = 'u32[]', space=smem, size = 0x4, offset = 0x4, fixed_abs, tag = 'smem constant byte address 0x4 - core index']
  #allocation1 [shape = 'u32[72,128]{1,0:T(1,128)}', space=vmem, size = 0x9000, scoped, tag = 'internal scratch']
  %s0 = inlined_call_operand.vmem [shape: bf16[48,128], index: 0, kind: input, shape index: {}]
  %s1 = inlined_call_operand.vmem [shape: bf16[128,512], index: 1, kind: input, shape index: {}]
  %s2 = inlined_call_operand.vmem [shape: f32[1,512], index: 2, kind: input, shape index: {}]
  %s3 = inlined_call_operand.vmem [shape: f32[1,128], index: 3, kind: input, shape index: {}]
  %s4 = inlined_call_operand.vmem [shape: f32[1,128], index: 4, kind: input, shape index: {}]
  %s5 = inlined_call_operand.vmem [shape: bf16[48,512], index: 5, kind: output, shape index: {}]
  %s6 = sld [smem:[#allocation0]]
  $region30: #{vision_transformer_forward.19} parent=0
    _
  %s8 = ssub.s32 1, %s6
  %s9 = scalar_select 0, %s8, %s6
  // Predicated region
  $region2: #{vision_transformer_forward.19} parent=0 // pred_check
    _
  $region3: #{vision_transformer_forward.19} parent=0 // pred_check_branch
    %11 = sbr.rel (0) target = $region5
  $region4: #{vision_transformer_forward.19} parent=0 // pred_region
    _
  $region5: #{vision_transformer_forward.19} parent=0 // pred_fallthru
    _
  // Predicated region
  $region6: #{vision_transformer_forward.19} parent=0 // pred_check
    _
  $region7: #{vision_transformer_forward.19} parent=0 // pred_check_branch
    %13 = sbr.rel (0) target = $region9
  $region8: #{vision_transformer_forward.19} parent=0 // pred_region
    _
  $region9: #{vision_transformer_forward.19} parent=0 // pred_fallthru
    _
  // Predicated region
  $region10: #{vision_transformer_forward.19} parent=0 // pred_check
    _
  $region11: #{vision_transformer_forward.19} parent=0 // pred_check_branch
    %15 = sbr.rel (0) target = $region13
  $region12: #{vision_transformer_forward.19} parent=0 // pred_region
    _
  $region13: #{vision_transformer_forward.19} parent=0 // pred_fallthru
    _
  // Predicated region
  $region14: #{vision_transformer_forward.19} parent=0 // pred_check
    _
  $region15: #{vision_transformer_forward.19} parent=0 // pred_check_branch
    %17 = sbr.rel (0) target = $region17
  $region16: #{vision_transformer_forward.19} parent=0 // pred_region
    _
  $region17: #{vision_transformer_forward.19} parent=0 // pred_fallthru
    _
  // Predicated region
  $region18: #{vision_transformer_forward.19} parent=0 // pred_check
    _
  $region19: #{vision_transformer_forward.19} parent=0 // pred_check_branch
    %19 = sbr.rel (0) target = $region21
  $region20: #{vision_transformer_forward.19} parent=0 // pred_region
    _
  $region21: #{vision_transformer_forward.19} parent=0 // pred_fallthru
    _
  %v20 = vld [vmem:[%s0] sm:$0xf]
  %v21 = vld [vmem:[%s0 + $0x4] sm:$0xf]
  %v22 = vld [vmem:[%s0 + $0x8] sm:$0xf]
  %v23 = vld [vmem:[%s0 + $0xc] sm:$0xf]
  %v24 = vld [vmem:[%s0 + $0x10] sm:$0xf]
  %v25 = vld [vmem:[%s0 + $0x14] sm:$0xf]
  %v26 = vunpack.c.l.bf16 %v20
  %v27 = vunpack.c.l.bf16 %v21
  %v28 = vunpack.c.l.bf16 %v22
  %v29 = vunpack.c.l.bf16 %v23
  %v30 = vunpack.c.l.bf16 %v24
  %v31 = vunpack.c.l.bf16 %v25
  %32 = vadd.xlane.f32.xlu0 %v26
  %v33 = vpop.xlane.xlu0 %32
  %34 = vadd.xlane.f32.xlu0 %v27
  %v35 = vpop.xlane.xlu0 %34
  %36 = vadd.xlane.f32.xlu0 %v28
  %v37 = vpop.xlane.xlu0 %36
  %38 = vadd.xlane.f32.xlu0 %v29
  %v39 = vpop.xlane.xlu0 %38
  %40 = vadd.xlane.f32.xlu0 %v30
  %v41 = vpop.xlane.xlu0 %40
  %42 = vadd.xlane.f32.xlu0 %v31
  %v43 = vpop.xlane.xlu0 %42
  %v44 = vrcp.pop 128.0
  %v45 = vmul.f32 128.0, %v44
  %v46 = vsub.f32 1.0, %v45
  %v47 = vmul.f32 %v44, %v46
  %v48 = vadd.f32 %v44, %v47
  %vm49 = vweird.f32 %v44
  %v50 = vsel %vm49, %v44, %v48
  %v51 = vmul.f32 %v33, %v50
  %v52 = vmul.f32 %v35, %v50
  %v53 = vmul.f32 %v37, %v50
  %v54 = vmul.f32 %v39, %v50
  %v55 = vmul.f32 %v41, %v50
  %v56 = vmul.f32 %v43, %v50
  %v57 = vsub.f32 %v26, %v51
  %v58 = vsub.f32 %v27, %v52
  %v59 = vsub.f32 %v28, %v53
  %v60 = vsub.f32 %v29, %v54
  %v61 = vsub.f32 %v30, %v55
  %v62 = vsub.f32 %v31, %v56
  %v63 = vmul.f32 %v57, %v57
  %v64 = vmul.f32 %v58, %v58
  %v65 = vmul.f32 %v59, %v59
  %v66 = vmul.f32 %v60, %v60
  %v67 = vmul.f32 %v61, %v61
  %v68 = vmul.f32 %v62, %v62
  %69 = vadd.xlane.f32.xlu0 %v63
  %v70 = vpop.xlane.xlu0 %69
  %71 = vadd.xlane.f32.xlu0 %v64
  %v72 = vpop.xlane.xlu0 %71
  %73 = vadd.xlane.f32.xlu0 %v65
  %v74 = vpop.xlane.xlu0 %73
  %75 = vadd.xlane.f32.xlu0 %v66
  %v76 = vpop.xlane.xlu0 %75
  %77 = vadd.xlane.f32.xlu0 %v67
  %v78 = vpop.xlane.xlu0 %77
  %79 = vadd.xlane.f32.xlu0 %v68
  %v80 = vpop.xlane.xlu0 %79
  %v81 = vmul.f32 %v70, %v50
  %v82 = vmul.f32 %v72, %v50
  %v83 = vmul.f32 %v74, %v50
  %v84 = vmul.f32 %v76, %v50
  %v85 = vmul.f32 %v78, %v50
  %v86 = vmul.f32 %v80, %v50
  %v87 = vadd.f32 %v81, 1e-05
  %v88 = vadd.f32 %v82, 1e-05
  %v89 = vadd.f32 %v83, 1e-05
  %v90 = vadd.f32 %v84, 1e-05
  %v91 = vadd.f32 %v85, 1e-05
  %v92 = vadd.f32 %v86, 1e-05
  %v93 = vrsqrt.pop %v87
  %v94 = vmul.f32 %v93, %v87
  %v95 = vmul.f32 %v94, %v93
  %v96 = vmul.f32 0.5, %v95
  %v97 = vsub.f32 1.5, %v96
  %v98 = vmul.f32 %v93, %v97
  %vm99 = vweird.f32 %v87
  %vm100 = vweird.f32 %v93
  %vm101 = vmor %vm99, %vm100
  %v102 = vsel %vm101, %v93, %v98
  %v103 = vrsqrt.pop %v88
  %v104 = vmul.f32 %v103, %v88
  %v105 = vmul.f32 %v104, %v103
  %v106 = vmul.f32 0.5, %v105
  %v107 = vsub.f32 1.5, %v106
  %v108 = vmul.f32 %v103, %v107
  %vm109 = vweird.f32 %v88
  %vm110 = vweird.f32 %v103
  %vm111 = vmor %vm109, %vm110
  %v112 = vsel %vm111, %v103, %v108
  %v113 = vrsqrt.pop %v89
  %v114 = vmul.f32 %v113, %v89
  %v115 = vmul.f32 %v114, %v113
  %v116 = vmul.f32 0.5, %v115
  %v117 = vsub.f32 1.5, %v116
  %v118 = vmul.f32 %v113, %v117
  %vm119 = vweird.f32 %v89
  %vm120 = vweird.f32 %v113
  %vm121 = vmor %vm119, %vm120
  %v122 = vsel %vm121, %v113, %v118
  %v123 = vrsqrt.pop %v90
  %v124 = vmul.f32 %v123, %v90
  %v125 = vmul.f32 %v124, %v123
  %v126 = vmul.f32 0.5, %v125
  %v127 = vsub.f32 1.5, %v126
  %v128 = vmul.f32 %v123, %v127
  %vm129 = vweird.f32 %v90
  %vm130 = vweird.f32 %v123
  %vm131 = vmor %vm129, %vm130
  %v132 = vsel %vm131, %v123, %v128
  %v133 = vrsqrt.pop %v91
  %v134 = vmul.f32 %v133, %v91
  %v135 = vmul.f32 %v134, %v133
  %v136 = vmul.f32 0.5, %v135
  %v137 = vsub.f32 1.5, %v136
  %v138 = vmul.f32 %v133, %v137
  %vm139 = vweird.f32 %v91
  %vm140 = vweird.f32 %v133
  %vm141 = vmor %vm139, %vm140
  %v142 = vsel %vm141, %v133, %v138
  %v143 = vrsqrt.pop %v92
  %v144 = vmul.f32 %v143, %v92
  %v145 = vmul.f32 %v144, %v143
  %v146 = vmul.f32 0.5, %v145
  %v147 = vsub.f32 1.5, %v146
  %v148 = vmul.f32 %v143, %v147
  %vm149 = vweird.f32 %v92
  %vm150 = vweird.f32 %v143
  %vm151 = vmor %vm149, %vm150
  %v152 = vsel %vm151, %v143, %v148
  %v153 = vmul.f32 %v57, %v102
  %v154 = vmul.f32 %v58, %v112
  %v155 = vmul.f32 %v59, %v122
  %v156 = vmul.f32 %v60, %v132
  %v157 = vmul.f32 %v61, %v142
  %v158 = vmul.f32 %v62, %v152
  %v159 = vld [vmem:[%s3] sm:$0x1]
  %v161 = vperm.slane %v159, 0
  %v163 = vmul.f32 %v153, %v161
  %v164 = vmul.f32 %v154, %v161
  %v165 = vmul.f32 %v155, %v161
  %v166 = vmul.f32 %v156, %v161
  %v167 = vmul.f32 %v157, %v161
  %v168 = vmul.f32 %v158, %v161
  %v169 = vld [vmem:[%s4] sm:$0x1]
  %v171 = vperm.slane %v169, 0
  %v173 = vadd.f32 %v163, %v171
  %v174 = vadd.f32 %v164, %v171
  %v175 = vadd.f32 %v165, %v171
  %v176 = vadd.f32 %v166, %v171
  %v177 = vadd.f32 %v167, %v171
  %v178 = vadd.f32 %v168, %v171
  %v179 = vpack.c.bf16 %v174, %v173
  %v180 = vpack.c.bf16 %v176, %v175
  %v181 = vpack.c.bf16 %v178, %v177
  %v182 = vld [vmem:[%s1] sm:$0xff]
  %v183 = vld [vmem:[%s1 + $0x8] sm:$0xff]
  %v184 = vld [vmem:[%s1 + $0x10] sm:$0xff]
  %v185 = vld [vmem:[%s1 + $0x18] sm:$0xff]
  %v186 = vld [vmem:[%s1 + $0x20] sm:$0xff]
  %v187 = vld [vmem:[%s1 + $0x28] sm:$0xff]
  %v188 = vld [vmem:[%s1 + $0x30] sm:$0xff]
  %v189 = vld [vmem:[%s1 + $0x38] sm:$0xff]
  %v190 = vld [vmem:[%s1 + $0x40] sm:$0xff]
  %v191 = vld [vmem:[%s1 + $0x48] sm:$0xff]
  %v192 = vld [vmem:[%s1 + $0x50] sm:$0xff]
  %v193 = vld [vmem:[%s1 + $0x58] sm:$0xff]
  %v194 = vld [vmem:[%s1 + $0x60] sm:$0xff]
  %v195 = vld [vmem:[%s1 + $0x68] sm:$0xff]
  %v196 = vld [vmem:[%s1 + $0x70] sm:$0xff]
  %v197 = vld [vmem:[%s1 + $0x78] sm:$0xff]
  %v198 = vld [vmem:[%s1 + $0x80] sm:$0xff]
  %v199 = vld [vmem:[%s1 + $0x88] sm:$0xff]
  %v200 = vld [vmem:[%s1 + $0x90] sm:$0xff]
  %v201 = vld [vmem:[%s1 + $0x98] sm:$0xff]
  %v202 = vld [vmem:[%s1 + $0xa0] sm:$0xff]
  %v203 = vld [vmem:[%s1 + $0xa8] sm:$0xff]
  %v204 = vld [vmem:[%s1 + $0xb0] sm:$0xff]
  %v205 = vld [vmem:[%s1 + $0xb8] sm:$0xff]
  %v206 = vld [vmem:[%s1 + $0xc0] sm:$0xff]
  %v207 = vld [vmem:[%s1 + $0xc8] sm:$0xff]
  %v208 = vld [vmem:[%s1 + $0xd0] sm:$0xff]
  %v209 = vld [vmem:[%s1 + $0xd8] sm:$0xff]
  %v210 = vld [vmem:[%s1 + $0xe0] sm:$0xff]
  %v211 = vld [vmem:[%s1 + $0xe8] sm:$0xff]
  %v212 = vld [vmem:[%s1 + $0xf0] sm:$0xff]
  %v213 = vld [vmem:[%s1 + $0xf8] sm:$0xff]
  %v214 = vld [vmem:[%s2] sm:$0xf]
  %v216 = vperm.slane %v214, 0
  %v217 = vperm.slane %v214, 1
  %v218 = vperm.slane %v214, 2
  %v219 = vperm.slane %v214, 3
  %v256 = vunpack.c.l.b16 %v182
  %v257 = vunpack.c.h.b16 %v182
  %v258 = vunpack.c.l.b16 %v183
  %v259 = vunpack.c.h.b16 %v183
  %v260 = vunpack.c.l.b16 %v184
  %v261 = vunpack.c.h.b16 %v184
  %v262 = vunpack.c.l.b16 %v185
  %v263 = vunpack.c.h.b16 %v185
  %v264 = vunpack.c.l.b16 %v186
  %v265 = vunpack.c.h.b16 %v186
  %v266 = vunpack.c.l.b16 %v187
  %v267 = vunpack.c.h.b16 %v187
  %v268 = vunpack.c.l.b16 %v188
  %v269 = vunpack.c.h.b16 %v188
  %v270 = vunpack.c.l.b16 %v189
  %v271 = vunpack.c.h.b16 %v189
  %v272 = vunpack.c.l.b16 %v190
  %v273 = vunpack.c.h.b16 %v190
  %v274 = vunpack.c.l.b16 %v191
  %v275 = vunpack.c.h.b16 %v191
  %v276 = vunpack.c.l.b16 %v192
  %v277 = vunpack.c.h.b16 %v192
  %v278 = vunpack.c.l.b16 %v193
  %v279 = vunpack.c.h.b16 %v193
  %v280 = vunpack.c.l.b16 %v194
  %v281 = vunpack.c.h.b16 %v194
  %v282 = vunpack.c.l.b16 %v195
  %v283 = vunpack.c.h.b16 %v195
  %v284 = vunpack.c.l.b16 %v196
  %v285 = vunpack.c.h.b16 %v196
  %v286 = vunpack.c.l.b16 %v197
  %v287 = vunpack.c.h.b16 %v197
  %v288 = vunpack.c.l.b16 %v198
  %v289 = vunpack.c.h.b16 %v198
  %v290 = vunpack.c.l.b16 %v199
  %v291 = vunpack.c.h.b16 %v199
  %v292 = vunpack.c.l.b16 %v200
  %v293 = vunpack.c.h.b16 %v200
  %v294 = vunpack.c.l.b16 %v201
  %v295 = vunpack.c.h.b16 %v201
  %v296 = vunpack.c.l.b16 %v202
  %v297 = vunpack.c.h.b16 %v202
  %v298 = vunpack.c.l.b16 %v203
  %v299 = vunpack.c.h.b16 %v203
  %v300 = vunpack.c.l.b16 %v204
  %v301 = vunpack.c.h.b16 %v204
  %v302 = vunpack.c.l.b16 %v205
  %v303 = vunpack.c.h.b16 %v205
  %v304 = vunpack.c.l.b16 %v206
  %v305 = vunpack.c.h.b16 %v206
  %v306 = vunpack.c.l.b16 %v207
  %v307 = vunpack.c.h.b16 %v207
  %v308 = vunpack.c.l.b16 %v208
  %v309 = vunpack.c.h.b16 %v208
  %v310 = vunpack.c.l.b16 %v209
  %v311 = vunpack.c.h.b16 %v209
  %v312 = vunpack.c.l.b16 %v210
  %v313 = vunpack.c.h.b16 %v210
  %v314 = vunpack.c.l.b16 %v211
  %v315 = vunpack.c.h.b16 %v211
  %v316 = vunpack.c.l.b16 %v212
  %v317 = vunpack.c.h.b16 %v212
  %v318 = vunpack.c.l.b16 %v213
  %v319 = vunpack.c.h.b16 %v213
  %v320 = vpack.c.b16 %v260, %v256
  %v321 = vpack.c.b16 %v261, %v257
  %v322 = vpack.c.b16 %v262, %v258
  %v323 = vpack.c.b16 %v263, %v259
  %v324 = vpack.c.b16 %v268, %v264
  %v325 = vpack.c.b16 %v269, %v265
  %v326 = vpack.c.b16 %v270, %v266
  %v327 = vpack.c.b16 %v271, %v267
  %v328 = vpack.c.b16 %v276, %v272
  %v329 = vpack.c.b16 %v277, %v273
  %v330 = vpack.c.b16 %v278, %v274
  %v331 = vpack.c.b16 %v279, %v275
  %v332 = vpack.c.b16 %v284, %v280
  %v333 = vpack.c.b16 %v285, %v281
  %v334 = vpack.c.b16 %v286, %v282
  %v335 = vpack.c.b16 %v287, %v283
  %v336 = vpack.c.b16 %v292, %v288
  %v337 = vpack.c.b16 %v293, %v289
  %v338 = vpack.c.b16 %v294, %v290
  %v339 = vpack.c.b16 %v295, %v291
  %v340 = vpack.c.b16 %v300, %v296
  %v341 = vpack.c.b16 %v301, %v297
  %v342 = vpack.c.b16 %v302, %v298
  %v343 = vpack.c.b16 %v303, %v299
  %v344 = vpack.c.b16 %v308, %v304
  %v345 = vpack.c.b16 %v309, %v305
  %v346 = vpack.c.b16 %v310, %v306
  %v347 = vpack.c.b16 %v311, %v307
  %v348 = vpack.c.b16 %v316, %v312
  %v349 = vpack.c.b16 %v317, %v313
  %v350 = vpack.c.b16 %v318, %v314
  %v351 = vpack.c.b16 %v319, %v315
  %384 = vmatpush.bf16.msra.mxu0 %v348
  %385 = vmatpush.bf16.msra.mxu0 %v344
  %386 = vmatpush.bf16.msra.mxu0 %v340
  %387 = vmatpush.bf16.msra.mxu0 %v336
  %388 = vmatpush.bf16.msra.mxu0 %v332
  %389 = vmatpush.bf16.msra.mxu0 %v328
  %390 = vmatpush.bf16.msra.mxu0 %v324
  %391 = vmatpush.bf16.msra.mxu0 %v320
  %392 = vmatmul.bf16.gmra.mxu0 %v179
  %v393 = vpop.f32.mrf.mxu0
  %v394 = vadd.f32 %v216, %v393
  %v395 = vpop.f32.mrf.mxu0
  %v396 = vadd.f32 %v216, %v395
  %397 = vmatmul.bf16.gmra.mxu0 %v180
  %v398 = vpop.f32.mrf.mxu0
  %v399 = vadd.f32 %v216, %v398
  %v400 = vpop.f32.mrf.mxu0
  %v401 = vadd.f32 %v216, %v400
  %402 = vmatmul.bf16.gmra.mxu0 %v181
  %v403 = vpop.f32.mrf.mxu0
  %v404 = vadd.f32 %v216, %v403
  %v405 = vpop.f32.mrf.mxu0
  %v406 = vadd.f32 %v216, %v405
  %407 = vdwg.mxu0
  %408 = vmatpush.bf16.msra.mxu0 %v349
  %409 = vmatpush.bf16.msra.mxu0 %v345
  %410 = vmatpush.bf16.msra.mxu0 %v341
  %411 = vmatpush.bf16.msra.mxu0 %v337
  %412 = vmatpush.bf16.msra.mxu0 %v333
  %413 = vmatpush.bf16.msra.mxu0 %v329
  %414 = vmatpush.bf16.msra.mxu0 %v325
  %415 = vmatpush.bf16.msra.mxu0 %v321
  %416 = vmatmul.bf16.gmra.mxu0 %v179
  %v417 = vpop.f32.mrf.mxu0
  %v418 = vadd.f32 %v217, %v417
  %v419 = vpop.f32.mrf.mxu0
  %v420 = vadd.f32 %v217, %v419
  %421 = vmatmul.bf16.gmra.mxu0 %v180
  %v422 = vpop.f32.mrf.mxu0
  %v423 = vadd.f32 %v217, %v422
  %v424 = vpop.f32.mrf.mxu0
  %v425 = vadd.f32 %v217, %v424
  %426 = vmatmul.bf16.gmra.mxu0 %v181
  %v427 = vpop.f32.mrf.mxu0
  %v428 = vadd.f32 %v217, %v427
  %v429 = vpop.f32.mrf.mxu0
  %v430 = vadd.f32 %v217, %v429
  %431 = vdwg.mxu0
  %432 = vmatpush.bf16.msra.mxu0 %v350
  %433 = vmatpush.bf16.msra.mxu0 %v346
  %434 = vmatpush.bf16.msra.mxu0 %v342
  %435 = vmatpush.bf16.msra.mxu0 %v338
  %436 = vmatpush.bf16.msra.mxu0 %v334
  %437 = vmatpush.bf16.msra.mxu0 %v330
  %438 = vmatpush.bf16.msra.mxu0 %v326
  %439 = vmatpush.bf16.msra.mxu0 %v322
  %440 = vmatmul.bf16.gmra.mxu0 %v179
  %v441 = vpop.f32.mrf.mxu0
  %v442 = vadd.f32 %v218, %v441
  %v443 = vpop.f32.mrf.mxu0
  %v444 = vadd.f32 %v218, %v443
  %445 = vmatmul.bf16.gmra.mxu0 %v180
  %v446 = vpop.f32.mrf.mxu0
  %v447 = vadd.f32 %v218, %v446
  %v448 = vpop.f32.mrf.mxu0
  %v449 = vadd.f32 %v218, %v448
  %450 = vmatmul.bf16.gmra.mxu0 %v181
  %v451 = vpop.f32.mrf.mxu0
  %v452 = vadd.f32 %v218, %v451
  %v453 = vpop.f32.mrf.mxu0
  %v454 = vadd.f32 %v218, %v453
  %455 = vdwg.mxu0
  %456 = vmatpush.bf16.msra.mxu0 %v351
  %457 = vmatpush.bf16.msra.mxu0 %v347
  %458 = vmatpush.bf16.msra.mxu0 %v343
  %459 = vmatpush.bf16.msra.mxu0 %v339
  %460 = vmatpush.bf16.msra.mxu0 %v335
  %461 = vmatpush.bf16.msra.mxu0 %v331
  %462 = vmatpush.bf16.msra.mxu0 %v327
  %463 = vmatpush.bf16.msra.mxu0 %v323
  %464 = vmatmul.bf16.gmra.mxu0 %v179
  %v465 = vpop.f32.mrf.mxu0
  %v466 = vadd.f32 %v219, %v465
  %v467 = vpop.f32.mrf.mxu0
  %v468 = vadd.f32 %v219, %v467
  %469 = vmatmul.bf16.gmra.mxu0 %v180
  %v470 = vpop.f32.mrf.mxu0
  %v471 = vadd.f32 %v219, %v470
  %v472 = vpop.f32.mrf.mxu0
  %v473 = vadd.f32 %v219, %v472
  %474 = vmatmul.bf16.gmra.mxu0 %v181
  %v475 = vpop.f32.mrf.mxu0
  %v476 = vadd.f32 %v219, %v475
  %v477 = vpop.f32.mrf.mxu0
  %v478 = vadd.f32 %v219, %v477
  %479 = vdwg.mxu0
  %v480 = vmul.f32 %v394, 1.702
  %v481 = vmul.f32 %v418, 1.702
  %v482 = vmul.f32 %v442, 1.702
  %v483 = vmul.f32 %v466, 1.702
  %v484 = vmul.f32 %v396, 1.702
  %v485 = vmul.f32 %v420, 1.702
  %v486 = vmul.f32 %v444, 1.702
  %v487 = vmul.f32 %v468, 1.702
  %v488 = vmul.f32 %v399, 1.702
  %v489 = vmul.f32 %v423, 1.702
  %v490 = vmul.f32 %v447, 1.702
  %v491 = vmul.f32 %v471, 1.702
  %v492 = vmul.f32 %v401, 1.702
  %v493 = vmul.f32 %v425, 1.702
  %v494 = vmul.f32 %v449, 1.702
  %v495 = vmul.f32 %v473, 1.702
  %v496 = vmul.f32 %v404, 1.702
  %v497 = vmul.f32 %v428, 1.702
  %v498 = vmul.f32 %v452, 1.702
  %v499 = vmul.f32 %v476, 1.702
  %v500 = vmul.f32 %v406, 1.702
  %v501 = vmul.f32 %v430, 1.702
  %v502 = vmul.f32 %v454, 1.702
  %v503 = vmul.f32 %v478, 1.702
  %v504 = vxor.u32 %v480, 2147483648
  %v505 = vxor.u32 %v481, 2147483648
  %v506 = vxor.u32 %v482, 2147483648
  %v507 = vxor.u32 %v483, 2147483648
  %v508 = vxor.u32 %v484, 2147483648
  %v509 = vxor.u32 %v485, 2147483648
  %v510 = vxor.u32 %v486, 2147483648
  %v511 = vxor.u32 %v487, 2147483648
  %v512 = vxor.u32 %v488, 2147483648
  %v513 = vxor.u32 %v489, 2147483648
  %v514 = vxor.u32 %v490, 2147483648
  %v515 = vxor.u32 %v491, 2147483648
  %v516 = vxor.u32 %v492, 2147483648
  %v517 = vxor.u32 %v493, 2147483648
  %v518 = vxor.u32 %v494, 2147483648
  %v519 = vxor.u32 %v495, 2147483648
  %v520 = vxor.u32 %v496, 2147483648
  %v521 = vxor.u32 %v497, 2147483648
  %v522 = vxor.u32 %v498, 2147483648
  %v523 = vxor.u32 %v499, 2147483648
  %v524 = vxor.u32 %v500, 2147483648
  %v525 = vxor.u32 %v501, 2147483648
  %v526 = vxor.u32 %v502, 2147483648
  %v527 = vxor.u32 %v503, 2147483648
  %v528 = vmul.f32 %v504, 1.442695
  %v529 = vpow.pop %v528
  %v530 = vmul.f32 %v505, 1.442695
  %v531 = vpow.pop %v530
  %v532 = vmul.f32 %v506, 1.442695
  %v533 = vpow.pop %v532
  %v534 = vmul.f32 %v507, 1.442695
  %v535 = vpow.pop %v534
  %v536 = vmul.f32 %v508, 1.442695
  %v537 = vpow.pop %v536
  %v538 = vmul.f32 %v509, 1.442695
  %v539 = vpow.pop %v538
  %v540 = vmul.f32 %v510, 1.442695
  %v541 = vpow.pop %v540
  %v542 = vmul.f32 %v511, 1.442695
  %v543 = vpow.pop %v542
  %v544 = vmul.f32 %v512, 1.442695
  %v545 = vpow.pop %v544
  %v546 = vmul.f32 %v513, 1.442695
  %v547 = vpow.pop %v546
  %v548 = vmul.f32 %v514, 1.442695
  %v549 = vpow.pop %v548
  %v550 = vmul.f32 %v515, 1.442695
  %v551 = vpow.pop %v550
  %v552 = vmul.f32 %v516, 1.442695
  %v553 = vpow.pop %v552
  %v554 = vmul.f32 %v517, 1.442695
  %v555 = vpow.pop %v554
  %v556 = vmul.f32 %v518, 1.442695
  %v557 = vpow.pop %v556
  %v558 = vmul.f32 %v519, 1.442695
  %v559 = vpow.pop %v558
  %v560 = vmul.f32 %v520, 1.442695
  %v561 = vpow.pop %v560
  %v562 = vmul.f32 %v521, 1.442695
  %v563 = vpow.pop %v562
  %v564 = vmul.f32 %v522, 1.442695
  %v565 = vpow.pop %v564
  %v566 = vmul.f32 %v523, 1.442695
  %v567 = vpow.pop %v566
  %v568 = vmul.f32 %v524, 1.442695
  %v569 = vpow.pop %v568
  %v570 = vmul.f32 %v525, 1.442695
  %v571 = vpow.pop %v570
  %v572 = vmul.f32 %v526, 1.442695
  %v573 = vpow.pop %v572
  %v574 = vmul.f32 %v527, 1.442695
  %v575 = vpow.pop %v574
  %v576 = vadd.f32 %v529, 1.0
  %v577 = vadd.f32 %v531, 1.0
  %v578 = vadd.f32 %v533, 1.0
  %v579 = vadd.f32 %v535, 1.0
  %v580 = vadd.f32 %v537, 1.0
  %v581 = vadd.f32 %v539, 1.0
  %v582 = vadd.f32 %v541, 1.0
  %v583 = vadd.f32 %v543, 1.0
  %v584 = vadd.f32 %v545, 1.0
  %v585 = vadd.f32 %v547, 1.0
  %v586 = vadd.f32 %v549, 1.0
  %v587 = vadd.f32 %v551, 1.0
  %v588 = vadd.f32 %v553, 1.0
  %v589 = vadd.f32 %v555, 1.0
  %v590 = vadd.f32 %v557, 1.0
  %v591 = vadd.f32 %v559, 1.0
  %v592 = vadd.f32 %v561, 1.0
  %v593 = vadd.f32 %v563, 1.0
  %v594 = vadd.f32 %v565, 1.0
  %v595 = vadd.f32 %v567, 1.0
  %v596 = vadd.f32 %v569, 1.0
  %v597 = vadd.f32 %v571, 1.0
  %v598 = vadd.f32 %v573, 1.0
  %v599 = vadd.f32 %v575, 1.0
  %v600 = vrcp.pop %v576
  %v601 = vmul.f32 %v576, %v600
  %v602 = vsub.f32 1.0, %v601
  %v603 = vmul.f32 %v600, %v602
  %v604 = vadd.f32 %v600, %v603
  %vm605 = vweird.f32 %v576
  %vm606 = vweird.f32 %v600
  %vm607 = vmor %vm605, %vm606
  %v608 = vsel %vm607, %v600, %v604
  %v609 = vand.u32 2147483647, %v576
  %vm610 = vcmp.eq.f32.partialorder %v609, 8.507059e+37
  %v611 = vand.u32 %v576, 2147483648
  %v612 = vor.u32 1.1754944e-38, %v611
  %v613 = vsel %vm610, %v612, %v608
  %v614 = vmul.f32 1.0, %v613
  %v615 = vrcp.pop %v577
  %v616 = vmul.f32 %v577, %v615
  %v617 = vsub.f32 1.0, %v616
  %v618 = vmul.f32 %v615, %v617
  %v619 = vadd.f32 %v615, %v618
  %vm620 = vweird.f32 %v577
  %vm621 = vweird.f32 %v615
  %vm622 = vmor %vm620, %vm621
  %v623 = vsel %vm622, %v615, %v619
  %v624 = vand.u32 2147483647, %v577
  %vm625 = vcmp.eq.f32.partialorder %v624, 8.507059e+37
  %v626 = vand.u32 %v577, 2147483648
  %v627 = vor.u32 1.1754944e-38, %v626
  %v628 = vsel %vm625, %v627, %v623
  %v629 = vmul.f32 1.0, %v628
  %v630 = vrcp.pop %v578
  %v631 = vmul.f32 %v578, %v630
  %v632 = vsub.f32 1.0, %v631
  %v633 = vmul.f32 %v630, %v632
  %v634 = vadd.f32 %v630, %v633
  %vm635 = vweird.f32 %v578
  %vm636 = vweird.f32 %v630
  %vm637 = vmor %vm635, %vm636
  %v638 = vsel %vm637, %v630, %v634
  %v639 = vand.u32 2147483647, %v578
  %vm640 = vcmp.eq.f32.partialorder %v639, 8.507059e+37
  %v641 = vand.u32 %v578, 2147483648
  %v642 = vor.u32 1.1754944e-38, %v641
  %v643 = vsel %vm640, %v642, %v638
  %v644 = vmul.f32 1.0, %v643
  %v645 = vrcp.pop %v579
  %v646 = vmul.f32 %v579, %v645
  %v647 = vsub.f32 1.0, %v646
  %v648 = vmul.f32 %v645, %v647
  %v649 = vadd.f32 %v645, %v648
  %vm650 = vweird.f32 %v579
  %vm651 = vweird.f32 %v645
  %vm652 = vmor %vm650, %vm651
  %v653 = vsel %vm652, %v645, %v649
  %v654 = vand.u32 2147483647, %v579
  %vm655 = vcmp.eq.f32.partialorder %v654, 8.507059e+37
  %v656 = vand.u32 %v579, 2147483648
  %v657 = vor.u32 1.1754944e-38, %v656
  %v658 = vsel %vm655, %v657, %v653
  %v659 = vmul.f32 1.0, %v658
  %v660 = vrcp.pop %v580
  %v661 = vmul.f32 %v580, %v660
  %v662 = vsub.f32 1.0, %v661
  %v663 = vmul.f32 %v660, %v662
  %v664 = vadd.f32 %v660, %v663
  %vm665 = vweird.f32 %v580
  %vm666 = vweird.f32 %v660
  %vm667 = vmor %vm665, %vm666
  %v668 = vsel %vm667, %v660, %v664
  %v669 = vand.u32 2147483647, %v580
  %vm670 = vcmp.eq.f32.partialorder %v669, 8.507059e+37
  %v671 = vand.u32 %v580, 2147483648
  %v672 = vor.u32 1.1754944e-38, %v671
  %v673 = vsel %vm670, %v672, %v668
  %v674 = vmul.f32 1.0, %v673
  %v675 = vrcp.pop %v581
  %v676 = vmul.f32 %v581, %v675
  %v677 = vsub.f32 1.0, %v676
  %v678 = vmul.f32 %v675, %v677
  %v679 = vadd.f32 %v675, %v678
  %vm680 = vweird.f32 %v581
  %vm681 = vweird.f32 %v675
  %vm682 = vmor %vm680, %vm681
  %v683 = vsel %vm682, %v675, %v679
  %v684 = vand.u32 2147483647, %v581
  %vm685 = vcmp.eq.f32.partialorder %v684, 8.507059e+37
  %v686 = vand.u32 %v581, 2147483648
  %v687 = vor.u32 1.1754944e-38, %v686
  %v688 = vsel %vm685, %v687, %v683
  %v689 = vmul.f32 1.0, %v688
  %v690 = vrcp.pop %v582
  %v691 = vmul.f32 %v582, %v690
  %v692 = vsub.f32 1.0, %v691
  %v693 = vmul.f32 %v690, %v692
  %v694 = vadd.f32 %v690, %v693
  %vm695 = vweird.f32 %v582
  %vm696 = vweird.f32 %v690
  %vm697 = vmor %vm695, %vm696
  %v698 = vsel %vm697, %v690, %v694
  %v699 = vand.u32 2147483647, %v582
  %vm700 = vcmp.eq.f32.partialorder %v699, 8.507059e+37
  %v701 = vand.u32 %v582, 2147483648
  %v702 = vor.u32 1.1754944e-38, %v701
  %v703 = vsel %vm700, %v702, %v698
  %v704 = vmul.f32 1.0, %v703
  %v705 = vrcp.pop %v583
  %v706 = vmul.f32 %v583, %v705
  %v707 = vsub.f32 1.0, %v706
  %v708 = vmul.f32 %v705, %v707
  %v709 = vadd.f32 %v705, %v708
  %vm710 = vweird.f32 %v583
  %vm711 = vweird.f32 %v705
  %vm712 = vmor %vm710, %vm711
  %v713 = vsel %vm712, %v705, %v709
  %v714 = vand.u32 2147483647, %v583
  %vm715 = vcmp.eq.f32.partialorder %v714, 8.507059e+37
  %v716 = vand.u32 %v583, 2147483648
  %v717 = vor.u32 1.1754944e-38, %v716
  %v718 = vsel %vm715, %v717, %v713
  %v719 = vmul.f32 1.0, %v718
  %v720 = vrcp.pop %v584
  %v721 = vmul.f32 %v584, %v720
  %v722 = vsub.f32 1.0, %v721
  %v723 = vmul.f32 %v720, %v722
  %v724 = vadd.f32 %v720, %v723
  %vm725 = vweird.f32 %v584
  %vm726 = vweird.f32 %v720
  %vm727 = vmor %vm725, %vm726
  %v728 = vsel %vm727, %v720, %v724
  %v729 = vand.u32 2147483647, %v584
  %vm730 = vcmp.eq.f32.partialorder %v729, 8.507059e+37
  %v731 = vand.u32 %v584, 2147483648
  %v732 = vor.u32 1.1754944e-38, %v731
  %v733 = vsel %vm730, %v732, %v728
  %v734 = vmul.f32 1.0, %v733
  %v735 = vrcp.pop %v585
  %v736 = vmul.f32 %v585, %v735
  %v737 = vsub.f32 1.0, %v736
  %v738 = vmul.f32 %v735, %v737
  %v739 = vadd.f32 %v735, %v738
  %vm740 = vweird.f32 %v585
  %vm741 = vweird.f32 %v735
  %vm742 = vmor %vm740, %vm741
  %v743 = vsel %vm742, %v735, %v739
  %v744 = vand.u32 2147483647, %v585
  %vm745 = vcmp.eq.f32.partialorder %v744, 8.507059e+37
  %v746 = vand.u32 %v585, 2147483648
  %v747 = vor.u32 1.1754944e-38, %v746
  %v748 = vsel %vm745, %v747, %v743
  %v749 = vmul.f32 1.0, %v748
  %v750 = vrcp.pop %v586
  %v751 = vmul.f32 %v586, %v750
  %v752 = vsub.f32 1.0, %v751
  %v753 = vmul.f32 %v750, %v752
  %v754 = vadd.f32 %v750, %v753
  %vm755 = vweird.f32 %v586
  %vm756 = vweird.f32 %v750
  %vm757 = vmor %vm755, %vm756
  %v758 = vsel %vm757, %v750, %v754
  %v759 = vand.u32 2147483647, %v586
  %vm760 = vcmp.eq.f32.partialorder %v759, 8.507059e+37
  %v761 = vand.u32 %v586, 2147483648
  %v762 = vor.u32 1.1754944e-38, %v761
  %v763 = vsel %vm760, %v762, %v758
  %v764 = vmul.f32 1.0, %v763
  %v765 = vrcp.pop %v587
  %v766 = vmul.f32 %v587, %v765
  %v767 = vsub.f32 1.0, %v766
  %v768 = vmul.f32 %v765, %v767
  %v769 = vadd.f32 %v765, %v768
  %vm770 = vweird.f32 %v587
  %vm771 = vweird.f32 %v765
  %vm772 = vmor %vm770, %vm771
  %v773 = vsel %vm772, %v765, %v769
  %v774 = vand.u32 2147483647, %v587
  %vm775 = vcmp.eq.f32.partialorder %v774, 8.507059e+37
  %v776 = vand.u32 %v587, 2147483648
  %v777 = vor.u32 1.1754944e-38, %v776
  %v778 = vsel %vm775, %v777, %v773
  %v779 = vmul.f32 1.0, %v778
  %v780 = vrcp.pop %v588
  %v781 = vmul.f32 %v588, %v780
  %v782 = vsub.f32 1.0, %v781
  %v783 = vmul.f32 %v780, %v782
  %v784 = vadd.f32 %v780, %v783
  %vm785 = vweird.f32 %v588
  %vm786 = vweird.f32 %v780
  %vm787 = vmor %vm785, %vm786
  %v788 = vsel %vm787, %v780, %v784
  %v789 = vand.u32 2147483647, %v588
  %vm790 = vcmp.eq.f32.partialorder %v789, 8.507059e+37
  %v791 = vand.u32 %v588, 2147483648
  %v792 = vor.u32 1.1754944e-38, %v791
  %v793 = vsel %vm790, %v792, %v788
  %v794 = vmul.f32 1.0, %v793
  %v795 = vrcp.pop %v589
  %v796 = vmul.f32 %v589, %v795
  %v797 = vsub.f32 1.0, %v796
  %v798 = vmul.f32 %v795, %v797
  %v799 = vadd.f32 %v795, %v798
  %vm800 = vweird.f32 %v589
  %vm801 = vweird.f32 %v795
  %vm802 = vmor %vm800, %vm801
  %v803 = vsel %vm802, %v795, %v799
  %v804 = vand.u32 2147483647, %v589
  %vm805 = vcmp.eq.f32.partialorder %v804, 8.507059e+37
  %v806 = vand.u32 %v589, 2147483648
  %v807 = vor.u32 1.1754944e-38, %v806
  %v808 = vsel %vm805, %v807, %v803
  %v809 = vmul.f32 1.0, %v808
  %v810 = vrcp.pop %v590
  %v811 = vmul.f32 %v590, %v810
  %v812 = vsub.f32 1.0, %v811
  %v813 = vmul.f32 %v810, %v812
  %v814 = vadd.f32 %v810, %v813
  %vm815 = vweird.f32 %v590
  %vm816 = vweird.f32 %v810
  %vm817 = vmor %vm815, %vm816
  %v818 = vsel %vm817, %v810, %v814
  %v819 = vand.u32 2147483647, %v590
  %vm820 = vcmp.eq.f32.partialorder %v819, 8.507059e+37
  %v821 = vand.u32 %v590, 2147483648
  %v822 = vor.u32 1.1754944e-38, %v821
  %v823 = vsel %vm820, %v822, %v818
  %v824 = vmul.f32 1.0, %v823
  %v825 = vrcp.pop %v591
  %v826 = vmul.f32 %v591, %v825
  %v827 = vsub.f32 1.0, %v826
  %v828 = vmul.f32 %v825, %v827
  %v829 = vadd.f32 %v825, %v828
  %vm830 = vweird.f32 %v591
  %vm831 = vweird.f32 %v825
  %vm832 = vmor %vm830, %vm831
  %v833 = vsel %vm832, %v825, %v829
  %v834 = vand.u32 2147483647, %v591
  %vm835 = vcmp.eq.f32.partialorder %v834, 8.507059e+37
  %v836 = vand.u32 %v591, 2147483648
  %v837 = vor.u32 1.1754944e-38, %v836
  %v838 = vsel %vm835, %v837, %v833
  %v839 = vmul.f32 1.0, %v838
  %v840 = vrcp.pop %v592
  %v841 = vmul.f32 %v592, %v840
  %v842 = vsub.f32 1.0, %v841
  %v843 = vmul.f32 %v840, %v842
  %v844 = vadd.f32 %v840, %v843
  %vm845 = vweird.f32 %v592
  %vm846 = vweird.f32 %v840
  %vm847 = vmor %vm845, %vm846
  %v848 = vsel %vm847, %v840, %v844
  %v849 = vand.u32 2147483647, %v592
  %vm850 = vcmp.eq.f32.partialorder %v849, 8.507059e+37
  %v851 = vand.u32 %v592, 2147483648
  %v852 = vor.u32 1.1754944e-38, %v851
  %v853 = vsel %vm850, %v852, %v848
  %v854 = vmul.f32 1.0, %v853
  %v855 = vrcp.pop %v593
  %v856 = vmul.f32 %v593, %v855
  %v857 = vsub.f32 1.0, %v856
  %v858 = vmul.f32 %v855, %v857
  %v859 = vadd.f32 %v855, %v858
  %vm860 = vweird.f32 %v593
  %vm861 = vweird.f32 %v855
  %vm862 = vmor %vm860, %vm861
  %v863 = vsel %vm862, %v855, %v859
  %v864 = vand.u32 2147483647, %v593
  %vm865 = vcmp.eq.f32.partialorder %v864, 8.507059e+37
  %v866 = vand.u32 %v593, 2147483648
  %v867 = vor.u32 1.1754944e-38, %v866
  %v868 = vsel %vm865, %v867, %v863
  %v869 = vmul.f32 1.0, %v868
  %v870 = vrcp.pop %v594
  %v871 = vmul.f32 %v594, %v870
  %v872 = vsub.f32 1.0, %v871
  %v873 = vmul.f32 %v870, %v872
  %v874 = vadd.f32 %v870, %v873
  %vm875 = vweird.f32 %v594
  %vm876 = vweird.f32 %v870
  %vm877 = vmor %vm875, %vm876
  %v878 = vsel %vm877, %v870, %v874
  %v879 = vand.u32 2147483647, %v594
  %vm880 = vcmp.eq.f32.partialorder %v879, 8.507059e+37
  %v881 = vand.u32 %v594, 2147483648
  %v882 = vor.u32 1.1754944e-38, %v881
  %v883 = vsel %vm880, %v882, %v878
  %v884 = vmul.f32 1.0, %v883
  %v885 = vrcp.pop %v595
  %v886 = vmul.f32 %v595, %v885
  %v887 = vsub.f32 1.0, %v886
  %v888 = vmul.f32 %v885, %v887
  %v889 = vadd.f32 %v885, %v888
  %vm890 = vweird.f32 %v595
  %vm891 = vweird.f32 %v885
  %vm892 = vmor %vm890, %vm891
  %v893 = vsel %vm892, %v885, %v889
  %v894 = vand.u32 2147483647, %v595
  %vm895 = vcmp.eq.f32.partialorder %v894, 8.507059e+37
  %v896 = vand.u32 %v595, 2147483648
  %v897 = vor.u32 1.1754944e-38, %v896
  %v898 = vsel %vm895, %v897, %v893
  %v899 = vmul.f32 1.0, %v898
  %v900 = vrcp.pop %v596
  %v901 = vmul.f32 %v596, %v900
  %v902 = vsub.f32 1.0, %v901
  %v903 = vmul.f32 %v900, %v902
  %v904 = vadd.f32 %v900, %v903
  %vm905 = vweird.f32 %v596
  %vm906 = vweird.f32 %v900
  %vm907 = vmor %vm905, %vm906
  %v908 = vsel %vm907, %v900, %v904
  %v909 = vand.u32 2147483647, %v596
  %vm910 = vcmp.eq.f32.partialorder %v909, 8.507059e+37
  %v911 = vand.u32 %v596, 2147483648
  %v912 = vor.u32 1.1754944e-38, %v911
  %v913 = vsel %vm910, %v912, %v908
  %v914 = vmul.f32 1.0, %v913
  %v915 = vrcp.pop %v597
  %v916 = vmul.f32 %v597, %v915
  %v917 = vsub.f32 1.0, %v916
  %v918 = vmul.f32 %v915, %v917
  %v919 = vadd.f32 %v915, %v918
  %vm920 = vweird.f32 %v597
  %vm921 = vweird.f32 %v915
  %vm922 = vmor %vm920, %vm921
  %v923 = vsel %vm922, %v915, %v919
  %v924 = vand.u32 2147483647, %v597
  %vm925 = vcmp.eq.f32.partialorder %v924, 8.507059e+37
  %v926 = vand.u32 %v597, 2147483648
  %v927 = vor.u32 1.1754944e-38, %v926
  %v928 = vsel %vm925, %v927, %v923
  %v929 = vmul.f32 1.0, %v928
  %v930 = vrcp.pop %v598
  %v931 = vmul.f32 %v598, %v930
  %v932 = vsub.f32 1.0, %v931
  %v933 = vmul.f32 %v930, %v932
  %v934 = vadd.f32 %v930, %v933
  %vm935 = vweird.f32 %v598
  %vm936 = vweird.f32 %v930
  %vm937 = vmor %vm935, %vm936
  %v938 = vsel %vm937, %v930, %v934
  %v939 = vand.u32 2147483647, %v598
  %vm940 = vcmp.eq.f32.partialorder %v939, 8.507059e+37
  %v941 = vand.u32 %v598, 2147483648
  %v942 = vor.u32 1.1754944e-38, %v941
  %v943 = vsel %vm940, %v942, %v938
  %v944 = vmul.f32 1.0, %v943
  %v945 = vrcp.pop %v599
  %v946 = vmul.f32 %v599, %v945
  %v947 = vsub.f32 1.0, %v946
  %v948 = vmul.f32 %v945, %v947
  %v949 = vadd.f32 %v945, %v948
  %vm950 = vweird.f32 %v599
  %vm951 = vweird.f32 %v945
  %vm952 = vmor %vm950, %vm951
  %v953 = vsel %vm952, %v945, %v949
  %v954 = vand.u32 2147483647, %v599
  %vm955 = vcmp.eq.f32.partialorder %v954, 8.507059e+37
  %v956 = vand.u32 %v599, 2147483648
  %v957 = vor.u32 1.1754944e-38, %v956
  %v958 = vsel %vm955, %v957, %v953
  %v959 = vmul.f32 1.0, %v958
  %v960 = vmul.f32 %v394, %v614
  %v961 = vmul.f32 %v418, %v629
  %v962 = vmul.f32 %v442, %v644
  %v963 = vmul.f32 %v466, %v659
  %v964 = vmul.f32 %v396, %v674
  %v965 = vmul.f32 %v420, %v689
  %v966 = vmul.f32 %v444, %v704
  %v967 = vmul.f32 %v468, %v719
  %v968 = vmul.f32 %v399, %v734
  %v969 = vmul.f32 %v423, %v749
  %v970 = vmul.f32 %v447, %v764
  %v971 = vmul.f32 %v471, %v779
  %v972 = vmul.f32 %v401, %v794
  %v973 = vmul.f32 %v425, %v809
  %v974 = vmul.f32 %v449, %v824
  %v975 = vmul.f32 %v473, %v839
  %v976 = vmul.f32 %v404, %v854
  %v977 = vmul.f32 %v428, %v869
  %v978 = vmul.f32 %v452, %v884
  %v979 = vmul.f32 %v476, %v899
  %v980 = vmul.f32 %v406, %v914
  %v981 = vmul.f32 %v430, %v929
  %v982 = vmul.f32 %v454, %v944
  %v983 = vmul.f32 %v478, %v959
  %v984 = vpack.c.bf16 %v961, %v960
  %v985 = vpack.c.bf16 %v963, %v962
  %v986 = vpack.c.bf16 %v965, %v964
  %v987 = vpack.c.bf16 %v967, %v966
  %v988 = vpack.c.bf16 %v969, %v968
  %v989 = vpack.c.bf16 %v971, %v970
  %v990 = vpack.c.bf16 %v973, %v972
  %v991 = vpack.c.bf16 %v975, %v974
  %v992 = vpack.c.bf16 %v977, %v976
  %v993 = vpack.c.bf16 %v979, %v978
  %v994 = vpack.c.bf16 %v981, %v980
  %v995 = vpack.c.bf16 %v983, %v982
  %996 = vst [vmem:[%s5] sm:$0xff] %v984
  %997 = vst [vmem:[%s5 + $0x8] sm:$0xff] %v985
  %998 = vst [vmem:[%s5 + $0x10] sm:$0xff] %v986
  %999 = vst [vmem:[%s5 + $0x18] sm:$0xff] %v987
  %1000 = vst [vmem:[%s5 + $0x20] sm:$0xff] %v988
  %1001 = vst [vmem:[%s5 + $0x28] sm:$0xff] %v989
  %1002 = vst [vmem:[%s5 + $0x30] sm:$0xff] %v990
  %1003 = vst [vmem:[%s5 + $0x38] sm:$0xff] %v991
  %1004 = vst [vmem:[%s5 + $0x40] sm:$0xff] %v992
  %1005 = vst [vmem:[%s5 + $0x48] sm:$0xff] %v993
  %1006 = vst [vmem:[%s5 + $0x50] sm:$0xff] %v994
  %1007 = vst [vmem:[%s5 + $0x58] sm:$0xff] %v995
  // Predicated region
  $region22: #{vision_transformer_forward.19} parent=0 // pred_check
    _
  $region23: #{vision_transformer_forward.19} parent=0 // pred_check_branch
    %1009 = sbr.rel (0) target = $region25
  $region24: #{vision_transformer_forward.19} parent=0 // pred_region
    _
  $region25: #{vision_transformer_forward.19} parent=0 // pred_fallthru
    _
  // Predicated region
  $region26: #{vision_transformer_forward.19} parent=0 // pred_check
    _
  $region27: #{vision_transformer_forward.19} parent=0 // pred_check_branch
    %1011 = sbr.rel (0) target = $region29
  $region28: #{vision_transformer_forward.19} parent=0 // pred_region
    _
  $region29: #{vision_transformer_forward.19} parent=0 // pred_fallthru
    _

// kernel: vision_transformer_forward.20
$region0: #{vision_transformer_forward.20}
  #allocation0 [shape = 'u32[]', space=smem, size = 0x4, offset = 0x4, fixed_abs, tag = 'smem constant byte address 0x4 - core index']
  #allocation1 [shape = 'u32[72,128]{1,0:T(1,128)}', space=vmem, size = 0x9000, scoped, tag = 'internal scratch']
  %s0 = inlined_call_operand.vmem [shape: bf16[48,512], index: 0, kind: input, shape index: {}]
  %s1 = inlined_call_operand.vmem [shape: bf16[512,128], index: 1, kind: input, shape index: {}]
  %s2 = inlined_call_operand.vmem [shape: f32[1,128], index: 2, kind: input, shape index: {}]
  %s3 = inlined_call_operand.vmem [shape: bf16[48,128], index: 3, kind: input, shape index: {}]
  %s4 = inlined_call_operand.vmem [shape: bf16[48,128], index: 4, kind: output, shape index: {}]
  %s5 = sld [smem:[#allocation0]]
  $region26: #{vision_transformer_forward.20} parent=0
    _
  %s7 = ssub.s32 1, %s5
  %s8 = scalar_select 0, %s7, %s5
  // Predicated region
  $region2: #{vision_transformer_forward.20} parent=0 // pred_check
    _
  $region3: #{vision_transformer_forward.20} parent=0 // pred_check_branch
    %10 = sbr.rel (0) target = $region5
  $region4: #{vision_transformer_forward.20} parent=0 // pred_region
    _
  $region5: #{vision_transformer_forward.20} parent=0 // pred_fallthru
    _
  // Predicated region
  $region6: #{vision_transformer_forward.20} parent=0 // pred_check
    _
  $region7: #{vision_transformer_forward.20} parent=0 // pred_check_branch
    %12 = sbr.rel (0) target = $region9
  $region8: #{vision_transformer_forward.20} parent=0 // pred_region
    _
  $region9: #{vision_transformer_forward.20} parent=0 // pred_fallthru
    _
  // Predicated region
  $region10: #{vision_transformer_forward.20} parent=0 // pred_check
    _
  $region11: #{vision_transformer_forward.20} parent=0 // pred_check_branch
    %14 = sbr.rel (0) target = $region13
  $region12: #{vision_transformer_forward.20} parent=0 // pred_region
    _
  $region13: #{vision_transformer_forward.20} parent=0 // pred_fallthru
    _
  // Predicated region
  $region14: #{vision_transformer_forward.20} parent=0 // pred_check
    _
  $region15: #{vision_transformer_forward.20} parent=0 // pred_check_branch
    %16 = sbr.rel (0) target = $region17
  $region16: #{vision_transformer_forward.20} parent=0 // pred_region
    _
  $region17: #{vision_transformer_forward.20} parent=0 // pred_fallthru
    _
  %v17 = vld [vmem:[%s0] sm:$0xff]
  %v18 = vld [vmem:[%s0 + $0x8] sm:$0xff]
  %v19 = vld [vmem:[%s0 + $0x10] sm:$0xff]
  %v20 = vld [vmem:[%s0 + $0x18] sm:$0xff]
  %v21 = vld [vmem:[%s0 + $0x20] sm:$0xff]
  %v22 = vld [vmem:[%s0 + $0x28] sm:$0xff]
  %v23 = vld [vmem:[%s0 + $0x30] sm:$0xff]
  %v24 = vld [vmem:[%s0 + $0x38] sm:$0xff]
  %v25 = vld [vmem:[%s0 + $0x40] sm:$0xff]
  %v26 = vld [vmem:[%s0 + $0x48] sm:$0xff]
  %v27 = vld [vmem:[%s0 + $0x50] sm:$0xff]
  %v28 = vld [vmem:[%s0 + $0x58] sm:$0xff]
  %v29 = vld [vmem:[%s1] sm:$0xf]
  %v30 = vld [vmem:[%s1 + $0x4] sm:$0xf]
  %v31 = vld [vmem:[%s1 + $0x8] sm:$0xf]
  %v32 = vld [vmem:[%s1 + $0xc] sm:$0xf]
  %v33 = vld [vmem:[%s1 + $0x10] sm:$0xf]
  %v34 = vld [vmem:[%s1 + $0x14] sm:$0xf]
  %v35 = vld [vmem:[%s1 + $0x18] sm:$0xf]
  %v36 = vld [vmem:[%s1 + $0x1c] sm:$0xf]
  %v37 = vld [vmem:[%s1 + $0x20] sm:$0xf]
  %v38 = vld [vmem:[%s1 + $0x24] sm:$0xf]
  %v39 = vld [vmem:[%s1 + $0x28] sm:$0xf]
  %v40 = vld [vmem:[%s1 + $0x2c] sm:$0xf]
  %v41 = vld [vmem:[%s1 + $0x30] sm:$0xf]
  %v42 = vld [vmem:[%s1 + $0x34] sm:$0xf]
  %v43 = vld [vmem:[%s1 + $0x38] sm:$0xf]
  %v44 = vld [vmem:[%s1 + $0x3c] sm:$0xf]
  %v45 = vld [vmem:[%s1 + $0x40] sm:$0xf]
  %v46 = vld [vmem:[%s1 + $0x44] sm:$0xf]
  %v47 = vld [vmem:[%s1 + $0x48] sm:$0xf]
  %v48 = vld [vmem:[%s1 + $0x4c] sm:$0xf]
  %v49 = vld [vmem:[%s1 + $0x50] sm:$0xf]
  %v50 = vld [vmem:[%s1 + $0x54] sm:$0xf]
  %v51 = vld [vmem:[%s1 + $0x58] sm:$0xf]
  %v52 = vld [vmem:[%s1 + $0x5c] sm:$0xf]
  %v53 = vld [vmem:[%s1 + $0x60] sm:$0xf]
  %v54 = vld [vmem:[%s1 + $0x64] sm:$0xf]
  %v55 = vld [vmem:[%s1 + $0x68] sm:$0xf]
  %v56 = vld [vmem:[%s1 + $0x6c] sm:$0xf]
  %v57 = vld [vmem:[%s1 + $0x70] sm:$0xf]
  %v58 = vld [vmem:[%s1 + $0x74] sm:$0xf]
  %v59 = vld [vmem:[%s1 + $0x78] sm:$0xf]
  %v60 = vld [vmem:[%s1 + $0x7c] sm:$0xf]
  %v61 = vld [vmem:[%s1 + $0x80] sm:$0xf]
  %v62 = vld [vmem:[%s1 + $0x84] sm:$0xf]
  %v63 = vld [vmem:[%s1 + $0x88] sm:$0xf]
  %v64 = vld [vmem:[%s1 + $0x8c] sm:$0xf]
  %v65 = vld [vmem:[%s1 + $0x90] sm:$0xf]
  %v66 = vld [vmem:[%s1 + $0x94] sm:$0xf]
  %v67 = vld [vmem:[%s1 + $0x98] sm:$0xf]
  %v68 = vld [vmem:[%s1 + $0x9c] sm:$0xf]
  %v69 = vld [vmem:[%s1 + $0xa0] sm:$0xf]
  %v70 = vld [vmem:[%s1 + $0xa4] sm:$0xf]
  %v71 = vld [vmem:[%s1 + $0xa8] sm:$0xf]
  %v72 = vld [vmem:[%s1 + $0xac] sm:$0xf]
  %v73 = vld [vmem:[%s1 + $0xb0] sm:$0xf]
  %v74 = vld [vmem:[%s1 + $0xb4] sm:$0xf]
  %v75 = vld [vmem:[%s1 + $0xb8] sm:$0xf]
  %v76 = vld [vmem:[%s1 + $0xbc] sm:$0xf]
  %v77 = vld [vmem:[%s1 + $0xc0] sm:$0xf]
  %v78 = vld [vmem:[%s1 + $0xc4] sm:$0xf]
  %v79 = vld [vmem:[%s1 + $0xc8] sm:$0xf]
  %v80 = vld [vmem:[%s1 + $0xcc] sm:$0xf]
  %v81 = vld [vmem:[%s1 + $0xd0] sm:$0xf]
  %v82 = vld [vmem:[%s1 + $0xd4] sm:$0xf]
  %v83 = vld [vmem:[%s1 + $0xd8] sm:$0xf]
  %v84 = vld [vmem:[%s1 + $0xdc] sm:$0xf]
  %v85 = vld [vmem:[%s1 + $0xe0] sm:$0xf]
  %v86 = vld [vmem:[%s1 + $0xe4] sm:$0xf]
  %v87 = vld [vmem:[%s1 + $0xe8] sm:$0xf]
  %v88 = vld [vmem:[%s1 + $0xec] sm:$0xf]
  %v89 = vld [vmem:[%s1 + $0xf0] sm:$0xf]
  %v90 = vld [vmem:[%s1 + $0xf4] sm:$0xf]
  %v91 = vld [vmem:[%s1 + $0xf8] sm:$0xf]
  %v92 = vld [vmem:[%s1 + $0xfc] sm:$0xf]
  %v93 = vld [vmem:[%s2] sm:$0x1]
  %v95 = vperm.slane %v93, 0
  %v109 = vunpack.c.l.b16 %v17
  %v110 = vunpack.c.h.b16 %v17
  %v111 = vunpack.c.l.b16 %v18
  %v112 = vunpack.c.h.b16 %v18
  %v113 = vunpack.c.l.b16 %v19
  %v114 = vunpack.c.h.b16 %v19
  %v115 = vunpack.c.l.b16 %v20
  %v116 = vunpack.c.h.b16 %v20
  %v117 = vunpack.c.l.b16 %v21
  %v118 = vunpack.c.h.b16 %v21
  %v119 = vunpack.c.l.b16 %v22
  %v120 = vunpack.c.h.b16 %v22
  %v121 = vunpack.c.l.b16 %v23
  %v122 = vunpack.c.h.b16 %v23
  %v123 = vunpack.c.l.b16 %v24
  %v124 = vunpack.c.h.b16 %v24
  %v125 = vunpack.c.l.b16 %v25
  %v126 = vunpack.c.h.b16 %v25
  %v127 = vunpack.c.l.b16 %v26
  %v128 = vunpack.c.h.b16 %v26
  %v129 = vunpack.c.l.b16 %v27
  %v130 = vunpack.c.h.b16 %v27
  %v131 = vunpack.c.l.b16 %v28
  %v132 = vunpack.c.h.b16 %v28
  %v133 = vpack.c.b16 %v113, %v109
  %v134 = vpack.c.b16 %v114, %v110
  %v135 = vpack.c.b16 %v115, %v111
  %v136 = vpack.c.b16 %v116, %v112
  %v137 = vpack.c.b16 %v121, %v117
  %v138 = vpack.c.b16 %v122, %v118
  %v139 = vpack.c.b16 %v123, %v119
  %v140 = vpack.c.b16 %v124, %v120
  %v141 = vpack.c.b16 %v129, %v125
  %v142 = vpack.c.b16 %v130, %v126
  %v143 = vpack.c.b16 %v131, %v127
  %v144 = vpack.c.b16 %v132, %v128
  %v221 = vunpack.c.l.b16 %v29
  %v222 = vunpack.c.l.b16 %v30
  %v223 = vunpack.c.l.b16 %v31
  %v224 = vunpack.c.l.b16 %v32
  %v225 = vunpack.c.l.b16 %v33
  %v226 = vunpack.c.l.b16 %v34
  %v227 = vunpack.c.l.b16 %v35
  %v228 = vunpack.c.l.b16 %v36
  %v229 = vunpack.c.l.b16 %v37
  %v230 = vunpack.c.l.b16 %v38
  %v231 = vunpack.c.l.b16 %v39
  %v232 = vunpack.c.l.b16 %v40
  %v233 = vunpack.c.l.b16 %v41
  %v234 = vunpack.c.l.b16 %v42
  %v235 = vunpack.c.l.b16 %v43
  %v236 = vunpack.c.l.b16 %v44
  %v237 = vunpack.c.l.b16 %v45
  %v238 = vunpack.c.l.b16 %v46
  %v239 = vunpack.c.l.b16 %v47
  %v240 = vunpack.c.l.b16 %v48
  %v241 = vunpack.c.l.b16 %v49
  %v242 = vunpack.c.l.b16 %v50
  %v243 = vunpack.c.l.b16 %v51
  %v244 = vunpack.c.l.b16 %v52
  %v245 = vunpack.c.l.b16 %v53
  %v246 = vunpack.c.l.b16 %v54
  %v247 = vunpack.c.l.b16 %v55
  %v248 = vunpack.c.l.b16 %v56
  %v249 = vunpack.c.l.b16 %v57
  %v250 = vunpack.c.l.b16 %v58
  %v251 = vunpack.c.l.b16 %v59
  %v252 = vunpack.c.l.b16 %v60
  %v253 = vunpack.c.l.b16 %v61
  %v254 = vunpack.c.l.b16 %v62
  %v255 = vunpack.c.l.b16 %v63
  %v256 = vunpack.c.l.b16 %v64
  %v257 = vunpack.c.l.b16 %v65
  %v258 = vunpack.c.l.b16 %v66
  %v259 = vunpack.c.l.b16 %v67
  %v260 = vunpack.c.l.b16 %v68
  %v261 = vunpack.c.l.b16 %v69
  %v262 = vunpack.c.l.b16 %v70
  %v263 = vunpack.c.l.b16 %v71
  %v264 = vunpack.c.l.b16 %v72
  %v265 = vunpack.c.l.b16 %v73
  %v266 = vunpack.c.l.b16 %v74
  %v267 = vunpack.c.l.b16 %v75
  %v268 = vunpack.c.l.b16 %v76
  %v269 = vunpack.c.l.b16 %v77
  %v270 = vunpack.c.l.b16 %v78
  %v271 = vunpack.c.l.b16 %v79
  %v272 = vunpack.c.l.b16 %v80
  %v273 = vunpack.c.l.b16 %v81
  %v274 = vunpack.c.l.b16 %v82
  %v275 = vunpack.c.l.b16 %v83
  %v276 = vunpack.c.l.b16 %v84
  %v277 = vunpack.c.l.b16 %v85
  %v278 = vunpack.c.l.b16 %v86
  %v279 = vunpack.c.l.b16 %v87
  %v280 = vunpack.c.l.b16 %v88
  %v281 = vunpack.c.l.b16 %v89
  %v282 = vunpack.c.l.b16 %v90
  %v283 = vunpack.c.l.b16 %v91
  %v284 = vunpack.c.l.b16 %v92
  %v285 = vpack.c.b16 %v222, %v221
  %v286 = vpack.c.b16 %v224, %v223
  %v287 = vpack.c.b16 %v226, %v225
  %v288 = vpack.c.b16 %v228, %v227
  %v289 = vpack.c.b16 %v230, %v229
  %v290 = vpack.c.b16 %v232, %v231
  %v291 = vpack.c.b16 %v234, %v233
  %v292 = vpack.c.b16 %v236, %v235
  %v293 = vpack.c.b16 %v238, %v237
  %v294 = vpack.c.b16 %v240, %v239
  %v295 = vpack.c.b16 %v242, %v241
  %v296 = vpack.c.b16 %v244, %v243
  %v297 = vpack.c.b16 %v246, %v245
  %v298 = vpack.c.b16 %v248, %v247
  %v299 = vpack.c.b16 %v250, %v249
  %v300 = vpack.c.b16 %v252, %v251
  %v301 = vpack.c.b16 %v254, %v253
  %v302 = vpack.c.b16 %v256, %v255
  %v303 = vpack.c.b16 %v258, %v257
  %v304 = vpack.c.b16 %v260, %v259
  %v305 = vpack.c.b16 %v262, %v261
  %v306 = vpack.c.b16 %v264, %v263
  %v307 = vpack.c.b16 %v266, %v265
  %v308 = vpack.c.b16 %v268, %v267
  %v309 = vpack.c.b16 %v270, %v269
  %v310 = vpack.c.b16 %v272, %v271
  %v311 = vpack.c.b16 %v274, %v273
  %v312 = vpack.c.b16 %v276, %v275
  %v313 = vpack.c.b16 %v278, %v277
  %v314 = vpack.c.b16 %v280, %v279
  %v315 = vpack.c.b16 %v282, %v281
  %v316 = vpack.c.b16 %v284, %v283
  %349 = vmatpush.bf16.msra.mxu0 %v292
  %350 = vmatpush.bf16.msra.mxu0 %v291
  %351 = vmatpush.bf16.msra.mxu0 %v290
  %352 = vmatpush.bf16.msra.mxu0 %v289
  %353 = vmatpush.bf16.msra.mxu0 %v288
  %354 = vmatpush.bf16.msra.mxu0 %v287
  %355 = vmatpush.bf16.msra.mxu0 %v286
  %356 = vmatpush.bf16.msra.mxu0 %v285
  %357 = vmatmul.bf16.gmra.mxu0 %v133
  %v358 = vpop.f32.mrf.mxu0
  %v359 = vadd.f32 %v95, %v358
  %v360 = vpop.f32.mrf.mxu0
  %v361 = vadd.f32 %v95, %v360
  %362 = vmatmul.bf16.gmra.mxu0 %v137
  %v363 = vpop.f32.mrf.mxu0
  %v364 = vadd.f32 %v95, %v363
  %v365 = vpop.f32.mrf.mxu0
  %v366 = vadd.f32 %v95, %v365
  %367 = vmatmul.bf16.gmra.mxu0 %v141
  %v368 = vpop.f32.mrf.mxu0
  %v369 = vadd.f32 %v95, %v368
  %v370 = vpop.f32.mrf.mxu0
  %v371 = vadd.f32 %v95, %v370
  %372 = vdwg.mxu0
  %373 = vmatpush.bf16.msra.mxu0 %v300
  %374 = vmatpush.bf16.msra.mxu0 %v299
  %375 = vmatpush.bf16.msra.mxu0 %v298
  %376 = vmatpush.bf16.msra.mxu0 %v297
  %377 = vmatpush.bf16.msra.mxu0 %v296
  %378 = vmatpush.bf16.msra.mxu0 %v295
  %379 = vmatpush.bf16.msra.mxu0 %v294
  %380 = vmatpush.bf16.msra.mxu0 %v293
  %381 = vmatmul.bf16.gmra.mxu0 %v134
  %v382 = vpop.f32.mrf.mxu0
  %v383 = vadd.f32 %v359, %v382
  %v384 = vpop.f32.mrf.mxu0
  %v385 = vadd.f32 %v361, %v384
  %386 = vmatmul.bf16.gmra.mxu0 %v138
  %v387 = vpop.f32.mrf.mxu0
  %v388 = vadd.f32 %v364, %v387
  %v389 = vpop.f32.mrf.mxu0
  %v390 = vadd.f32 %v366, %v389
  %391 = vmatmul.bf16.gmra.mxu0 %v142
  %v392 = vpop.f32.mrf.mxu0
  %v393 = vadd.f32 %v369, %v392
  %v394 = vpop.f32.mrf.mxu0
  %v395 = vadd.f32 %v371, %v394
  %396 = vdwg.mxu0
  %397 = vmatpush.bf16.msra.mxu0 %v308
  %398 = vmatpush.bf16.msra.mxu0 %v307
  %399 = vmatpush.bf16.msra.mxu0 %v306
  %400 = vmatpush.bf16.msra.mxu0 %v305
  %401 = vmatpush.bf16.msra.mxu0 %v304
  %402 = vmatpush.bf16.msra.mxu0 %v303
  %403 = vmatpush.bf16.msra.mxu0 %v302
  %404 = vmatpush.bf16.msra.mxu0 %v301
  %405 = vmatmul.bf16.gmra.mxu0 %v135
  %v406 = vpop.f32.mrf.mxu0
  %v407 = vadd.f32 %v383, %v406
  %v408 = vpop.f32.mrf.mxu0
  %v409 = vadd.f32 %v385, %v408
  %410 = vmatmul.bf16.gmra.mxu0 %v139
  %v411 = vpop.f32.mrf.mxu0
  %v412 = vadd.f32 %v388, %v411
  %v413 = vpop.f32.mrf.mxu0
  %v414 = vadd.f32 %v390, %v413
  %415 = vmatmul.bf16.gmra.mxu0 %v143
  %v416 = vpop.f32.mrf.mxu0
  %v417 = vadd.f32 %v393, %v416
  %v418 = vpop.f32.mrf.mxu0
  %v419 = vadd.f32 %v395, %v418
  %420 = vdwg.mxu0
  %421 = vmatpush.bf16.msra.mxu0 %v316
  %422 = vmatpush.bf16.msra.mxu0 %v315
  %423 = vmatpush.bf16.msra.mxu0 %v314
  %424 = vmatpush.bf16.msra.mxu0 %v313
  %425 = vmatpush.bf16.msra.mxu0 %v312
  %426 = vmatpush.bf16.msra.mxu0 %v311
  %427 = vmatpush.bf16.msra.mxu0 %v310
  %428 = vmatpush.bf16.msra.mxu0 %v309
  %429 = vmatmul.bf16.gmra.mxu0 %v136
  %v430 = vpop.f32.mrf.mxu0
  %v431 = vadd.f32 %v407, %v430
  %v432 = vpop.f32.mrf.mxu0
  %v433 = vadd.f32 %v409, %v432
  %434 = vmatmul.bf16.gmra.mxu0 %v140
  %v435 = vpop.f32.mrf.mxu0
  %v436 = vadd.f32 %v412, %v435
  %v437 = vpop.f32.mrf.mxu0
  %v438 = vadd.f32 %v414, %v437
  %439 = vmatmul.bf16.gmra.mxu0 %v144
  %v440 = vpop.f32.mrf.mxu0
  %v441 = vadd.f32 %v417, %v440
  %v442 = vpop.f32.mrf.mxu0
  %v443 = vadd.f32 %v419, %v442
  %444 = vdwg.mxu0
  %v445 = vld [vmem:[%s3] sm:$0xf]
  %v446 = vld [vmem:[%s3 + $0x4] sm:$0xf]
  %v447 = vld [vmem:[%s3 + $0x8] sm:$0xf]
  %v448 = vld [vmem:[%s3 + $0xc] sm:$0xf]
  %v449 = vld [vmem:[%s3 + $0x10] sm:$0xf]
  %v450 = vld [vmem:[%s3 + $0x14] sm:$0xf]
  %v451 = vunpack.c.l.bf16 %v445
  %v452 = vunpack.c.l.bf16 %v446
  %v453 = vunpack.c.l.bf16 %v447
  %v454 = vunpack.c.l.bf16 %v448
  %v455 = vunpack.c.l.bf16 %v449
  %v456 = vunpack.c.l.bf16 %v450
  %v457 = vadd.f32 %v431, %v451
  %v458 = vadd.f32 %v433, %v452
  %v459 = vadd.f32 %v436, %v453
  %v460 = vadd.f32 %v438, %v454
  %v461 = vadd.f32 %v441, %v455
  %v462 = vadd.f32 %v443, %v456
  %v463 = vpack.c.bf16 %v457, %v457
  %v464 = vpack.c.bf16 %v458, %v458
  %v465 = vpack.c.bf16 %v459, %v459
  %v466 = vpack.c.bf16 %v460, %v460
  %v467 = vpack.c.bf16 %v461, %v461
  %v468 = vpack.c.bf16 %v462, %v462
  %469 = vst [vmem:[%s4] sm:$0xf] %v463
  %470 = vst [vmem:[%s4 + $0x4] sm:$0xf] %v464
  %471 = vst [vmem:[%s4 + $0x8] sm:$0xf] %v465
  %472 = vst [vmem:[%s4 + $0xc] sm:$0xf] %v466
  %473 = vst [vmem:[%s4 + $0x10] sm:$0xf] %v467
  %474 = vst [vmem:[%s4 + $0x14] sm:$0xf] %v468
  // Predicated region
  $region18: #{vision_transformer_forward.20} parent=0 // pred_check
    _
  $region19: #{vision_transformer_forward.20} parent=0 // pred_check_branch
    %476 = sbr.rel (0) target = $region21
  $region20: #{vision_transformer_forward.20} parent=0 // pred_region
    _
  $region21: #{vision_transformer_forward.20} parent=0 // pred_fallthru
    _
  // Predicated region
  $region22: #{vision_transformer_forward.20} parent=0 // pred_check
    _
  $region23: #{vision_transformer_forward.20} parent=0 // pred_check_branch
    %478 = sbr.rel (0) target = $region25
  $region24: #{vision_transformer_forward.20} parent=0 // pred_region
    _
  $region25: #{vision_transformer_forward.20} parent=0 // pred_fallthru
    _

// kernel: vision_transformer_forward.21
$region0: #{vision_transformer_forward.21}
  #allocation0 [shape = 'u32[]', space=smem, size = 0x4, offset = 0x4, fixed_abs, tag = 'smem constant byte address 0x4 - core index']
  #allocation1 [shape = 'u32[72,128]{1,0:T(1,128)}', space=vmem, size = 0x9000, scoped, tag = 'internal scratch']
  %s0 = inlined_call_operand.vmem [shape: bf16[48,128], index: 0, kind: input, shape index: {}]
  %s1 = inlined_call_operand.vmem [shape: bf16[128,384], index: 1, kind: input, shape index: {}]
  %s2 = inlined_call_operand.vmem [shape: f32[1,384], index: 2, kind: input, shape index: {}]
  %s3 = inlined_call_operand.hbm [shape: f32[1,128], index: 3, kind: input, shape index: {}]
  %s4 = inlined_call_operand.hbm [shape: f32[1,128], index: 4, kind: input, shape index: {}]
  %s5 = inlined_call_operand.vmem [shape: bf16[48,384], index: 5, kind: output, shape index: {}]
  %s6 = sld [smem:[#allocation0]]
  $region38: #{vision_transformer_forward.21} parent=0
    _
  %s8 = ssub.s32 1, %s6
  %s9 = scalar_select 0, %s8, %s6
  $region1: #{vision_transformer_forward.21} parent=0
    #allocation2 [shape = 'u8[512]{0}', space=vmem, size = 0x400, scoped, tag = 'input window, operand 3, single buffered']
    #allocation3 [shape = 's32[1]{0}', space=sflag, size = 0x4, scoped, tag = 'scoped memory for vision_transformer_forward.21']
    #allocation4 [shape = 'u8[512]{0}', space=vmem, size = 0x400, scoped, tag = 'input window, operand 4, single buffered']
    #allocation5 [shape = 's32[1]{0}', space=sflag, size = 0x4, scoped, tag = 'scoped memory for vision_transformer_forward.21']
    %10 = vsyncpa [#allocation3], 0
    %11 = vsyncpa [#allocation5], 0
    // Predicated region
    $region2: #{vision_transformer_forward.21} parent=1 // pred_check
      _
    $region3: #{vision_transformer_forward.21} parent=1 // pred_check_branch
      %13 = sbr.rel (0) target = $region5
    $region4: #{vision_transformer_forward.21} parent=1 // pred_region
      _
    $region5: #{vision_transformer_forward.21} parent=1 // pred_fallthru
      _
    // Predicated region
    $region6: #{vision_transformer_forward.21} parent=1 // pred_check
      _
    $region7: #{vision_transformer_forward.21} parent=1 // pred_check_branch
      %15 = sbr.rel (0) target = $region9
    $region8: #{vision_transformer_forward.21} parent=1 // pred_region
      _
    $region9: #{vision_transformer_forward.21} parent=1 // pred_fallthru
      _
    // Predicated region
    $region10: #{vision_transformer_forward.21} parent=1 // pred_check
      _
    $region11: #{vision_transformer_forward.21} parent=1 // pred_check_branch
      %17 = sbr.rel (0) target = $region13
    $region12: #{vision_transformer_forward.21} parent=1 // pred_region
      _
    $region13: #{vision_transformer_forward.21} parent=1 // pred_fallthru
      _
    // Predicated region
    $region14: #{vision_transformer_forward.21} parent=1 // pred_check
      _
    $region15: #{vision_transformer_forward.21} parent=1 // pred_check_branch
      %19 = sbr.rel (0) target = $region17
    $region16: #{vision_transformer_forward.21} parent=1 // pred_region
      %21 = vsyncadd [#allocation3], 0
      %s23 = sshll.u32 %s3, 4
      %s24 = int_to_ptr.hbm [resolvable:$true] %s23
      %s25 = sshll.u32 [#allocation2], 4
      %s26 = int_to_ptr.vmem [resolvable:$true] %s25
      %28 = dma.hbm_to_vmem [thread:$0]  %s24, 16, %s26, [#allocation3]
    $region17: #{vision_transformer_forward.21} parent=1 // pred_fallthru
      _
    // Predicated region
    $region18: #{vision_transformer_forward.21} parent=1 // pred_check
      _
    $region19: #{vision_transformer_forward.21} parent=1 // pred_check_branch
      %30 = sbr.rel (0) target = $region21
    $region20: #{vision_transformer_forward.21} parent=1 // pred_region
      %32 = vsyncadd [#allocation5], 0
      %s34 = sshll.u32 %s4, 4
      %s35 = int_to_ptr.hbm [resolvable:$true] %s34
      %s36 = sshll.u32 [#allocation4], 4
      %s37 = int_to_ptr.vmem [resolvable:$true] %s36
      %39 = dma.hbm_to_vmem [thread:$0]  %s35, 16, %s37, [#allocation5]
    $region21: #{vision_transformer_forward.21} parent=1 // pred_fallthru
      _
    // Predicated region
    $region22: #{vision_transformer_forward.21} parent=1 // pred_check
      _
    $region23: #{vision_transformer_forward.21} parent=1 // pred_check_branch
      %41 = sbr.rel (0) target = $region25
    $region24: #{vision_transformer_forward.21} parent=1 // pred_region
      %43 = dma.done [#allocation3], 16
    $region25: #{vision_transformer_forward.21} parent=1 // pred_fallthru
      _
    // Predicated region
    $region26: #{vision_transformer_forward.21} parent=1 // pred_check
      _
    $region27: #{vision_transformer_forward.21} parent=1 // pred_check_branch
      %45 = sbr.rel (0) target = $region29
    $region28: #{vision_transformer_forward.21} parent=1 // pred_region
      %47 = dma.done [#allocation5], 16
    $region29: #{vision_transformer_forward.21} parent=1 // pred_fallthru
      _
    %v48 = vld [vmem:[%s0] sm:$0xf]
    %v49 = vld [vmem:[%s0 + $0x4] sm:$0xf]
    %v50 = vld [vmem:[%s0 + $0x8] sm:$0xf]
    %v51 = vld [vmem:[%s0 + $0xc] sm:$0xf]
    %v52 = vld [vmem:[%s0 + $0x10] sm:$0xf]
    %v53 = vld [vmem:[%s0 + $0x14] sm:$0xf]
    %v54 = vunpack.c.l.bf16 %v48
    %v55 = vunpack.c.l.bf16 %v49
    %v56 = vunpack.c.l.bf16 %v50
    %v57 = vunpack.c.l.bf16 %v51
    %v58 = vunpack.c.l.bf16 %v52
    %v59 = vunpack.c.l.bf16 %v53
    %60 = vadd.xlane.f32.xlu0 %v54
    %v61 = vpop.xlane.xlu0 %60
    %62 = vadd.xlane.f32.xlu0 %v55
    %v63 = vpop.xlane.xlu0 %62
    %64 = vadd.xlane.f32.xlu0 %v56
    %v65 = vpop.xlane.xlu0 %64
    %66 = vadd.xlane.f32.xlu0 %v57
    %v67 = vpop.xlane.xlu0 %66
    %68 = vadd.xlane.f32.xlu0 %v58
    %v69 = vpop.xlane.xlu0 %68
    %70 = vadd.xlane.f32.xlu0 %v59
    %v71 = vpop.xlane.xlu0 %70
    %v72 = vrcp.pop 128.0
    %v73 = vmul.f32 128.0, %v72
    %v74 = vsub.f32 1.0, %v73
    %v75 = vmul.f32 %v72, %v74
    %v76 = vadd.f32 %v72, %v75
    %vm77 = vweird.f32 %v72
    %v78 = vsel %vm77, %v72, %v76
    %v79 = vmul.f32 %v61, %v78
    %v80 = vmul.f32 %v63, %v78
    %v81 = vmul.f32 %v65, %v78
    %v82 = vmul.f32 %v67, %v78
    %v83 = vmul.f32 %v69, %v78
    %v84 = vmul.f32 %v71, %v78
    %v85 = vsub.f32 %v54, %v79
    %v86 = vsub.f32 %v55, %v80
    %v87 = vsub.f32 %v56, %v81
    %v88 = vsub.f32 %v57, %v82
    %v89 = vsub.f32 %v58, %v83
    %v90 = vsub.f32 %v59, %v84
    %v91 = vmul.f32 %v85, %v85
    %v92 = vmul.f32 %v86, %v86
    %v93 = vmul.f32 %v87, %v87
    %v94 = vmul.f32 %v88, %v88
    %v95 = vmul.f32 %v89, %v89
    %v96 = vmul.f32 %v90, %v90
    %97 = vadd.xlane.f32.xlu0 %v91
    %v98 = vpop.xlane.xlu0 %97
    %99 = vadd.xlane.f32.xlu0 %v92
    %v100 = vpop.xlane.xlu0 %99
    %101 = vadd.xlane.f32.xlu0 %v93
    %v102 = vpop.xlane.xlu0 %101
    %103 = vadd.xlane.f32.xlu0 %v94
    %v104 = vpop.xlane.xlu0 %103
    %105 = vadd.xlane.f32.xlu0 %v95
    %v106 = vpop.xlane.xlu0 %105
    %107 = vadd.xlane.f32.xlu0 %v96
    %v108 = vpop.xlane.xlu0 %107
    %v109 = vmul.f32 %v98, %v78
    %v110 = vmul.f32 %v100, %v78
    %v111 = vmul.f32 %v102, %v78
    %v112 = vmul.f32 %v104, %v78
    %v113 = vmul.f32 %v106, %v78
    %v114 = vmul.f32 %v108, %v78
    %v115 = vadd.f32 %v109, 1e-05
    %v116 = vadd.f32 %v110, 1e-05
    %v117 = vadd.f32 %v111, 1e-05
    %v118 = vadd.f32 %v112, 1e-05
    %v119 = vadd.f32 %v113, 1e-05
    %v120 = vadd.f32 %v114, 1e-05
    %v121 = vrsqrt.pop %v115
    %v122 = vmul.f32 %v121, %v115
    %v123 = vmul.f32 %v122, %v121
    %v124 = vmul.f32 0.5, %v123
    %v125 = vsub.f32 1.5, %v124
    %v126 = vmul.f32 %v121, %v125
    %vm127 = vweird.f32 %v115
    %vm128 = vweird.f32 %v121
    %vm129 = vmor %vm127, %vm128
    %v130 = vsel %vm129, %v121, %v126
    %v131 = vrsqrt.pop %v116
    %v132 = vmul.f32 %v131, %v116
    %v133 = vmul.f32 %v132, %v131
    %v134 = vmul.f32 0.5, %v133
    %v135 = vsub.f32 1.5, %v134
    %v136 = vmul.f32 %v131, %v135
    %vm137 = vweird.f32 %v116
    %vm138 = vweird.f32 %v131
    %vm139 = vmor %vm137, %vm138
    %v140 = vsel %vm139, %v131, %v136
    %v141 = vrsqrt.pop %v117
    %v142 = vmul.f32 %v141, %v117
    %v143 = vmul.f32 %v142, %v141
    %v144 = vmul.f32 0.5, %v143
    %v145 = vsub.f32 1.5, %v144
    %v146 = vmul.f32 %v141, %v145
    %vm147 = vweird.f32 %v117
    %vm148 = vweird.f32 %v141
    %vm149 = vmor %vm147, %vm148
    %v150 = vsel %vm149, %v141, %v146
    %v151 = vrsqrt.pop %v118
    %v152 = vmul.f32 %v151, %v118
    %v153 = vmul.f32 %v152, %v151
    %v154 = vmul.f32 0.5, %v153
    %v155 = vsub.f32 1.5, %v154
    %v156 = vmul.f32 %v151, %v155
    %vm157 = vweird.f32 %v118
    %vm158 = vweird.f32 %v151
    %vm159 = vmor %vm157, %vm158
    %v160 = vsel %vm159, %v151, %v156
    %v161 = vrsqrt.pop %v119
    %v162 = vmul.f32 %v161, %v119
    %v163 = vmul.f32 %v162, %v161
    %v164 = vmul.f32 0.5, %v163
    %v165 = vsub.f32 1.5, %v164
    %v166 = vmul.f32 %v161, %v165
    %vm167 = vweird.f32 %v119
    %vm168 = vweird.f32 %v161
    %vm169 = vmor %vm167, %vm168
    %v170 = vsel %vm169, %v161, %v166
    %v171 = vrsqrt.pop %v120
    %v172 = vmul.f32 %v171, %v120
    %v173 = vmul.f32 %v172, %v171
    %v174 = vmul.f32 0.5, %v173
    %v175 = vsub.f32 1.5, %v174
    %v176 = vmul.f32 %v171, %v175
    %vm177 = vweird.f32 %v120
    %vm178 = vweird.f32 %v171
    %vm179 = vmor %vm177, %vm178
    %v180 = vsel %vm179, %v171, %v176
    %v181 = vmul.f32 %v85, %v130
    %v182 = vmul.f32 %v86, %v140
    %v183 = vmul.f32 %v87, %v150
    %v184 = vmul.f32 %v88, %v160
    %v185 = vmul.f32 %v89, %v170
    %v186 = vmul.f32 %v90, %v180
    %v187 = vld [vmem:[#allocation2] sm:$0x1]
    %v189 = vperm.slane %v187, 0
    %v191 = vmul.f32 %v181, %v189
    %v192 = vmul.f32 %v182, %v189
    %v193 = vmul.f32 %v183, %v189
    %v194 = vmul.f32 %v184, %v189
    %v195 = vmul.f32 %v185, %v189
    %v196 = vmul.f32 %v186, %v189
    %v197 = vld [vmem:[#allocation4] sm:$0x1]
    %v199 = vperm.slane %v197, 0
    %v201 = vadd.f32 %v191, %v199
    %v202 = vadd.f32 %v192, %v199
    %v203 = vadd.f32 %v193, %v199
    %v204 = vadd.f32 %v194, %v199
    %v205 = vadd.f32 %v195, %v199
    %v206 = vadd.f32 %v196, %v199
    %v207 = vpack.c.bf16 %v202, %v201
    %v208 = vpack.c.bf16 %v204, %v203
    %v209 = vpack.c.bf16 %v206, %v205
    %v210 = vld [vmem:[%s1] sm:$0xff]
    %v211 = vld [vmem:[%s1 + $0x8] sm:$0xf]
    %v212 = vld [vmem:[%s1 + $0xc] sm:$0xff]
    %v213 = vld [vmem:[%s1 + $0x14] sm:$0xf]
    %v214 = vld [vmem:[%s1 + $0x18] sm:$0xff]
    %v215 = vld [vmem:[%s1 + $0x20] sm:$0xf]
    %v216 = vld [vmem:[%s1 + $0x24] sm:$0xff]
    %v217 = vld [vmem:[%s1 + $0x2c] sm:$0xf]
    %v218 = vld [vmem:[%s1 + $0x30] sm:$0xff]
    %v219 = vld [vmem:[%s1 + $0x38] sm:$0xf]
    %v220 = vld [vmem:[%s1 + $0x3c] sm:$0xff]
    %v221 = vld [vmem:[%s1 + $0x44] sm:$0xf]
    %v222 = vld [vmem:[%s1 + $0x48] sm:$0xff]
    %v223 = vld [vmem:[%s1 + $0x50] sm:$0xf]
    %v224 = vld [vmem:[%s1 + $0x54] sm:$0xff]
    %v225 = vld [vmem:[%s1 + $0x5c] sm:$0xf]
    %v226 = vld [vmem:[%s1 + $0x60] sm:$0xff]
    %v227 = vld [vmem:[%s1 + $0x68] sm:$0xf]
    %v228 = vld [vmem:[%s1 + $0x6c] sm:$0xff]
    %v229 = vld [vmem:[%s1 + $0x74] sm:$0xf]
    %v230 = vld [vmem:[%s1 + $0x78] sm:$0xff]
    %v231 = vld [vmem:[%s1 + $0x80] sm:$0xf]
    %v232 = vld [vmem:[%s1 + $0x84] sm:$0xff]
    %v233 = vld [vmem:[%s1 + $0x8c] sm:$0xf]
    %v234 = vld [vmem:[%s1 + $0x90] sm:$0xff]
    %v235 = vld [vmem:[%s1 + $0x98] sm:$0xf]
    %v236 = vld [vmem:[%s1 + $0x9c] sm:$0xff]
    %v237 = vld [vmem:[%s1 + $0xa4] sm:$0xf]
    %v238 = vld [vmem:[%s1 + $0xa8] sm:$0xff]
    %v239 = vld [vmem:[%s1 + $0xb0] sm:$0xf]
    %v240 = vld [vmem:[%s1 + $0xb4] sm:$0xff]
    %v241 = vld [vmem:[%s1 + $0xbc] sm:$0xf]
    %v242 = vld [vmem:[%s2] sm:$0x7]
    %v244 = vperm.slane %v242, 0
    %v245 = vperm.slane %v242, 1
    %v246 = vperm.slane %v242, 2
    %v282 = vunpack.c.l.b16 %v210
    %v283 = vunpack.c.h.b16 %v210
    %v284 = vunpack.c.l.b16 %v211
    %v285 = vunpack.c.l.b16 %v212
    %v286 = vunpack.c.h.b16 %v212
    %v287 = vunpack.c.l.b16 %v213
    %v288 = vunpack.c.l.b16 %v214
    %v289 = vunpack.c.h.b16 %v214
    %v290 = vunpack.c.l.b16 %v215
    %v291 = vunpack.c.l.b16 %v216
    %v292 = vunpack.c.h.b16 %v216
    %v293 = vunpack.c.l.b16 %v217
    %v294 = vunpack.c.l.b16 %v218
    %v295 = vunpack.c.h.b16 %v218
    %v296 = vunpack.c.l.b16 %v219
    %v297 = vunpack.c.l.b16 %v220
    %v298 = vunpack.c.h.b16 %v220
    %v299 = vunpack.c.l.b16 %v221
    %v300 = vunpack.c.l.b16 %v222
    %v301 = vunpack.c.h.b16 %v222
    %v302 = vunpack.c.l.b16 %v223
    %v303 = vunpack.c.l.b16 %v224
    %v304 = vunpack.c.h.b16 %v224
    %v305 = vunpack.c.l.b16 %v225
    %v306 = vunpack.c.l.b16 %v226
    %v307 = vunpack.c.h.b16 %v226
    %v308 = vunpack.c.l.b16 %v227
    %v309 = vunpack.c.l.b16 %v228
    %v310 = vunpack.c.h.b16 %v228
    %v311 = vunpack.c.l.b16 %v229
    %v312 = vunpack.c.l.b16 %v230
    %v313 = vunpack.c.h.b16 %v230
    %v314 = vunpack.c.l.b16 %v231
    %v315 = vunpack.c.l.b16 %v232
    %v316 = vunpack.c.h.b16 %v232
    %v317 = vunpack.c.l.b16 %v233
    %v318 = vunpack.c.l.b16 %v234
    %v319 = vunpack.c.h.b16 %v234
    %v320 = vunpack.c.l.b16 %v235
    %v321 = vunpack.c.l.b16 %v236
    %v322 = vunpack.c.h.b16 %v236
    %v323 = vunpack.c.l.b16 %v237
    %v324 = vunpack.c.l.b16 %v238
    %v325 = vunpack.c.h.b16 %v238
    %v326 = vunpack.c.l.b16 %v239
    %v327 = vunpack.c.l.b16 %v240
    %v328 = vunpack.c.h.b16 %v240
    %v329 = vunpack.c.l.b16 %v241
    %v330 = vpack.c.b16 %v285, %v282
    %v331 = vpack.c.b16 %v286, %v283
    %v332 = vpack.c.b16 %v287, %v284
    %v333 = vpack.c.b16 %v291, %v288
    %v334 = vpack.c.b16 %v292, %v289
    %v335 = vpack.c.b16 %v293, %v290
    %v336 = vpack.c.b16 %v297, %v294
    %v337 = vpack.c.b16 %v298, %v295
    %v338 = vpack.c.b16 %v299, %v296
    %v339 = vpack.c.b16 %v303, %v300
    %v340 = vpack.c.b16 %v304, %v301
    %v341 = vpack.c.b16 %v305, %v302
    %v342 = vpack.c.b16 %v309, %v306
    %v343 = vpack.c.b16 %v310, %v307
    %v344 = vpack.c.b16 %v311, %v308
    %v345 = vpack.c.b16 %v315, %v312
    %v346 = vpack.c.b16 %v316, %v313
    %v347 = vpack.c.b16 %v317, %v314
    %v348 = vpack.c.b16 %v321, %v318
    %v349 = vpack.c.b16 %v322, %v319
    %v350 = vpack.c.b16 %v323, %v320
    %v351 = vpack.c.b16 %v327, %v324
    %v352 = vpack.c.b16 %v328, %v325
    %v353 = vpack.c.b16 %v329, %v326
    %378 = vmatpush.bf16.msra.mxu0 %v351
    %379 = vmatpush.bf16.msra.mxu0 %v348
    %380 = vmatpush.bf16.msra.mxu0 %v345
    %381 = vmatpush.bf16.msra.mxu0 %v342
    %382 = vmatpush.bf16.msra.mxu0 %v339
    %383 = vmatpush.bf16.msra.mxu0 %v336
    %384 = vmatpush.bf16.msra.mxu0 %v333
    %385 = vmatpush.bf16.msra.mxu0 %v330
    %386 = vmatmul.bf16.gmra.mxu0 %v207
    %v387 = vpop.f32.mrf.mxu0
    %v388 = vadd.f32 %v244, %v387
    %v389 = vpop.f32.mrf.mxu0
    %v390 = vadd.f32 %v244, %v389
    %391 = vmatmul.bf16.gmra.mxu0 %v208
    %v392 = vpop.f32.mrf.mxu0
    %v393 = vadd.f32 %v244, %v392
    %v394 = vpop.f32.mrf.mxu0
    %v395 = vadd.f32 %v244, %v394
    %396 = vmatmul.bf16.gmra.mxu0 %v209
    %v397 = vpop.f32.mrf.mxu0
    %v398 = vadd.f32 %v244, %v397
    %v399 = vpop.f32.mrf.mxu0
    %v400 = vadd.f32 %v244, %v399
    %401 = vdwg.mxu0
    %402 = vmatpush.bf16.msra.mxu0 %v352
    %403 = vmatpush.bf16.msra.mxu0 %v349
    %404 = vmatpush.bf16.msra.mxu0 %v346
    %405 = vmatpush.bf16.msra.mxu0 %v343
    %406 = vmatpush.bf16.msra.mxu0 %v340
    %407 = vmatpush.bf16.msra.mxu0 %v337
    %408 = vmatpush.bf16.msra.mxu0 %v334
    %409 = vmatpush.bf16.msra.mxu0 %v331
    %410 = vmatmul.bf16.gmra.mxu0 %v207
    %v411 = vpop.f32.mrf.mxu0
    %v412 = vadd.f32 %v245, %v411
    %v413 = vpop.f32.mrf.mxu0
    %v414 = vadd.f32 %v245, %v413
    %415 = vmatmul.bf16.gmra.mxu0 %v208
    %v416 = vpop.f32.mrf.mxu0
    %v417 = vadd.f32 %v245, %v416
    %v418 = vpop.f32.mrf.mxu0
    %v419 = vadd.f32 %v245, %v418
    %420 = vmatmul.bf16.gmra.mxu0 %v209
    %v421 = vpop.f32.mrf.mxu0
    %v422 = vadd.f32 %v245, %v421
    %v423 = vpop.f32.mrf.mxu0
    %v424 = vadd.f32 %v245, %v423
    %425 = vdwg.mxu0
    %426 = vmatpush.bf16.msra.mxu0 %v353
    %427 = vmatpush.bf16.msra.mxu0 %v350
    %428 = vmatpush.bf16.msra.mxu0 %v347
    %429 = vmatpush.bf16.msra.mxu0 %v344
    %430 = vmatpush.bf16.msra.mxu0 %v341
    %431 = vmatpush.bf16.msra.mxu0 %v338
    %432 = vmatpush.bf16.msra.mxu0 %v335
    %433 = vmatpush.bf16.msra.mxu0 %v332
    %434 = vmatmul.bf16.gmra.mxu0 %v207
    %v435 = vpop.f32.mrf.mxu0
    %v436 = vadd.f32 %v246, %v435
    %v437 = vpop.f32.mrf.mxu0
    %v438 = vadd.f32 %v246, %v437
    %439 = vmatmul.bf16.gmra.mxu0 %v208
    %v440 = vpop.f32.mrf.mxu0
    %v441 = vadd.f32 %v246, %v440
    %v442 = vpop.f32.mrf.mxu0
    %v443 = vadd.f32 %v246, %v442
    %444 = vmatmul.bf16.gmra.mxu0 %v209
    %v445 = vpop.f32.mrf.mxu0
    %v446 = vadd.f32 %v246, %v445
    %v447 = vpop.f32.mrf.mxu0
    %v448 = vadd.f32 %v246, %v447
    %449 = vdwg.mxu0
    %v450 = vpack.c.bf16 %v412, %v388
    %v451 = vpack.c.bf16 %v436, %v436
    %v452 = vpack.c.bf16 %v414, %v390
    %v453 = vpack.c.bf16 %v438, %v438
    %v454 = vpack.c.bf16 %v417, %v393
    %v455 = vpack.c.bf16 %v441, %v441
    %v456 = vpack.c.bf16 %v419, %v395
    %v457 = vpack.c.bf16 %v443, %v443
    %v458 = vpack.c.bf16 %v422, %v398
    %v459 = vpack.c.bf16 %v446, %v446
    %v460 = vpack.c.bf16 %v424, %v400
    %v461 = vpack.c.bf16 %v448, %v448
    %462 = vst [vmem:[%s5] sm:$0xff] %v450
    %463 = vst [vmem:[%s5 + $0x8] sm:$0xf] %v451
    %464 = vst [vmem:[%s5 + $0xc] sm:$0xff] %v452
    %465 = vst [vmem:[%s5 + $0x14] sm:$0xf] %v453
    %466 = vst [vmem:[%s5 + $0x18] sm:$0xff] %v454
    %467 = vst [vmem:[%s5 + $0x20] sm:$0xf] %v455
    %468 = vst [vmem:[%s5 + $0x24] sm:$0xff] %v456
    %469 = vst [vmem:[%s5 + $0x2c] sm:$0xf] %v457
    %470 = vst [vmem:[%s5 + $0x30] sm:$0xff] %v458
    %471 = vst [vmem:[%s5 + $0x38] sm:$0xf] %v459
    %472 = vst [vmem:[%s5 + $0x3c] sm:$0xff] %v460
    %473 = vst [vmem:[%s5 + $0x44] sm:$0xf] %v461
    // Predicated region
    $region30: #{vision_transformer_forward.21} parent=1 // pred_check
      _
    $region31: #{vision_transformer_forward.21} parent=1 // pred_check_branch
      %475 = sbr.rel (0) target = $region33
    $region32: #{vision_transformer_forward.21} parent=1 // pred_region
      _
    $region33: #{vision_transformer_forward.21} parent=1 // pred_fallthru
      _
    // Predicated region
    $region34: #{vision_transformer_forward.21} parent=1 // pred_check
      _
    $region35: #{vision_transformer_forward.21} parent=1 // pred_check_branch
      %477 = sbr.rel (0) target = $region37
    $region36: #{vision_transformer_forward.21} parent=1 // pred_region
      _
    $region37: #{vision_transformer_forward.21} parent=1 // pred_fallthru
      _
    %478 = vsyncpa [#allocation3], 1
    %479 = vsyncpa [#allocation5], 1

// kernel: vision_transformer_forward.25
$region0: #{vision_transformer_forward.25}
  #allocation0 [shape = 'u32[]', space=smem, size = 0x4, offset = 0x4, fixed_abs, tag = 'smem constant byte address 0x4 - core index']
  #allocation1 [shape = 'u32[72,128]{1,0:T(1,128)}', space=vmem, size = 0x9000, scoped, tag = 'internal scratch']
  %s0 = inlined_call_operand.vmem [shape: bf16[48,128], index: 0, kind: input, shape index: {}]
  %s1 = inlined_call_operand.vmem [shape: bf16[128,512], index: 1, kind: input, shape index: {}]
  %s2 = inlined_call_operand.vmem [shape: f32[1,512], index: 2, kind: input, shape index: {}]
  %s3 = inlined_call_operand.vmem [shape: f32[1,128], index: 3, kind: input, shape index: {}]
  %s4 = inlined_call_operand.hbm [shape: f32[1,128], index: 4, kind: input, shape index: {}]
  %s5 = inlined_call_operand.vmem [shape: bf16[48,512], index: 5, kind: output, shape index: {}]
  %s6 = sld [smem:[#allocation0]]
  $region34: #{vision_transformer_forward.25} parent=0
    _
  %s8 = ssub.s32 1, %s6
  %s9 = scalar_select 0, %s8, %s6
  $region1: #{vision_transformer_forward.25} parent=0
    #allocation2 [shape = 'u8[512]{0}', space=vmem, size = 0x400, scoped, tag = 'input window, operand 4, single buffered']
    #allocation3 [shape = 's32[1]{0}', space=sflag, size = 0x4, scoped, tag = 'scoped memory for vision_transformer_forward.25']
    %10 = vsyncpa [#allocation3], 0
    // Predicated region
    $region2: #{vision_transformer_forward.25} parent=1 // pred_check
      _
    $region3: #{vision_transformer_forward.25} parent=1 // pred_check_branch
      %12 = sbr.rel (0) target = $region5
    $region4: #{vision_transformer_forward.25} parent=1 // pred_region
      _
    $region5: #{vision_transformer_forward.25} parent=1 // pred_fallthru
      _
    // Predicated region
    $region6: #{vision_transformer_forward.25} parent=1 // pred_check
      _
    $region7: #{vision_transformer_forward.25} parent=1 // pred_check_branch
      %14 = sbr.rel (0) target = $region9
    $region8: #{vision_transformer_forward.25} parent=1 // pred_region
      _
    $region9: #{vision_transformer_forward.25} parent=1 // pred_fallthru
      _
    // Predicated region
    $region10: #{vision_transformer_forward.25} parent=1 // pred_check
      _
    $region11: #{vision_transformer_forward.25} parent=1 // pred_check_branch
      %16 = sbr.rel (0) target = $region13
    $region12: #{vision_transformer_forward.25} parent=1 // pred_region
      _
    $region13: #{vision_transformer_forward.25} parent=1 // pred_fallthru
      _
    // Predicated region
    $region14: #{vision_transformer_forward.25} parent=1 // pred_check
      _
    $region15: #{vision_transformer_forward.25} parent=1 // pred_check_branch
      %18 = sbr.rel (0) target = $region17
    $region16: #{vision_transformer_forward.25} parent=1 // pred_region
      _
    $region17: #{vision_transformer_forward.25} parent=1 // pred_fallthru
      _
    // Predicated region
    $region18: #{vision_transformer_forward.25} parent=1 // pred_check
      _
    $region19: #{vision_transformer_forward.25} parent=1 // pred_check_branch
      %20 = sbr.rel (0) target = $region21
    $region20: #{vision_transformer_forward.25} parent=1 // pred_region
      %22 = vsyncadd [#allocation3], 0
      %s24 = sshll.u32 %s4, 4
      %s25 = int_to_ptr.hbm [resolvable:$true] %s24
      %s26 = sshll.u32 [#allocation2], 4
      %s27 = int_to_ptr.vmem [resolvable:$true] %s26
      %29 = dma.hbm_to_vmem [thread:$0]  %s25, 16, %s27, [#allocation3]
    $region21: #{vision_transformer_forward.25} parent=1 // pred_fallthru
      _
    // Predicated region
    $region22: #{vision_transformer_forward.25} parent=1 // pred_check
      _
    $region23: #{vision_transformer_forward.25} parent=1 // pred_check_branch
      %31 = sbr.rel (0) target = $region25
    $region24: #{vision_transformer_forward.25} parent=1 // pred_region
      %33 = dma.done [#allocation3], 16
    $region25: #{vision_transformer_forward.25} parent=1 // pred_fallthru
      _
    %v34 = vld [vmem:[%s0] sm:$0xf]
    %v35 = vld [vmem:[%s0 + $0x4] sm:$0xf]
    %v36 = vld [vmem:[%s0 + $0x8] sm:$0xf]
    %v37 = vld [vmem:[%s0 + $0xc] sm:$0xf]
    %v38 = vld [vmem:[%s0 + $0x10] sm:$0xf]
    %v39 = vld [vmem:[%s0 + $0x14] sm:$0xf]
    %v40 = vunpack.c.l.bf16 %v34
    %v41 = vunpack.c.l.bf16 %v35
    %v42 = vunpack.c.l.bf16 %v36
    %v43 = vunpack.c.l.bf16 %v37
    %v44 = vunpack.c.l.bf16 %v38
    %v45 = vunpack.c.l.bf16 %v39
    %46 = vadd.xlane.f32.xlu0 %v40
    %v47 = vpop.xlane.xlu0 %46
    %48 = vadd.xlane.f32.xlu0 %v41
    %v49 = vpop.xlane.xlu0 %48
    %50 = vadd.xlane.f32.xlu0 %v42
    %v51 = vpop.xlane.xlu0 %50
    %52 = vadd.xlane.f32.xlu0 %v43
    %v53 = vpop.xlane.xlu0 %52
    %54 = vadd.xlane.f32.xlu0 %v44
    %v55 = vpop.xlane.xlu0 %54
    %56 = vadd.xlane.f32.xlu0 %v45
    %v57 = vpop.xlane.xlu0 %56
    %v58 = vrcp.pop 128.0
    %v59 = vmul.f32 128.0, %v58
    %v60 = vsub.f32 1.0, %v59
    %v61 = vmul.f32 %v58, %v60
    %v62 = vadd.f32 %v58, %v61
    %vm63 = vweird.f32 %v58
    %v64 = vsel %vm63, %v58, %v62
    %v65 = vmul.f32 %v47, %v64
    %v66 = vmul.f32 %v49, %v64
    %v67 = vmul.f32 %v51, %v64
    %v68 = vmul.f32 %v53, %v64
    %v69 = vmul.f32 %v55, %v64
    %v70 = vmul.f32 %v57, %v64
    %v71 = vsub.f32 %v40, %v65
    %v72 = vsub.f32 %v41, %v66
    %v73 = vsub.f32 %v42, %v67
    %v74 = vsub.f32 %v43, %v68
    %v75 = vsub.f32 %v44, %v69
    %v76 = vsub.f32 %v45, %v70
    %v77 = vmul.f32 %v71, %v71
    %v78 = vmul.f32 %v72, %v72
    %v79 = vmul.f32 %v73, %v73
    %v80 = vmul.f32 %v74, %v74
    %v81 = vmul.f32 %v75, %v75
    %v82 = vmul.f32 %v76, %v76
    %83 = vadd.xlane.f32.xlu0 %v77
    %v84 = vpop.xlane.xlu0 %83
    %85 = vadd.xlane.f32.xlu0 %v78
    %v86 = vpop.xlane.xlu0 %85
    %87 = vadd.xlane.f32.xlu0 %v79
    %v88 = vpop.xlane.xlu0 %87
    %89 = vadd.xlane.f32.xlu0 %v80
    %v90 = vpop.xlane.xlu0 %89
    %91 = vadd.xlane.f32.xlu0 %v81
    %v92 = vpop.xlane.xlu0 %91
    %93 = vadd.xlane.f32.xlu0 %v82
    %v94 = vpop.xlane.xlu0 %93
    %v95 = vmul.f32 %v84, %v64
    %v96 = vmul.f32 %v86, %v64
    %v97 = vmul.f32 %v88, %v64
    %v98 = vmul.f32 %v90, %v64
    %v99 = vmul.f32 %v92, %v64
    %v100 = vmul.f32 %v94, %v64
    %v101 = vadd.f32 %v95, 1e-05
    %v102 = vadd.f32 %v96, 1e-05
    %v103 = vadd.f32 %v97, 1e-05
    %v104 = vadd.f32 %v98, 1e-05
    %v105 = vadd.f32 %v99, 1e-05
    %v106 = vadd.f32 %v100, 1e-05
    %v107 = vrsqrt.pop %v101
    %v108 = vmul.f32 %v107, %v101
    %v109 = vmul.f32 %v108, %v107
    %v110 = vmul.f32 0.5, %v109
    %v111 = vsub.f32 1.5, %v110
    %v112 = vmul.f32 %v107, %v111
    %vm113 = vweird.f32 %v101
    %vm114 = vweird.f32 %v107
    %vm115 = vmor %vm113, %vm114
    %v116 = vsel %vm115, %v107, %v112
    %v117 = vrsqrt.pop %v102
    %v118 = vmul.f32 %v117, %v102
    %v119 = vmul.f32 %v118, %v117
    %v120 = vmul.f32 0.5, %v119
    %v121 = vsub.f32 1.5, %v120
    %v122 = vmul.f32 %v117, %v121
    %vm123 = vweird.f32 %v102
    %vm124 = vweird.f32 %v117
    %vm125 = vmor %vm123, %vm124
    %v126 = vsel %vm125, %v117, %v122
    %v127 = vrsqrt.pop %v103
    %v128 = vmul.f32 %v127, %v103
    %v129 = vmul.f32 %v128, %v127
    %v130 = vmul.f32 0.5, %v129
    %v131 = vsub.f32 1.5, %v130
    %v132 = vmul.f32 %v127, %v131
    %vm133 = vweird.f32 %v103
    %vm134 = vweird.f32 %v127
    %vm135 = vmor %vm133, %vm134
    %v136 = vsel %vm135, %v127, %v132
    %v137 = vrsqrt.pop %v104
    %v138 = vmul.f32 %v137, %v104
    %v139 = vmul.f32 %v138, %v137
    %v140 = vmul.f32 0.5, %v139
    %v141 = vsub.f32 1.5, %v140
    %v142 = vmul.f32 %v137, %v141
    %vm143 = vweird.f32 %v104
    %vm144 = vweird.f32 %v137
    %vm145 = vmor %vm143, %vm144
    %v146 = vsel %vm145, %v137, %v142
    %v147 = vrsqrt.pop %v105
    %v148 = vmul.f32 %v147, %v105
    %v149 = vmul.f32 %v148, %v147
    %v150 = vmul.f32 0.5, %v149
    %v151 = vsub.f32 1.5, %v150
    %v152 = vmul.f32 %v147, %v151
    %vm153 = vweird.f32 %v105
    %vm154 = vweird.f32 %v147
    %vm155 = vmor %vm153, %vm154
    %v156 = vsel %vm155, %v147, %v152
    %v157 = vrsqrt.pop %v106
    %v158 = vmul.f32 %v157, %v106
    %v159 = vmul.f32 %v158, %v157
    %v160 = vmul.f32 0.5, %v159
    %v161 = vsub.f32 1.5, %v160
    %v162 = vmul.f32 %v157, %v161
    %vm163 = vweird.f32 %v106
    %vm164 = vweird.f32 %v157
    %vm165 = vmor %vm163, %vm164
    %v166 = vsel %vm165, %v157, %v162
    %v167 = vmul.f32 %v71, %v116
    %v168 = vmul.f32 %v72, %v126
    %v169 = vmul.f32 %v73, %v136
    %v170 = vmul.f32 %v74, %v146
    %v171 = vmul.f32 %v75, %v156
    %v172 = vmul.f32 %v76, %v166
    %v173 = vld [vmem:[%s3] sm:$0x1]
    %v175 = vperm.slane %v173, 0
    %v177 = vmul.f32 %v167, %v175
    %v178 = vmul.f32 %v168, %v175
    %v179 = vmul.f32 %v169, %v175
    %v180 = vmul.f32 %v170, %v175
    %v181 = vmul.f32 %v171, %v175
    %v182 = vmul.f32 %v172, %v175
    %v183 = vld [vmem:[#allocation2] sm:$0x1]
    %v185 = vperm.slane %v183, 0
    %v187 = vadd.f32 %v177, %v185
    %v188 = vadd.f32 %v178, %v185
    %v189 = vadd.f32 %v179, %v185
    %v190 = vadd.f32 %v180, %v185
    %v191 = vadd.f32 %v181, %v185
    %v192 = vadd.f32 %v182, %v185
    %v193 = vpack.c.bf16 %v188, %v187
    %v194 = vpack.c.bf16 %v190, %v189
    %v195 = vpack.c.bf16 %v192, %v191
    %v196 = vld [vmem:[%s1] sm:$0xff]
    %v197 = vld [vmem:[%s1 + $0x8] sm:$0xff]
    %v198 = vld [vmem:[%s1 + $0x10] sm:$0xff]
    %v199 = vld [vmem:[%s1 + $0x18] sm:$0xff]
    %v200 = vld [vmem:[%s1 + $0x20] sm:$0xff]
    %v201 = vld [vmem:[%s1 + $0x28] sm:$0xff]
    %v202 = vld [vmem:[%s1 + $0x30] sm:$0xff]
    %v203 = vld [vmem:[%s1 + $0x38] sm:$0xff]
    %v204 = vld [vmem:[%s1 + $0x40] sm:$0xff]
    %v205 = vld [vmem:[%s1 + $0x48] sm:$0xff]
    %v206 = vld [vmem:[%s1 + $0x50] sm:$0xff]
    %v207 = vld [vmem:[%s1 + $0x58] sm:$0xff]
    %v208 = vld [vmem:[%s1 + $0x60] sm:$0xff]
    %v209 = vld [vmem:[%s1 + $0x68] sm:$0xff]
    %v210 = vld [vmem:[%s1 + $0x70] sm:$0xff]
    %v211 = vld [vmem:[%s1 + $0x78] sm:$0xff]
    %v212 = vld [vmem:[%s1 + $0x80] sm:$0xff]
    %v213 = vld [vmem:[%s1 + $0x88] sm:$0xff]
    %v214 = vld [vmem:[%s1 + $0x90] sm:$0xff]
    %v215 = vld [vmem:[%s1 + $0x98] sm:$0xff]
    %v216 = vld [vmem:[%s1 + $0xa0] sm:$0xff]
    %v217 = vld [vmem:[%s1 + $0xa8] sm:$0xff]
    %v218 = vld [vmem:[%s1 + $0xb0] sm:$0xff]
    %v219 = vld [vmem:[%s1 + $0xb8] sm:$0xff]
    %v220 = vld [vmem:[%s1 + $0xc0] sm:$0xff]
    %v221 = vld [vmem:[%s1 + $0xc8] sm:$0xff]
    %v222 = vld [vmem:[%s1 + $0xd0] sm:$0xff]
    %v223 = vld [vmem:[%s1 + $0xd8] sm:$0xff]
    %v224 = vld [vmem:[%s1 + $0xe0] sm:$0xff]
    %v225 = vld [vmem:[%s1 + $0xe8] sm:$0xff]
    %v226 = vld [vmem:[%s1 + $0xf0] sm:$0xff]
    %v227 = vld [vmem:[%s1 + $0xf8] sm:$0xff]
    %v228 = vld [vmem:[%s2] sm:$0xf]
    %v230 = vperm.slane %v228, 0
    %v231 = vperm.slane %v228, 1
    %v232 = vperm.slane %v228, 2
    %v233 = vperm.slane %v228, 3
    %v270 = vunpack.c.l.b16 %v196
    %v271 = vunpack.c.h.b16 %v196
    %v272 = vunpack.c.l.b16 %v197
    %v273 = vunpack.c.h.b16 %v197
    %v274 = vunpack.c.l.b16 %v198
    %v275 = vunpack.c.h.b16 %v198
    %v276 = vunpack.c.l.b16 %v199
    %v277 = vunpack.c.h.b16 %v199
    %v278 = vunpack.c.l.b16 %v200
    %v279 = vunpack.c.h.b16 %v200
    %v280 = vunpack.c.l.b16 %v201
    %v281 = vunpack.c.h.b16 %v201
    %v282 = vunpack.c.l.b16 %v202
    %v283 = vunpack.c.h.b16 %v202
    %v284 = vunpack.c.l.b16 %v203
    %v285 = vunpack.c.h.b16 %v203
    %v286 = vunpack.c.l.b16 %v204
    %v287 = vunpack.c.h.b16 %v204
    %v288 = vunpack.c.l.b16 %v205
    %v289 = vunpack.c.h.b16 %v205
    %v290 = vunpack.c.l.b16 %v206
    %v291 = vunpack.c.h.b16 %v206
    %v292 = vunpack.c.l.b16 %v207
    %v293 = vunpack.c.h.b16 %v207
    %v294 = vunpack.c.l.b16 %v208
    %v295 = vunpack.c.h.b16 %v208
    %v296 = vunpack.c.l.b16 %v209
    %v297 = vunpack.c.h.b16 %v209
    %v298 = vunpack.c.l.b16 %v210
    %v299 = vunpack.c.h.b16 %v210
    %v300 = vunpack.c.l.b16 %v211
    %v301 = vunpack.c.h.b16 %v211
    %v302 = vunpack.c.l.b16 %v212
    %v303 = vunpack.c.h.b16 %v212
    %v304 = vunpack.c.l.b16 %v213
    %v305 = vunpack.c.h.b16 %v213
    %v306 = vunpack.c.l.b16 %v214
    %v307 = vunpack.c.h.b16 %v214
    %v308 = vunpack.c.l.b16 %v215
    %v309 = vunpack.c.h.b16 %v215
    %v310 = vunpack.c.l.b16 %v216
    %v311 = vunpack.c.h.b16 %v216
    %v312 = vunpack.c.l.b16 %v217
    %v313 = vunpack.c.h.b16 %v217
    %v314 = vunpack.c.l.b16 %v218
    %v315 = vunpack.c.h.b16 %v218
    %v316 = vunpack.c.l.b16 %v219
    %v317 = vunpack.c.h.b16 %v219
    %v318 = vunpack.c.l.b16 %v220
    %v319 = vunpack.c.h.b16 %v220
    %v320 = vunpack.c.l.b16 %v221
    %v321 = vunpack.c.h.b16 %v221
    %v322 = vunpack.c.l.b16 %v222
    %v323 = vunpack.c.h.b16 %v222
    %v324 = vunpack.c.l.b16 %v223
    %v325 = vunpack.c.h.b16 %v223
    %v326 = vunpack.c.l.b16 %v224
    %v327 = vunpack.c.h.b16 %v224
    %v328 = vunpack.c.l.b16 %v225
    %v329 = vunpack.c.h.b16 %v225
    %v330 = vunpack.c.l.b16 %v226
    %v331 = vunpack.c.h.b16 %v226
    %v332 = vunpack.c.l.b16 %v227
    %v333 = vunpack.c.h.b16 %v227
    %v334 = vpack.c.b16 %v274, %v270
    %v335 = vpack.c.b16 %v275, %v271
    %v336 = vpack.c.b16 %v276, %v272
    %v337 = vpack.c.b16 %v277, %v273
    %v338 = vpack.c.b16 %v282, %v278
    %v339 = vpack.c.b16 %v283, %v279
    %v340 = vpack.c.b16 %v284, %v280
    %v341 = vpack.c.b16 %v285, %v281
    %v342 = vpack.c.b16 %v290, %v286
    %v343 = vpack.c.b16 %v291, %v287
    %v344 = vpack.c.b16 %v292, %v288
    %v345 = vpack.c.b16 %v293, %v289
    %v346 = vpack.c.b16 %v298, %v294
    %v347 = vpack.c.b16 %v299, %v295
    %v348 = vpack.c.b16 %v300, %v296
    %v349 = vpack.c.b16 %v301, %v297
    %v350 = vpack.c.b16 %v306, %v302
    %v351 = vpack.c.b16 %v307, %v303
    %v352 = vpack.c.b16 %v308, %v304
    %v353 = vpack.c.b16 %v309, %v305
    %v354 = vpack.c.b16 %v314, %v310
    %v355 = vpack.c.b16 %v315, %v311
    %v356 = vpack.c.b16 %v316, %v312
    %v357 = vpack.c.b16 %v317, %v313
    %v358 = vpack.c.b16 %v322, %v318
    %v359 = vpack.c.b16 %v323, %v319
    %v360 = vpack.c.b16 %v324, %v320
    %v361 = vpack.c.b16 %v325, %v321
    %v362 = vpack.c.b16 %v330, %v326
    %v363 = vpack.c.b16 %v331, %v327
    %v364 = vpack.c.b16 %v332, %v328
    %v365 = vpack.c.b16 %v333, %v329
    %398 = vmatpush.bf16.msra.mxu0 %v362
    %399 = vmatpush.bf16.msra.mxu0 %v358
    %400 = vmatpush.bf16.msra.mxu0 %v354
    %401 = vmatpush.bf16.msra.mxu0 %v350
    %402 = vmatpush.bf16.msra.mxu0 %v346
    %403 = vmatpush.bf16.msra.mxu0 %v342
    %404 = vmatpush.bf16.msra.mxu0 %v338
    %405 = vmatpush.bf16.msra.mxu0 %v334
    %406 = vmatmul.bf16.gmra.mxu0 %v193
    %v407 = vpop.f32.mrf.mxu0
    %v408 = vadd.f32 %v230, %v407
    %v409 = vpop.f32.mrf.mxu0
    %v410 = vadd.f32 %v230, %v409
    %411 = vmatmul.bf16.gmra.mxu0 %v194
    %v412 = vpop.f32.mrf.mxu0
    %v413 = vadd.f32 %v230, %v412
    %v414 = vpop.f32.mrf.mxu0
    %v415 = vadd.f32 %v230, %v414
    %416 = vmatmul.bf16.gmra.mxu0 %v195
    %v417 = vpop.f32.mrf.mxu0
    %v418 = vadd.f32 %v230, %v417
    %v419 = vpop.f32.mrf.mxu0
    %v420 = vadd.f32 %v230, %v419
    %421 = vdwg.mxu0
    %422 = vmatpush.bf16.msra.mxu0 %v363
    %423 = vmatpush.bf16.msra.mxu0 %v359
    %424 = vmatpush.bf16.msra.mxu0 %v355
    %425 = vmatpush.bf16.msra.mxu0 %v351
    %426 = vmatpush.bf16.msra.mxu0 %v347
    %427 = vmatpush.bf16.msra.mxu0 %v343
    %428 = vmatpush.bf16.msra.mxu0 %v339
    %429 = vmatpush.bf16.msra.mxu0 %v335
    %430 = vmatmul.bf16.gmra.mxu0 %v193
    %v431 = vpop.f32.mrf.mxu0
    %v432 = vadd.f32 %v231, %v431
    %v433 = vpop.f32.mrf.mxu0
    %v434 = vadd.f32 %v231, %v433
    %435 = vmatmul.bf16.gmra.mxu0 %v194
    %v436 = vpop.f32.mrf.mxu0
    %v437 = vadd.f32 %v231, %v436
    %v438 = vpop.f32.mrf.mxu0
    %v439 = vadd.f32 %v231, %v438
    %440 = vmatmul.bf16.gmra.mxu0 %v195
    %v441 = vpop.f32.mrf.mxu0
    %v442 = vadd.f32 %v231, %v441
    %v443 = vpop.f32.mrf.mxu0
    %v444 = vadd.f32 %v231, %v443
    %445 = vdwg.mxu0
    %446 = vmatpush.bf16.msra.mxu0 %v364
    %447 = vmatpush.bf16.msra.mxu0 %v360
    %448 = vmatpush.bf16.msra.mxu0 %v356
    %449 = vmatpush.bf16.msra.mxu0 %v352
    %450 = vmatpush.bf16.msra.mxu0 %v348
    %451 = vmatpush.bf16.msra.mxu0 %v344
    %452 = vmatpush.bf16.msra.mxu0 %v340
    %453 = vmatpush.bf16.msra.mxu0 %v336
    %454 = vmatmul.bf16.gmra.mxu0 %v193
    %v455 = vpop.f32.mrf.mxu0
    %v456 = vadd.f32 %v232, %v455
    %v457 = vpop.f32.mrf.mxu0
    %v458 = vadd.f32 %v232, %v457
    %459 = vmatmul.bf16.gmra.mxu0 %v194
    %v460 = vpop.f32.mrf.mxu0
    %v461 = vadd.f32 %v232, %v460
    %v462 = vpop.f32.mrf.mxu0
    %v463 = vadd.f32 %v232, %v462
    %464 = vmatmul.bf16.gmra.mxu0 %v195
    %v465 = vpop.f32.mrf.mxu0
    %v466 = vadd.f32 %v232, %v465
    %v467 = vpop.f32.mrf.mxu0
    %v468 = vadd.f32 %v232, %v467
    %469 = vdwg.mxu0
    %470 = vmatpush.bf16.msra.mxu0 %v365
    %471 = vmatpush.bf16.msra.mxu0 %v361
    %472 = vmatpush.bf16.msra.mxu0 %v357
    %473 = vmatpush.bf16.msra.mxu0 %v353
    %474 = vmatpush.bf16.msra.mxu0 %v349
    %475 = vmatpush.bf16.msra.mxu0 %v345
    %476 = vmatpush.bf16.msra.mxu0 %v341
    %477 = vmatpush.bf16.msra.mxu0 %v337
    %478 = vmatmul.bf16.gmra.mxu0 %v193
    %v479 = vpop.f32.mrf.mxu0
    %v480 = vadd.f32 %v233, %v479
    %v481 = vpop.f32.mrf.mxu0
    %v482 = vadd.f32 %v233, %v481
    %483 = vmatmul.bf16.gmra.mxu0 %v194
    %v484 = vpop.f32.mrf.mxu0
    %v485 = vadd.f32 %v233, %v484
    %v486 = vpop.f32.mrf.mxu0
    %v487 = vadd.f32 %v233, %v486
    %488 = vmatmul.bf16.gmra.mxu0 %v195
    %v489 = vpop.f32.mrf.mxu0
    %v490 = vadd.f32 %v233, %v489
    %v491 = vpop.f32.mrf.mxu0
    %v492 = vadd.f32 %v233, %v491
    %493 = vdwg.mxu0
    %v494 = vmul.f32 %v408, 1.702
    %v495 = vmul.f32 %v432, 1.702
    %v496 = vmul.f32 %v456, 1.702
    %v497 = vmul.f32 %v480, 1.702
    %v498 = vmul.f32 %v410, 1.702
    %v499 = vmul.f32 %v434, 1.702
    %v500 = vmul.f32 %v458, 1.702
    %v501 = vmul.f32 %v482, 1.702
    %v502 = vmul.f32 %v413, 1.702
    %v503 = vmul.f32 %v437, 1.702
    %v504 = vmul.f32 %v461, 1.702
    %v505 = vmul.f32 %v485, 1.702
    %v506 = vmul.f32 %v415, 1.702
    %v507 = vmul.f32 %v439, 1.702
    %v508 = vmul.f32 %v463, 1.702
    %v509 = vmul.f32 %v487, 1.702
    %v510 = vmul.f32 %v418, 1.702
    %v511 = vmul.f32 %v442, 1.702
    %v512 = vmul.f32 %v466, 1.702
    %v513 = vmul.f32 %v490, 1.702
    %v514 = vmul.f32 %v420, 1.702
    %v515 = vmul.f32 %v444, 1.702
    %v516 = vmul.f32 %v468, 1.702
    %v517 = vmul.f32 %v492, 1.702
    %v518 = vxor.u32 %v494, 2147483648
    %v519 = vxor.u32 %v495, 2147483648
    %v520 = vxor.u32 %v496, 2147483648
    %v521 = vxor.u32 %v497, 2147483648
    %v522 = vxor.u32 %v498, 2147483648
    %v523 = vxor.u32 %v499, 2147483648
    %v524 = vxor.u32 %v500, 2147483648
    %v525 = vxor.u32 %v501, 2147483648
    %v526 = vxor.u32 %v502, 2147483648
    %v527 = vxor.u32 %v503, 2147483648
    %v528 = vxor.u32 %v504, 2147483648
    %v529 = vxor.u32 %v505, 2147483648
    %v530 = vxor.u32 %v506, 2147483648
    %v531 = vxor.u32 %v507, 2147483648
    %v532 = vxor.u32 %v508, 2147483648
    %v533 = vxor.u32 %v509, 2147483648
    %v534 = vxor.u32 %v510, 2147483648
    %v535 = vxor.u32 %v511, 2147483648
    %v536 = vxor.u32 %v512, 2147483648
    %v537 = vxor.u32 %v513, 2147483648
    %v538 = vxor.u32 %v514, 2147483648
    %v539 = vxor.u32 %v515, 2147483648
    %v540 = vxor.u32 %v516, 2147483648
    %v541 = vxor.u32 %v517, 2147483648
    %v542 = vmul.f32 %v518, 1.442695
    %v543 = vpow.pop %v542
    %v544 = vmul.f32 %v519, 1.442695
    %v545 = vpow.pop %v544
    %v546 = vmul.f32 %v520, 1.442695
    %v547 = vpow.pop %v546
    %v548 = vmul.f32 %v521, 1.442695
    %v549 = vpow.pop %v548
    %v550 = vmul.f32 %v522, 1.442695
    %v551 = vpow.pop %v550
    %v552 = vmul.f32 %v523, 1.442695
    %v553 = vpow.pop %v552
    %v554 = vmul.f32 %v524, 1.442695
    %v555 = vpow.pop %v554
    %v556 = vmul.f32 %v525, 1.442695
    %v557 = vpow.pop %v556
    %v558 = vmul.f32 %v526, 1.442695
    %v559 = vpow.pop %v558
    %v560 = vmul.f32 %v527, 1.442695
    %v561 = vpow.pop %v560
    %v562 = vmul.f32 %v528, 1.442695
    %v563 = vpow.pop %v562
    %v564 = vmul.f32 %v529, 1.442695
    %v565 = vpow.pop %v564
    %v566 = vmul.f32 %v530, 1.442695
    %v567 = vpow.pop %v566
    %v568 = vmul.f32 %v531, 1.442695
    %v569 = vpow.pop %v568
    %v570 = vmul.f32 %v532, 1.442695
    %v571 = vpow.pop %v570
    %v572 = vmul.f32 %v533, 1.442695
    %v573 = vpow.pop %v572
    %v574 = vmul.f32 %v534, 1.442695
    %v575 = vpow.pop %v574
    %v576 = vmul.f32 %v535, 1.442695
    %v577 = vpow.pop %v576
    %v578 = vmul.f32 %v536, 1.442695
    %v579 = vpow.pop %v578
    %v580 = vmul.f32 %v537, 1.442695
    %v581 = vpow.pop %v580
    %v582 = vmul.f32 %v538, 1.442695
    %v583 = vpow.pop %v582
    %v584 = vmul.f32 %v539, 1.442695
    %v585 = vpow.pop %v584
    %v586 = vmul.f32 %v540, 1.442695
    %v587 = vpow.pop %v586
    %v588 = vmul.f32 %v541, 1.442695
    %v589 = vpow.pop %v588
    %v590 = vadd.f32 %v543, 1.0
    %v591 = vadd.f32 %v545, 1.0
    %v592 = vadd.f32 %v547, 1.0
    %v593 = vadd.f32 %v549, 1.0
    %v594 = vadd.f32 %v551, 1.0
    %v595 = vadd.f32 %v553, 1.0
    %v596 = vadd.f32 %v555, 1.0
    %v597 = vadd.f32 %v557, 1.0
    %v598 = vadd.f32 %v559, 1.0
    %v599 = vadd.f32 %v561, 1.0
    %v600 = vadd.f32 %v563, 1.0
    %v601 = vadd.f32 %v565, 1.0
    %v602 = vadd.f32 %v567, 1.0
    %v603 = vadd.f32 %v569, 1.0
    %v604 = vadd.f32 %v571, 1.0
    %v605 = vadd.f32 %v573, 1.0
    %v606 = vadd.f32 %v575, 1.0
    %v607 = vadd.f32 %v577, 1.0
    %v608 = vadd.f32 %v579, 1.0
    %v609 = vadd.f32 %v581, 1.0
    %v610 = vadd.f32 %v583, 1.0
    %v611 = vadd.f32 %v585, 1.0
    %v612 = vadd.f32 %v587, 1.0
    %v613 = vadd.f32 %v589, 1.0
    %v614 = vrcp.pop %v590
    %v615 = vmul.f32 %v590, %v614
    %v616 = vsub.f32 1.0, %v615
    %v617 = vmul.f32 %v614, %v616
    %v618 = vadd.f32 %v614, %v617
    %vm619 = vweird.f32 %v590
    %vm620 = vweird.f32 %v614
    %vm621 = vmor %vm619, %vm620
    %v622 = vsel %vm621, %v614, %v618
    %v623 = vand.u32 2147483647, %v590
    %vm624 = vcmp.eq.f32.partialorder %v623, 8.507059e+37
    %v625 = vand.u32 %v590, 2147483648
    %v626 = vor.u32 1.1754944e-38, %v625
    %v627 = vsel %vm624, %v626, %v622
    %v628 = vmul.f32 1.0, %v627
    %v629 = vrcp.pop %v591
    %v630 = vmul.f32 %v591, %v629
    %v631 = vsub.f32 1.0, %v630
    %v632 = vmul.f32 %v629, %v631
    %v633 = vadd.f32 %v629, %v632
    %vm634 = vweird.f32 %v591
    %vm635 = vweird.f32 %v629
    %vm636 = vmor %vm634, %vm635
    %v637 = vsel %vm636, %v629, %v633
    %v638 = vand.u32 2147483647, %v591
    %vm639 = vcmp.eq.f32.partialorder %v638, 8.507059e+37
    %v640 = vand.u32 %v591, 2147483648
    %v641 = vor.u32 1.1754944e-38, %v640
    %v642 = vsel %vm639, %v641, %v637
    %v643 = vmul.f32 1.0, %v642
    %v644 = vrcp.pop %v592
    %v645 = vmul.f32 %v592, %v644
    %v646 = vsub.f32 1.0, %v645
    %v647 = vmul.f32 %v644, %v646
    %v648 = vadd.f32 %v644, %v647
    %vm649 = vweird.f32 %v592
    %vm650 = vweird.f32 %v644
    %vm651 = vmor %vm649, %vm650
    %v652 = vsel %vm651, %v644, %v648
    %v653 = vand.u32 2147483647, %v592
    %vm654 = vcmp.eq.f32.partialorder %v653, 8.507059e+37
    %v655 = vand.u32 %v592, 2147483648
    %v656 = vor.u32 1.1754944e-38, %v655
    %v657 = vsel %vm654, %v656, %v652
    %v658 = vmul.f32 1.0, %v657
    %v659 = vrcp.pop %v593
    %v660 = vmul.f32 %v593, %v659
    %v661 = vsub.f32 1.0, %v660
    %v662 = vmul.f32 %v659, %v661
    %v663 = vadd.f32 %v659, %v662
    %vm664 = vweird.f32 %v593
    %vm665 = vweird.f32 %v659
    %vm666 = vmor %vm664, %vm665
    %v667 = vsel %vm666, %v659, %v663
    %v668 = vand.u32 2147483647, %v593
    %vm669 = vcmp.eq.f32.partialorder %v668, 8.507059e+37
    %v670 = vand.u32 %v593, 2147483648
    %v671 = vor.u32 1.1754944e-38, %v670
    %v672 = vsel %vm669, %v671, %v667
    %v673 = vmul.f32 1.0, %v672
    %v674 = vrcp.pop %v594
    %v675 = vmul.f32 %v594, %v674
    %v676 = vsub.f32 1.0, %v675
    %v677 = vmul.f32 %v674, %v676
    %v678 = vadd.f32 %v674, %v677
    %vm679 = vweird.f32 %v594
    %vm680 = vweird.f32 %v674
    %vm681 = vmor %vm679, %vm680
    %v682 = vsel %vm681, %v674, %v678
    %v683 = vand.u32 2147483647, %v594
    %vm684 = vcmp.eq.f32.partialorder %v683, 8.507059e+37
    %v685 = vand.u32 %v594, 2147483648
    %v686 = vor.u32 1.1754944e-38, %v685
    %v687 = vsel %vm684, %v686, %v682
    %v688 = vmul.f32 1.0, %v687
    %v689 = vrcp.pop %v595
    %v690 = vmul.f32 %v595, %v689
    %v691 = vsub.f32 1.0, %v690
    %v692 = vmul.f32 %v689, %v691
    %v693 = vadd.f32 %v689, %v692
    %vm694 = vweird.f32 %v595
    %vm695 = vweird.f32 %v689
    %vm696 = vmor %vm694, %vm695
    %v697 = vsel %vm696, %v689, %v693
    %v698 = vand.u32 2147483647, %v595
    %vm699 = vcmp.eq.f32.partialorder %v698, 8.507059e+37
    %v700 = vand.u32 %v595, 2147483648
    %v701 = vor.u32 1.1754944e-38, %v700
    %v702 = vsel %vm699, %v701, %v697
    %v703 = vmul.f32 1.0, %v702
    %v704 = vrcp.pop %v596
    %v705 = vmul.f32 %v596, %v704
    %v706 = vsub.f32 1.0, %v705
    %v707 = vmul.f32 %v704, %v706
    %v708 = vadd.f32 %v704, %v707
    %vm709 = vweird.f32 %v596
    %vm710 = vweird.f32 %v704
    %vm711 = vmor %vm709, %vm710
    %v712 = vsel %vm711, %v704, %v708
    %v713 = vand.u32 2147483647, %v596
    %vm714 = vcmp.eq.f32.partialorder %v713, 8.507059e+37
    %v715 = vand.u32 %v596, 2147483648
    %v716 = vor.u32 1.1754944e-38, %v715
    %v717 = vsel %vm714, %v716, %v712
    %v718 = vmul.f32 1.0, %v717
    %v719 = vrcp.pop %v597
    %v720 = vmul.f32 %v597, %v719
    %v721 = vsub.f32 1.0, %v720
    %v722 = vmul.f32 %v719, %v721
    %v723 = vadd.f32 %v719, %v722
    %vm724 = vweird.f32 %v597
    %vm725 = vweird.f32 %v719
    %vm726 = vmor %vm724, %vm725
    %v727 = vsel %vm726, %v719, %v723
    %v728 = vand.u32 2147483647, %v597
    %vm729 = vcmp.eq.f32.partialorder %v728, 8.507059e+37
    %v730 = vand.u32 %v597, 2147483648
    %v731 = vor.u32 1.1754944e-38, %v730
    %v732 = vsel %vm729, %v731, %v727
    %v733 = vmul.f32 1.0, %v732
    %v734 = vrcp.pop %v598
    %v735 = vmul.f32 %v598, %v734
    %v736 = vsub.f32 1.0, %v735
    %v737 = vmul.f32 %v734, %v736
    %v738 = vadd.f32 %v734, %v737
    %vm739 = vweird.f32 %v598
    %vm740 = vweird.f32 %v734
    %vm741 = vmor %vm739, %vm740
    %v742 = vsel %vm741, %v734, %v738
    %v743 = vand.u32 2147483647, %v598
    %vm744 = vcmp.eq.f32.partialorder %v743, 8.507059e+37
    %v745 = vand.u32 %v598, 2147483648
    %v746 = vor.u32 1.1754944e-38, %v745
    %v747 = vsel %vm744, %v746, %v742
    %v748 = vmul.f32 1.0, %v747
    %v749 = vrcp.pop %v599
    %v750 = vmul.f32 %v599, %v749
    %v751 = vsub.f32 1.0, %v750
    %v752 = vmul.f32 %v749, %v751
    %v753 = vadd.f32 %v749, %v752
    %vm754 = vweird.f32 %v599
    %vm755 = vweird.f32 %v749
    %vm756 = vmor %vm754, %vm755
    %v757 = vsel %vm756, %v749, %v753
    %v758 = vand.u32 2147483647, %v599
    %vm759 = vcmp.eq.f32.partialorder %v758, 8.507059e+37
    %v760 = vand.u32 %v599, 2147483648
    %v761 = vor.u32 1.1754944e-38, %v760
    %v762 = vsel %vm759, %v761, %v757
    %v763 = vmul.f32 1.0, %v762
    %v764 = vrcp.pop %v600
    %v765 = vmul.f32 %v600, %v764
    %v766 = vsub.f32 1.0, %v765
    %v767 = vmul.f32 %v764, %v766
    %v768 = vadd.f32 %v764, %v767
    %vm769 = vweird.f32 %v600
    %vm770 = vweird.f32 %v764
    %vm771 = vmor %vm769, %vm770
    %v772 = vsel %vm771, %v764, %v768
    %v773 = vand.u32 2147483647, %v600
    %vm774 = vcmp.eq.f32.partialorder %v773, 8.507059e+37
    %v775 = vand.u32 %v600, 2147483648
    %v776 = vor.u32 1.1754944e-38, %v775
    %v777 = vsel %vm774, %v776, %v772
    %v778 = vmul.f32 1.0, %v777
    %v779 = vrcp.pop %v601
    %v780 = vmul.f32 %v601, %v779
    %v781 = vsub.f32 1.0, %v780
    %v782 = vmul.f32 %v779, %v781
    %v783 = vadd.f32 %v779, %v782
    %vm784 = vweird.f32 %v601
    %vm785 = vweird.f32 %v779
    %vm786 = vmor %vm784, %vm785
    %v787 = vsel %vm786, %v779, %v783
    %v788 = vand.u32 2147483647, %v601
    %vm789 = vcmp.eq.f32.partialorder %v788, 8.507059e+37
    %v790 = vand.u32 %v601, 2147483648
    %v791 = vor.u32 1.1754944e-38, %v790
    %v792 = vsel %vm789, %v791, %v787
    %v793 = vmul.f32 1.0, %v792
    %v794 = vrcp.pop %v602
    %v795 = vmul.f32 %v602, %v794
    %v796 = vsub.f32 1.0, %v795
    %v797 = vmul.f32 %v794, %v796
    %v798 = vadd.f32 %v794, %v797
    %vm799 = vweird.f32 %v602
    %vm800 = vweird.f32 %v794
    %vm801 = vmor %vm799, %vm800
    %v802 = vsel %vm801, %v794, %v798
    %v803 = vand.u32 2147483647, %v602
    %vm804 = vcmp.eq.f32.partialorder %v803, 8.507059e+37
    %v805 = vand.u32 %v602, 2147483648
    %v806 = vor.u32 1.1754944e-38, %v805
    %v807 = vsel %vm804, %v806, %v802
    %v808 = vmul.f32 1.0, %v807
    %v809 = vrcp.pop %v603
    %v810 = vmul.f32 %v603, %v809
    %v811 = vsub.f32 1.0, %v810
    %v812 = vmul.f32 %v809, %v811
    %v813 = vadd.f32 %v809, %v812
    %vm814 = vweird.f32 %v603
    %vm815 = vweird.f32 %v809
    %vm816 = vmor %vm814, %vm815
    %v817 = vsel %vm816, %v809, %v813
    %v818 = vand.u32 2147483647, %v603
    %vm819 = vcmp.eq.f32.partialorder %v818, 8.507059e+37
    %v820 = vand.u32 %v603, 2147483648
    %v821 = vor.u32 1.1754944e-38, %v820
    %v822 = vsel %vm819, %v821, %v817
    %v823 = vmul.f32 1.0, %v822
    %v824 = vrcp.pop %v604
    %v825 = vmul.f32 %v604, %v824
    %v826 = vsub.f32 1.0, %v825
    %v827 = vmul.f32 %v824, %v826
    %v828 = vadd.f32 %v824, %v827
    %vm829 = vweird.f32 %v604
    %vm830 = vweird.f32 %v824
    %vm831 = vmor %vm829, %vm830
    %v832 = vsel %vm831, %v824, %v828
    %v833 = vand.u32 2147483647, %v604
    %vm834 = vcmp.eq.f32.partialorder %v833, 8.507059e+37
    %v835 = vand.u32 %v604, 2147483648
    %v836 = vor.u32 1.1754944e-38, %v835
    %v837 = vsel %vm834, %v836, %v832
    %v838 = vmul.f32 1.0, %v837
    %v839 = vrcp.pop %v605
    %v840 = vmul.f32 %v605, %v839
    %v841 = vsub.f32 1.0, %v840
    %v842 = vmul.f32 %v839, %v841
    %v843 = vadd.f32 %v839, %v842
    %vm844 = vweird.f32 %v605
    %vm845 = vweird.f32 %v839
    %vm846 = vmor %vm844, %vm845
    %v847 = vsel %vm846, %v839, %v843
    %v848 = vand.u32 2147483647, %v605
    %vm849 = vcmp.eq.f32.partialorder %v848, 8.507059e+37
    %v850 = vand.u32 %v605, 2147483648
    %v851 = vor.u32 1.1754944e-38, %v850
    %v852 = vsel %vm849, %v851, %v847
    %v853 = vmul.f32 1.0, %v852
    %v854 = vrcp.pop %v606
    %v855 = vmul.f32 %v606, %v854
    %v856 = vsub.f32 1.0, %v855
    %v857 = vmul.f32 %v854, %v856
    %v858 = vadd.f32 %v854, %v857
    %vm859 = vweird.f32 %v606
    %vm860 = vweird.f32 %v854
    %vm861 = vmor %vm859, %vm860
    %v862 = vsel %vm861, %v854, %v858
    %v863 = vand.u32 2147483647, %v606
    %vm864 = vcmp.eq.f32.partialorder %v863, 8.507059e+37
    %v865 = vand.u32 %v606, 2147483648
    %v866 = vor.u32 1.1754944e-38, %v865
    %v867 = vsel %vm864, %v866, %v862
    %v868 = vmul.f32 1.0, %v867
    %v869 = vrcp.pop %v607
    %v870 = vmul.f32 %v607, %v869
    %v871 = vsub.f32 1.0, %v870
    %v872 = vmul.f32 %v869, %v871
    %v873 = vadd.f32 %v869, %v872
    %vm874 = vweird.f32 %v607
    %vm875 = vweird.f32 %v869
    %vm876 = vmor %vm874, %vm875
    %v877 = vsel %vm876, %v869, %v873
    %v878 = vand.u32 2147483647, %v607
    %vm879 = vcmp.eq.f32.partialorder %v878, 8.507059e+37
    %v880 = vand.u32 %v607, 2147483648
    %v881 = vor.u32 1.1754944e-38, %v880
    %v882 = vsel %vm879, %v881, %v877
    %v883 = vmul.f32 1.0, %v882
    %v884 = vrcp.pop %v608
    %v885 = vmul.f32 %v608, %v884
    %v886 = vsub.f32 1.0, %v885
    %v887 = vmul.f32 %v884, %v886
    %v888 = vadd.f32 %v884, %v887
    %vm889 = vweird.f32 %v608
    %vm890 = vweird.f32 %v884
    %vm891 = vmor %vm889, %vm890
    %v892 = vsel %vm891, %v884, %v888
    %v893 = vand.u32 2147483647, %v608
    %vm894 = vcmp.eq.f32.partialorder %v893, 8.507059e+37
    %v895 = vand.u32 %v608, 2147483648
    %v896 = vor.u32 1.1754944e-38, %v895
    %v897 = vsel %vm894, %v896, %v892
    %v898 = vmul.f32 1.0, %v897
    %v899 = vrcp.pop %v609
    %v900 = vmul.f32 %v609, %v899
    %v901 = vsub.f32 1.0, %v900
    %v902 = vmul.f32 %v899, %v901
    %v903 = vadd.f32 %v899, %v902
    %vm904 = vweird.f32 %v609
    %vm905 = vweird.f32 %v899
    %vm906 = vmor %vm904, %vm905
    %v907 = vsel %vm906, %v899, %v903
    %v908 = vand.u32 2147483647, %v609
    %vm909 = vcmp.eq.f32.partialorder %v908, 8.507059e+37
    %v910 = vand.u32 %v609, 2147483648
    %v911 = vor.u32 1.1754944e-38, %v910
    %v912 = vsel %vm909, %v911, %v907
    %v913 = vmul.f32 1.0, %v912
    %v914 = vrcp.pop %v610
    %v915 = vmul.f32 %v610, %v914
    %v916 = vsub.f32 1.0, %v915
    %v917 = vmul.f32 %v914, %v916
    %v918 = vadd.f32 %v914, %v917
    %vm919 = vweird.f32 %v610
    %vm920 = vweird.f32 %v914
    %vm921 = vmor %vm919, %vm920
    %v922 = vsel %vm921, %v914, %v918
    %v923 = vand.u32 2147483647, %v610
    %vm924 = vcmp.eq.f32.partialorder %v923, 8.507059e+37
    %v925 = vand.u32 %v610, 2147483648
    %v926 = vor.u32 1.1754944e-38, %v925
    %v927 = vsel %vm924, %v926, %v922
    %v928 = vmul.f32 1.0, %v927
    %v929 = vrcp.pop %v611
    %v930 = vmul.f32 %v611, %v929
    %v931 = vsub.f32 1.0, %v930
    %v932 = vmul.f32 %v929, %v931
    %v933 = vadd.f32 %v929, %v932
    %vm934 = vweird.f32 %v611
    %vm935 = vweird.f32 %v929
    %vm936 = vmor %vm934, %vm935
    %v937 = vsel %vm936, %v929, %v933
    %v938 = vand.u32 2147483647, %v611
    %vm939 = vcmp.eq.f32.partialorder %v938, 8.507059e+37
    %v940 = vand.u32 %v611, 2147483648
    %v941 = vor.u32 1.1754944e-38, %v940
    %v942 = vsel %vm939, %v941, %v937
    %v943 = vmul.f32 1.0, %v942
    %v944 = vrcp.pop %v612
    %v945 = vmul.f32 %v612, %v944
    %v946 = vsub.f32 1.0, %v945
    %v947 = vmul.f32 %v944, %v946
    %v948 = vadd.f32 %v944, %v947
    %vm949 = vweird.f32 %v612
    %vm950 = vweird.f32 %v944
    %vm951 = vmor %vm949, %vm950
    %v952 = vsel %vm951, %v944, %v948
    %v953 = vand.u32 2147483647, %v612
    %vm954 = vcmp.eq.f32.partialorder %v953, 8.507059e+37
    %v955 = vand.u32 %v612, 2147483648
    %v956 = vor.u32 1.1754944e-38, %v955
    %v957 = vsel %vm954, %v956, %v952
    %v958 = vmul.f32 1.0, %v957
    %v959 = vrcp.pop %v613
    %v960 = vmul.f32 %v613, %v959
    %v961 = vsub.f32 1.0, %v960
    %v962 = vmul.f32 %v959, %v961
    %v963 = vadd.f32 %v959, %v962
    %vm964 = vweird.f32 %v613
    %vm965 = vweird.f32 %v959
    %vm966 = vmor %vm964, %vm965
    %v967 = vsel %vm966, %v959, %v963
    %v968 = vand.u32 2147483647, %v613
    %vm969 = vcmp.eq.f32.partialorder %v968, 8.507059e+37
    %v970 = vand.u32 %v613, 2147483648
    %v971 = vor.u32 1.1754944e-38, %v970
    %v972 = vsel %vm969, %v971, %v967
    %v973 = vmul.f32 1.0, %v972
    %v974 = vmul.f32 %v408, %v628
    %v975 = vmul.f32 %v432, %v643
    %v976 = vmul.f32 %v456, %v658
    %v977 = vmul.f32 %v480, %v673
    %v978 = vmul.f32 %v410, %v688
    %v979 = vmul.f32 %v434, %v703
    %v980 = vmul.f32 %v458, %v718
    %v981 = vmul.f32 %v482, %v733
    %v982 = vmul.f32 %v413, %v748
    %v983 = vmul.f32 %v437, %v763
    %v984 = vmul.f32 %v461, %v778
    %v985 = vmul.f32 %v485, %v793
    %v986 = vmul.f32 %v415, %v808
    %v987 = vmul.f32 %v439, %v823
    %v988 = vmul.f32 %v463, %v838
    %v989 = vmul.f32 %v487, %v853
    %v990 = vmul.f32 %v418, %v868
    %v991 = vmul.f32 %v442, %v883
    %v992 = vmul.f32 %v466, %v898
    %v993 = vmul.f32 %v490, %v913
    %v994 = vmul.f32 %v420, %v928
    %v995 = vmul.f32 %v444, %v943
    %v996 = vmul.f32 %v468, %v958
    %v997 = vmul.f32 %v492, %v973
    %v998 = vpack.c.bf16 %v975, %v974
    %v999 = vpack.c.bf16 %v977, %v976
    %v1000 = vpack.c.bf16 %v979, %v978
    %v1001 = vpack.c.bf16 %v981, %v980
    %v1002 = vpack.c.bf16 %v983, %v982
    %v1003 = vpack.c.bf16 %v985, %v984
    %v1004 = vpack.c.bf16 %v987, %v986
    %v1005 = vpack.c.bf16 %v989, %v988
    %v1006 = vpack.c.bf16 %v991, %v990
    %v1007 = vpack.c.bf16 %v993, %v992
    %v1008 = vpack.c.bf16 %v995, %v994
    %v1009 = vpack.c.bf16 %v997, %v996
    %1010 = vst [vmem:[%s5] sm:$0xff] %v998
    %1011 = vst [vmem:[%s5 + $0x8] sm:$0xff] %v999
    %1012 = vst [vmem:[%s5 + $0x10] sm:$0xff] %v1000
    %1013 = vst [vmem:[%s5 + $0x18] sm:$0xff] %v1001
    %1014 = vst [vmem:[%s5 + $0x20] sm:$0xff] %v1002
    %1015 = vst [vmem:[%s5 + $0x28] sm:$0xff] %v1003
    %1016 = vst [vmem:[%s5 + $0x30] sm:$0xff] %v1004
    %1017 = vst [vmem:[%s5 + $0x38] sm:$0xff] %v1005
    %1018 = vst [vmem:[%s5 + $0x40] sm:$0xff] %v1006
    %1019 = vst [vmem:[%s5 + $0x48] sm:$0xff] %v1007
    %1020 = vst [vmem:[%s5 + $0x50] sm:$0xff] %v1008
    %1021 = vst [vmem:[%s5 + $0x58] sm:$0xff] %v1009
    // Predicated region
    $region26: #{vision_transformer_forward.25} parent=1 // pred_check
      _
    $region27: #{vision_transformer_forward.25} parent=1 // pred_check_branch
      %1023 = sbr.rel (0) target = $region29
    $region28: #{vision_transformer_forward.25} parent=1 // pred_region
      _
    $region29: #{vision_transformer_forward.25} parent=1 // pred_fallthru
      _
    // Predicated region
    $region30: #{vision_transformer_forward.25} parent=1 // pred_check
      _
    $region31: #{vision_transformer_forward.25} parent=1 // pred_check_branch
      %1025 = sbr.rel (0) target = $region33
    $region32: #{vision_transformer_forward.25} parent=1 // pred_region
      _
    $region33: #{vision_transformer_forward.25} parent=1 // pred_fallthru
      _
    %1026 = vsyncpa [#allocation3], 1

// kernel: vision_transformer_forward.26
$region0: #{vision_transformer_forward.26}
  #allocation0 [shape = 'u32[]', space=smem, size = 0x4, offset = 0x4, fixed_abs, tag = 'smem constant byte address 0x4 - core index']
  #allocation1 [shape = 'u32[72,128]{1,0:T(1,128)}', space=vmem, size = 0x9000, scoped, tag = 'internal scratch']
  %s0 = inlined_call_operand.vmem [shape: bf16[48,512], index: 0, kind: input, shape index: {}]
  %s1 = inlined_call_operand.hbm [shape: bf16[512,128], index: 1, kind: input, shape index: {}]
  %s2 = inlined_call_operand.vmem [shape: f32[1,128], index: 2, kind: input, shape index: {}]
  %s3 = inlined_call_operand.vmem [shape: bf16[48,128], index: 3, kind: input, shape index: {}]
  %s4 = inlined_call_operand.vmem [shape: bf16[48,128], index: 4, kind: output, shape index: {}]
  %s5 = sld [smem:[#allocation0]]
  $region30: #{vision_transformer_forward.26} parent=0
    _
  %s7 = ssub.s32 1, %s5
  %s8 = scalar_select 0, %s7, %s5
  $region1: #{vision_transformer_forward.26} parent=0
    #allocation2 [shape = 'u8[131072]{0}', space=vmem, size = 0x20000, scoped, tag = 'input window, operand 1, single buffered']
    #allocation3 [shape = 's32[1]{0}', space=sflag, size = 0x4, scoped, tag = 'scoped memory for vision_transformer_forward.26']
    %9 = vsyncpa [#allocation3], 0
    // Predicated region
    $region2: #{vision_transformer_forward.26} parent=1 // pred_check
      _
    $region3: #{vision_transformer_forward.26} parent=1 // pred_check_branch
      %11 = sbr.rel (0) target = $region5
    $region4: #{vision_transformer_forward.26} parent=1 // pred_region
      _
    $region5: #{vision_transformer_forward.26} parent=1 // pred_fallthru
      _
    // Predicated region
    $region6: #{vision_transformer_forward.26} parent=1 // pred_check
      _
    $region7: #{vision_transformer_forward.26} parent=1 // pred_check_branch
      %13 = sbr.rel (0) target = $region9
    $region8: #{vision_transformer_forward.26} parent=1 // pred_region
      %15 = vsyncadd [#allocation3], 0
      %s16 = sshll.u32 %s1, 4
      %s17 = int_to_ptr.hbm [resolvable:$true] %s16
      %s18 = sshll.u32 [#allocation2], 4
      %s19 = int_to_ptr.vmem [resolvable:$true] %s18
      %24 = dma.hbm_to_vmem [thread:$0]  %s17, 4096, %s19, [#allocation3], 64, 64, 4
    $region9: #{vision_transformer_forward.26} parent=1 // pred_fallthru
      _
    // Predicated region
    $region10: #{vision_transformer_forward.26} parent=1 // pred_check
      _
    $region11: #{vision_transformer_forward.26} parent=1 // pred_check_branch
      %26 = sbr.rel (0) target = $region13
    $region12: #{vision_transformer_forward.26} parent=1 // pred_region
      _
    $region13: #{vision_transformer_forward.26} parent=1 // pred_fallthru
      _
    // Predicated region
    $region14: #{vision_transformer_forward.26} parent=1 // pred_check
      _
    $region15: #{vision_transformer_forward.26} parent=1 // pred_check_branch
      %28 = sbr.rel (0) target = $region17
    $region16: #{vision_transformer_forward.26} parent=1 // pred_region
      _
    $region17: #{vision_transformer_forward.26} parent=1 // pred_fallthru
      _
    // Predicated region
    $region18: #{vision_transformer_forward.26} parent=1 // pred_check
      _
    $region19: #{vision_transformer_forward.26} parent=1 // pred_check_branch
      %30 = sbr.rel (0) target = $region21
    $region20: #{vision_transformer_forward.26} parent=1 // pred_region
      %32 = dma.done [#allocation3], 4096
    $region21: #{vision_transformer_forward.26} parent=1 // pred_fallthru
      _
    %v33 = vld [vmem:[%s0] sm:$0xff]
    %v34 = vld [vmem:[%s0 + $0x8] sm:$0xff]
    %v35 = vld [vmem:[%s0 + $0x10] sm:$0xff]
    %v36 = vld [vmem:[%s0 + $0x18] sm:$0xff]
    %v37 = vld [vmem:[%s0 + $0x20] sm:$0xff]
    %v38 = vld [vmem:[%s0 + $0x28] sm:$0xff]
    %v39 = vld [vmem:[%s0 + $0x30] sm:$0xff]
    %v40 = vld [vmem:[%s0 + $0x38] sm:$0xff]
    %v41 = vld [vmem:[%s0 + $0x40] sm:$0xff]
    %v42 = vld [vmem:[%s0 + $0x48] sm:$0xff]
    %v43 = vld [vmem:[%s0 + $0x50] sm:$0xff]
    %v44 = vld [vmem:[%s0 + $0x58] sm:$0xff]
    %v45 = vld [vmem:[#allocation2] sm:$0xf]
    %v46 = vld [vmem:[#allocation2 + $0x4] sm:$0xf]
    %v47 = vld [vmem:[#allocation2 + $0x8] sm:$0xf]
    %v48 = vld [vmem:[#allocation2 + $0xc] sm:$0xf]
    %v49 = vld [vmem:[#allocation2 + $0x10] sm:$0xf]
    %v50 = vld [vmem:[#allocation2 + $0x14] sm:$0xf]
    %v51 = vld [vmem:[#allocation2 + $0x18] sm:$0xf]
    %v52 = vld [vmem:[#allocation2 + $0x1c] sm:$0xf]
    %v53 = vld [vmem:[#allocation2 + $0x20] sm:$0xf]
    %v54 = vld [vmem:[#allocation2 + $0x24] sm:$0xf]
    %v55 = vld [vmem:[#allocation2 + $0x28] sm:$0xf]
    %v56 = vld [vmem:[#allocation2 + $0x2c] sm:$0xf]
    %v57 = vld [vmem:[#allocation2 + $0x30] sm:$0xf]
    %v58 = vld [vmem:[#allocation2 + $0x34] sm:$0xf]
    %v59 = vld [vmem:[#allocation2 + $0x38] sm:$0xf]
    %v60 = vld [vmem:[#allocation2 + $0x3c] sm:$0xf]
    %v61 = vld [vmem:[#allocation2 + $0x40] sm:$0xf]
    %v62 = vld [vmem:[#allocation2 + $0x44] sm:$0xf]
    %v63 = vld [vmem:[#allocation2 + $0x48] sm:$0xf]
    %v64 = vld [vmem:[#allocation2 + $0x4c] sm:$0xf]
    %v65 = vld [vmem:[#allocation2 + $0x50] sm:$0xf]
    %v66 = vld [vmem:[#allocation2 + $0x54] sm:$0xf]
    %v67 = vld [vmem:[#allocation2 + $0x58] sm:$0xf]
    %v68 = vld [vmem:[#allocation2 + $0x5c] sm:$0xf]
    %v69 = vld [vmem:[#allocation2 + $0x60] sm:$0xf]
    %v70 = vld [vmem:[#allocation2 + $0x64] sm:$0xf]
    %v71 = vld [vmem:[#allocation2 + $0x68] sm:$0xf]
    %v72 = vld [vmem:[#allocation2 + $0x6c] sm:$0xf]
    %v73 = vld [vmem:[#allocation2 + $0x70] sm:$0xf]
    %v74 = vld [vmem:[#allocation2 + $0x74] sm:$0xf]
    %v75 = vld [vmem:[#allocation2 + $0x78] sm:$0xf]
    %v76 = vld [vmem:[#allocation2 + $0x7c] sm:$0xf]
    %v77 = vld [vmem:[#allocation2 + $0x80] sm:$0xf]
    %v78 = vld [vmem:[#allocation2 + $0x84] sm:$0xf]
    %v79 = vld [vmem:[#allocation2 + $0x88] sm:$0xf]
    %v80 = vld [vmem:[#allocation2 + $0x8c] sm:$0xf]
    %v81 = vld [vmem:[#allocation2 + $0x90] sm:$0xf]
    %v82 = vld [vmem:[#allocation2 + $0x94] sm:$0xf]
    %v83 = vld [vmem:[#allocation2 + $0x98] sm:$0xf]
    %v84 = vld [vmem:[#allocation2 + $0x9c] sm:$0xf]
    %v85 = vld [vmem:[#allocation2 + $0xa0] sm:$0xf]
    %v86 = vld [vmem:[#allocation2 + $0xa4] sm:$0xf]
    %v87 = vld [vmem:[#allocation2 + $0xa8] sm:$0xf]
    %v88 = vld [vmem:[#allocation2 + $0xac] sm:$0xf]
    %v89 = vld [vmem:[#allocation2 + $0xb0] sm:$0xf]
    %v90 = vld [vmem:[#allocation2 + $0xb4] sm:$0xf]
    %v91 = vld [vmem:[#allocation2 + $0xb8] sm:$0xf]
    %v92 = vld [vmem:[#allocation2 + $0xbc] sm:$0xf]
    %v93 = vld [vmem:[#allocation2 + $0xc0] sm:$0xf]
    %v94 = vld [vmem:[#allocation2 + $0xc4] sm:$0xf]
    %v95 = vld [vmem:[#allocation2 + $0xc8] sm:$0xf]
    %v96 = vld [vmem:[#allocation2 + $0xcc] sm:$0xf]
    %v97 = vld [vmem:[#allocation2 + $0xd0] sm:$0xf]
    %v98 = vld [vmem:[#allocation2 + $0xd4] sm:$0xf]
    %v99 = vld [vmem:[#allocation2 + $0xd8] sm:$0xf]
    %v100 = vld [vmem:[#allocation2 + $0xdc] sm:$0xf]
    %v101 = vld [vmem:[#allocation2 + $0xe0] sm:$0xf]
    %v102 = vld [vmem:[#allocation2 + $0xe4] sm:$0xf]
    %v103 = vld [vmem:[#allocation2 + $0xe8] sm:$0xf]
    %v104 = vld [vmem:[#allocation2 + $0xec] sm:$0xf]
    %v105 = vld [vmem:[#allocation2 + $0xf0] sm:$0xf]
    %v106 = vld [vmem:[#allocation2 + $0xf4] sm:$0xf]
    %v107 = vld [vmem:[#allocation2 + $0xf8] sm:$0xf]
    %v108 = vld [vmem:[#allocation2 + $0xfc] sm:$0xf]
    %v109 = vld [vmem:[%s2] sm:$0x1]
    %v111 = vperm.slane %v109, 0
    %v125 = vunpack.c.l.b16 %v33
    %v126 = vunpack.c.h.b16 %v33
    %v127 = vunpack.c.l.b16 %v34
    %v128 = vunpack.c.h.b16 %v34
    %v129 = vunpack.c.l.b16 %v35
    %v130 = vunpack.c.h.b16 %v35
    %v131 = vunpack.c.l.b16 %v36
    %v132 = vunpack.c.h.b16 %v36
    %v133 = vunpack.c.l.b16 %v37
    %v134 = vunpack.c.h.b16 %v37
    %v135 = vunpack.c.l.b16 %v38
    %v136 = vunpack.c.h.b16 %v38
    %v137 = vunpack.c.l.b16 %v39
    %v138 = vunpack.c.h.b16 %v39
    %v139 = vunpack.c.l.b16 %v40
    %v140 = vunpack.c.h.b16 %v40
    %v141 = vunpack.c.l.b16 %v41
    %v142 = vunpack.c.h.b16 %v41
    %v143 = vunpack.c.l.b16 %v42
    %v144 = vunpack.c.h.b16 %v42
    %v145 = vunpack.c.l.b16 %v43
    %v146 = vunpack.c.h.b16 %v43
    %v147 = vunpack.c.l.b16 %v44
    %v148 = vunpack.c.h.b16 %v44
    %v149 = vpack.c.b16 %v129, %v125
    %v150 = vpack.c.b16 %v130, %v126
    %v151 = vpack.c.b16 %v131, %v127
    %v152 = vpack.c.b16 %v132, %v128
    %v153 = vpack.c.b16 %v137, %v133
    %v154 = vpack.c.b16 %v138, %v134
    %v155 = vpack.c.b16 %v139, %v135
    %v156 = vpack.c.b16 %v140, %v136
    %v157 = vpack.c.b16 %v145, %v141
    %v158 = vpack.c.b16 %v146, %v142
    %v159 = vpack.c.b16 %v147, %v143
    %v160 = vpack.c.b16 %v148, %v144
    %v237 = vunpack.c.l.b16 %v45
    %v238 = vunpack.c.l.b16 %v46
    %v239 = vunpack.c.l.b16 %v47
    %v240 = vunpack.c.l.b16 %v48
    %v241 = vunpack.c.l.b16 %v49
    %v242 = vunpack.c.l.b16 %v50
    %v243 = vunpack.c.l.b16 %v51
    %v244 = vunpack.c.l.b16 %v52
    %v245 = vunpack.c.l.b16 %v53
    %v246 = vunpack.c.l.b16 %v54
    %v247 = vunpack.c.l.b16 %v55
    %v248 = vunpack.c.l.b16 %v56
    %v249 = vunpack.c.l.b16 %v57
    %v250 = vunpack.c.l.b16 %v58
    %v251 = vunpack.c.l.b16 %v59
    %v252 = vunpack.c.l.b16 %v60
    %v253 = vunpack.c.l.b16 %v61
    %v254 = vunpack.c.l.b16 %v62
    %v255 = vunpack.c.l.b16 %v63
    %v256 = vunpack.c.l.b16 %v64
    %v257 = vunpack.c.l.b16 %v65
    %v258 = vunpack.c.l.b16 %v66
    %v259 = vunpack.c.l.b16 %v67
    %v260 = vunpack.c.l.b16 %v68
    %v261 = vunpack.c.l.b16 %v69
    %v262 = vunpack.c.l.b16 %v70
    %v263 = vunpack.c.l.b16 %v71
    %v264 = vunpack.c.l.b16 %v72
    %v265 = vunpack.c.l.b16 %v73
    %v266 = vunpack.c.l.b16 %v74
    %v267 = vunpack.c.l.b16 %v75
    %v268 = vunpack.c.l.b16 %v76
    %v269 = vunpack.c.l.b16 %v77
    %v270 = vunpack.c.l.b16 %v78
    %v271 = vunpack.c.l.b16 %v79
    %v272 = vunpack.c.l.b16 %v80
    %v273 = vunpack.c.l.b16 %v81
    %v274 = vunpack.c.l.b16 %v82
    %v275 = vunpack.c.l.b16 %v83
    %v276 = vunpack.c.l.b16 %v84
    %v277 = vunpack.c.l.b16 %v85
    %v278 = vunpack.c.l.b16 %v86
    %v279 = vunpack.c.l.b16 %v87
    %v280 = vunpack.c.l.b16 %v88
    %v281 = vunpack.c.l.b16 %v89
    %v282 = vunpack.c.l.b16 %v90
    %v283 = vunpack.c.l.b16 %v91
    %v284 = vunpack.c.l.b16 %v92
    %v285 = vunpack.c.l.b16 %v93
    %v286 = vunpack.c.l.b16 %v94
    %v287 = vunpack.c.l.b16 %v95
    %v288 = vunpack.c.l.b16 %v96
    %v289 = vunpack.c.l.b16 %v97
    %v290 = vunpack.c.l.b16 %v98
    %v291 = vunpack.c.l.b16 %v99
    %v292 = vunpack.c.l.b16 %v100
    %v293 = vunpack.c.l.b16 %v101
    %v294 = vunpack.c.l.b16 %v102
    %v295 = vunpack.c.l.b16 %v103
    %v296 = vunpack.c.l.b16 %v104
    %v297 = vunpack.c.l.b16 %v105
    %v298 = vunpack.c.l.b16 %v106
    %v299 = vunpack.c.l.b16 %v107
    %v300 = vunpack.c.l.b16 %v108
    %v301 = vpack.c.b16 %v238, %v237
    %v302 = vpack.c.b16 %v240, %v239
    %v303 = vpack.c.b16 %v242, %v241
    %v304 = vpack.c.b16 %v244, %v243
    %v305 = vpack.c.b16 %v246, %v245
    %v306 = vpack.c.b16 %v248, %v247
    %v307 = vpack.c.b16 %v250, %v249
    %v308 = vpack.c.b16 %v252, %v251
    %v309 = vpack.c.b16 %v254, %v253
    %v310 = vpack.c.b16 %v256, %v255
    %v311 = vpack.c.b16 %v258, %v257
    %v312 = vpack.c.b16 %v260, %v259
    %v313 = vpack.c.b16 %v262, %v261
    %v314 = vpack.c.b16 %v264, %v263
    %v315 = vpack.c.b16 %v266, %v265
    %v316 = vpack.c.b16 %v268, %v267
    %v317 = vpack.c.b16 %v270, %v269
    %v318 = vpack.c.b16 %v272, %v271
    %v319 = vpack.c.b16 %v274, %v273
    %v320 = vpack.c.b16 %v276, %v275
    %v321 = vpack.c.b16 %v278, %v277
    %v322 = vpack.c.b16 %v280, %v279
    %v323 = vpack.c.b16 %v282, %v281
    %v324 = vpack.c.b16 %v284, %v283
    %v325 = vpack.c.b16 %v286, %v285
    %v326 = vpack.c.b16 %v288, %v287
    %v327 = vpack.c.b16 %v290, %v289
    %v328 = vpack.c.b16 %v292, %v291
    %v329 = vpack.c.b16 %v294, %v293
    %v330 = vpack.c.b16 %v296, %v295
    %v331 = vpack.c.b16 %v298, %v297
    %v332 = vpack.c.b16 %v300, %v299
    %365 = vmatpush.bf16.msra.mxu0 %v308
    %366 = vmatpush.bf16.msra.mxu0 %v307
    %367 = vmatpush.bf16.msra.mxu0 %v306
    %368 = vmatpush.bf16.msra.mxu0 %v305
    %369 = vmatpush.bf16.msra.mxu0 %v304
    %370 = vmatpush.bf16.msra.mxu0 %v303
    %371 = vmatpush.bf16.msra.mxu0 %v302
    %372 = vmatpush.bf16.msra.mxu0 %v301
    %373 = vmatmul.bf16.gmra.mxu0 %v149
    %v374 = vpop.f32.mrf.mxu0
    %v375 = vadd.f32 %v111, %v374
    %v376 = vpop.f32.mrf.mxu0
    %v377 = vadd.f32 %v111, %v376
    %378 = vmatmul.bf16.gmra.mxu0 %v153
    %v379 = vpop.f32.mrf.mxu0
    %v380 = vadd.f32 %v111, %v379
    %v381 = vpop.f32.mrf.mxu0
    %v382 = vadd.f32 %v111, %v381
    %383 = vmatmul.bf16.gmra.mxu0 %v157
    %v384 = vpop.f32.mrf.mxu0
    %v385 = vadd.f32 %v111, %v384
    %v386 = vpop.f32.mrf.mxu0
    %v387 = vadd.f32 %v111, %v386
    %388 = vdwg.mxu0
    %389 = vmatpush.bf16.msra.mxu0 %v316
    %390 = vmatpush.bf16.msra.mxu0 %v315
    %391 = vmatpush.bf16.msra.mxu0 %v314
    %392 = vmatpush.bf16.msra.mxu0 %v313
    %393 = vmatpush.bf16.msra.mxu0 %v312
    %394 = vmatpush.bf16.msra.mxu0 %v311
    %395 = vmatpush.bf16.msra.mxu0 %v310
    %396 = vmatpush.bf16.msra.mxu0 %v309
    %397 = vmatmul.bf16.gmra.mxu0 %v150
    %v398 = vpop.f32.mrf.mxu0
    %v399 = vadd.f32 %v375, %v398
    %v400 = vpop.f32.mrf.mxu0
    %v401 = vadd.f32 %v377, %v400
    %402 = vmatmul.bf16.gmra.mxu0 %v154
    %v403 = vpop.f32.mrf.mxu0
    %v404 = vadd.f32 %v380, %v403
    %v405 = vpop.f32.mrf.mxu0
    %v406 = vadd.f32 %v382, %v405
    %407 = vmatmul.bf16.gmra.mxu0 %v158
    %v408 = vpop.f32.mrf.mxu0
    %v409 = vadd.f32 %v385, %v408
    %v410 = vpop.f32.mrf.mxu0
    %v411 = vadd.f32 %v387, %v410
    %412 = vdwg.mxu0
    %413 = vmatpush.bf16.msra.mxu0 %v324
    %414 = vmatpush.bf16.msra.mxu0 %v323
    %415 = vmatpush.bf16.msra.mxu0 %v322
    %416 = vmatpush.bf16.msra.mxu0 %v321
    %417 = vmatpush.bf16.msra.mxu0 %v320
    %418 = vmatpush.bf16.msra.mxu0 %v319
    %419 = vmatpush.bf16.msra.mxu0 %v318
    %420 = vmatpush.bf16.msra.mxu0 %v317
    %421 = vmatmul.bf16.gmra.mxu0 %v151
    %v422 = vpop.f32.mrf.mxu0
    %v423 = vadd.f32 %v399, %v422
    %v424 = vpop.f32.mrf.mxu0
    %v425 = vadd.f32 %v401, %v424
    %426 = vmatmul.bf16.gmra.mxu0 %v155
    %v427 = vpop.f32.mrf.mxu0
    %v428 = vadd.f32 %v404, %v427
    %v429 = vpop.f32.mrf.mxu0
    %v430 = vadd.f32 %v406, %v429
    %431 = vmatmul.bf16.gmra.mxu0 %v159
    %v432 = vpop.f32.mrf.mxu0
    %v433 = vadd.f32 %v409, %v432
    %v434 = vpop.f32.mrf.mxu0
    %v435 = vadd.f32 %v411, %v434
    %436 = vdwg.mxu0
    %437 = vmatpush.bf16.msra.mxu0 %v332
    %438 = vmatpush.bf16.msra.mxu0 %v331
    %439 = vmatpush.bf16.msra.mxu0 %v330
    %440 = vmatpush.bf16.msra.mxu0 %v329
    %441 = vmatpush.bf16.msra.mxu0 %v328
    %442 = vmatpush.bf16.msra.mxu0 %v327
    %443 = vmatpush.bf16.msra.mxu0 %v326
    %444 = vmatpush.bf16.msra.mxu0 %v325
    %445 = vmatmul.bf16.gmra.mxu0 %v152
    %v446 = vpop.f32.mrf.mxu0
    %v447 = vadd.f32 %v423, %v446
    %v448 = vpop.f32.mrf.mxu0
    %v449 = vadd.f32 %v425, %v448
    %450 = vmatmul.bf16.gmra.mxu0 %v156
    %v451 = vpop.f32.mrf.mxu0
    %v452 = vadd.f32 %v428, %v451
    %v453 = vpop.f32.mrf.mxu0
    %v454 = vadd.f32 %v430, %v453
    %455 = vmatmul.bf16.gmra.mxu0 %v160
    %v456 = vpop.f32.mrf.mxu0
    %v457 = vadd.f32 %v433, %v456
    %v458 = vpop.f32.mrf.mxu0
    %v459 = vadd.f32 %v435, %v458
    %460 = vdwg.mxu0
    %v461 = vld [vmem:[%s3] sm:$0xf]
    %v462 = vld [vmem:[%s3 + $0x4] sm:$0xf]
    %v463 = vld [vmem:[%s3 + $0x8] sm:$0xf]
    %v464 = vld [vmem:[%s3 + $0xc] sm:$0xf]
    %v465 = vld [vmem:[%s3 + $0x10] sm:$0xf]
    %v466 = vld [vmem:[%s3 + $0x14] sm:$0xf]
    %v467 = vunpack.c.l.bf16 %v461
    %v468 = vunpack.c.l.bf16 %v462
    %v469 = vunpack.c.l.bf16 %v463
    %v470 = vunpack.c.l.bf16 %v464
    %v471 = vunpack.c.l.bf16 %v465
    %v472 = vunpack.c.l.bf16 %v466
    %v473 = vadd.f32 %v447, %v467
    %v474 = vadd.f32 %v449, %v468
    %v475 = vadd.f32 %v452, %v469
    %v476 = vadd.f32 %v454, %v470
    %v477 = vadd.f32 %v457, %v471
    %v478 = vadd.f32 %v459, %v472
    %v479 = vpack.c.bf16 %v473, %v473
    %v480 = vpack.c.bf16 %v474, %v474
    %v481 = vpack.c.bf16 %v475, %v475
    %v482 = vpack.c.bf16 %v476, %v476
    %v483 = vpack.c.bf16 %v477, %v477
    %v484 = vpack.c.bf16 %v478, %v478
    %485 = vst [vmem:[%s4] sm:$0xf] %v479
    %486 = vst [vmem:[%s4 + $0x4] sm:$0xf] %v480
    %487 = vst [vmem:[%s4 + $0x8] sm:$0xf] %v481
    %488 = vst [vmem:[%s4 + $0xc] sm:$0xf] %v482
    %489 = vst [vmem:[%s4 + $0x10] sm:$0xf] %v483
    %490 = vst [vmem:[%s4 + $0x14] sm:$0xf] %v484
    // Predicated region
    $region22: #{vision_transformer_forward.26} parent=1 // pred_check
      _
    $region23: #{vision_transformer_forward.26} parent=1 // pred_check_branch
      %492 = sbr.rel (0) target = $region25
    $region24: #{vision_transformer_forward.26} parent=1 // pred_region
      _
    $region25: #{vision_transformer_forward.26} parent=1 // pred_fallthru
      _
    // Predicated region
    $region26: #{vision_transformer_forward.26} parent=1 // pred_check
      _
    $region27: #{vision_transformer_forward.26} parent=1 // pred_check_branch
      %494 = sbr.rel (0) target = $region29
    $region28: #{vision_transformer_forward.26} parent=1 // pred_region
      _
    $region29: #{vision_transformer_forward.26} parent=1 // pred_fallthru
      _
    %495 = vsyncpa [#allocation3], 1

// kernel: vision_transformer_forward.27
$region0: #{vision_transformer_forward.27}
  #allocation0 [shape = 'u32[]', space=smem, size = 0x4, offset = 0x4, fixed_abs, tag = 'smem constant byte address 0x4 - core index']
  #allocation1 [shape = 'u32[72,128]{1,0:T(1,128)}', space=vmem, size = 0x9000, scoped, tag = 'internal scratch']
  %s0 = inlined_call_operand.vmem [shape: bf16[48,128], index: 0, kind: input, shape index: {}]
  %s1 = inlined_call_operand.vmem [shape: bf16[128,64], index: 1, kind: input, shape index: {}]
  %s2 = inlined_call_operand.vmem [shape: f32[1,64], index: 2, kind: input, shape index: {}]
  %s3 = inlined_call_operand.vmem [shape: f32[1,128], index: 3, kind: input, shape index: {}]
  %s4 = inlined_call_operand.vmem [shape: f32[1,128], index: 4, kind: input, shape index: {}]
  %s5 = inlined_call_operand.vmem [shape: f32[48,64], index: 5, kind: output, shape index: {}]
  %s6 = sld [smem:[#allocation0]]
  $region30: #{vision_transformer_forward.27} parent=0
    _
  %s8 = ssub.s32 1, %s6
  %s9 = scalar_select 0, %s8, %s6
  // Predicated region
  $region2: #{vision_transformer_forward.27} parent=0 // pred_check
    _
  $region3: #{vision_transformer_forward.27} parent=0 // pred_check_branch
    %11 = sbr.rel (0) target = $region5
  $region4: #{vision_transformer_forward.27} parent=0 // pred_region
    _
  $region5: #{vision_transformer_forward.27} parent=0 // pred_fallthru
    _
  // Predicated region
  $region6: #{vision_transformer_forward.27} parent=0 // pred_check
    _
  $region7: #{vision_transformer_forward.27} parent=0 // pred_check_branch
    %13 = sbr.rel (0) target = $region9
  $region8: #{vision_transformer_forward.27} parent=0 // pred_region
    _
  $region9: #{vision_transformer_forward.27} parent=0 // pred_fallthru
    _
  // Predicated region
  $region10: #{vision_transformer_forward.27} parent=0 // pred_check
    _
  $region11: #{vision_transformer_forward.27} parent=0 // pred_check_branch
    %15 = sbr.rel (0) target = $region13
  $region12: #{vision_transformer_forward.27} parent=0 // pred_region
    _
  $region13: #{vision_transformer_forward.27} parent=0 // pred_fallthru
    _
  // Predicated region
  $region14: #{vision_transformer_forward.27} parent=0 // pred_check
    _
  $region15: #{vision_transformer_forward.27} parent=0 // pred_check_branch
    %17 = sbr.rel (0) target = $region17
  $region16: #{vision_transformer_forward.27} parent=0 // pred_region
    _
  $region17: #{vision_transformer_forward.27} parent=0 // pred_fallthru
    _
  // Predicated region
  $region18: #{vision_transformer_forward.27} parent=0 // pred_check
    _
  $region19: #{vision_transformer_forward.27} parent=0 // pred_check_branch
    %19 = sbr.rel (0) target = $region21
  $region20: #{vision_transformer_forward.27} parent=0 // pred_region
    _
  $region21: #{vision_transformer_forward.27} parent=0 // pred_fallthru
    _
  %v20 = vld [vmem:[%s0] sm:$0xf]
  %v21 = vld [vmem:[%s0 + $0x4] sm:$0xf]
  %v22 = vld [vmem:[%s0 + $0x8] sm:$0xf]
  %v23 = vld [vmem:[%s0 + $0xc] sm:$0xf]
  %v24 = vld [vmem:[%s0 + $0x10] sm:$0xf]
  %v25 = vld [vmem:[%s0 + $0x14] sm:$0xf]
  %v26 = vunpack.c.l.bf16 %v20
  %v27 = vunpack.c.l.bf16 %v21
  %v28 = vunpack.c.l.bf16 %v22
  %v29 = vunpack.c.l.bf16 %v23
  %v30 = vunpack.c.l.bf16 %v24
  %v31 = vunpack.c.l.bf16 %v25
  %32 = vadd.xlane.f32.xlu0 %v26
  %v33 = vpop.xlane.xlu0 %32
  %34 = vadd.xlane.f32.xlu0 %v27
  %v35 = vpop.xlane.xlu0 %34
  %36 = vadd.xlane.f32.xlu0 %v28
  %v37 = vpop.xlane.xlu0 %36
  %38 = vadd.xlane.f32.xlu0 %v29
  %v39 = vpop.xlane.xlu0 %38
  %40 = vadd.xlane.f32.xlu0 %v30
  %v41 = vpop.xlane.xlu0 %40
  %42 = vadd.xlane.f32.xlu0 %v31
  %v43 = vpop.xlane.xlu0 %42
  %v44 = vrcp.pop 128.0
  %v45 = vmul.f32 128.0, %v44
  %v46 = vsub.f32 1.0, %v45
  %v47 = vmul.f32 %v44, %v46
  %v48 = vadd.f32 %v44, %v47
  %vm49 = vweird.f32 %v44
  %v50 = vsel %vm49, %v44, %v48
  %v51 = vmul.f32 %v33, %v50
  %v52 = vmul.f32 %v35, %v50
  %v53 = vmul.f32 %v37, %v50
  %v54 = vmul.f32 %v39, %v50
  %v55 = vmul.f32 %v41, %v50
  %v56 = vmul.f32 %v43, %v50
  %v57 = vsub.f32 %v26, %v51
  %v58 = vsub.f32 %v27, %v52
  %v59 = vsub.f32 %v28, %v53
  %v60 = vsub.f32 %v29, %v54
  %v61 = vsub.f32 %v30, %v55
  %v62 = vsub.f32 %v31, %v56
  %v63 = vmul.f32 %v57, %v57
  %v64 = vmul.f32 %v58, %v58
  %v65 = vmul.f32 %v59, %v59
  %v66 = vmul.f32 %v60, %v60
  %v67 = vmul.f32 %v61, %v61
  %v68 = vmul.f32 %v62, %v62
  %69 = vadd.xlane.f32.xlu0 %v63
  %v70 = vpop.xlane.xlu0 %69
  %71 = vadd.xlane.f32.xlu0 %v64
  %v72 = vpop.xlane.xlu0 %71
  %73 = vadd.xlane.f32.xlu0 %v65
  %v74 = vpop.xlane.xlu0 %73
  %75 = vadd.xlane.f32.xlu0 %v66
  %v76 = vpop.xlane.xlu0 %75
  %77 = vadd.xlane.f32.xlu0 %v67
  %v78 = vpop.xlane.xlu0 %77
  %79 = vadd.xlane.f32.xlu0 %v68
  %v80 = vpop.xlane.xlu0 %79
  %v81 = vmul.f32 %v70, %v50
  %v82 = vmul.f32 %v72, %v50
  %v83 = vmul.f32 %v74, %v50
  %v84 = vmul.f32 %v76, %v50
  %v85 = vmul.f32 %v78, %v50
  %v86 = vmul.f32 %v80, %v50
  %v87 = vadd.f32 %v81, 1e-05
  %v88 = vadd.f32 %v82, 1e-05
  %v89 = vadd.f32 %v83, 1e-05
  %v90 = vadd.f32 %v84, 1e-05
  %v91 = vadd.f32 %v85, 1e-05
  %v92 = vadd.f32 %v86, 1e-05
  %v93 = vrsqrt.pop %v87
  %v94 = vmul.f32 %v93, %v87
  %v95 = vmul.f32 %v94, %v93
  %v96 = vmul.f32 0.5, %v95
  %v97 = vsub.f32 1.5, %v96
  %v98 = vmul.f32 %v93, %v97
  %vm99 = vweird.f32 %v87
  %vm100 = vweird.f32 %v93
  %vm101 = vmor %vm99, %vm100
  %v102 = vsel %vm101, %v93, %v98
  %v103 = vrsqrt.pop %v88
  %v104 = vmul.f32 %v103, %v88
  %v105 = vmul.f32 %v104, %v103
  %v106 = vmul.f32 0.5, %v105
  %v107 = vsub.f32 1.5, %v106
  %v108 = vmul.f32 %v103, %v107
  %vm109 = vweird.f32 %v88
  %vm110 = vweird.f32 %v103
  %vm111 = vmor %vm109, %vm110
  %v112 = vsel %vm111, %v103, %v108
  %v113 = vrsqrt.pop %v89
  %v114 = vmul.f32 %v113, %v89
  %v115 = vmul.f32 %v114, %v113
  %v116 = vmul.f32 0.5, %v115
  %v117 = vsub.f32 1.5, %v116
  %v118 = vmul.f32 %v113, %v117
  %vm119 = vweird.f32 %v89
  %vm120 = vweird.f32 %v113
  %vm121 = vmor %vm119, %vm120
  %v122 = vsel %vm121, %v113, %v118
  %v123 = vrsqrt.pop %v90
  %v124 = vmul.f32 %v123, %v90
  %v125 = vmul.f32 %v124, %v123
  %v126 = vmul.f32 0.5, %v125
  %v127 = vsub.f32 1.5, %v126
  %v128 = vmul.f32 %v123, %v127
  %vm129 = vweird.f32 %v90
  %vm130 = vweird.f32 %v123
  %vm131 = vmor %vm129, %vm130
  %v132 = vsel %vm131, %v123, %v128
  %v133 = vrsqrt.pop %v91
  %v134 = vmul.f32 %v133, %v91
  %v135 = vmul.f32 %v134, %v133
  %v136 = vmul.f32 0.5, %v135
  %v137 = vsub.f32 1.5, %v136
  %v138 = vmul.f32 %v133, %v137
  %vm139 = vweird.f32 %v91
  %vm140 = vweird.f32 %v133
  %vm141 = vmor %vm139, %vm140
  %v142 = vsel %vm141, %v133, %v138
  %v143 = vrsqrt.pop %v92
  %v144 = vmul.f32 %v143, %v92
  %v145 = vmul.f32 %v144, %v143
  %v146 = vmul.f32 0.5, %v145
  %v147 = vsub.f32 1.5, %v146
  %v148 = vmul.f32 %v143, %v147
  %vm149 = vweird.f32 %v92
  %vm150 = vweird.f32 %v143
  %vm151 = vmor %vm149, %vm150
  %v152 = vsel %vm151, %v143, %v148
  %v153 = vmul.f32 %v57, %v102
  %v154 = vmul.f32 %v58, %v112
  %v155 = vmul.f32 %v59, %v122
  %v156 = vmul.f32 %v60, %v132
  %v157 = vmul.f32 %v61, %v142
  %v158 = vmul.f32 %v62, %v152
  %v159 = vld [vmem:[%s3] sm:$0x1]
  %v161 = vperm.slane %v159, 0
  %v163 = vmul.f32 %v153, %v161
  %v164 = vmul.f32 %v154, %v161
  %v165 = vmul.f32 %v155, %v161
  %v166 = vmul.f32 %v156, %v161
  %v167 = vmul.f32 %v157, %v161
  %v168 = vmul.f32 %v158, %v161
  %v169 = vld [vmem:[%s4] sm:$0x1]
  %v171 = vperm.slane %v169, 0
  %v173 = vadd.f32 %v163, %v171
  %v174 = vadd.f32 %v164, %v171
  %v175 = vadd.f32 %v165, %v171
  %v176 = vadd.f32 %v166, %v171
  %v177 = vadd.f32 %v167, %v171
  %v178 = vadd.f32 %v168, %v171
  %v179 = vpack.c.bf16 %v174, %v173
  %v180 = vpack.c.bf16 %v176, %v175
  %v181 = vpack.c.bf16 %v178, %v177
  %v182 = vld [vmem:[%s1] sm:$0xf]
  %v183 = vld [vmem:[%s1 + $0x4] sm:$0xf]
  %v184 = vld [vmem:[%s1 + $0x8] sm:$0xf]
  %v185 = vld [vmem:[%s1 + $0xc] sm:$0xf]
  %v186 = vld [vmem:[%s1 + $0x10] sm:$0xf]
  %v187 = vld [vmem:[%s1 + $0x14] sm:$0xf]
  %v188 = vld [vmem:[%s1 + $0x18] sm:$0xf]
  %v189 = vld [vmem:[%s1 + $0x1c] sm:$0xf]
  %v190 = vld [vmem:[%s1 + $0x20] sm:$0xf]
  %v191 = vld [vmem:[%s1 + $0x24] sm:$0xf]
  %v192 = vld [vmem:[%s1 + $0x28] sm:$0xf]
  %v193 = vld [vmem:[%s1 + $0x2c] sm:$0xf]
  %v194 = vld [vmem:[%s1 + $0x30] sm:$0xf]
  %v195 = vld [vmem:[%s1 + $0x34] sm:$0xf]
  %v196 = vld [vmem:[%s1 + $0x38] sm:$0xf]
  %v197 = vld [vmem:[%s1 + $0x3c] sm:$0xf]
  %v198 = vld [vmem:[%s2] sm:$0x1]
  %v200 = vperm.slane %v198, 0
  %v218 = vunpack.c.l.b16 %v182
  %v219 = vunpack.c.l.b16 %v183
  %v220 = vunpack.c.l.b16 %v184
  %v221 = vunpack.c.l.b16 %v185
  %v222 = vunpack.c.l.b16 %v186
  %v223 = vunpack.c.l.b16 %v187
  %v224 = vunpack.c.l.b16 %v188
  %v225 = vunpack.c.l.b16 %v189
  %v226 = vunpack.c.l.b16 %v190
  %v227 = vunpack.c.l.b16 %v191
  %v228 = vunpack.c.l.b16 %v192
  %v229 = vunpack.c.l.b16 %v193
  %v230 = vunpack.c.l.b16 %v194
  %v231 = vunpack.c.l.b16 %v195
  %v232 = vunpack.c.l.b16 %v196
  %v233 = vunpack.c.l.b16 %v197
  %v234 = vpack.c.b16 %v219, %v218
  %v235 = vpack.c.b16 %v221, %v220
  %v236 = vpack.c.b16 %v223, %v222
  %v237 = vpack.c.b16 %v225, %v224
  %v238 = vpack.c.b16 %v227, %v226
  %v239 = vpack.c.b16 %v229, %v228
  %v240 = vpack.c.b16 %v231, %v230
  %v241 = vpack.c.b16 %v233, %v232
  %250 = vmatpush.bf16.msra.mxu0 %v241
  %251 = vmatpush.bf16.msra.mxu0 %v240
  %252 = vmatpush.bf16.msra.mxu0 %v239
  %253 = vmatpush.bf16.msra.mxu0 %v238
  %254 = vmatpush.bf16.msra.mxu0 %v237
  %255 = vmatpush.bf16.msra.mxu0 %v236
  %256 = vmatpush.bf16.msra.mxu0 %v235
  %257 = vmatpush.bf16.msra.mxu0 %v234
  %258 = vmatmul.bf16.gmra.mxu0 %v179
  %v259 = vpop.f32.mrf.mxu0
  %v260 = vadd.f32 %v200, %v259
  %v261 = vpop.f32.mrf.mxu0
  %v262 = vadd.f32 %v200, %v261
  %263 = vmatmul.bf16.gmra.mxu0 %v180
  %v264 = vpop.f32.mrf.mxu0
  %v265 = vadd.f32 %v200, %v264
  %v266 = vpop.f32.mrf.mxu0
  %v267 = vadd.f32 %v200, %v266
  %268 = vmatmul.bf16.gmra.mxu0 %v181
  %v269 = vpop.f32.mrf.mxu0
  %v270 = vadd.f32 %v200, %v269
  %v271 = vpop.f32.mrf.mxu0
  %v272 = vadd.f32 %v200, %v271
  %273 = vdwg.mxu0
  %vm274 = vcmask 523264
  %275 = vst.msk [vmem:[%s5] sm:$0xff] %vm274, %v260
  %276 = vst.msk [vmem:[%s5 + $0x8] sm:$0xff] %vm274, %v262
  %277 = vst.msk [vmem:[%s5 + $0x10] sm:$0xff] %vm274, %v265
  %278 = vst.msk [vmem:[%s5 + $0x18] sm:$0xff] %vm274, %v267
  %279 = vst.msk [vmem:[%s5 + $0x20] sm:$0xff] %vm274, %v270
  %280 = vst.msk [vmem:[%s5 + $0x28] sm:$0xff] %vm274, %v272
  // Predicated region
  $region22: #{vision_transformer_forward.27} parent=0 // pred_check
    _
  $region23: #{vision_transformer_forward.27} parent=0 // pred_check_branch
    %282 = sbr.rel (0) target = $region25
  $region24: #{vision_transformer_forward.27} parent=0 // pred_region
    _
  $region25: #{vision_transformer_forward.27} parent=0 // pred_fallthru
    _
  // Predicated region
  $region26: #{vision_transformer_forward.27} parent=0 // pred_check
    _
  $region27: #{vision_transformer_forward.27} parent=0 // pred_check_branch
    %284 = sbr.rel (0) target = $region29
  $region28: #{vision_transformer_forward.27} parent=0 // pred_region
    _
  $region29: #{vision_transformer_forward.27} parent=0 // pred_fallthru
    _

// kernel: vision_transformer_forward.23
$region0: #{vision_transformer_forward.23}
  #allocation0 [shape = 'u32[]', space=smem, size = 0x4, offset = 0x4, fixed_abs, tag = 'smem constant byte address 0x4 - core index']
  #allocation1 [shape = 'u32[72,128]{1,0:T(1,128)}', space=vmem, size = 0x9000, scoped, tag = 'internal scratch']
  %s0 = inlined_call_operand.vmem [shape: bf16[2,24,384], index: 0, kind: input, shape index: {}, may-alias: {0,1}]
  %s1 = inlined_call_operand.vmem [shape: bf16[2,24,384], index: 1, kind: input, shape index: {}, may-alias: {0,1}]
  %s2 = inlined_call_operand.vmem [shape: f32[2,1,24], index: 2, kind: output, shape index: {}]
  %s3 = sld [smem:[#allocation0]]
  $region82: #{vision_transformer_forward.23} parent=0
    _
  %s5 = ssub.s32 1, %s3
  %s6 = scalar_select 0, %s5, %s3
  $region1: #{vision_transformer_forward.23} parent=0
    #allocation2 [shape = 'u8[12288]{0}', space=vmem, size = 0x3000, scoped, tag = 'input window, operand 1']
    loop: start=0, step=1, limit=4
    $region2: #{vision_transformer_forward.23} parent=1 // loop_pre_header
      _
    $region3: #{vision_transformer_forward.23} parent=1 // loop_header
      %s8 = sphi 0, %s12
      %p9 = scmp.ge.s32.totalorder %s8, 4
      %s18 = sphi 0, %s20
      %s21 = sphi 0, %s18
      %s22 = sphi 0, %s21
      %s38 = sphi 0, %s22
      %s44 = sphi 0, %s46
      %s47 = sphi 0, %s44
      %s48 = sphi 0, %s47
      %s64 = sphi 0, %s48
      %s70 = sphi 0, %s72
      %s73 = sphi 0, %s70
      %s74 = sphi 0, %s73
      %s90 = sphi 0, %s74
    $region4: #{vision_transformer_forward.23} parent=1 // loop_header_branch
      %11 = sbr.rel (%p9) target = $region8
    $region5: #{vision_transformer_forward.23} parent=1 // loop_body
      %s13 = ssub.s32 %s8, 1
      %s14 = ssub.s32 %s8, 2
      %s15 = sadd.s32 %s8, 1
      %s16 = ssub.s32 %s8, %s15
      %p17 = scmp.eq.s32.totalorder %s16, 0
      %s19 = sadd.s32 %s18, 1
      %s20 = scalar_select %p17, %s18, %s19
      %p23 = pneg %p17
      %p24 = scmp.eq.s32.totalorder %s8, 1
      %p25 = por %p23, %p24
      %p26 = scmp.ne.s32.totalorder %s18, %s21
      %p27 = scmp.eq.s32.totalorder %s8, 0
      %p28 = por %p26, %p27
      %p29 = scmp.ne.s32.totalorder %s18, %s21
      %p30 = scmp.eq.s32.totalorder %s13, 1
      %p31 = por %p29, %p30
      %p32 = scmp.ne.s32.totalorder %s21, %s22
      %p33 = scmp.eq.s32.totalorder %s13, 0
      %p34 = por %p32, %p33
      %p35 = scmp.ne.s32.totalorder %s21, %s22
      %p36 = scmp.eq.s32.totalorder %s14, 1
      %p37 = por %p35, %p36
      %p39 = scmp.ne.s32.totalorder %s22, %s38
      %p40 = scmp.eq.s32.totalorder %s14, 0
      %p41 = por %p39, %p40
      %s42 = ssub.s32 %s8, %s15
      %p43 = scmp.eq.s32.totalorder %s42, 0
      %s45 = sadd.s32 %s44, 1
      %s46 = scalar_select %p43, %s44, %s45
      %p49 = pneg %p43
      %p50 = scmp.eq.s32.totalorder %s8, 1
      %p51 = por %p49, %p50
      %p52 = scmp.ne.s32.totalorder %s44, %s47
      %p53 = scmp.eq.s32.totalorder %s8, 0
      %p54 = por %p52, %p53
      %p55 = scmp.ne.s32.totalorder %s44, %s47
      %p56 = scmp.eq.s32.totalorder %s13, 1
      %p57 = por %p55, %p56
      %p58 = scmp.ne.s32.totalorder %s47, %s48
      %p59 = scmp.eq.s32.totalorder %s13, 0
      %p60 = por %p58, %p59
      %p61 = scmp.ne.s32.totalorder %s47, %s48
      %p62 = scmp.eq.s32.totalorder %s14, 1
      %p63 = por %p61, %p62
      %p65 = scmp.ne.s32.totalorder %s48, %s64
      %p66 = scmp.eq.s32.totalorder %s14, 0
      %p67 = por %p65, %p66
      %s68 = ssub.s32 %s8, %s15
      %p69 = scmp.eq.s32.totalorder %s68, 0
      %s71 = sadd.s32 %s70, 1
      %s72 = scalar_select %p69, %s70, %s71
      %p75 = pneg %p69
      %p76 = scmp.eq.s32.totalorder %s8, 1
      %p77 = por %p75, %p76
      %p78 = scmp.ne.s32.totalorder %s70, %s73
      %p79 = scmp.eq.s32.totalorder %s8, 0
      %p80 = por %p78, %p79
      %p81 = scmp.ne.s32.totalorder %s70, %s73
      %p82 = scmp.eq.s32.totalorder %s13, 1
      %p83 = por %p81, %p82
      %p84 = scmp.ne.s32.totalorder %s73, %s74
      %p85 = scmp.eq.s32.totalorder %s13, 0
      %p86 = por %p84, %p85
      %p87 = scmp.ne.s32.totalorder %s73, %s74
      %p88 = scmp.eq.s32.totalorder %s14, 1
      %p89 = por %p87, %p88
      %p91 = scmp.ne.s32.totalorder %s74, %s90
      %p92 = scmp.eq.s32.totalorder %s14, 0
      %p93 = por %p91, %p92
      %p94 = scmp.le.s32.totalorder 1, %s8
      %p95 = scmp.lt.s32.totalorder %s8, 3
      %p96 = pnand %p94, %p95
      %p97 = pneg %p96
      // Predicated region
      $region9: #{vision_transformer_forward.23} parent=5 // pred_check
        _
      $region10: #{vision_transformer_forward.23} parent=5 // pred_check_branch
        %99 = sbr.rel (%p96) target = $region12
      $region11: #{vision_transformer_forward.23} parent=5 // pred_region
        %s100 = ssub.s32 %s8, 1
      $region12: #{vision_transformer_forward.23} parent=5 // pred_fallthru
        _
      %p101 = scmp.lt.s32.totalorder %s8, 2
      // Predicated region
      $region13: #{vision_transformer_forward.23} parent=5 // pred_check
        %p102 = pneg %p101
      $region14: #{vision_transformer_forward.23} parent=5 // pred_check_branch
        %104 = sbr.rel (%p102) target = $region16
      $region15: #{vision_transformer_forward.23} parent=5 // pred_region
        // Predicated region
        $region17: #{vision_transformer_forward.23} parent=15 // pred_check
          %p105 = pneg %p28
        $region18: #{vision_transformer_forward.23} parent=15 // pred_check_branch
          %107 = sbr.rel (%p105) target = $region20
        $region19: #{vision_transformer_forward.23} parent=15 // pred_region
          %p108 = scmp.lt.s32.totalorder %s8, 1
          %s109 = scalar_select %p108, %s8, 1
          %s110 = smul.addr %s109, 9
          %s111 = smul.addr %s110, 4
          %s112 = scalar_lea.vmem %s0, %s111
        $region20: #{vision_transformer_forward.23} parent=15 // pred_fallthru
          _
        // Predicated region
        $region21: #{vision_transformer_forward.23} parent=15 // pred_check
          %p113 = pneg %p54
        $region22: #{vision_transformer_forward.23} parent=15 // pred_check_branch
          %115 = sbr.rel (%p113) target = $region24
        $region23: #{vision_transformer_forward.23} parent=15 // pred_region
          %s116 = sand.u32 %s44, 1
          %s117 = sand.u32 %s44, 1
          %s118 = smul.addr %s117, 12
          %s119 = scalar_lea.vmem [#allocation2], %s118
          %s120 = smul.addr %s8, 9
          %s121 = sadd.s32 1, %s120
          %s122 = smul.addr %s121, 4
          %s123 = scalar_lea.vmem %s1, %s122
          // Predicated region
          $region25: #{vision_transformer_forward.23} parent=23 // pred_check
            _
          $region26: #{vision_transformer_forward.23} parent=23 // pred_check_branch
            %125 = sbr.rel (0) target = $region28
          $region27: #{vision_transformer_forward.23} parent=23 // pred_region
            // Predicated region
            $region29: #{vision_transformer_forward.23} parent=27 // pred_check
              _
            $region30: #{vision_transformer_forward.23} parent=27 // pred_check_branch
              %127 = sbr.rel target = $region32
            $region31: #{vision_transformer_forward.23} parent=27 // pred_region
              // Predicated region
              $region44: #{vision_transformer_forward.23} parent=31 // pred_check
                _
              $region45: #{vision_transformer_forward.23} parent=31 // pred_check_branch
                %147 = sbr.rel (0) target = $region47
              $region46: #{vision_transformer_forward.23} parent=31 // pred_region
                loop: start=0, step=1, limit=1
                $region48: #{vision_transformer_forward.23} parent=46 // loop_pre_header
                  _
                $region49: #{vision_transformer_forward.23} parent=46 // loop_header
                  %s149 = sphi 0, %s153
                  %p150 = scmp.ge.s32.totalorder %s149, 1
                  %s154 = sphi %s123, %s123
                  %s155 = sphi %s119, %s119
                $region50: #{vision_transformer_forward.23} parent=46 // loop_header_branch
                  %152 = sbr.rel (%p150) target = $region54
                $region51: #{vision_transformer_forward.23} parent=46 // loop_body
                  _
                $region52: #{vision_transformer_forward.23} parent=46 // loop_footer
                  %s153 = sadd.s32 1, %s149
                $region53: #{vision_transformer_forward.23} parent=46 // loop_footer_branch
                  %148 = sbr.rel target = $region49
                $region54: #{vision_transformer_forward.23} parent=46 // loop_exit
                  _
                %s157 = ssub.s32 16, 1
                loop: start=0, step=1, limit=1
                $region55: #{vision_transformer_forward.23} parent=46 // loop_pre_header
                  _
                $region56: #{vision_transformer_forward.23} parent=46 // loop_header
                  %s159 = sphi 0, %s163
                  %p160 = scmp.ge.s32.totalorder %s159, 1
                  %s164 = sphi %s123, %s123
                  %s165 = sphi %s119, %s119
                $region57: #{vision_transformer_forward.23} parent=46 // loop_header_branch
                  %162 = sbr.rel (%p160) target = $region61
                $region58: #{vision_transformer_forward.23} parent=46 // loop_body
                  %v166 = vld [vmem:[%s164] sm:%s157]
                  %167 = vst [vmem:[%s165] sm:%s157] %v166
                  %v168 = vld [vmem:[%s164 + $0xc] sm:%s157]
                  %169 = vst [vmem:[%s165 + $0x4] sm:%s157] %v168
                  %v170 = vld [vmem:[%s164 + $0x18] sm:%s157]
                  %171 = vst [vmem:[%s165 + $0x8] sm:%s157] %v170
                $region59: #{vision_transformer_forward.23} parent=46 // loop_footer
                  %s163 = sadd.s32 1, %s159
                $region60: #{vision_transformer_forward.23} parent=46 // loop_footer_branch
                  %158 = sbr.rel target = $region56
                $region61: #{vision_transformer_forward.23} parent=46 // loop_exit
                  _
              $region47: #{vision_transformer_forward.23} parent=31 // pred_fallthru
                _
            $region32: #{vision_transformer_forward.23} parent=27 // pred_fallthru
              _
            // Predicated region
            $region33: #{vision_transformer_forward.23} parent=27 // pred_check
              _
            $region34: #{vision_transformer_forward.23} parent=27 // pred_check_branch
              %129 = sbr.rel (0) target = $region36
            $region35: #{vision_transformer_forward.23} parent=27 // pred_region
              %s131 = ssub.s32 16, 1
              loop: start=0, step=1, limit=1
              $region37: #{vision_transformer_forward.23} parent=35 // loop_pre_header
                _
              $region38: #{vision_transformer_forward.23} parent=35 // loop_header
                %s133 = sphi 0, %s137
                %p134 = scmp.ge.s32.totalorder %s133, 1
                %s138 = sphi %s123, %s123
                %s139 = sphi %s119, %s119
              $region39: #{vision_transformer_forward.23} parent=35 // loop_header_branch
                %136 = sbr.rel (%p134) target = $region43
              $region40: #{vision_transformer_forward.23} parent=35 // loop_body
                %v140 = vld [vmem:[%s138] sm:%s131]
                %141 = vst [vmem:[%s139] sm:%s131] %v140
                %v142 = vld [vmem:[%s138 + $0xc] sm:%s131]
                %143 = vst [vmem:[%s139 + $0x4] sm:%s131] %v142
                %v144 = vld [vmem:[%s138 + $0x18] sm:%s131]
                %145 = vst [vmem:[%s139 + $0x8] sm:%s131] %v144
              $region41: #{vision_transformer_forward.23} parent=35 // loop_footer
                %s137 = sadd.s32 1, %s133
              $region42: #{vision_transformer_forward.23} parent=35 // loop_footer_branch
                %132 = sbr.rel target = $region38
              $region43: #{vision_transformer_forward.23} parent=35 // loop_exit
                _
            $region36: #{vision_transformer_forward.23} parent=27 // pred_fallthru
              _
          $region28: #{vision_transformer_forward.23} parent=23 // pred_fallthru
            _
          %172 = vnop
        $region24: #{vision_transformer_forward.23} parent=15 // pred_fallthru
          _
      $region16: #{vision_transformer_forward.23} parent=5 // pred_fallthru
        _
      %p173 = scmp.le.s32.totalorder 1, %s8
      %p174 = scmp.lt.s32.totalorder %s8, 3
      %p175 = pnand %p173, %p174
      %p176 = pneg %p175
      // Predicated region
      $region62: #{vision_transformer_forward.23} parent=5 // pred_check
        _
      $region63: #{vision_transformer_forward.23} parent=5 // pred_check_branch
        %178 = sbr.rel (%p175) target = $region65
      $region64: #{vision_transformer_forward.23} parent=5 // pred_region
        %s179 = ssub.s32 %s8, 1
        %s180 = sand.u32 %s47, 1
        %s181 = sand.u32 %s47, 1
        %s182 = smul.addr %s181, 12
        %s183 = scalar_lea.vmem [#allocation2], %s182
        // Predicated region
        $region66: #{vision_transformer_forward.23} parent=64 // pred_check
          %p184 = pneg %p60
        $region67: #{vision_transformer_forward.23} parent=64 // pred_check_branch
          %186 = sbr.rel (%p184) target = $region69
        $region68: #{vision_transformer_forward.23} parent=64 // pred_region
          _
        $region69: #{vision_transformer_forward.23} parent=64 // pred_fallthru
          _
        %p187 = scmp.lt.s32.totalorder %s13, 1
        %s188 = scalar_select %p187, %s13, 1
        %s189 = smul.addr %s188, 9
        %s190 = smul.addr %s189, 4
        %s191 = scalar_lea.vmem %s0, %s190
        %p192 = pneg %p34
        %p193 = pneg %p31
        %s194 = sand.u32 %s47, 1
        %s195 = sand.u32 %s47, 1
        %s196 = smul.addr %s195, 12
        %s197 = scalar_lea.vmem [#allocation2], %s196
        %p198 = pneg %p60
        %p199 = pneg %p57
        %p200 = pneg %p86
        %p201 = pneg %p83
        %p202 = scmp.lt.s32.totalorder %s13, 1
        %s203 = scalar_select %p202, %s13, 1
        %s204 = scalar_lea.vmem %s2, %s203
        %p205 = scmp.lt.s32.totalorder %s13, 1
        %s206 = scalar_select %p205, %s13, 1
        %s207 = smul.addr %s206, 9
        %s208 = smul.addr %s207, 4
        %s209 = scalar_lea.vmem %s0, %s208
        %p210 = scmp.lt.s32.totalorder %s13, 1
        %s211 = scalar_select %p210, %s13, 1
        %s212 = scalar_lea.vmem %s2, %s211
        %v214 = vld [vmem:[%s209] sm:$0x1]
        %v215 = vld [vmem:[%s183] sm:$0xf]
        %v216 = vld [vmem:[%s183 + $0x4] sm:$0xf]
        %v217 = vld [vmem:[%s183 + $0x8] sm:$0xf]
        %v218 = vlaneseq
        %v219 = vand.u32 %v218, 127
        %vm220 = vcmp.lt.s32.totalorder %v219, 17
        %v224 = vunpack.c.l.b16 %v215
        %v225 = vunpack.c.l.b16 %v216
        %v226 = vunpack.c.l.b16 %v217
        %v227 = vpack.c.b16 %v225, %v224
        %v228 = vpack.c.b16 %v226, %v226
        %vm229 = vcmask 261120
        %v231 = vsel %vm229, %v214, 0
        %v234 = vsel %vm229, %v227, 0
        %v237 = vsel %vm229, %v228, 0
        %239 = vmatpush.bf16.xpose.msra.mxu0 0
        %240 = vmatpush.bf16.xpose.msra.mxu0 0
        %241 = vmatpush.bf16.xpose.msra.mxu0 0
        %242 = vmatpush.bf16.xpose.msra.mxu0 0
        %243 = vmatpush.bf16.xpose.msra.mxu0 0
        %244 = vmatpush.bf16.xpose.msra.mxu0 0
        %245 = vmatpush.bf16.xpose.msra.mxu0 %v237
        %246 = vmatpush.bf16.xpose.msra.mxu0 %v234
        %247 = vmatmul.bf16.gmra.mxu0 %v231
        %v248 = vpop.f32.mrf.mxu0
        %v249 = vadd.f32 0.0, %v248
        %v250 = vpop.f32.mrf.mxu0
        %251 = vdwg.mxu0
        %v252 = vmul.f32 %v249, 0.17677669
        %v253 = vsel %vm220, %v252, -1e+30
        %vm254 = vcmask 188416
        %v255 = vsel %vm254, %v253, -inf
        %256 = vmax.xlane.f32.xlu0 %v255
        %v257 = vpop.xlane.xlu0 %256
        %v258 = vsub.f32 %v253, %v257
        %v259 = vmul.f32 %v258, 1.442695
        %v260 = vpow.pop %v259
        %v261 = vsel %vm254, %v260, 0.0
        %262 = vadd.xlane.f32.xlu0 %v261
        %v263 = vpop.xlane.xlu0 %262
        %v264 = vrcp.pop %v263
        %v265 = vmul.f32 %v263, %v264
        %v266 = vsub.f32 1.0, %v265
        %v267 = vmul.f32 %v264, %v266
        %v268 = vadd.f32 %v264, %v267
        %vm269 = vweird.f32 %v263
        %vm270 = vweird.f32 %v264
        %vm271 = vmor %vm269, %vm270
        %v272 = vsel %vm271, %v264, %v268
        %v273 = vand.u32 2147483647, %v263
        %vm274 = vcmp.eq.f32.partialorder %v273, 8.507059e+37
        %v275 = vand.u32 %v263, 2147483648
        %v276 = vor.u32 1.1754944e-38, %v275
        %v277 = vsel %vm274, %v276, %v272
        %v278 = vmul.f32 %v260, %v277
        %v279 = vadd.f32 %v278, 0.0
        %v281 = vunpack.c.l.b16 %v214
        %v282 = vpack.c.b16 %v281, %v281
        %283 = vrot.lane.b32.xlu0 %v282, 96
        %v284 = vpop.permute.xlu0 %283
        %285 = vrot.lane.b32.xlu0 %v227, 96
        %v286 = vpop.permute.xlu0 %285
        %287 = vrot.lane.b32.xlu0 %v228, 96
        %v288 = vpop.permute.xlu0 %287
        %v290 = vsel %vm229, %v284, 0
        %v293 = vsel %vm229, %v286, 0
        %v296 = vsel %vm229, %v288, 0
        %298 = vmatpush.bf16.xpose.msra.mxu0 0
        %299 = vmatpush.bf16.xpose.msra.mxu0 0
        %300 = vmatpush.bf16.xpose.msra.mxu0 0
        %301 = vmatpush.bf16.xpose.msra.mxu0 0
        %302 = vmatpush.bf16.xpose.msra.mxu0 0
        %303 = vmatpush.bf16.xpose.msra.mxu0 0
        %304 = vmatpush.bf16.xpose.msra.mxu0 %v296
        %305 = vmatpush.bf16.xpose.msra.mxu0 %v293
        %306 = vmatmul.bf16.gmra.mxu0 %v290
        %v307 = vpop.f32.mrf.mxu0
        %v308 = vadd.f32 0.0, %v307
        %v309 = vpop.f32.mrf.mxu0
        %310 = vdwg.mxu0
        %v311 = vmul.f32 %v308, 0.17677669
        %v312 = vsel %vm220, %v311, -1e+30
        %v313 = vsel %vm254, %v312, -inf
        %314 = vmax.xlane.f32.xlu0 %v313
        %v315 = vpop.xlane.xlu0 %314
        %v316 = vsub.f32 %v312, %v315
        %v317 = vmul.f32 %v316, 1.442695
        %v318 = vpow.pop %v317
        %v319 = vsel %vm254, %v318, 0.0
        %320 = vadd.xlane.f32.xlu0 %v319
        %v321 = vpop.xlane.xlu0 %320
        %v322 = vrcp.pop %v321
        %v323 = vmul.f32 %v321, %v322
        %v324 = vsub.f32 1.0, %v323
        %v325 = vmul.f32 %v322, %v324
        %v326 = vadd.f32 %v322, %v325
        %vm327 = vweird.f32 %v321
        %vm328 = vweird.f32 %v322
        %vm329 = vmor %vm327, %vm328
        %v330 = vsel %vm329, %v322, %v326
        %v331 = vand.u32 2147483647, %v321
        %vm332 = vcmp.eq.f32.partialorder %v331, 8.507059e+37
        %v333 = vand.u32 %v321, 2147483648
        %v334 = vor.u32 1.1754944e-38, %v333
        %v335 = vsel %vm332, %v334, %v330
        %v336 = vmul.f32 %v318, %v335
        %v337 = vadd.f32 %v279, %v336
        %338 = vrot.lane.b32.xlu0 %v282, 64
        %v339 = vpop.permute.xlu0 %338
        %340 = vrot.lane.b32.xlu0 %v227, 64
        %v341 = vpop.permute.xlu0 %340
        %342 = vrot.lane.b32.xlu0 %v228, 64
        %v343 = vpop.permute.xlu0 %342
        %v345 = vsel %vm229, %v339, 0
        %v348 = vsel %vm229, %v341, 0
        %v351 = vsel %vm229, %v343, 0
        %353 = vmatpush.bf16.xpose.msra.mxu0 0
        %354 = vmatpush.bf16.xpose.msra.mxu0 0
        %355 = vmatpush.bf16.xpose.msra.mxu0 0
        %356 = vmatpush.bf16.xpose.msra.mxu0 0
        %357 = vmatpush.bf16.xpose.msra.mxu0 0
        %358 = vmatpush.bf16.xpose.msra.mxu0 0
        %359 = vmatpush.bf16.xpose.msra.mxu0 %v351
        %360 = vmatpush.bf16.xpose.msra.mxu0 %v348
        %361 = vmatmul.bf16.gmra.mxu0 %v345
        %v362 = vpop.f32.mrf.mxu0
        %v363 = vadd.f32 0.0, %v362
        %v364 = vpop.f32.mrf.mxu0
        %365 = vdwg.mxu0
        %v366 = vmul.f32 %v363, 0.17677669
        %v367 = vsel %vm220, %v366, -1e+30
        %v368 = vsel %vm254, %v367, -inf
        %369 = vmax.xlane.f32.xlu0 %v368
        %v370 = vpop.xlane.xlu0 %369
        %v371 = vsub.f32 %v367, %v370
        %v372 = vmul.f32 %v371, 1.442695
        %v373 = vpow.pop %v372
        %v374 = vsel %vm254, %v373, 0.0
        %375 = vadd.xlane.f32.xlu0 %v374
        %v376 = vpop.xlane.xlu0 %375
        %v377 = vrcp.pop %v376
        %v378 = vmul.f32 %v376, %v377
        %v379 = vsub.f32 1.0, %v378
        %v380 = vmul.f32 %v377, %v379
        %v381 = vadd.f32 %v377, %v380
        %vm382 = vweird.f32 %v376
        %vm383 = vweird.f32 %v377
        %vm384 = vmor %vm382, %vm383
        %v385 = vsel %vm384, %v377, %v381
        %v386 = vand.u32 2147483647, %v376
        %vm387 = vcmp.eq.f32.partialorder %v386, 8.507059e+37
        %v388 = vand.u32 %v376, 2147483648
        %v389 = vor.u32 1.1754944e-38, %v388
        %v390 = vsel %vm387, %v389, %v385
        %v391 = vmul.f32 %v373, %v390
        %v392 = vadd.f32 %v337, %v391
        %393 = vrot.lane.b32.xlu0 %v282, 32
        %v394 = vpop.permute.xlu0 %393
        %395 = vrot.lane.b32.xlu0 %v227, 32
        %v396 = vpop.permute.xlu0 %395
        %397 = vrot.lane.b32.xlu0 %v228, 32
        %v398 = vpop.permute.xlu0 %397
        %v400 = vsel %vm229, %v394, 0
        %v403 = vsel %vm229, %v396, 0
        %v406 = vsel %vm229, %v398, 0
        %408 = vmatpush.bf16.xpose.msra.mxu0 0
        %409 = vmatpush.bf16.xpose.msra.mxu0 0
        %410 = vmatpush.bf16.xpose.msra.mxu0 0
        %411 = vmatpush.bf16.xpose.msra.mxu0 0
        %412 = vmatpush.bf16.xpose.msra.mxu0 0
        %413 = vmatpush.bf16.xpose.msra.mxu0 0
        %414 = vmatpush.bf16.xpose.msra.mxu0 %v406
        %415 = vmatpush.bf16.xpose.msra.mxu0 %v403
        %416 = vmatmul.bf16.gmra.mxu0 %v400
        %v417 = vpop.f32.mrf.mxu0
        %v418 = vadd.f32 0.0, %v417
        %v419 = vpop.f32.mrf.mxu0
        %420 = vdwg.mxu0
        %v421 = vmul.f32 %v418, 0.17677669
        %v422 = vsel %vm220, %v421, -1e+30
        %v423 = vsel %vm254, %v422, -inf
        %424 = vmax.xlane.f32.xlu0 %v423
        %v425 = vpop.xlane.xlu0 %424
        %v426 = vsub.f32 %v422, %v425
        %v427 = vmul.f32 %v426, 1.442695
        %v428 = vpow.pop %v427
        %v429 = vsel %vm254, %v428, 0.0
        %430 = vadd.xlane.f32.xlu0 %v429
        %v431 = vpop.xlane.xlu0 %430
        %v432 = vrcp.pop %v431
        %v433 = vmul.f32 %v431, %v432
        %v434 = vsub.f32 1.0, %v433
        %v435 = vmul.f32 %v432, %v434
        %v436 = vadd.f32 %v432, %v435
        %vm437 = vweird.f32 %v431
        %vm438 = vweird.f32 %v432
        %vm439 = vmor %vm437, %vm438
        %v440 = vsel %vm439, %v432, %v436
        %v441 = vand.u32 2147483647, %v431
        %vm442 = vcmp.eq.f32.partialorder %v441, 8.507059e+37
        %v443 = vand.u32 %v431, 2147483648
        %v444 = vor.u32 1.1754944e-38, %v443
        %v445 = vsel %vm442, %v444, %v440
        %v446 = vmul.f32 %v428, %v445
        %v447 = vadd.f32 %v392, %v446
        %v448 = vmul.f32 %v447, 0.25
        %449 = vst.msk [vmem:[%s212] sm:$0x1] %vm254, %v448
        %p450 = scmp.lt.s32.totalorder %s13, 1
        %s451 = scalar_select %p450, %s13, 1
        %s452 = scalar_lea.vmem %s2, %s451
        // Predicated region
        $region70: #{vision_transformer_forward.23} parent=64 // pred_check
          %p453 = pneg %p83
        $region71: #{vision_transformer_forward.23} parent=64 // pred_check_branch
          %455 = sbr.rel (%p453) target = $region73
        $region72: #{vision_transformer_forward.23} parent=64 // pred_region
          _
        $region73: #{vision_transformer_forward.23} parent=64 // pred_fallthru
          _
      $region65: #{vision_transformer_forward.23} parent=5 // pred_fallthru
        _
      %p456 = scmp.le.s32.totalorder 2, %s8
      // Predicated region
      $region74: #{vision_transformer_forward.23} parent=5 // pred_check
        %p457 = pneg %p456
      $region75: #{vision_transformer_forward.23} parent=5 // pred_check_branch
        %459 = sbr.rel (%p457) target = $region77
      $region76: #{vision_transformer_forward.23} parent=5 // pred_region
        %s460 = ssub.s32 %s8, 2
        // Predicated region
        $region78: #{vision_transformer_forward.23} parent=76 // pred_check
          %p461 = pneg %p89
        $region79: #{vision_transformer_forward.23} parent=76 // pred_check_branch
          %463 = sbr.rel (%p461) target = $region81
        $region80: #{vision_transformer_forward.23} parent=76 // pred_region
          %p464 = scmp.lt.s32.totalorder %s14, 1
          %s465 = scalar_select %p464, %s14, 1
          %s466 = scalar_lea.vmem %s2, %s465
        $region81: #{vision_transformer_forward.23} parent=76 // pred_fallthru
          _
      $region77: #{vision_transformer_forward.23} parent=5 // pred_fallthru
        _
    $region6: #{vision_transformer_forward.23} parent=1 // loop_footer
      %s12 = sadd.s32 1, %s8
    $region7: #{vision_transformer_forward.23} parent=1 // loop_footer_branch
      %7 = sbr.rel target = $region3
    $region8: #{vision_transformer_forward.23} parent=1 // loop_exit
      _

</llo_original>
